<compile_context>
chip_gen: v5e
topology: v5e:2x2
jax: 0.10.0
libtpu: 0.0.40
codegen_flags: <defaults>
</compile_context>

<pallas_src>
import functools

import jax
import jax.numpy as jnp
from jax.experimental import pallas as pl
from jax.experimental.pallas import tpu as pltpu

_EPS = 1e-5
_VMEM = pl.BlockSpec(memory_space=pltpu.MemorySpace.VMEM)


def _basic_block_kernel(x_ref, w1_ref, g1_ref, b1_ref, w2_ref, g2_ref, b2_ref,
                        out_ref, pad_s, p_s, *, H, W, eps, mxu_dtype):
    """Fused conv1+bn1+relu+conv2+bn2+add+relu.

    x_ref:   (N, C, H*W)  f32   -- NCHW with spatial collapsed onto lanes
    w*_ref:  (C, 9*C)     mxu_dtype (rows=Cout, cols ordered (dy, dx, cin))
    g*/b*:   (C, 1)       f32
    out_ref: (N, C, H*W)  f32
    pad_s:   (N, C, H+2, W+2) f32   -- shared zero-padded activation scratch (halo in VMEM)
    p_s:     (9*C, N*H*W) mxu_dtype -- shared im2col patch matrix (one matmul per conv)
    """
    N, C, HW = x_ref.shape
    inv_cnt = 1.0 / float(N * HW)

    def fill_padded(get_plane):
        # In-VMEM zero padding (replaces wrapper-side jnp.pad / HBM round-trip).
        pad_s[...] = jnp.zeros(pad_s.shape, pad_s.dtype)
        for n in range(N):
            pad_s[n, :, 1:H + 1, 1:W + 1] = get_plane(n)

    def im2col():
        # Build the (9*C, N*H*W) patch matrix once -> a single MXU matmul with K = 9*C.
        for n in range(N):
            for dy in range(3):
                for dx in range(3):
                    t = dy * 3 + dx
                    p_s[t * C:(t + 1) * C, n * HW:(n + 1) * HW] = (
                        pad_s[n, :, dy:dy + H, dx:dx + W]
                        .reshape(C, HW).astype(mxu_dtype))

    def batchnorm(acc, g, b):
        # Training-mode BatchNorm2d: per-channel stats over (N, H, W), biased variance.
        # Single pass (sum + sum-of-squares), f32, lane-axis (XLU) reductions.
        s = jnp.sum(acc, axis=1, keepdims=True)
        q = jnp.sum(acc * acc, axis=1, keepdims=True)
        mean = s * inv_cnt
        var = q * inv_cnt - mean * mean
        return (acc - mean) * jax.lax.rsqrt(var + eps) * g + b

    # ---- conv1 -> bn1 -> relu (stays in VMEM) ----------------------------------------
    fill_padded(lambda n: x_ref[n].reshape(C, H, W))
    im2col()
    acc1 = jnp.dot(w1_ref[...], p_s[...], preferred_element_type=jnp.float32)  # (C, N*HW) f32
    h1 = jnp.maximum(batchnorm(acc1, g1_ref[...], b1_ref[...]), 0.0)

    # ---- conv2 -> bn2 (+ identity) -> relu; scratch buffers reused --------------------
    fill_padded(lambda n: h1[:, n * HW:(n + 1) * HW].reshape(C, H, W))
    im2col()
    acc2 = jnp.dot(w2_ref[...], p_s[...], preferred_element_type=jnp.float32)
    y2 = batchnorm(acc2, g2_ref[...], b2_ref[...])

    for n in range(N):
        # residual add in f32 from the original input; lane-dense (H*W) store.
        out_ref[n] = jnp.maximum(y2[:, n * HW:(n + 1) * HW] + x_ref[n], 0.0)


def _conv_weight_as_matrix(w):
    """PyTorch conv weight (Cout, Cin, 3, 3) -> (Cout, 9*Cin), columns ordered (dy, dx, cin)."""
    co, ci, kh, kw = w.shape
    return jnp.transpose(w, (0, 2, 3, 1)).reshape(co, kh * kw * ci)


@functools.partial(jax.jit, static_argnames=("mxu_dtype",))
def basic_block_forward(x_nchw, params, *, mxu_dtype=jnp.bfloat16):
    """BasicBlock forward. x_nchw: [N, C, H, W] (PyTorch layout). stride=1, downsample=None."""
    N, C, H, W = x_nchw.shape
    HW = H * W
    assert params["w1"].shape == (C, C, 3, 3) and params["w2"].shape == (C, C, 3, 3), (
        "stride=1 / downsample=None BasicBlock requires inplanes == planes")

    w1m = _conv_weight_as_matrix(params["w1"]).astype(mxu_dtype)
    w2m = _conv_weight_as_matrix(params["w2"]).astype(mxu_dtype)
    g1 = params["gamma1"].reshape(C, 1).astype(jnp.float32)
    b1 = params["beta1"].reshape(C, 1).astype(jnp.float32)
    g2 = params["gamma2"].reshape(C, 1).astype(jnp.float32)
    b2 = params["beta2"].reshape(C, 1).astype(jnp.float32)

    # Free row-major collapse of NCHW -> (N, C, H*W); H*W becomes the (lane-dense) minor dim.
    x2d = x_nchw.reshape(N, C, HW)

    out2d = pl.pallas_call(
        functools.partial(_basic_block_kernel, H=H, W=W, eps=_EPS, mxu_dtype=mxu_dtype),
        out_shape=jax.ShapeDtypeStruct((N, C, HW), jnp.float32),
        in_specs=[_VMEM] * 7,
        out_specs=_VMEM,
        scratch_shapes=[
            pltpu.VMEM((N, C, H + 2, W + 2), jnp.float32),  # padded activations (shared conv1/conv2)
            pltpu.VMEM((9 * C, N * HW), mxu_dtype),         # im2col patch matrix (shared conv1/conv2)
        ],
    )(x2d, w1m, g1, b1, w2m, g2, b2)

    return out2d.reshape(N, C, H, W)


@functools.partial(jax.jit, static_argnames=("conv_dtype",))
def _reference_forward(x_nchw, params, *, conv_dtype=jnp.float32):
    """Pure-JAX reference (NCHW). conv_dtype lets us mirror the kernel's bf16-MXU-operand policy."""
    dn = ("NCHW", "OIHW", "NCHW")

    def conv_bn(h, w, g, b):
        c = jax.lax.conv_general_dilated(
            h.astype(conv_dtype), w.astype(conv_dtype), (1, 1), ((1, 1), (1, 1)),
            dimension_numbers=dn, preferred_element_type=jnp.float32)
        mean = jnp.mean(c, axis=(0, 2, 3), keepdims=True)
        var = jnp.mean((c - mean) ** 2, axis=(0, 2, 3), keepdims=True)
        return (c - mean) * jax.lax.rsqrt(var + _EPS) * g.reshape(1, -1, 1, 1) + b.reshape(1, -1, 1, 1)

    out = jnp.maximum(conv_bn(x_nchw, params["w1"], params["gamma1"], params["beta1"]), 0.0)
    out = conv_bn(out, params["w2"], params["gamma2"], params["beta2"]) + x_nchw
    return jnp.maximum(out, 0.0)


def init_params(key, inplanes, planes):
    k1, k2, k3, k4, k5, k6 = jax.random.split(key, 6)
    fan1 = inplanes * 9
    fan2 = planes * 9
    return {
        # PyTorch conv weight layout: (Cout, Cin, KH, KW)
        "w1": jax.random.normal(k1, (planes, inplanes, 3, 3), jnp.float32) / jnp.sqrt(fan1),
        "w2": jax.random.normal(k2, (planes, planes, 3, 3), jnp.float32) / jnp.sqrt(fan2),
        "gamma1": 1.0 + 0.1 * jax.random.normal(k3, (planes,), jnp.float32),
        "beta1": 0.1 * jax.random.normal(k4, (planes,), jnp.float32),
        "gamma2": 1.0 + 0.1 * jax.random.normal(k5, (planes,), jnp.float32),
        "beta2": 0.1 * jax.random.normal(k6, (planes,), jnp.float32),
    }


if __name__ == "__main__":
    N, C, H, W = 2, 4, 16, 16          # inplanes = planes = 4
    key = jax.random.PRNGKey(0)
    kx, kp = jax.random.split(key)
    x = jax.random.normal(kx, (N, C, H, W), jnp.float32)
    params = init_params(kp, inplanes=C, planes=C)

    # 1) strict module-semantics check: f32 MXU operands vs pure-f32 reference.
    out_f32 = jax.block_until_ready(basic_block_forward(x, params, mxu_dtype=jnp.float32))
    ref_f32 = jax.block_until_ready(_reference_forward(x, params))
    assert out_f32.shape == (N, C, H, W)
    assert jnp.allclose(out_f32, ref_f32, atol=1e-4, rtol=1e-4), \
        float(jnp.max(jnp.abs(out_f32 - ref_f32)))

    # 2) fast path (default): bf16 MXU operands, f32 accumulation + f32 BN/residual.
    out_bf16 = jax.block_until_ready(basic_block_forward(x, params))
    ref_bf16 = jax.block_until_ready(_reference_forward(x, params, conv_dtype=jnp.bfloat16))
    assert jnp.allclose(out_bf16, ref_bf16, atol=5e-3, rtol=5e-3), \
        float(jnp.max(jnp.abs(out_bf16 - ref_bf16)))
    # sanity vs the pure-f32 module numerics (bf16 operand rounding expected, ~1e-2 level).
    assert jnp.allclose(out_bf16, ref_f32, atol=5e-2, rtol=5e-2), \
        float(jnp.max(jnp.abs(out_bf16 - ref_f32)))

    print("KERNEL_OK")
</pallas_src>

<mosaic_0001>
module attributes {stable_mosaic.version = 11 : i64} {
  func.func @_basic_block_kernel(%arg0: memref<2x4x256xf32, #tpu.memory_space<vmem>>, %arg1: memref<4x36xf32, #tpu.memory_space<vmem>>, %arg2: memref<4x1xf32, #tpu.memory_space<vmem>>, %arg3: memref<4x1xf32, #tpu.memory_space<vmem>>, %arg4: memref<4x36xf32, #tpu.memory_space<vmem>>, %arg5: memref<4x1xf32, #tpu.memory_space<vmem>>, %arg6: memref<4x1xf32, #tpu.memory_space<vmem>>, %arg7: memref<2x4x256xf32, #tpu.memory_space<vmem>>, %arg8: memref<2x4x18x18xf32, #tpu.memory_space<vmem>>, %arg9: memref<36x512xf32, #tpu.memory_space<vmem>>) attributes {dimension_semantics = [], scalar_prefetch = 0 : i64, scratch_operands = 2 : i64, tpu.core_type = #tpu.core_type<tc>} {
    %cst = arith.constant 0.000000e+00 : f32
    %0 = vector.broadcast %cst : f32 to vector<2x4x18x18xf32>
    %c0 = arith.constant 0 : index
    %c0_0 = arith.constant 0 : index
    %c0_1 = arith.constant 0 : index
    %c0_2 = arith.constant 0 : index
    %1 = vector.load %arg8[%c0, %c0_0, %c0_1, %c0_2] : memref<2x4x18x18xf32, #tpu.memory_space<vmem>>, vector<2x4x18x18xf32>
    tpu.vector_store %arg8[%c0, %c0_0, %c0_1, %c0_2], %0 {strides = array<i32>} : memref<2x4x18x18xf32, #tpu.memory_space<vmem>>, vector<2x4x18x18xf32>,
    %c0_3 = arith.constant 0 : index
    %c0_4 = arith.constant 0 : index
    %c0_5 = arith.constant 0 : index
    %2 = vector.load %arg0[%c0_3, %c0_4, %c0_5] : memref<2x4x256xf32, #tpu.memory_space<vmem>>, vector<1x4x256xf32>
    %3 = vector.shape_cast %2 : vector<1x4x256xf32> to vector<4x256xf32>
    %4 = vector.shape_cast %3 : vector<4x256xf32> to vector<4x16x16xf32>
    %c0_6 = arith.constant 0 : index
    %c0_7 = arith.constant 0 : index
    %c1 = arith.constant 1 : index
    %c1_8 = arith.constant 1 : index
    %5 = vector.load %arg8[%c0_6, %c0_7, %c1, %c1_8] : memref<2x4x18x18xf32, #tpu.memory_space<vmem>>, vector<1x4x16x16xf32>
    %6 = vector.shape_cast %5 : vector<1x4x16x16xf32> to vector<4x16x16xf32>
    %7 = vector.shape_cast %4 : vector<4x16x16xf32> to vector<1x4x16x16xf32>
    tpu.vector_store %arg8[%c0_6, %c0_7, %c1, %c1_8], %7 {strides = array<i32>} : memref<2x4x18x18xf32, #tpu.memory_space<vmem>>, vector<1x4x16x16xf32>,
    %c1_9 = arith.constant 1 : index
    %c0_10 = arith.constant 0 : index
    %c0_11 = arith.constant 0 : index
    %8 = vector.load %arg0[%c1_9, %c0_10, %c0_11] : memref<2x4x256xf32, #tpu.memory_space<vmem>>, vector<1x4x256xf32>
    %9 = vector.shape_cast %8 : vector<1x4x256xf32> to vector<4x256xf32>
    %10 = vector.shape_cast %9 : vector<4x256xf32> to vector<4x16x16xf32>
    %c1_12 = arith.constant 1 : index
    %c0_13 = arith.constant 0 : index
    %c1_14 = arith.constant 1 : index
    %c1_15 = arith.constant 1 : index
    %11 = vector.load %arg8[%c1_12, %c0_13, %c1_14, %c1_15] : memref<2x4x18x18xf32, #tpu.memory_space<vmem>>, vector<1x4x16x16xf32>
    %12 = vector.shape_cast %11 : vector<1x4x16x16xf32> to vector<4x16x16xf32>
    %13 = vector.shape_cast %10 : vector<4x16x16xf32> to vector<1x4x16x16xf32>
    tpu.vector_store %arg8[%c1_12, %c0_13, %c1_14, %c1_15], %13 {strides = array<i32>} : memref<2x4x18x18xf32, #tpu.memory_space<vmem>>, vector<1x4x16x16xf32>,
    %c0_16 = arith.constant 0 : index
    %c0_17 = arith.constant 0 : index
    %c0_18 = arith.constant 0 : index
    %c0_19 = arith.constant 0 : index
    %14 = vector.load %arg8[%c0_16, %c0_17, %c0_18, %c0_19] : memref<2x4x18x18xf32, #tpu.memory_space<vmem>>, vector<1x4x16x16xf32>
    %15 = vector.shape_cast %14 : vector<1x4x16x16xf32> to vector<4x16x16xf32>
    %16 = vector.shape_cast %15 : vector<4x16x16xf32> to vector<4x256xf32>
    %c0_20 = arith.constant 0 : index
    %c0_21 = arith.constant 0 : index
    %17 = vector.load %arg9[%c0_20, %c0_21] : memref<36x512xf32, #tpu.memory_space<vmem>>, vector<4x256xf32>
    tpu.vector_store %arg9[%c0_20, %c0_21], %16 {strides = array<i32>} : memref<36x512xf32, #tpu.memory_space<vmem>>, vector<4x256xf32>,
    %c0_22 = arith.constant 0 : index
    %c0_23 = arith.constant 0 : index
    %c0_24 = arith.constant 0 : index
    %c1_25 = arith.constant 1 : index
    %18 = vector.load %arg8[%c0_22, %c0_23, %c0_24, %c1_25] : memref<2x4x18x18xf32, #tpu.memory_space<vmem>>, vector<1x4x16x16xf32>
    %19 = vector.shape_cast %18 : vector<1x4x16x16xf32> to vector<4x16x16xf32>
    %20 = vector.shape_cast %19 : vector<4x16x16xf32> to vector<4x256xf32>
    %c4 = arith.constant 4 : index
    %c0_26 = arith.constant 0 : index
    %21 = vector.load %arg9[%c4, %c0_26] : memref<36x512xf32, #tpu.memory_space<vmem>>, vector<4x256xf32>
    tpu.vector_store %arg9[%c4, %c0_26], %20 {strides = array<i32>} : memref<36x512xf32, #tpu.memory_space<vmem>>, vector<4x256xf32>,
    %c0_27 = arith.constant 0 : index
    %c0_28 = arith.constant 0 : index
    %c0_29 = arith.constant 0 : index
    %c2 = arith.constant 2 : index
    %22 = vector.load %arg8[%c0_27, %c0_28, %c0_29, %c2] : memref<2x4x18x18xf32, #tpu.memory_space<vmem>>, vector<1x4x16x16xf32>
    %23 = vector.shape_cast %22 : vector<1x4x16x16xf32> to vector<4x16x16xf32>
    %24 = vector.shape_cast %23 : vector<4x16x16xf32> to vector<4x256xf32>
    %c8 = arith.constant 8 : index
    %c0_30 = arith.constant 0 : index
    %25 = vector.load %arg9[%c8, %c0_30] : memref<36x512xf32, #tpu.memory_space<vmem>>, vector<4x256xf32>
    tpu.vector_store %arg9[%c8, %c0_30], %24 {strides = array<i32>} : memref<36x512xf32, #tpu.memory_space<vmem>>, vector<4x256xf32>,
    %c0_31 = arith.constant 0 : index
    %c0_32 = arith.constant 0 : index
    %c1_33 = arith.constant 1 : index
    %c0_34 = arith.constant 0 : index
    %26 = vector.load %arg8[%c0_31, %c0_32, %c1_33, %c0_34] : memref<2x4x18x18xf32, #tpu.memory_space<vmem>>, vector<1x4x16x16xf32>
    %27 = vector.shape_cast %26 : vector<1x4x16x16xf32> to vector<4x16x16xf32>
    %28 = vector.shape_cast %27 : vector<4x16x16xf32> to vector<4x256xf32>
    %c12 = arith.constant 12 : index
    %c0_35 = arith.constant 0 : index
    %29 = vector.load %arg9[%c12, %c0_35] : memref<36x512xf32, #tpu.memory_space<vmem>>, vector<4x256xf32>
    tpu.vector_store %arg9[%c12, %c0_35], %28 {strides = array<i32>} : memref<36x512xf32, #tpu.memory_space<vmem>>, vector<4x256xf32>,
    %c0_36 = arith.constant 0 : index
    %c0_37 = arith.constant 0 : index
    %c1_38 = arith.constant 1 : index
    %c1_39 = arith.constant 1 : index
    %30 = vector.load %arg8[%c0_36, %c0_37, %c1_38, %c1_39] : memref<2x4x18x18xf32, #tpu.memory_space<vmem>>, vector<1x4x16x16xf32>
    %31 = vector.shape_cast %30 : vector<1x4x16x16xf32> to vector<4x16x16xf32>
    %32 = vector.shape_cast %31 : vector<4x16x16xf32> to vector<4x256xf32>
    %c16 = arith.constant 16 : index
    %c0_40 = arith.constant 0 : index
    %33 = vector.load %arg9[%c16, %c0_40] : memref<36x512xf32, #tpu.memory_space<vmem>>, vector<4x256xf32>
    tpu.vector_store %arg9[%c16, %c0_40], %32 {strides = array<i32>} : memref<36x512xf32, #tpu.memory_space<vmem>>, vector<4x256xf32>,
    %c0_41 = arith.constant 0 : index
    %c0_42 = arith.constant 0 : index
    %c1_43 = arith.constant 1 : index
    %c2_44 = arith.constant 2 : index
    %34 = vector.load %arg8[%c0_41, %c0_42, %c1_43, %c2_44] : memref<2x4x18x18xf32, #tpu.memory_space<vmem>>, vector<1x4x16x16xf32>
    %35 = vector.shape_cast %34 : vector<1x4x16x16xf32> to vector<4x16x16xf32>
    %36 = vector.shape_cast %35 : vector<4x16x16xf32> to vector<4x256xf32>
    %c20 = arith.constant 20 : index
    %c0_45 = arith.constant 0 : index
    %37 = vector.load %arg9[%c20, %c0_45] : memref<36x512xf32, #tpu.memory_space<vmem>>, vector<4x256xf32>
    tpu.vector_store %arg9[%c20, %c0_45], %36 {strides = array<i32>} : memref<36x512xf32, #tpu.memory_space<vmem>>, vector<4x256xf32>,
    %c0_46 = arith.constant 0 : index
    %c0_47 = arith.constant 0 : index
    %c2_48 = arith.constant 2 : index
    %c0_49 = arith.constant 0 : index
    %38 = vector.load %arg8[%c0_46, %c0_47, %c2_48, %c0_49] : memref<2x4x18x18xf32, #tpu.memory_space<vmem>>, vector<1x4x16x16xf32>
    %39 = vector.shape_cast %38 : vector<1x4x16x16xf32> to vector<4x16x16xf32>
    %40 = vector.shape_cast %39 : vector<4x16x16xf32> to vector<4x256xf32>
    %c24 = arith.constant 24 : index
    %c0_50 = arith.constant 0 : index
    %41 = vector.load %arg9[%c24, %c0_50] : memref<36x512xf32, #tpu.memory_space<vmem>>, vector<4x256xf32>
    tpu.vector_store %arg9[%c24, %c0_50], %40 {strides = array<i32>} : memref<36x512xf32, #tpu.memory_space<vmem>>, vector<4x256xf32>,
    %c0_51 = arith.constant 0 : index
    %c0_52 = arith.constant 0 : index
    %c2_53 = arith.constant 2 : index
    %c1_54 = arith.constant 1 : index
    %42 = vector.load %arg8[%c0_51, %c0_52, %c2_53, %c1_54] : memref<2x4x18x18xf32, #tpu.memory_space<vmem>>, vector<1x4x16x16xf32>
    %43 = vector.shape_cast %42 : vector<1x4x16x16xf32> to vector<4x16x16xf32>
    %44 = vector.shape_cast %43 : vector<4x16x16xf32> to vector<4x256xf32>
    %c28 = arith.constant 28 : index
    %c0_55 = arith.constant 0 : index
    %45 = vector.load %arg9[%c28, %c0_55] : memref<36x512xf32, #tpu.memory_space<vmem>>, vector<4x256xf32>
    tpu.vector_store %arg9[%c28, %c0_55], %44 {strides = array<i32>} : memref<36x512xf32, #tpu.memory_space<vmem>>, vector<4x256xf32>,
    %c0_56 = arith.constant 0 : index
    %c0_57 = arith.constant 0 : index
    %c2_58 = arith.constant 2 : index
    %c2_59 = arith.constant 2 : index
    %46 = vector.load %arg8[%c0_56, %c0_57, %c2_58, %c2_59] : memref<2x4x18x18xf32, #tpu.memory_space<vmem>>, vector<1x4x16x16xf32>
    %47 = vector.shape_cast %46 : vector<1x4x16x16xf32> to vector<4x16x16xf32>
    %48 = vector.shape_cast %47 : vector<4x16x16xf32> to vector<4x256xf32>
    %c32 = arith.constant 32 : index
    %c0_60 = arith.constant 0 : index
    %49 = vector.load %arg9[%c32, %c0_60] : memref<36x512xf32, #tpu.memory_space<vmem>>, vector<4x256xf32>
    tpu.vector_store %arg9[%c32, %c0_60], %48 {strides = array<i32>} : memref<36x512xf32, #tpu.memory_space<vmem>>, vector<4x256xf32>,
    %c1_61 = arith.constant 1 : index
    %c0_62 = arith.constant 0 : index
    %c0_63 = arith.constant 0 : index
    %c0_64 = arith.constant 0 : index
    %50 = vector.load %arg8[%c1_61, %c0_62, %c0_63, %c0_64] : memref<2x4x18x18xf32, #tpu.memory_space<vmem>>, vector<1x4x16x16xf32>
    %51 = vector.shape_cast %50 : vector<1x4x16x16xf32> to vector<4x16x16xf32>
    %52 = vector.shape_cast %51 : vector<4x16x16xf32> to vector<4x256xf32>
    %c0_65 = arith.constant 0 : index
    %c256 = arith.constant 256 : index
    %53 = vector.load %arg9[%c0_65, %c256] : memref<36x512xf32, #tpu.memory_space<vmem>>, vector<4x256xf32>
    tpu.vector_store %arg9[%c0_65, %c256], %52 {strides = array<i32>} : memref<36x512xf32, #tpu.memory_space<vmem>>, vector<4x256xf32>,
    %c1_66 = arith.constant 1 : index
    %c0_67 = arith.constant 0 : index
    %c0_68 = arith.constant 0 : index
    %c1_69 = arith.constant 1 : index
    %54 = vector.load %arg8[%c1_66, %c0_67, %c0_68, %c1_69] : memref<2x4x18x18xf32, #tpu.memory_space<vmem>>, vector<1x4x16x16xf32>
    %55 = vector.shape_cast %54 : vector<1x4x16x16xf32> to vector<4x16x16xf32>
    %56 = vector.shape_cast %55 : vector<4x16x16xf32> to vector<4x256xf32>
    %c4_70 = arith.constant 4 : index
    %c256_71 = arith.constant 256 : index
    %57 = vector.load %arg9[%c4_70, %c256_71] : memref<36x512xf32, #tpu.memory_space<vmem>>, vector<4x256xf32>
    tpu.vector_store %arg9[%c4_70, %c256_71], %56 {strides = array<i32>} : memref<36x512xf32, #tpu.memory_space<vmem>>, vector<4x256xf32>,
    %c1_72 = arith.constant 1 : index
    %c0_73 = arith.constant 0 : index
    %c0_74 = arith.constant 0 : index
    %c2_75 = arith.constant 2 : index
    %58 = vector.load %arg8[%c1_72, %c0_73, %c0_74, %c2_75] : memref<2x4x18x18xf32, #tpu.memory_space<vmem>>, vector<1x4x16x16xf32>
    %59 = vector.shape_cast %58 : vector<1x4x16x16xf32> to vector<4x16x16xf32>
    %60 = vector.shape_cast %59 : vector<4x16x16xf32> to vector<4x256xf32>
    %c8_76 = arith.constant 8 : index
    %c256_77 = arith.constant 256 : index
    %61 = vector.load %arg9[%c8_76, %c256_77] : memref<36x512xf32, #tpu.memory_space<vmem>>, vector<4x256xf32>
    tpu.vector_store %arg9[%c8_76, %c256_77], %60 {strides = array<i32>} : memref<36x512xf32, #tpu.memory_space<vmem>>, vector<4x256xf32>,
    %c1_78 = arith.constant 1 : index
    %c0_79 = arith.constant 0 : index
    %c1_80 = arith.constant 1 : index
    %c0_81 = arith.constant 0 : index
    %62 = vector.load %arg8[%c1_78, %c0_79, %c1_80, %c0_81] : memref<2x4x18x18xf32, #tpu.memory_space<vmem>>, vector<1x4x16x16xf32>
    %63 = vector.shape_cast %62 : vector<1x4x16x16xf32> to vector<4x16x16xf32>
    %64 = vector.shape_cast %63 : vector<4x16x16xf32> to vector<4x256xf32>
    %c12_82 = arith.constant 12 : index
    %c256_83 = arith.constant 256 : index
    %65 = vector.load %arg9[%c12_82, %c256_83] : memref<36x512xf32, #tpu.memory_space<vmem>>, vector<4x256xf32>
    tpu.vector_store %arg9[%c12_82, %c256_83], %64 {strides = array<i32>} : memref<36x512xf32, #tpu.memory_space<vmem>>, vector<4x256xf32>,
    %c1_84 = arith.constant 1 : index
    %c0_85 = arith.constant 0 : index
    %c1_86 = arith.constant 1 : index
    %c1_87 = arith.constant 1 : index
    %66 = vector.load %arg8[%c1_84, %c0_85, %c1_86, %c1_87] : memref<2x4x18x18xf32, #tpu.memory_space<vmem>>, vector<1x4x16x16xf32>
    %67 = vector.shape_cast %66 : vector<1x4x16x16xf32> to vector<4x16x16xf32>
    %68 = vector.shape_cast %67 : vector<4x16x16xf32> to vector<4x256xf32>
    %c16_88 = arith.constant 16 : index
    %c256_89 = arith.constant 256 : index
    %69 = vector.load %arg9[%c16_88, %c256_89] : memref<36x512xf32, #tpu.memory_space<vmem>>, vector<4x256xf32>
    tpu.vector_store %arg9[%c16_88, %c256_89], %68 {strides = array<i32>} : memref<36x512xf32, #tpu.memory_space<vmem>>, vector<4x256xf32>,
    %c1_90 = arith.constant 1 : index
    %c0_91 = arith.constant 0 : index
    %c1_92 = arith.constant 1 : index
    %c2_93 = arith.constant 2 : index
    %70 = vector.load %arg8[%c1_90, %c0_91, %c1_92, %c2_93] : memref<2x4x18x18xf32, #tpu.memory_space<vmem>>, vector<1x4x16x16xf32>
    %71 = vector.shape_cast %70 : vector<1x4x16x16xf32> to vector<4x16x16xf32>
    %72 = vector.shape_cast %71 : vector<4x16x16xf32> to vector<4x256xf32>
    %c20_94 = arith.constant 20 : index
    %c256_95 = arith.constant 256 : index
    %73 = vector.load %arg9[%c20_94, %c256_95] : memref<36x512xf32, #tpu.memory_space<vmem>>, vector<4x256xf32>
    tpu.vector_store %arg9[%c20_94, %c256_95], %72 {strides = array<i32>} : memref<36x512xf32, #tpu.memory_space<vmem>>, vector<4x256xf32>,
    %c1_96 = arith.constant 1 : index
    %c0_97 = arith.constant 0 : index
    %c2_98 = arith.constant 2 : index
    %c0_99 = arith.constant 0 : index
    %74 = vector.load %arg8[%c1_96, %c0_97, %c2_98, %c0_99] : memref<2x4x18x18xf32, #tpu.memory_space<vmem>>, vector<1x4x16x16xf32>
    %75 = vector.shape_cast %74 : vector<1x4x16x16xf32> to vector<4x16x16xf32>
    %76 = vector.shape_cast %75 : vector<4x16x16xf32> to vector<4x256xf32>
    %c24_100 = arith.constant 24 : index
    %c256_101 = arith.constant 256 : index
    %77 = vector.load %arg9[%c24_100, %c256_101] : memref<36x512xf32, #tpu.memory_space<vmem>>, vector<4x256xf32>
    tpu.vector_store %arg9[%c24_100, %c256_101], %76 {strides = array<i32>} : memref<36x512xf32, #tpu.memory_space<vmem>>, vector<4x256xf32>,
    %c1_102 = arith.constant 1 : index
    %c0_103 = arith.constant 0 : index
    %c2_104 = arith.constant 2 : index
    %c1_105 = arith.constant 1 : index
    %78 = vector.load %arg8[%c1_102, %c0_103, %c2_104, %c1_105] : memref<2x4x18x18xf32, #tpu.memory_space<vmem>>, vector<1x4x16x16xf32>
    %79 = vector.shape_cast %78 : vector<1x4x16x16xf32> to vector<4x16x16xf32>
    %80 = vector.shape_cast %79 : vector<4x16x16xf32> to vector<4x256xf32>
    %c28_106 = arith.constant 28 : index
    %c256_107 = arith.constant 256 : index
    %81 = vector.load %arg9[%c28_106, %c256_107] : memref<36x512xf32, #tpu.memory_space<vmem>>, vector<4x256xf32>
    tpu.vector_store %arg9[%c28_106, %c256_107], %80 {strides = array<i32>} : memref<36x512xf32, #tpu.memory_space<vmem>>, vector<4x256xf32>,
    %c1_108 = arith.constant 1 : index
    %c0_109 = arith.constant 0 : index
    %c2_110 = arith.constant 2 : index
    %c2_111 = arith.constant 2 : index
    %82 = vector.load %arg8[%c1_108, %c0_109, %c2_110, %c2_111] : memref<2x4x18x18xf32, #tpu.memory_space<vmem>>, vector<1x4x16x16xf32>
    %83 = vector.shape_cast %82 : vector<1x4x16x16xf32> to vector<4x16x16xf32>
    %84 = vector.shape_cast %83 : vector<4x16x16xf32> to vector<4x256xf32>
    %c32_112 = arith.constant 32 : index
    %c256_113 = arith.constant 256 : index
    %85 = vector.load %arg9[%c32_112, %c256_113] : memref<36x512xf32, #tpu.memory_space<vmem>>, vector<4x256xf32>
    tpu.vector_store %arg9[%c32_112, %c256_113], %84 {strides = array<i32>} : memref<36x512xf32, #tpu.memory_space<vmem>>, vector<4x256xf32>,
    %c0_114 = arith.constant 0 : index
    %c0_115 = arith.constant 0 : index
    %86 = vector.load %arg1[%c0_114, %c0_115] : memref<4x36xf32, #tpu.memory_space<vmem>>, vector<4x36xf32>
    %c0_116 = arith.constant 0 : index
    %c0_117 = arith.constant 0 : index
    %87 = vector.load %arg9[%c0_116, %c0_117] : memref<36x512xf32, #tpu.memory_space<vmem>>, vector<36x512xf32>
    %cst_118 = arith.constant dense<0.000000e+00> : vector<4x512xf32>
    %88 = tpu.matmul %86, %87, %cst_118 {dimension_numbers = #tpu.dot_dimension_numbers<[1], [0], [0], [1], [0, 0, 1, 1], [], []>} : vector<4x36xf32>, vector<36x512xf32>, vector<4x512xf32> -> vector<4x512xf32>
    %c0_119 = arith.constant 0 : index
    %c0_120 = arith.constant 0 : index
    %89 = vector.load %arg2[%c0_119, %c0_120] : memref<4x1xf32, #tpu.memory_space<vmem>>, vector<4x1xf32>
    %c0_121 = arith.constant 0 : index
    %c0_122 = arith.constant 0 : index
    %90 = vector.load %arg3[%c0_121, %c0_122] : memref<4x1xf32, #tpu.memory_space<vmem>>, vector<4x1xf32>
    %cst_123 = arith.constant dense<0.000000e+00> : vector<4xf32>
    %91 = vector.multi_reduction <add>, %88, %cst_123 [1] : vector<4x512xf32> to vector<4xf32>
    %92 = vector.shape_cast %91 : vector<4xf32> to vector<4x1xf32>
    %93 = arith.mulf %88, %88 : vector<4x512xf32>
    %cst_124 = arith.constant dense<0.000000e+00> : vector<4xf32>
    %94 = vector.multi_reduction <add>, %93, %cst_124 [1] : vector<4x512xf32> to vector<4xf32>
    %95 = vector.shape_cast %94 : vector<4xf32> to vector<4x1xf32>
    %cst_125 = arith.constant 0.001953125 : f32
    %96 = vector.broadcast %cst_125 : f32 to vector<4x1xf32>
    %97 = arith.mulf %92, %96 : vector<4x1xf32>
    %cst_126 = arith.constant 0.001953125 : f32
    %98 = vector.broadcast %cst_126 : f32 to vector<4x1xf32>
    %99 = arith.mulf %95, %98 : vector<4x1xf32>
    %100 = arith.mulf %97, %97 : vector<4x1xf32>
    %101 = arith.subf %99, %100 : vector<4x1xf32>
    %102 = vector.broadcast %97 : vector<4x1xf32> to vector<4x512xf32>
    %103 = arith.subf %88, %102 : vector<4x512xf32>
    %cst_127 = arith.constant 9.99999974E-6 : f32
    %104 = vector.broadcast %cst_127 : f32 to vector<4x1xf32>
    %105 = arith.addf %101, %104 : vector<4x1xf32>
    %106 = math.rsqrt %105 : vector<4x1xf32>
    %107 = vector.broadcast %106 : vector<4x1xf32> to vector<4x512xf32>
    %108 = arith.mulf %103, %107 : vector<4x512xf32>
    %109 = vector.broadcast %89 : vector<4x1xf32> to vector<4x512xf32>
    %110 = arith.mulf %108, %109 : vector<4x512xf32>
    %111 = vector.broadcast %90 : vector<4x1xf32> to vector<4x512xf32>
    %112 = arith.addf %110, %111 : vector<4x512xf32>
    %cst_128 = arith.constant 0.000000e+00 : f32
    %113 = vector.broadcast %cst_128 : f32 to vector<4x512xf32>
    %114 = arith.maximumf %112, %113 : vector<4x512xf32>
    %cst_129 = arith.constant 0.000000e+00 : f32
    %115 = vector.broadcast %cst_129 : f32 to vector<2x4x18x18xf32>
    %c0_130 = arith.constant 0 : index
    %c0_131 = arith.constant 0 : index
    %c0_132 = arith.constant 0 : index
    %c0_133 = arith.constant 0 : index
    %116 = vector.load %arg8[%c0_130, %c0_131, %c0_132, %c0_133] : memref<2x4x18x18xf32, #tpu.memory_space<vmem>>, vector<2x4x18x18xf32>
    tpu.vector_store %arg8[%c0_130, %c0_131, %c0_132, %c0_133], %115 {strides = array<i32>} : memref<2x4x18x18xf32, #tpu.memory_space<vmem>>, vector<2x4x18x18xf32>,
    %117 = vector.extract_strided_slice %114 {offsets = [0, 0], sizes = [4, 256], strides = [1, 1]} : vector<4x512xf32> to vector<4x256xf32>
    %118 = vector.shape_cast %117 : vector<4x256xf32> to vector<4x16x16xf32>
    %c0_134 = arith.constant 0 : index
    %c0_135 = arith.constant 0 : index
    %c1_136 = arith.constant 1 : index
    %c1_137 = arith.constant 1 : index
    %119 = vector.load %arg8[%c0_134, %c0_135, %c1_136, %c1_137] : memref<2x4x18x18xf32, #tpu.memory_space<vmem>>, vector<1x4x16x16xf32>
    %120 = vector.shape_cast %119 : vector<1x4x16x16xf32> to vector<4x16x16xf32>
    %121 = vector.shape_cast %118 : vector<4x16x16xf32> to vector<1x4x16x16xf32>
    tpu.vector_store %arg8[%c0_134, %c0_135, %c1_136, %c1_137], %121 {strides = array<i32>} : memref<2x4x18x18xf32, #tpu.memory_space<vmem>>, vector<1x4x16x16xf32>,
    %122 = vector.extract_strided_slice %114 {offsets = [0, 256], sizes = [4, 256], strides = [1, 1]} : vector<4x512xf32> to vector<4x256xf32>
    %123 = vector.shape_cast %122 : vector<4x256xf32> to vector<4x16x16xf32>
    %c1_138 = arith.constant 1 : index
    %c0_139 = arith.constant 0 : index
    %c1_140 = arith.constant 1 : index
    %c1_141 = arith.constant 1 : index
    %124 = vector.load %arg8[%c1_138, %c0_139, %c1_140, %c1_141] : memref<2x4x18x18xf32, #tpu.memory_space<vmem>>, vector<1x4x16x16xf32>
    %125 = vector.shape_cast %124 : vector<1x4x16x16xf32> to vector<4x16x16xf32>
    %126 = vector.shape_cast %123 : vector<4x16x16xf32> to vector<1x4x16x16xf32>
    tpu.vector_store %arg8[%c1_138, %c0_139, %c1_140, %c1_141], %126 {strides = array<i32>} : memref<2x4x18x18xf32, #tpu.memory_space<vmem>>, vector<1x4x16x16xf32>,
    %c0_142 = arith.constant 0 : index
    %c0_143 = arith.constant 0 : index
    %c0_144 = arith.constant 0 : index
    %c0_145 = arith.constant 0 : index
    %127 = vector.load %arg8[%c0_142, %c0_143, %c0_144, %c0_145] : memref<2x4x18x18xf32, #tpu.memory_space<vmem>>, vector<1x4x16x16xf32>
    %128 = vector.shape_cast %127 : vector<1x4x16x16xf32> to vector<4x16x16xf32>
    %129 = vector.shape_cast %128 : vector<4x16x16xf32> to vector<4x256xf32>
    %c0_146 = arith.constant 0 : index
    %c0_147 = arith.constant 0 : index
    %130 = vector.load %arg9[%c0_146, %c0_147] : memref<36x512xf32, #tpu.memory_space<vmem>>, vector<4x256xf32>
    tpu.vector_store %arg9[%c0_146, %c0_147], %129 {strides = array<i32>} : memref<36x512xf32, #tpu.memory_space<vmem>>, vector<4x256xf32>,
    %c0_148 = arith.constant 0 : index
    %c0_149 = arith.constant 0 : index
    %c0_150 = arith.constant 0 : index
    %c1_151 = arith.constant 1 : index
    %131 = vector.load %arg8[%c0_148, %c0_149, %c0_150, %c1_151] : memref<2x4x18x18xf32, #tpu.memory_space<vmem>>, vector<1x4x16x16xf32>
    %132 = vector.shape_cast %131 : vector<1x4x16x16xf32> to vector<4x16x16xf32>
    %133 = vector.shape_cast %132 : vector<4x16x16xf32> to vector<4x256xf32>
    %c4_152 = arith.constant 4 : index
    %c0_153 = arith.constant 0 : index
    %134 = vector.load %arg9[%c4_152, %c0_153] : memref<36x512xf32, #tpu.memory_space<vmem>>, vector<4x256xf32>
    tpu.vector_store %arg9[%c4_152, %c0_153], %133 {strides = array<i32>} : memref<36x512xf32, #tpu.memory_space<vmem>>, vector<4x256xf32>,
    %c0_154 = arith.constant 0 : index
    %c0_155 = arith.constant 0 : index
    %c0_156 = arith.constant 0 : index
    %c2_157 = arith.constant 2 : index
    %135 = vector.load %arg8[%c0_154, %c0_155, %c0_156, %c2_157] : memref<2x4x18x18xf32, #tpu.memory_space<vmem>>, vector<1x4x16x16xf32>
    %136 = vector.shape_cast %135 : vector<1x4x16x16xf32> to vector<4x16x16xf32>
    %137 = vector.shape_cast %136 : vector<4x16x16xf32> to vector<4x256xf32>
    %c8_158 = arith.constant 8 : index
    %c0_159 = arith.constant 0 : index
    %138 = vector.load %arg9[%c8_158, %c0_159] : memref<36x512xf32, #tpu.memory_space<vmem>>, vector<4x256xf32>
    tpu.vector_store %arg9[%c8_158, %c0_159], %137 {strides = array<i32>} : memref<36x512xf32, #tpu.memory_space<vmem>>, vector<4x256xf32>,
    %c0_160 = arith.constant 0 : index
    %c0_161 = arith.constant 0 : index
    %c1_162 = arith.constant 1 : index
    %c0_163 = arith.constant 0 : index
    %139 = vector.load %arg8[%c0_160, %c0_161, %c1_162, %c0_163] : memref<2x4x18x18xf32, #tpu.memory_space<vmem>>, vector<1x4x16x16xf32>
    %140 = vector.shape_cast %139 : vector<1x4x16x16xf32> to vector<4x16x16xf32>
    %141 = vector.shape_cast %140 : vector<4x16x16xf32> to vector<4x256xf32>
    %c12_164 = arith.constant 12 : index
    %c0_165 = arith.constant 0 : index
    %142 = vector.load %arg9[%c12_164, %c0_165] : memref<36x512xf32, #tpu.memory_space<vmem>>, vector<4x256xf32>
    tpu.vector_store %arg9[%c12_164, %c0_165], %141 {strides = array<i32>} : memref<36x512xf32, #tpu.memory_space<vmem>>, vector<4x256xf32>,
    %c0_166 = arith.constant 0 : index
    %c0_167 = arith.constant 0 : index
    %c1_168 = arith.constant 1 : index
    %c1_169 = arith.constant 1 : index
    %143 = vector.load %arg8[%c0_166, %c0_167, %c1_168, %c1_169] : memref<2x4x18x18xf32, #tpu.memory_space<vmem>>, vector<1x4x16x16xf32>
    %144 = vector.shape_cast %143 : vector<1x4x16x16xf32> to vector<4x16x16xf32>
    %145 = vector.shape_cast %144 : vector<4x16x16xf32> to vector<4x256xf32>
    %c16_170 = arith.constant 16 : index
    %c0_171 = arith.constant 0 : index
    %146 = vector.load %arg9[%c16_170, %c0_171] : memref<36x512xf32, #tpu.memory_space<vmem>>, vector<4x256xf32>
    tpu.vector_store %arg9[%c16_170, %c0_171], %145 {strides = array<i32>} : memref<36x512xf32, #tpu.memory_space<vmem>>, vector<4x256xf32>,
    %c0_172 = arith.constant 0 : index
    %c0_173 = arith.constant 0 : index
    %c1_174 = arith.constant 1 : index
    %c2_175 = arith.constant 2 : index
    %147 = vector.load %arg8[%c0_172, %c0_173, %c1_174, %c2_175] : memref<2x4x18x18xf32, #tpu.memory_space<vmem>>, vector<1x4x16x16xf32>
    %148 = vector.shape_cast %147 : vector<1x4x16x16xf32> to vector<4x16x16xf32>
    %149 = vector.shape_cast %148 : vector<4x16x16xf32> to vector<4x256xf32>
    %c20_176 = arith.constant 20 : index
    %c0_177 = arith.constant 0 : index
    %150 = vector.load %arg9[%c20_176, %c0_177] : memref<36x512xf32, #tpu.memory_space<vmem>>, vector<4x256xf32>
    tpu.vector_store %arg9[%c20_176, %c0_177], %149 {strides = array<i32>} : memref<36x512xf32, #tpu.memory_space<vmem>>, vector<4x256xf32>,
    %c0_178 = arith.constant 0 : index
    %c0_179 = arith.constant 0 : index
    %c2_180 = arith.constant 2 : index
    %c0_181 = arith.constant 0 : index
    %151 = vector.load %arg8[%c0_178, %c0_179, %c2_180, %c0_181] : memref<2x4x18x18xf32, #tpu.memory_space<vmem>>, vector<1x4x16x16xf32>
    %152 = vector.shape_cast %151 : vector<1x4x16x16xf32> to vector<4x16x16xf32>
    %153 = vector.shape_cast %152 : vector<4x16x16xf32> to vector<4x256xf32>
    %c24_182 = arith.constant 24 : index
    %c0_183 = arith.constant 0 : index
    %154 = vector.load %arg9[%c24_182, %c0_183] : memref<36x512xf32, #tpu.memory_space<vmem>>, vector<4x256xf32>
    tpu.vector_store %arg9[%c24_182, %c0_183], %153 {strides = array<i32>} : memref<36x512xf32, #tpu.memory_space<vmem>>, vector<4x256xf32>,
    %c0_184 = arith.constant 0 : index
    %c0_185 = arith.constant 0 : index
    %c2_186 = arith.constant 2 : index
    %c1_187 = arith.constant 1 : index
    %155 = vector.load %arg8[%c0_184, %c0_185, %c2_186, %c1_187] : memref<2x4x18x18xf32, #tpu.memory_space<vmem>>, vector<1x4x16x16xf32>
    %156 = vector.shape_cast %155 : vector<1x4x16x16xf32> to vector<4x16x16xf32>
    %157 = vector.shape_cast %156 : vector<4x16x16xf32> to vector<4x256xf32>
    %c28_188 = arith.constant 28 : index
    %c0_189 = arith.constant 0 : index
    %158 = vector.load %arg9[%c28_188, %c0_189] : memref<36x512xf32, #tpu.memory_space<vmem>>, vector<4x256xf32>
    tpu.vector_store %arg9[%c28_188, %c0_189], %157 {strides = array<i32>} : memref<36x512xf32, #tpu.memory_space<vmem>>, vector<4x256xf32>,
    %c0_190 = arith.constant 0 : index
    %c0_191 = arith.constant 0 : index
    %c2_192 = arith.constant 2 : index
    %c2_193 = arith.constant 2 : index
    %159 = vector.load %arg8[%c0_190, %c0_191, %c2_192, %c2_193] : memref<2x4x18x18xf32, #tpu.memory_space<vmem>>, vector<1x4x16x16xf32>
    %160 = vector.shape_cast %159 : vector<1x4x16x16xf32> to vector<4x16x16xf32>
    %161 = vector.shape_cast %160 : vector<4x16x16xf32> to vector<4x256xf32>
    %c32_194 = arith.constant 32 : index
    %c0_195 = arith.constant 0 : index
    %162 = vector.load %arg9[%c32_194, %c0_195] : memref<36x512xf32, #tpu.memory_space<vmem>>, vector<4x256xf32>
    tpu.vector_store %arg9[%c32_194, %c0_195], %161 {strides = array<i32>} : memref<36x512xf32, #tpu.memory_space<vmem>>, vector<4x256xf32>,
    %c1_196 = arith.constant 1 : index
    %c0_197 = arith.constant 0 : index
    %c0_198 = arith.constant 0 : index
    %c0_199 = arith.constant 0 : index
    %163 = vector.load %arg8[%c1_196, %c0_197, %c0_198, %c0_199] : memref<2x4x18x18xf32, #tpu.memory_space<vmem>>, vector<1x4x16x16xf32>
    %164 = vector.shape_cast %163 : vector<1x4x16x16xf32> to vector<4x16x16xf32>
    %165 = vector.shape_cast %164 : vector<4x16x16xf32> to vector<4x256xf32>
    %c0_200 = arith.constant 0 : index
    %c256_201 = arith.constant 256 : index
    %166 = vector.load %arg9[%c0_200, %c256_201] : memref<36x512xf32, #tpu.memory_space<vmem>>, vector<4x256xf32>
    tpu.vector_store %arg9[%c0_200, %c256_201], %165 {strides = array<i32>} : memref<36x512xf32, #tpu.memory_space<vmem>>, vector<4x256xf32>,
    %c1_202 = arith.constant 1 : index
    %c0_203 = arith.constant 0 : index
    %c0_204 = arith.constant 0 : index
    %c1_205 = arith.constant 1 : index
    %167 = vector.load %arg8[%c1_202, %c0_203, %c0_204, %c1_205] : memref<2x4x18x18xf32, #tpu.memory_space<vmem>>, vector<1x4x16x16xf32>
    %168 = vector.shape_cast %167 : vector<1x4x16x16xf32> to vector<4x16x16xf32>
    %169 = vector.shape_cast %168 : vector<4x16x16xf32> to vector<4x256xf32>
    %c4_206 = arith.constant 4 : index
    %c256_207 = arith.constant 256 : index
    %170 = vector.load %arg9[%c4_206, %c256_207] : memref<36x512xf32, #tpu.memory_space<vmem>>, vector<4x256xf32>
    tpu.vector_store %arg9[%c4_206, %c256_207], %169 {strides = array<i32>} : memref<36x512xf32, #tpu.memory_space<vmem>>, vector<4x256xf32>,
    %c1_208 = arith.constant 1 : index
    %c0_209 = arith.constant 0 : index
    %c0_210 = arith.constant 0 : index
    %c2_211 = arith.constant 2 : index
    %171 = vector.load %arg8[%c1_208, %c0_209, %c0_210, %c2_211] : memref<2x4x18x18xf32, #tpu.memory_space<vmem>>, vector<1x4x16x16xf32>
    %172 = vector.shape_cast %171 : vector<1x4x16x16xf32> to vector<4x16x16xf32>
    %173 = vector.shape_cast %172 : vector<4x16x16xf32> to vector<4x256xf32>
    %c8_212 = arith.constant 8 : index
    %c256_213 = arith.constant 256 : index
    %174 = vector.load %arg9[%c8_212, %c256_213] : memref<36x512xf32, #tpu.memory_space<vmem>>, vector<4x256xf32>
    tpu.vector_store %arg9[%c8_212, %c256_213], %173 {strides = array<i32>} : memref<36x512xf32, #tpu.memory_space<vmem>>, vector<4x256xf32>,
    %c1_214 = arith.constant 1 : index
    %c0_215 = arith.constant 0 : index
    %c1_216 = arith.constant 1 : index
    %c0_217 = arith.constant 0 : index
    %175 = vector.load %arg8[%c1_214, %c0_215, %c1_216, %c0_217] : memref<2x4x18x18xf32, #tpu.memory_space<vmem>>, vector<1x4x16x16xf32>
    %176 = vector.shape_cast %175 : vector<1x4x16x16xf32> to vector<4x16x16xf32>
    %177 = vector.shape_cast %176 : vector<4x16x16xf32> to vector<4x256xf32>
    %c12_218 = arith.constant 12 : index
    %c256_219 = arith.constant 256 : index
    %178 = vector.load %arg9[%c12_218, %c256_219] : memref<36x512xf32, #tpu.memory_space<vmem>>, vector<4x256xf32>
    tpu.vector_store %arg9[%c12_218, %c256_219], %177 {strides = array<i32>} : memref<36x512xf32, #tpu.memory_space<vmem>>, vector<4x256xf32>,
    %c1_220 = arith.constant 1 : index
    %c0_221 = arith.constant 0 : index
    %c1_222 = arith.constant 1 : index
    %c1_223 = arith.constant 1 : index
    %179 = vector.load %arg8[%c1_220, %c0_221, %c1_222, %c1_223] : memref<2x4x18x18xf32, #tpu.memory_space<vmem>>, vector<1x4x16x16xf32>
    %180 = vector.shape_cast %179 : vector<1x4x16x16xf32> to vector<4x16x16xf32>
    %181 = vector.shape_cast %180 : vector<4x16x16xf32> to vector<4x256xf32>
    %c16_224 = arith.constant 16 : index
    %c256_225 = arith.constant 256 : index
    %182 = vector.load %arg9[%c16_224, %c256_225] : memref<36x512xf32, #tpu.memory_space<vmem>>, vector<4x256xf32>
    tpu.vector_store %arg9[%c16_224, %c256_225], %181 {strides = array<i32>} : memref<36x512xf32, #tpu.memory_space<vmem>>, vector<4x256xf32>,
    %c1_226 = arith.constant 1 : index
    %c0_227 = arith.constant 0 : index
    %c1_228 = arith.constant 1 : index
    %c2_229 = arith.constant 2 : index
    %183 = vector.load %arg8[%c1_226, %c0_227, %c1_228, %c2_229] : memref<2x4x18x18xf32, #tpu.memory_space<vmem>>, vector<1x4x16x16xf32>
    %184 = vector.shape_cast %183 : vector<1x4x16x16xf32> to vector<4x16x16xf32>
    %185 = vector.shape_cast %184 : vector<4x16x16xf32> to vector<4x256xf32>
    %c20_230 = arith.constant 20 : index
    %c256_231 = arith.constant 256 : index
    %186 = vector.load %arg9[%c20_230, %c256_231] : memref<36x512xf32, #tpu.memory_space<vmem>>, vector<4x256xf32>
    tpu.vector_store %arg9[%c20_230, %c256_231], %185 {strides = array<i32>} : memref<36x512xf32, #tpu.memory_space<vmem>>, vector<4x256xf32>,
    %c1_232 = arith.constant 1 : index
    %c0_233 = arith.constant 0 : index
    %c2_234 = arith.constant 2 : index
    %c0_235 = arith.constant 0 : index
    %187 = vector.load %arg8[%c1_232, %c0_233, %c2_234, %c0_235] : memref<2x4x18x18xf32, #tpu.memory_space<vmem>>, vector<1x4x16x16xf32>
    %188 = vector.shape_cast %187 : vector<1x4x16x16xf32> to vector<4x16x16xf32>
    %189 = vector.shape_cast %188 : vector<4x16x16xf32> to vector<4x256xf32>
    %c24_236 = arith.constant 24 : index
    %c256_237 = arith.constant 256 : index
    %190 = vector.load %arg9[%c24_236, %c256_237] : memref<36x512xf32, #tpu.memory_space<vmem>>, vector<4x256xf32>
    tpu.vector_store %arg9[%c24_236, %c256_237], %189 {strides = array<i32>} : memref<36x512xf32, #tpu.memory_space<vmem>>, vector<4x256xf32>,
    %c1_238 = arith.constant 1 : index
    %c0_239 = arith.constant 0 : index
    %c2_240 = arith.constant 2 : index
    %c1_241 = arith.constant 1 : index
    %191 = vector.load %arg8[%c1_238, %c0_239, %c2_240, %c1_241] : memref<2x4x18x18xf32, #tpu.memory_space<vmem>>, vector<1x4x16x16xf32>
    %192 = vector.shape_cast %191 : vector<1x4x16x16xf32> to vector<4x16x16xf32>
    %193 = vector.shape_cast %192 : vector<4x16x16xf32> to vector<4x256xf32>
    %c28_242 = arith.constant 28 : index
    %c256_243 = arith.constant 256 : index
    %194 = vector.load %arg9[%c28_242, %c256_243] : memref<36x512xf32, #tpu.memory_space<vmem>>, vector<4x256xf32>
    tpu.vector_store %arg9[%c28_242, %c256_243], %193 {strides = array<i32>} : memref<36x512xf32, #tpu.memory_space<vmem>>, vector<4x256xf32>,
    %c1_244 = arith.constant 1 : index
    %c0_245 = arith.constant 0 : index
    %c2_246 = arith.constant 2 : index
    %c2_247 = arith.constant 2 : index
    %195 = vector.load %arg8[%c1_244, %c0_245, %c2_246, %c2_247] : memref<2x4x18x18xf32, #tpu.memory_space<vmem>>, vector<1x4x16x16xf32>
    %196 = vector.shape_cast %195 : vector<1x4x16x16xf32> to vector<4x16x16xf32>
    %197 = vector.shape_cast %196 : vector<4x16x16xf32> to vector<4x256xf32>
    %c32_248 = arith.constant 32 : index
    %c256_249 = arith.constant 256 : index
    %198 = vector.load %arg9[%c32_248, %c256_249] : memref<36x512xf32, #tpu.memory_space<vmem>>, vector<4x256xf32>
    tpu.vector_store %arg9[%c32_248, %c256_249], %197 {strides = array<i32>} : memref<36x512xf32, #tpu.memory_space<vmem>>, vector<4x256xf32>,
    %c0_250 = arith.constant 0 : index
    %c0_251 = arith.constant 0 : index
    %199 = vector.load %arg4[%c0_250, %c0_251] : memref<4x36xf32, #tpu.memory_space<vmem>>, vector<4x36xf32>
    %c0_252 = arith.constant 0 : index
    %c0_253 = arith.constant 0 : index
    %200 = vector.load %arg9[%c0_252, %c0_253] : memref<36x512xf32, #tpu.memory_space<vmem>>, vector<36x512xf32>
    %cst_254 = arith.constant dense<0.000000e+00> : vector<4x512xf32>
    %201 = tpu.matmul %199, %200, %cst_254 {dimension_numbers = #tpu.dot_dimension_numbers<[1], [0], [0], [1], [0, 0, 1, 1], [], []>} : vector<4x36xf32>, vector<36x512xf32>, vector<4x512xf32> -> vector<4x512xf32>
    %c0_255 = arith.constant 0 : index
    %c0_256 = arith.constant 0 : index
    %202 = vector.load %arg5[%c0_255, %c0_256] : memref<4x1xf32, #tpu.memory_space<vmem>>, vector<4x1xf32>
    %c0_257 = arith.constant 0 : index
    %c0_258 = arith.constant 0 : index
    %203 = vector.load %arg6[%c0_257, %c0_258] : memref<4x1xf32, #tpu.memory_space<vmem>>, vector<4x1xf32>
    %cst_259 = arith.constant dense<0.000000e+00> : vector<4xf32>
    %204 = vector.multi_reduction <add>, %201, %cst_259 [1] : vector<4x512xf32> to vector<4xf32>
    %205 = vector.shape_cast %204 : vector<4xf32> to vector<4x1xf32>
    %206 = arith.mulf %201, %201 : vector<4x512xf32>
    %cst_260 = arith.constant dense<0.000000e+00> : vector<4xf32>
    %207 = vector.multi_reduction <add>, %206, %cst_260 [1] : vector<4x512xf32> to vector<4xf32>
    %208 = vector.shape_cast %207 : vector<4xf32> to vector<4x1xf32>
    %cst_261 = arith.constant 0.001953125 : f32
    %209 = vector.broadcast %cst_261 : f32 to vector<4x1xf32>
    %210 = arith.mulf %205, %209 : vector<4x1xf32>
    %cst_262 = arith.constant 0.001953125 : f32
    %211 = vector.broadcast %cst_262 : f32 to vector<4x1xf32>
    %212 = arith.mulf %208, %211 : vector<4x1xf32>
    %213 = arith.mulf %210, %210 : vector<4x1xf32>
    %214 = arith.subf %212, %213 : vector<4x1xf32>
    %215 = vector.broadcast %210 : vector<4x1xf32> to vector<4x512xf32>
    %216 = arith.subf %201, %215 : vector<4x512xf32>
    %cst_263 = arith.constant 9.99999974E-6 : f32
    %217 = vector.broadcast %cst_263 : f32 to vector<4x1xf32>
    %218 = arith.addf %214, %217 : vector<4x1xf32>
    %219 = math.rsqrt %218 : vector<4x1xf32>
    %220 = vector.broadcast %219 : vector<4x1xf32> to vector<4x512xf32>
    %221 = arith.mulf %216, %220 : vector<4x512xf32>
    %222 = vector.broadcast %202 : vector<4x1xf32> to vector<4x512xf32>
    %223 = arith.mulf %221, %222 : vector<4x512xf32>
    %224 = vector.broadcast %203 : vector<4x1xf32> to vector<4x512xf32>
    %225 = arith.addf %223, %224 : vector<4x512xf32>
    %226 = vector.extract_strided_slice %225 {offsets = [0, 0], sizes = [4, 256], strides = [1, 1]} : vector<4x512xf32> to vector<4x256xf32>
    %c0_264 = arith.constant 0 : index
    %c0_265 = arith.constant 0 : index
    %c0_266 = arith.constant 0 : index
    %227 = vector.load %arg0[%c0_264, %c0_265, %c0_266] : memref<2x4x256xf32, #tpu.memory_space<vmem>>, vector<1x4x256xf32>
    %228 = vector.shape_cast %227 : vector<1x4x256xf32> to vector<4x256xf32>
    %229 = arith.addf %226, %228 : vector<4x256xf32>
    %cst_267 = arith.constant 0.000000e+00 : f32
    %230 = vector.broadcast %cst_267 : f32 to vector<4x256xf32>
    %231 = arith.maximumf %229, %230 : vector<4x256xf32>
    %c0_268 = arith.constant 0 : index
    %c0_269 = arith.constant 0 : index
    %c0_270 = arith.constant 0 : index
    %232 = vector.load %arg7[%c0_268, %c0_269, %c0_270] : memref<2x4x256xf32, #tpu.memory_space<vmem>>, vector<1x4x256xf32>
    %233 = vector.shape_cast %232 : vector<1x4x256xf32> to vector<4x256xf32>
    %234 = vector.shape_cast %231 : vector<4x256xf32> to vector<1x4x256xf32>
    tpu.vector_store %arg7[%c0_268, %c0_269, %c0_270], %234 {strides = array<i32>} : memref<2x4x256xf32, #tpu.memory_space<vmem>>, vector<1x4x256xf32>,
    %235 = vector.extract_strided_slice %225 {offsets = [0, 256], sizes = [4, 256], strides = [1, 1]} : vector<4x512xf32> to vector<4x256xf32>
    %c1_271 = arith.constant 1 : index
    %c0_272 = arith.constant 0 : index
    %c0_273 = arith.constant 0 : index
    %236 = vector.load %arg0[%c1_271, %c0_272, %c0_273] : memref<2x4x256xf32, #tpu.memory_space<vmem>>, vector<1x4x256xf32>
    %237 = vector.shape_cast %236 : vector<1x4x256xf32> to vector<4x256xf32>
    %238 = arith.addf %235, %237 : vector<4x256xf32>
    %cst_274 = arith.constant 0.000000e+00 : f32
    %239 = vector.broadcast %cst_274 : f32 to vector<4x256xf32>
    %240 = arith.maximumf %238, %239 : vector<4x256xf32>
    %c1_275 = arith.constant 1 : index
    %c0_276 = arith.constant 0 : index
    %c0_277 = arith.constant 0 : index
    %241 = vector.load %arg7[%c1_275, %c0_276, %c0_277] : memref<2x4x256xf32, #tpu.memory_space<vmem>>, vector<1x4x256xf32>
    %242 = vector.shape_cast %241 : vector<1x4x256xf32> to vector<4x256xf32>
    %243 = vector.shape_cast %240 : vector<4x256xf32> to vector<1x4x256xf32>
    tpu.vector_store %arg7[%c1_275, %c0_276, %c0_277], %243 {strides = array<i32>} : memref<2x4x256xf32, #tpu.memory_space<vmem>>, vector<1x4x256xf32>,
    return
  }
}

</mosaic_0001>

<llo_original>
// kernel: basic_block_forward.1
$region0: #{basic_block_forward.1}
  #allocation0 [shape = 'u32[]', space=smem, size = 0x4, offset = 0x4, fixed_abs, tag = 'smem constant byte address 0x4 - core index']
  #allocation1 [shape = 'u32[72,128]{1,0:T(1,128)}', space=vmem, size = 0x9000, scoped, tag = 'internal scratch']
  #allocation2 [shape = 'f32[2,4,18,18]{3,2,1,0:T(8,128)}', space=vmem, size = 0x18000, scoped, tag = 'scratch operand']
  #allocation3 [shape = 'f32[36,512]{1,0:T(8,128)}', space=vmem, size = 0x14000, scoped, tag = 'scratch operand']
  %s0 = inlined_call_operand.vmem [shape: f32[2,4,256], index: 0, kind: input, shape index: {}]
  %s1 = inlined_call_operand.vmem [shape: f32[4,36], index: 1, kind: input, shape index: {}]
  %s2 = inlined_call_operand.vmem [shape: f32[4,1], index: 2, kind: input, shape index: {}]
  %s3 = inlined_call_operand.vmem [shape: f32[4,1], index: 3, kind: input, shape index: {}]
  %s4 = inlined_call_operand.vmem [shape: f32[4,36], index: 4, kind: input, shape index: {}]
  %s5 = inlined_call_operand.vmem [shape: f32[4,1], index: 5, kind: input, shape index: {}]
  %s6 = inlined_call_operand.vmem [shape: f32[4,1], index: 6, kind: input, shape index: {}]
  %s7 = inlined_call_operand.vmem [shape: f32[2,4,256], index: 7, kind: output, shape index: {}]
  %s8 = sld [smem:[#allocation0]]
  $region38: #{basic_block_forward.1} parent=0
    _
  %s10 = ssub.s32 1, %s8
  %s11 = scalar_select 0, %s10, %s8
  // Predicated region
  $region2: #{basic_block_forward.1} parent=0 // pred_check
    _
  $region3: #{basic_block_forward.1} parent=0 // pred_check_branch
    %13 = sbr.rel (0) target = $region5
  $region4: #{basic_block_forward.1} parent=0 // pred_region
    _
  $region5: #{basic_block_forward.1} parent=0 // pred_fallthru
    _
  // Predicated region
  $region6: #{basic_block_forward.1} parent=0 // pred_check
    _
  $region7: #{basic_block_forward.1} parent=0 // pred_check_branch
    %15 = sbr.rel (0) target = $region9
  $region8: #{basic_block_forward.1} parent=0 // pred_region
    _
  $region9: #{basic_block_forward.1} parent=0 // pred_fallthru
    _
  // Predicated region
  $region10: #{basic_block_forward.1} parent=0 // pred_check
    _
  $region11: #{basic_block_forward.1} parent=0 // pred_check_branch
    %17 = sbr.rel (0) target = $region13
  $region12: #{basic_block_forward.1} parent=0 // pred_region
    _
  $region13: #{basic_block_forward.1} parent=0 // pred_fallthru
    _
  // Predicated region
  $region14: #{basic_block_forward.1} parent=0 // pred_check
    _
  $region15: #{basic_block_forward.1} parent=0 // pred_check_branch
    %19 = sbr.rel (0) target = $region17
  $region16: #{basic_block_forward.1} parent=0 // pred_region
    _
  $region17: #{basic_block_forward.1} parent=0 // pred_fallthru
    _
  // Predicated region
  $region18: #{basic_block_forward.1} parent=0 // pred_check
    _
  $region19: #{basic_block_forward.1} parent=0 // pred_check_branch
    %21 = sbr.rel (0) target = $region21
  $region20: #{basic_block_forward.1} parent=0 // pred_region
    _
  $region21: #{basic_block_forward.1} parent=0 // pred_fallthru
    _
  // Predicated region
  $region22: #{basic_block_forward.1} parent=0 // pred_check
    _
  $region23: #{basic_block_forward.1} parent=0 // pred_check_branch
    %23 = sbr.rel (0) target = $region25
  $region24: #{basic_block_forward.1} parent=0 // pred_region
    _
  $region25: #{basic_block_forward.1} parent=0 // pred_fallthru
    _
  // Predicated region
  $region26: #{basic_block_forward.1} parent=0 // pred_check
    _
  $region27: #{basic_block_forward.1} parent=0 // pred_check_branch
    %25 = sbr.rel (0) target = $region29
  $region28: #{basic_block_forward.1} parent=0 // pred_region
    _
  $region29: #{basic_block_forward.1} parent=0 // pred_fallthru
    _
  %vm26 = vcmask 146432
  %27 = vst.msk [vmem:[#allocation2] sm:$0xff] %vm26, 0.0
  %28 = vst.msk [vmem:[#allocation2 + $0x8] sm:$0xff] %vm26, 0.0
  %vm29 = vcmask 140288
  %30 = vst.msk [vmem:[#allocation2 + $0x10] sm:$0x3] %vm29, 0.0
  %31 = vst.msk [vmem:[#allocation2 + $0x18] sm:$0xff] %vm26, 0.0
  %32 = vst.msk [vmem:[#allocation2 + $0x20] sm:$0xff] %vm26, 0.0
  %33 = vst.msk [vmem:[#allocation2 + $0x28] sm:$0x3] %vm29, 0.0
  %34 = vst.msk [vmem:[#allocation2 + $0x30] sm:$0xff] %vm26, 0.0
  %35 = vst.msk [vmem:[#allocation2 + $0x38] sm:$0xff] %vm26, 0.0
  %36 = vst.msk [vmem:[#allocation2 + $0x40] sm:$0x3] %vm29, 0.0
  %37 = vst.msk [vmem:[#allocation2 + $0x48] sm:$0xff] %vm26, 0.0
  %38 = vst.msk [vmem:[#allocation2 + $0x50] sm:$0xff] %vm26, 0.0
  %39 = vst.msk [vmem:[#allocation2 + $0x58] sm:$0x3] %vm29, 0.0
  %40 = vst.msk [vmem:[#allocation2 + $0x60] sm:$0xff] %vm26, 0.0
  %41 = vst.msk [vmem:[#allocation2 + $0x68] sm:$0xff] %vm26, 0.0
  %42 = vst.msk [vmem:[#allocation2 + $0x70] sm:$0x3] %vm29, 0.0
  %43 = vst.msk [vmem:[#allocation2 + $0x78] sm:$0xff] %vm26, 0.0
  %44 = vst.msk [vmem:[#allocation2 + $0x80] sm:$0xff] %vm26, 0.0
  %45 = vst.msk [vmem:[#allocation2 + $0x88] sm:$0x3] %vm29, 0.0
  %46 = vst.msk [vmem:[#allocation2 + $0x90] sm:$0xff] %vm26, 0.0
  %47 = vst.msk [vmem:[#allocation2 + $0x98] sm:$0xff] %vm26, 0.0
  %48 = vst.msk [vmem:[#allocation2 + $0xa0] sm:$0x3] %vm29, 0.0
  %49 = vst.msk [vmem:[#allocation2 + $0xa8] sm:$0xff] %vm26, 0.0
  %50 = vst.msk [vmem:[#allocation2 + $0xb0] sm:$0xff] %vm26, 0.0
  %51 = vst.msk [vmem:[#allocation2 + $0xb8] sm:$0x3] %vm29, 0.0
  %v52 = vld [vmem:[%s0] sm:$0xff]
  %v54 = vrot.slane %v52, 4
  %56 = vrot.lane.b32.xlu0 %v52, 112
  %v57 = vpop.permute.xlu0 %56
  %v58 = vrot.slane %v57, 4
  %60 = vrot.lane.b32.xlu0 %v52, 96
  %v61 = vpop.permute.xlu0 %60
  %v62 = vrot.slane %v61, 4
  %64 = vrot.lane.b32.xlu0 %v52, 80
  %v65 = vpop.permute.xlu0 %64
  %v66 = vrot.slane %v65, 4
  %68 = vrot.lane.b32.xlu0 %v52, 64
  %v69 = vpop.permute.xlu0 %68
  %v70 = vrot.slane %v69, 4
  %72 = vrot.lane.b32.xlu0 %v52, 48
  %v73 = vpop.permute.xlu0 %72
  %v74 = vrot.slane %v73, 4
  %76 = vrot.lane.b32.xlu0 %v52, 32
  %v77 = vpop.permute.xlu0 %76
  %v78 = vrot.slane %v77, 4
  %80 = vrot.lane.b32.xlu0 %v52, 16
  %v81 = vpop.permute.xlu0 %80
  %v82 = vrot.slane %v81, 4
  %v91 = vrot.slane %v61, 4
  %vm92 = vcmask 1047556
  %v93 = vsel %vm92, %v91, %v52
  %v95 = vunpack.c.l.s4 1983009808
  %v96 = vunpack.c.0.s8 %v95
  %v97 = vperm.slane %v93, %v96
  %v98 = vrot.slane %v65, 4
  %v99 = vsel %vm92, %v98, %v57
  %v101 = vunpack.c.l.s4 1983009808
  %v102 = vunpack.c.0.s8 %v101
  %v103 = vperm.slane %v99, %v102
  %v104 = vrot.slane %v103, 4
  %v105 = vsel %vm92, %v104, %v97
  %v106 = vrot.slane %v97, 4
  %v107 = vsel %vm92, %v103, %v106
  %v109 = vunpack.c.l.s4 1934713408
  %v110 = vunpack.c.0.s8 %v109
  %v111 = vperm.slane %v105, %v110
  %v113 = vunpack.c.l.s4 1934713408
  %v114 = vunpack.c.0.s8 %v113
  %v115 = vperm.slane %v107, %v114
  %v116 = vrot.slane %v111, 4
  %v117 = vsel %vm92, 0.0, %v116
  %v118 = vrot.slane %v115, 4
  %v119 = vsel %vm92, 0.0, %v118
  %v120 = vrot.slane %v77, 4
  %v121 = vsel %vm92, %v120, %v69
  %v123 = vunpack.c.l.s4 1983009808
  %v124 = vunpack.c.0.s8 %v123
  %v125 = vperm.slane %v121, %v124
  %v126 = vrot.slane %v81, 4
  %v127 = vsel %vm92, %v126, %v73
  %v129 = vunpack.c.l.s4 1983009808
  %v130 = vunpack.c.0.s8 %v129
  %v131 = vperm.slane %v127, %v130
  %v132 = vrot.slane %v131, 4
  %v133 = vsel %vm92, %v132, %v125
  %v134 = vrot.slane %v125, 4
  %v135 = vsel %vm92, %v131, %v134
  %v137 = vunpack.c.l.s4 1934713408
  %v138 = vunpack.c.0.s8 %v137
  %v139 = vperm.slane %v133, %v138
  %v141 = vunpack.c.l.s4 1934713408
  %v142 = vunpack.c.0.s8 %v141
  %v143 = vperm.slane %v135, %v142
  %v144 = vrot.slane %v139, 4
  %v145 = vsel %vm92, 0.0, %v144
  %v146 = vrot.slane %v143, 4
  %v147 = vsel %vm92, 0.0, %v146
  %v148 = vrot.slane %v62, 4
  %v149 = vsel %vm92, %v148, %v54
  %v151 = vunpack.c.l.s4 1983009808
  %v152 = vunpack.c.0.s8 %v151
  %v153 = vperm.slane %v149, %v152
  %v154 = vrot.slane %v66, 4
  %v155 = vsel %vm92, %v154, %v58
  %v157 = vunpack.c.l.s4 1983009808
  %v158 = vunpack.c.0.s8 %v157
  %v159 = vperm.slane %v155, %v158
  %v160 = vrot.slane %v159, 4
  %v161 = vsel %vm92, %v160, %v153
  %v162 = vrot.slane %v153, 4
  %v163 = vsel %vm92, %v159, %v162
  %v165 = vunpack.c.l.s4 1934713408
  %v166 = vunpack.c.0.s8 %v165
  %v167 = vperm.slane %v161, %v166
  %v169 = vunpack.c.l.s4 1934713408
  %v170 = vunpack.c.0.s8 %v169
  %v171 = vperm.slane %v163, %v170
  %v172 = vrot.slane %v167, 4
  %v173 = vsel %vm92, 0.0, %v172
  %v174 = vrot.slane %v171, 4
  %v175 = vsel %vm92, 0.0, %v174
  %v176 = vrot.slane %v78, 4
  %v177 = vsel %vm92, %v176, %v70
  %v179 = vunpack.c.l.s4 1983009808
  %v180 = vunpack.c.0.s8 %v179
  %v181 = vperm.slane %v177, %v180
  %v182 = vrot.slane %v82, 4
  %v183 = vsel %vm92, %v182, %v74
  %v185 = vunpack.c.l.s4 1983009808
  %v186 = vunpack.c.0.s8 %v185
  %v187 = vperm.slane %v183, %v186
  %v188 = vrot.slane %v187, 4
  %v189 = vsel %vm92, %v188, %v181
  %v190 = vrot.slane %v181, 4
  %v191 = vsel %vm92, %v187, %v190
  %v193 = vunpack.c.l.s4 1934713408
  %v194 = vunpack.c.0.s8 %v193
  %v195 = vperm.slane %v189, %v194
  %v197 = vunpack.c.l.s4 1934713408
  %v198 = vunpack.c.0.s8 %v197
  %v199 = vperm.slane %v191, %v198
  %v200 = vrot.slane %v195, 4
  %v201 = vsel %vm92, 0.0, %v200
  %v202 = vrot.slane %v199, 4
  %v203 = vsel %vm92, 0.0, %v202
  %220 = vst [vmem:[#allocation1] ss:$2 sm:$0xff] %v111
  %s221 = scalar_lea.vmem [#allocation1], 1
  %222 = vst [vmem:[%s221] ss:$2 sm:$0xff] %v139
  %s223 = scalar_lea.vmem [#allocation1], 16
  %224 = vst [vmem:[%s223] ss:$2 sm:$0xff] %v167
  %s225 = scalar_lea.vmem [#allocation1], 17
  %226 = vst [vmem:[%s225] ss:$2 sm:$0xff] %v195
  %v227 = vld.sshfl [vmem:[#allocation1] sm:$0xff pattern:$0x75316420]
  %v228 = vld.sshfl [vmem:[#allocation1 + $0x10] sm:$0xff pattern:$0x75316420]
  %s229 = scalar_lea.vmem [#allocation1], 32
  %230 = vst [vmem:[%s229] ss:$2 sm:$0xff] %v117
  %s231 = scalar_lea.vmem [#allocation1], 33
  %232 = vst [vmem:[%s231] ss:$2 sm:$0xff] %v145
  %s233 = scalar_lea.vmem [#allocation1], 48
  %234 = vst [vmem:[%s233] ss:$2 sm:$0xff] %v173
  %s235 = scalar_lea.vmem [#allocation1], 49
  %236 = vst [vmem:[%s235] ss:$2 sm:$0xff] %v201
  %v237 = vld.sshfl [vmem:[#allocation1 + $0x20] sm:$0xff pattern:$0x75316420]
  %v238 = vld.sshfl [vmem:[#allocation1 + $0x30] sm:$0xff pattern:$0x75316420]
  %239 = vst [vmem:[#allocation1] ss:$2 sm:$0xff] %v115
  %240 = vst [vmem:[%s221] ss:$2 sm:$0xff] %v143
  %241 = vst [vmem:[%s223] ss:$2 sm:$0xff] %v171
  %242 = vst [vmem:[%s225] ss:$2 sm:$0xff] %v199
  %v243 = vld.sshfl [vmem:[#allocation1] sm:$0xff pattern:$0x75316420]
  %v244 = vld.sshfl [vmem:[#allocation1 + $0x10] sm:$0xff pattern:$0x75316420]
  %245 = vst [vmem:[%s229] ss:$2 sm:$0xff] %v119
  %246 = vst [vmem:[%s231] ss:$2 sm:$0xff] %v147
  %247 = vst [vmem:[%s233] ss:$2 sm:$0xff] %v175
  %248 = vst [vmem:[%s235] ss:$2 sm:$0xff] %v203
  %v249 = vld.sshfl [vmem:[#allocation1 + $0x20] sm:$0xff pattern:$0x75316420]
  %v250 = vld.sshfl [vmem:[#allocation1 + $0x30] sm:$0xff pattern:$0x75316420]
  %251 = vrot.lane.b32.xlu0 %v227, 1
  %v252 = vpop.permute.xlu0 %251
  %253 = vrot.lane.b32.xlu0 %v228, 1
  %v254 = vpop.permute.xlu0 %253
  %255 = vrot.lane.b32.xlu0 %v237, 1
  %v256 = vpop.permute.xlu0 %255
  %257 = vrot.lane.b32.xlu0 %v238, 1
  %v258 = vpop.permute.xlu0 %257
  %259 = vrot.lane.b32.xlu0 %v243, 1
  %v260 = vpop.permute.xlu0 %259
  %261 = vrot.lane.b32.xlu0 %v244, 1
  %v262 = vpop.permute.xlu0 %261
  %263 = vrot.lane.b32.xlu0 %v249, 1
  %v264 = vpop.permute.xlu0 %263
  %265 = vrot.lane.b32.xlu0 %v250, 1
  %v266 = vpop.permute.xlu0 %265
  %vm275 = vcmask 138248
  %276 = vst.msk [vmem:[#allocation2 + $0x1] sm:$0xff] %vm275, %v252
  %277 = vst.msk [vmem:[#allocation2 + $0x9] sm:$0xff] %vm275, %v254
  %278 = vst.msk [vmem:[#allocation2 + $0x19] sm:$0xff] %vm275, %v256
  %279 = vst.msk [vmem:[#allocation2 + $0x21] sm:$0xff] %vm275, %v258
  %280 = vst.msk [vmem:[#allocation2 + $0x31] sm:$0xff] %vm275, %v260
  %281 = vst.msk [vmem:[#allocation2 + $0x39] sm:$0xff] %vm275, %v262
  %282 = vst.msk [vmem:[#allocation2 + $0x49] sm:$0xff] %vm275, %v264
  %283 = vst.msk [vmem:[#allocation2 + $0x51] sm:$0xff] %vm275, %v266
  %s284 = scalar_lea.vmem %s0, 8
  %v285 = vld [vmem:[%s284] sm:$0xff]
  %v287 = vrot.slane %v285, 4
  %289 = vrot.lane.b32.xlu0 %v285, 112
  %v290 = vpop.permute.xlu0 %289
  %v291 = vrot.slane %v290, 4
  %293 = vrot.lane.b32.xlu0 %v285, 96
  %v294 = vpop.permute.xlu0 %293
  %v295 = vrot.slane %v294, 4
  %297 = vrot.lane.b32.xlu0 %v285, 80
  %v298 = vpop.permute.xlu0 %297
  %v299 = vrot.slane %v298, 4
  %301 = vrot.lane.b32.xlu0 %v285, 64
  %v302 = vpop.permute.xlu0 %301
  %v303 = vrot.slane %v302, 4
  %305 = vrot.lane.b32.xlu0 %v285, 48
  %v306 = vpop.permute.xlu0 %305
  %v307 = vrot.slane %v306, 4
  %309 = vrot.lane.b32.xlu0 %v285, 32
  %v310 = vpop.permute.xlu0 %309
  %v311 = vrot.slane %v310, 4
  %313 = vrot.lane.b32.xlu0 %v285, 16
  %v314 = vpop.permute.xlu0 %313
  %v315 = vrot.slane %v314, 4
  %v324 = vrot.slane %v294, 4
  %v325 = vsel %vm92, %v324, %v285
  %v327 = vunpack.c.l.s4 1983009808
  %v328 = vunpack.c.0.s8 %v327
  %v329 = vperm.slane %v325, %v328
  %v330 = vrot.slane %v298, 4
  %v331 = vsel %vm92, %v330, %v290
  %v333 = vunpack.c.l.s4 1983009808
  %v334 = vunpack.c.0.s8 %v333
  %v335 = vperm.slane %v331, %v334
  %v336 = vrot.slane %v335, 4
  %v337 = vsel %vm92, %v336, %v329
  %v338 = vrot.slane %v329, 4
  %v339 = vsel %vm92, %v335, %v338
  %v341 = vunpack.c.l.s4 1934713408
  %v342 = vunpack.c.0.s8 %v341
  %v343 = vperm.slane %v337, %v342
  %v345 = vunpack.c.l.s4 1934713408
  %v346 = vunpack.c.0.s8 %v345
  %v347 = vperm.slane %v339, %v346
  %v348 = vrot.slane %v343, 4
  %v349 = vsel %vm92, 0.0, %v348
  %v350 = vrot.slane %v347, 4
  %v351 = vsel %vm92, 0.0, %v350
  %v352 = vrot.slane %v310, 4
  %v353 = vsel %vm92, %v352, %v302
  %v355 = vunpack.c.l.s4 1983009808
  %v356 = vunpack.c.0.s8 %v355
  %v357 = vperm.slane %v353, %v356
  %v358 = vrot.slane %v314, 4
  %v359 = vsel %vm92, %v358, %v306
  %v361 = vunpack.c.l.s4 1983009808
  %v362 = vunpack.c.0.s8 %v361
  %v363 = vperm.slane %v359, %v362
  %v364 = vrot.slane %v363, 4
  %v365 = vsel %vm92, %v364, %v357
  %v366 = vrot.slane %v357, 4
  %v367 = vsel %vm92, %v363, %v366
  %v369 = vunpack.c.l.s4 1934713408
  %v370 = vunpack.c.0.s8 %v369
  %v371 = vperm.slane %v365, %v370
  %v373 = vunpack.c.l.s4 1934713408
  %v374 = vunpack.c.0.s8 %v373
  %v375 = vperm.slane %v367, %v374
  %v376 = vrot.slane %v371, 4
  %v377 = vsel %vm92, 0.0, %v376
  %v378 = vrot.slane %v375, 4
  %v379 = vsel %vm92, 0.0, %v378
  %v380 = vrot.slane %v295, 4
  %v381 = vsel %vm92, %v380, %v287
  %v383 = vunpack.c.l.s4 1983009808
  %v384 = vunpack.c.0.s8 %v383
  %v385 = vperm.slane %v381, %v384
  %v386 = vrot.slane %v299, 4
  %v387 = vsel %vm92, %v386, %v291
  %v389 = vunpack.c.l.s4 1983009808
  %v390 = vunpack.c.0.s8 %v389
  %v391 = vperm.slane %v387, %v390
  %v392 = vrot.slane %v391, 4
  %v393 = vsel %vm92, %v392, %v385
  %v394 = vrot.slane %v385, 4
  %v395 = vsel %vm92, %v391, %v394
  %v397 = vunpack.c.l.s4 1934713408
  %v398 = vunpack.c.0.s8 %v397
  %v399 = vperm.slane %v393, %v398
  %v401 = vunpack.c.l.s4 1934713408
  %v402 = vunpack.c.0.s8 %v401
  %v403 = vperm.slane %v395, %v402
  %v404 = vrot.slane %v399, 4
  %v405 = vsel %vm92, 0.0, %v404
  %v406 = vrot.slane %v403, 4
  %v407 = vsel %vm92, 0.0, %v406
  %v408 = vrot.slane %v311, 4
  %v409 = vsel %vm92, %v408, %v303
  %v411 = vunpack.c.l.s4 1983009808
  %v412 = vunpack.c.0.s8 %v411
  %v413 = vperm.slane %v409, %v412
  %v414 = vrot.slane %v315, 4
  %v415 = vsel %vm92, %v414, %v307
  %v417 = vunpack.c.l.s4 1983009808
  %v418 = vunpack.c.0.s8 %v417
  %v419 = vperm.slane %v415, %v418
  %v420 = vrot.slane %v419, 4
  %v421 = vsel %vm92, %v420, %v413
  %v422 = vrot.slane %v413, 4
  %v423 = vsel %vm92, %v419, %v422
  %v425 = vunpack.c.l.s4 1934713408
  %v426 = vunpack.c.0.s8 %v425
  %v427 = vperm.slane %v421, %v426
  %v429 = vunpack.c.l.s4 1934713408
  %v430 = vunpack.c.0.s8 %v429
  %v431 = vperm.slane %v423, %v430
  %v432 = vrot.slane %v427, 4
  %v433 = vsel %vm92, 0.0, %v432
  %v434 = vrot.slane %v431, 4
  %v435 = vsel %vm92, 0.0, %v434
  %452 = vst [vmem:[#allocation1] ss:$2 sm:$0xff] %v343
  %s453 = scalar_lea.vmem [#allocation1], 1
  %454 = vst [vmem:[%s453] ss:$2 sm:$0xff] %v371
  %s455 = scalar_lea.vmem [#allocation1], 16
  %456 = vst [vmem:[%s455] ss:$2 sm:$0xff] %v399
  %s457 = scalar_lea.vmem [#allocation1], 17
  %458 = vst [vmem:[%s457] ss:$2 sm:$0xff] %v427
  %v459 = vld.sshfl [vmem:[#allocation1] sm:$0xff pattern:$0x75316420]
  %v460 = vld.sshfl [vmem:[#allocation1 + $0x10] sm:$0xff pattern:$0x75316420]
  %s461 = scalar_lea.vmem [#allocation1], 32
  %462 = vst [vmem:[%s461] ss:$2 sm:$0xff] %v349
  %s463 = scalar_lea.vmem [#allocation1], 33
  %464 = vst [vmem:[%s463] ss:$2 sm:$0xff] %v377
  %s465 = scalar_lea.vmem [#allocation1], 48
  %466 = vst [vmem:[%s465] ss:$2 sm:$0xff] %v405
  %s467 = scalar_lea.vmem [#allocation1], 49
  %468 = vst [vmem:[%s467] ss:$2 sm:$0xff] %v433
  %v469 = vld.sshfl [vmem:[#allocation1 + $0x20] sm:$0xff pattern:$0x75316420]
  %v470 = vld.sshfl [vmem:[#allocation1 + $0x30] sm:$0xff pattern:$0x75316420]
  %471 = vst [vmem:[#allocation1] ss:$2 sm:$0xff] %v347
  %472 = vst [vmem:[%s453] ss:$2 sm:$0xff] %v375
  %473 = vst [vmem:[%s455] ss:$2 sm:$0xff] %v403
  %474 = vst [vmem:[%s457] ss:$2 sm:$0xff] %v431
  %v475 = vld.sshfl [vmem:[#allocation1] sm:$0xff pattern:$0x75316420]
  %v476 = vld.sshfl [vmem:[#allocation1 + $0x10] sm:$0xff pattern:$0x75316420]
  %477 = vst [vmem:[%s461] ss:$2 sm:$0xff] %v351
  %478 = vst [vmem:[%s463] ss:$2 sm:$0xff] %v379
  %479 = vst [vmem:[%s465] ss:$2 sm:$0xff] %v407
  %480 = vst [vmem:[%s467] ss:$2 sm:$0xff] %v435
  %v481 = vld.sshfl [vmem:[#allocation1 + $0x20] sm:$0xff pattern:$0x75316420]
  %v482 = vld.sshfl [vmem:[#allocation1 + $0x30] sm:$0xff pattern:$0x75316420]
  %483 = vrot.lane.b32.xlu0 %v459, 1
  %v484 = vpop.permute.xlu0 %483
  %485 = vrot.lane.b32.xlu0 %v460, 1
  %v486 = vpop.permute.xlu0 %485
  %487 = vrot.lane.b32.xlu0 %v469, 1
  %v488 = vpop.permute.xlu0 %487
  %489 = vrot.lane.b32.xlu0 %v470, 1
  %v490 = vpop.permute.xlu0 %489
  %491 = vrot.lane.b32.xlu0 %v475, 1
  %v492 = vpop.permute.xlu0 %491
  %493 = vrot.lane.b32.xlu0 %v476, 1
  %v494 = vpop.permute.xlu0 %493
  %495 = vrot.lane.b32.xlu0 %v481, 1
  %v496 = vpop.permute.xlu0 %495
  %497 = vrot.lane.b32.xlu0 %v482, 1
  %v498 = vpop.permute.xlu0 %497
  %s507 = scalar_lea.vmem [#allocation2], 96
  %508 = vst.msk [vmem:[%s507 + $0x1] sm:$0xff] %vm275, %v484
  %509 = vst.msk [vmem:[%s507 + $0x9] sm:$0xff] %vm275, %v486
  %510 = vst.msk [vmem:[%s507 + $0x19] sm:$0xff] %vm275, %v488
  %511 = vst.msk [vmem:[%s507 + $0x21] sm:$0xff] %vm275, %v490
  %512 = vst.msk [vmem:[%s507 + $0x31] sm:$0xff] %vm275, %v492
  %513 = vst.msk [vmem:[%s507 + $0x39] sm:$0xff] %vm275, %v494
  %514 = vst.msk [vmem:[%s507 + $0x49] sm:$0xff] %vm275, %v496
  %515 = vst.msk [vmem:[%s507 + $0x51] sm:$0xff] %vm275, %v498
  %v516 = vld [vmem:[#allocation2] sm:$0xff]
  %v517 = vld [vmem:[#allocation2 + $0x8] sm:$0xff]
  %v518 = vld [vmem:[#allocation2 + $0x18] sm:$0xff]
  %v519 = vld [vmem:[#allocation2 + $0x20] sm:$0xff]
  %v520 = vld [vmem:[#allocation2 + $0x30] sm:$0xff]
  %v521 = vld [vmem:[#allocation2 + $0x38] sm:$0xff]
  %v522 = vld [vmem:[#allocation2 + $0x48] sm:$0xff]
  %v523 = vld [vmem:[#allocation2 + $0x50] sm:$0xff]
  %v524 = vrot.slane %v520, 4
  %v525 = vsel %vm92, %v524, %v516
  %v526 = vrot.slane %v516, 4
  %v527 = vsel %vm92, %v520, %v526
  %v529 = vunpack.c.l.s4 1983009808
  %v530 = vunpack.c.0.s8 %v529
  %v531 = vperm.slane %v525, %v530
  %v533 = vunpack.c.l.s4 1983009808
  %v534 = vunpack.c.0.s8 %v533
  %v535 = vperm.slane %v527, %v534
  %v536 = vrot.slane %v522, 4
  %v537 = vsel %vm92, %v536, %v518
  %v538 = vrot.slane %v518, 4
  %v539 = vsel %vm92, %v522, %v538
  %v541 = vunpack.c.l.s4 1983009808
  %v542 = vunpack.c.0.s8 %v541
  %v543 = vperm.slane %v537, %v542
  %v545 = vunpack.c.l.s4 1983009808
  %v546 = vunpack.c.0.s8 %v545
  %v547 = vperm.slane %v539, %v546
  %v548 = vrot.slane %v543, 4
  %v549 = vsel %vm92, %v548, %v531
  %v550 = vrot.slane %v531, 4
  %v551 = vsel %vm92, %v543, %v550
  %v553 = vunpack.c.l.s4 1934713408
  %v554 = vunpack.c.0.s8 %v553
  %v555 = vperm.slane %v549, %v554
  %v557 = vunpack.c.l.s4 1934713408
  %v558 = vunpack.c.0.s8 %v557
  %v559 = vperm.slane %v551, %v558
  %v560 = vrot.slane %v547, 4
  %v561 = vsel %vm92, %v560, %v535
  %v562 = vrot.slane %v535, 4
  %v563 = vsel %vm92, %v547, %v562
  %v565 = vunpack.c.l.s4 1934713408
  %v566 = vunpack.c.0.s8 %v565
  %v567 = vperm.slane %v561, %v566
  %v569 = vunpack.c.l.s4 1934713408
  %v570 = vunpack.c.0.s8 %v569
  %v571 = vperm.slane %v563, %v570
  %v572 = vrot.slane %v555, 4
  %v573 = vsel %vm92, 0.0, %v572
  %v574 = vrot.slane %v559, 4
  %v575 = vsel %vm92, 0.0, %v574
  %v576 = vrot.slane %v567, 4
  %v577 = vsel %vm92, 0.0, %v576
  %v578 = vrot.slane %v571, 4
  %v579 = vsel %vm92, 0.0, %v578
  %v580 = vrot.slane %v521, 4
  %v581 = vsel %vm92, %v580, %v517
  %v582 = vrot.slane %v517, 4
  %v583 = vsel %vm92, %v521, %v582
  %v585 = vunpack.c.l.s4 1983009808
  %v586 = vunpack.c.0.s8 %v585
  %v587 = vperm.slane %v581, %v586
  %v589 = vunpack.c.l.s4 1983009808
  %v590 = vunpack.c.0.s8 %v589
  %v591 = vperm.slane %v583, %v590
  %v592 = vrot.slane %v523, 4
  %v593 = vsel %vm92, %v592, %v519
  %v594 = vrot.slane %v519, 4
  %v595 = vsel %vm92, %v523, %v594
  %v597 = vunpack.c.l.s4 1983009808
  %v598 = vunpack.c.0.s8 %v597
  %v599 = vperm.slane %v593, %v598
  %v601 = vunpack.c.l.s4 1983009808
  %v602 = vunpack.c.0.s8 %v601
  %v603 = vperm.slane %v595, %v602
  %v604 = vrot.slane %v599, 4
  %v605 = vsel %vm92, %v604, %v587
  %v606 = vrot.slane %v587, 4
  %v607 = vsel %vm92, %v599, %v606
  %v609 = vunpack.c.l.s4 1934713408
  %v610 = vunpack.c.0.s8 %v609
  %v611 = vperm.slane %v605, %v610
  %v613 = vunpack.c.l.s4 1934713408
  %v614 = vunpack.c.0.s8 %v613
  %v615 = vperm.slane %v607, %v614
  %v616 = vrot.slane %v603, 4
  %v617 = vsel %vm92, %v616, %v591
  %v618 = vrot.slane %v591, 4
  %v619 = vsel %vm92, %v603, %v618
  %v621 = vunpack.c.l.s4 1934713408
  %v622 = vunpack.c.0.s8 %v621
  %v623 = vperm.slane %v617, %v622
  %v625 = vunpack.c.l.s4 1934713408
  %v626 = vunpack.c.0.s8 %v625
  %v627 = vperm.slane %v619, %v626
  %v628 = vrot.slane %v611, 4
  %v629 = vsel %vm92, 0.0, %v628
  %v630 = vrot.slane %v615, 4
  %v631 = vsel %vm92, 0.0, %v630
  %v632 = vrot.slane %v623, 4
  %v633 = vsel %vm92, 0.0, %v632
  %v634 = vrot.slane %v627, 4
  %v635 = vsel %vm92, 0.0, %v634
  %637 = vrot.lane.b32.xlu0 %v573, 16
  %v638 = vpop.permute.xlu0 %637
  %641 = vrot.lane.b32.xlu0 %v559, 32
  %v642 = vpop.permute.xlu0 %641
  %645 = vrot.lane.b32.xlu0 %v575, 48
  %v646 = vpop.permute.xlu0 %645
  %649 = vrot.lane.b32.xlu0 %v567, 64
  %v650 = vpop.permute.xlu0 %649
  %653 = vrot.lane.b32.xlu0 %v577, 80
  %v654 = vpop.permute.xlu0 %653
  %657 = vrot.lane.b32.xlu0 %v571, 96
  %v658 = vpop.permute.xlu0 %657
  %661 = vrot.lane.b32.xlu0 %v579, 112
  %v662 = vpop.permute.xlu0 %661
  %665 = vrot.lane.b32.xlu0 %v629, 16
  %v666 = vpop.permute.xlu0 %665
  %669 = vrot.lane.b32.xlu0 %v615, 32
  %v670 = vpop.permute.xlu0 %669
  %673 = vrot.lane.b32.xlu0 %v631, 48
  %v674 = vpop.permute.xlu0 %673
  %677 = vrot.lane.b32.xlu0 %v623, 64
  %v678 = vpop.permute.xlu0 %677
  %681 = vrot.lane.b32.xlu0 %v633, 80
  %v682 = vpop.permute.xlu0 %681
  %685 = vrot.lane.b32.xlu0 %v627, 96
  %v686 = vpop.permute.xlu0 %685
  %689 = vrot.lane.b32.xlu0 %v635, 112
  %v690 = vpop.permute.xlu0 %689
  %vm692 = vcmask 130048
  %v693 = vsel %vm692, %v555, %v638
  %vm694 = vcmask 261120
  %v695 = vsel %vm694, %v693, %v642
  %vm696 = vcmask 392192
  %v697 = vsel %vm696, %v695, %v646
  %vm698 = vcmask 523264
  %v699 = vsel %vm698, %v697, %v650
  %vm700 = vcmask 654336
  %v701 = vsel %vm700, %v699, %v654
  %vm702 = vcmask 785408
  %v703 = vsel %vm702, %v701, %v658
  %vm704 = vcmask 916480
  %v705 = vsel %vm704, %v703, %v662
  %v706 = vsel %vm692, %v611, %v666
  %v707 = vsel %vm694, %v706, %v670
  %v708 = vsel %vm696, %v707, %v674
  %v709 = vsel %vm698, %v708, %v678
  %v710 = vsel %vm700, %v709, %v682
  %v711 = vsel %vm702, %v710, %v686
  %v712 = vsel %vm704, %v711, %v690
  %713 = vst [vmem:[#allocation3] sm:$0xf] %v705
  %714 = vst [vmem:[#allocation3 + $0x8] sm:$0xf] %v712
  %v715 = vld [vmem:[#allocation2] sm:$0xff]
  %v716 = vld [vmem:[#allocation2 + $0x8] sm:$0xff]
  %v717 = vld [vmem:[#allocation2 + $0x18] sm:$0xff]
  %v718 = vld [vmem:[#allocation2 + $0x20] sm:$0xff]
  %v719 = vld [vmem:[#allocation2 + $0x30] sm:$0xff]
  %v720 = vld [vmem:[#allocation2 + $0x38] sm:$0xff]
  %v721 = vld [vmem:[#allocation2 + $0x48] sm:$0xff]
  %v722 = vld [vmem:[#allocation2 + $0x50] sm:$0xff]
  %731 = vrot.lane.b32.xlu0 %v715, 127
  %v732 = vpop.permute.xlu0 %731
  %733 = vrot.lane.b32.xlu0 %v716, 127
  %v734 = vpop.permute.xlu0 %733
  %735 = vrot.lane.b32.xlu0 %v717, 127
  %v736 = vpop.permute.xlu0 %735
  %737 = vrot.lane.b32.xlu0 %v718, 127
  %v738 = vpop.permute.xlu0 %737
  %739 = vrot.lane.b32.xlu0 %v719, 127
  %v740 = vpop.permute.xlu0 %739
  %741 = vrot.lane.b32.xlu0 %v720, 127
  %v742 = vpop.permute.xlu0 %741
  %743 = vrot.lane.b32.xlu0 %v721, 127
  %v744 = vpop.permute.xlu0 %743
  %745 = vrot.lane.b32.xlu0 %v722, 127
  %v746 = vpop.permute.xlu0 %745
  %v755 = vrot.slane %v740, 4
  %v756 = vsel %vm92, %v755, %v732
  %v757 = vrot.slane %v732, 4
  %v758 = vsel %vm92, %v740, %v757
  %v760 = vunpack.c.l.s4 1983009808
  %v761 = vunpack.c.0.s8 %v760
  %v762 = vperm.slane %v756, %v761
  %v764 = vunpack.c.l.s4 1983009808
  %v765 = vunpack.c.0.s8 %v764
  %v766 = vperm.slane %v758, %v765
  %v767 = vrot.slane %v744, 4
  %v768 = vsel %vm92, %v767, %v736
  %v769 = vrot.slane %v736, 4
  %v770 = vsel %vm92, %v744, %v769
  %v772 = vunpack.c.l.s4 1983009808
  %v773 = vunpack.c.0.s8 %v772
  %v774 = vperm.slane %v768, %v773
  %v776 = vunpack.c.l.s4 1983009808
  %v777 = vunpack.c.0.s8 %v776
  %v778 = vperm.slane %v770, %v777
  %v779 = vrot.slane %v774, 4
  %v780 = vsel %vm92, %v779, %v762
  %v781 = vrot.slane %v762, 4
  %v782 = vsel %vm92, %v774, %v781
  %v784 = vunpack.c.l.s4 1934713408
  %v785 = vunpack.c.0.s8 %v784
  %v786 = vperm.slane %v780, %v785
  %v788 = vunpack.c.l.s4 1934713408
  %v789 = vunpack.c.0.s8 %v788
  %v790 = vperm.slane %v782, %v789
  %v791 = vrot.slane %v778, 4
  %v792 = vsel %vm92, %v791, %v766
  %v793 = vrot.slane %v766, 4
  %v794 = vsel %vm92, %v778, %v793
  %v796 = vunpack.c.l.s4 1934713408
  %v797 = vunpack.c.0.s8 %v796
  %v798 = vperm.slane %v792, %v797
  %v800 = vunpack.c.l.s4 1934713408
  %v801 = vunpack.c.0.s8 %v800
  %v802 = vperm.slane %v794, %v801
  %v803 = vrot.slane %v786, 4
  %v804 = vsel %vm92, 0.0, %v803
  %v805 = vrot.slane %v790, 4
  %v806 = vsel %vm92, 0.0, %v805
  %v807 = vrot.slane %v798, 4
  %v808 = vsel %vm92, 0.0, %v807
  %v809 = vrot.slane %v802, 4
  %v810 = vsel %vm92, 0.0, %v809
  %v811 = vrot.slane %v742, 4
  %v812 = vsel %vm92, %v811, %v734
  %v813 = vrot.slane %v734, 4
  %v814 = vsel %vm92, %v742, %v813
  %v816 = vunpack.c.l.s4 1983009808
  %v817 = vunpack.c.0.s8 %v816
  %v818 = vperm.slane %v812, %v817
  %v820 = vunpack.c.l.s4 1983009808
  %v821 = vunpack.c.0.s8 %v820
  %v822 = vperm.slane %v814, %v821
  %v823 = vrot.slane %v746, 4
  %v824 = vsel %vm92, %v823, %v738
  %v825 = vrot.slane %v738, 4
  %v826 = vsel %vm92, %v746, %v825
  %v828 = vunpack.c.l.s4 1983009808
  %v829 = vunpack.c.0.s8 %v828
  %v830 = vperm.slane %v824, %v829
  %v832 = vunpack.c.l.s4 1983009808
  %v833 = vunpack.c.0.s8 %v832
  %v834 = vperm.slane %v826, %v833
  %v835 = vrot.slane %v830, 4
  %v836 = vsel %vm92, %v835, %v818
  %v837 = vrot.slane %v818, 4
  %v838 = vsel %vm92, %v830, %v837
  %v840 = vunpack.c.l.s4 1934713408
  %v841 = vunpack.c.0.s8 %v840
  %v842 = vperm.slane %v836, %v841
  %v844 = vunpack.c.l.s4 1934713408
  %v845 = vunpack.c.0.s8 %v844
  %v846 = vperm.slane %v838, %v845
  %v847 = vrot.slane %v834, 4
  %v848 = vsel %vm92, %v847, %v822
  %v849 = vrot.slane %v822, 4
  %v850 = vsel %vm92, %v834, %v849
  %v852 = vunpack.c.l.s4 1934713408
  %v853 = vunpack.c.0.s8 %v852
  %v854 = vperm.slane %v848, %v853
  %v856 = vunpack.c.l.s4 1934713408
  %v857 = vunpack.c.0.s8 %v856
  %v858 = vperm.slane %v850, %v857
  %v859 = vrot.slane %v842, 4
  %v860 = vsel %vm92, 0.0, %v859
  %v861 = vrot.slane %v846, 4
  %v862 = vsel %vm92, 0.0, %v861
  %v863 = vrot.slane %v854, 4
  %v864 = vsel %vm92, 0.0, %v863
  %v865 = vrot.slane %v858, 4
  %v866 = vsel %vm92, 0.0, %v865
  %868 = vrot.lane.b32.xlu0 %v804, 16
  %v869 = vpop.permute.xlu0 %868
  %872 = vrot.lane.b32.xlu0 %v790, 32
  %v873 = vpop.permute.xlu0 %872
  %876 = vrot.lane.b32.xlu0 %v806, 48
  %v877 = vpop.permute.xlu0 %876
  %880 = vrot.lane.b32.xlu0 %v798, 64
  %v881 = vpop.permute.xlu0 %880
  %884 = vrot.lane.b32.xlu0 %v808, 80
  %v885 = vpop.permute.xlu0 %884
  %888 = vrot.lane.b32.xlu0 %v802, 96
  %v889 = vpop.permute.xlu0 %888
  %892 = vrot.lane.b32.xlu0 %v810, 112
  %v893 = vpop.permute.xlu0 %892
  %896 = vrot.lane.b32.xlu0 %v860, 16
  %v897 = vpop.permute.xlu0 %896
  %900 = vrot.lane.b32.xlu0 %v846, 32
  %v901 = vpop.permute.xlu0 %900
  %904 = vrot.lane.b32.xlu0 %v862, 48
  %v905 = vpop.permute.xlu0 %904
  %908 = vrot.lane.b32.xlu0 %v854, 64
  %v909 = vpop.permute.xlu0 %908
  %912 = vrot.lane.b32.xlu0 %v864, 80
  %v913 = vpop.permute.xlu0 %912
  %916 = vrot.lane.b32.xlu0 %v858, 96
  %v917 = vpop.permute.xlu0 %916
  %920 = vrot.lane.b32.xlu0 %v866, 112
  %v921 = vpop.permute.xlu0 %920
  %v923 = vsel %vm692, %v786, %v869
  %v924 = vsel %vm694, %v923, %v873
  %v925 = vsel %vm696, %v924, %v877
  %v926 = vsel %vm698, %v925, %v881
  %v927 = vsel %vm700, %v926, %v885
  %v928 = vsel %vm702, %v927, %v889
  %v929 = vsel %vm704, %v928, %v893
  %v930 = vsel %vm692, %v842, %v897
  %v931 = vsel %vm694, %v930, %v901
  %v932 = vsel %vm696, %v931, %v905
  %v933 = vsel %vm698, %v932, %v909
  %v934 = vsel %vm700, %v933, %v913
  %v935 = vsel %vm702, %v934, %v917
  %v936 = vsel %vm704, %v935, %v921
  %v939 = vrot.slane %v929, 4
  %v940 = vrot.slane %v936, 4
  %943 = vst [vmem:[#allocation3] sm:$0xf0] %v939
  %944 = vst [vmem:[#allocation3 + $0x8] sm:$0xf0] %v940
  %v945 = vld [vmem:[#allocation2] sm:$0xff]
  %v946 = vld [vmem:[#allocation2 + $0x8] sm:$0xff]
  %v947 = vld [vmem:[#allocation2 + $0x18] sm:$0xff]
  %v948 = vld [vmem:[#allocation2 + $0x20] sm:$0xff]
  %v949 = vld [vmem:[#allocation2 + $0x30] sm:$0xff]
  %v950 = vld [vmem:[#allocation2 + $0x38] sm:$0xff]
  %v951 = vld [vmem:[#allocation2 + $0x48] sm:$0xff]
  %v952 = vld [vmem:[#allocation2 + $0x50] sm:$0xff]
  %961 = vrot.lane.b32.xlu0 %v945, 126
  %v962 = vpop.permute.xlu0 %961
  %963 = vrot.lane.b32.xlu0 %v946, 126
  %v964 = vpop.permute.xlu0 %963
  %965 = vrot.lane.b32.xlu0 %v947, 126
  %v966 = vpop.permute.xlu0 %965
  %967 = vrot.lane.b32.xlu0 %v948, 126
  %v968 = vpop.permute.xlu0 %967
  %969 = vrot.lane.b32.xlu0 %v949, 126
  %v970 = vpop.permute.xlu0 %969
  %971 = vrot.lane.b32.xlu0 %v950, 126
  %v972 = vpop.permute.xlu0 %971
  %973 = vrot.lane.b32.xlu0 %v951, 126
  %v974 = vpop.permute.xlu0 %973
  %975 = vrot.lane.b32.xlu0 %v952, 126
  %v976 = vpop.permute.xlu0 %975
  %v985 = vrot.slane %v970, 4
  %v986 = vsel %vm92, %v985, %v962
  %v987 = vrot.slane %v962, 4
  %v988 = vsel %vm92, %v970, %v987
  %v990 = vunpack.c.l.s4 1983009808
  %v991 = vunpack.c.0.s8 %v990
  %v992 = vperm.slane %v986, %v991
  %v994 = vunpack.c.l.s4 1983009808
  %v995 = vunpack.c.0.s8 %v994
  %v996 = vperm.slane %v988, %v995
  %v997 = vrot.slane %v974, 4
  %v998 = vsel %vm92, %v997, %v966
  %v999 = vrot.slane %v966, 4
  %v1000 = vsel %vm92, %v974, %v999
  %v1002 = vunpack.c.l.s4 1983009808
  %v1003 = vunpack.c.0.s8 %v1002
  %v1004 = vperm.slane %v998, %v1003
  %v1006 = vunpack.c.l.s4 1983009808
  %v1007 = vunpack.c.0.s8 %v1006
  %v1008 = vperm.slane %v1000, %v1007
  %v1009 = vrot.slane %v1004, 4
  %v1010 = vsel %vm92, %v1009, %v992
  %v1011 = vrot.slane %v992, 4
  %v1012 = vsel %vm92, %v1004, %v1011
  %v1014 = vunpack.c.l.s4 1934713408
  %v1015 = vunpack.c.0.s8 %v1014
  %v1016 = vperm.slane %v1010, %v1015
  %v1018 = vunpack.c.l.s4 1934713408
  %v1019 = vunpack.c.0.s8 %v1018
  %v1020 = vperm.slane %v1012, %v1019
  %v1021 = vrot.slane %v1008, 4
  %v1022 = vsel %vm92, %v1021, %v996
  %v1023 = vrot.slane %v996, 4
  %v1024 = vsel %vm92, %v1008, %v1023
  %v1026 = vunpack.c.l.s4 1934713408
  %v1027 = vunpack.c.0.s8 %v1026
  %v1028 = vperm.slane %v1022, %v1027
  %v1030 = vunpack.c.l.s4 1934713408
  %v1031 = vunpack.c.0.s8 %v1030
  %v1032 = vperm.slane %v1024, %v1031
  %v1033 = vrot.slane %v1016, 4
  %v1034 = vsel %vm92, 0.0, %v1033
  %v1035 = vrot.slane %v1020, 4
  %v1036 = vsel %vm92, 0.0, %v1035
  %v1037 = vrot.slane %v1028, 4
  %v1038 = vsel %vm92, 0.0, %v1037
  %v1039 = vrot.slane %v1032, 4
  %v1040 = vsel %vm92, 0.0, %v1039
  %v1041 = vrot.slane %v972, 4
  %v1042 = vsel %vm92, %v1041, %v964
  %v1043 = vrot.slane %v964, 4
  %v1044 = vsel %vm92, %v972, %v1043
  %v1046 = vunpack.c.l.s4 1983009808
  %v1047 = vunpack.c.0.s8 %v1046
  %v1048 = vperm.slane %v1042, %v1047
  %v1050 = vunpack.c.l.s4 1983009808
  %v1051 = vunpack.c.0.s8 %v1050
  %v1052 = vperm.slane %v1044, %v1051
  %v1053 = vrot.slane %v976, 4
  %v1054 = vsel %vm92, %v1053, %v968
  %v1055 = vrot.slane %v968, 4
  %v1056 = vsel %vm92, %v976, %v1055
  %v1058 = vunpack.c.l.s4 1983009808
  %v1059 = vunpack.c.0.s8 %v1058
  %v1060 = vperm.slane %v1054, %v1059
  %v1062 = vunpack.c.l.s4 1983009808
  %v1063 = vunpack.c.0.s8 %v1062
  %v1064 = vperm.slane %v1056, %v1063
  %v1065 = vrot.slane %v1060, 4
  %v1066 = vsel %vm92, %v1065, %v1048
  %v1067 = vrot.slane %v1048, 4
  %v1068 = vsel %vm92, %v1060, %v1067
  %v1070 = vunpack.c.l.s4 1934713408
  %v1071 = vunpack.c.0.s8 %v1070
  %v1072 = vperm.slane %v1066, %v1071
  %v1074 = vunpack.c.l.s4 1934713408
  %v1075 = vunpack.c.0.s8 %v1074
  %v1076 = vperm.slane %v1068, %v1075
  %v1077 = vrot.slane %v1064, 4
  %v1078 = vsel %vm92, %v1077, %v1052
  %v1079 = vrot.slane %v1052, 4
  %v1080 = vsel %vm92, %v1064, %v1079
  %v1082 = vunpack.c.l.s4 1934713408
  %v1083 = vunpack.c.0.s8 %v1082
  %v1084 = vperm.slane %v1078, %v1083
  %v1086 = vunpack.c.l.s4 1934713408
  %v1087 = vunpack.c.0.s8 %v1086
  %v1088 = vperm.slane %v1080, %v1087
  %v1089 = vrot.slane %v1072, 4
  %v1090 = vsel %vm92, 0.0, %v1089
  %v1091 = vrot.slane %v1076, 4
  %v1092 = vsel %vm92, 0.0, %v1091
  %v1093 = vrot.slane %v1084, 4
  %v1094 = vsel %vm92, 0.0, %v1093
  %v1095 = vrot.slane %v1088, 4
  %v1096 = vsel %vm92, 0.0, %v1095
  %1098 = vrot.lane.b32.xlu0 %v1034, 16
  %v1099 = vpop.permute.xlu0 %1098
  %1102 = vrot.lane.b32.xlu0 %v1020, 32
  %v1103 = vpop.permute.xlu0 %1102
  %1106 = vrot.lane.b32.xlu0 %v1036, 48
  %v1107 = vpop.permute.xlu0 %1106
  %1110 = vrot.lane.b32.xlu0 %v1028, 64
  %v1111 = vpop.permute.xlu0 %1110
  %1114 = vrot.lane.b32.xlu0 %v1038, 80
  %v1115 = vpop.permute.xlu0 %1114
  %1118 = vrot.lane.b32.xlu0 %v1032, 96
  %v1119 = vpop.permute.xlu0 %1118
  %1122 = vrot.lane.b32.xlu0 %v1040, 112
  %v1123 = vpop.permute.xlu0 %1122
  %1126 = vrot.lane.b32.xlu0 %v1090, 16
  %v1127 = vpop.permute.xlu0 %1126
  %1130 = vrot.lane.b32.xlu0 %v1076, 32
  %v1131 = vpop.permute.xlu0 %1130
  %1134 = vrot.lane.b32.xlu0 %v1092, 48
  %v1135 = vpop.permute.xlu0 %1134
  %1138 = vrot.lane.b32.xlu0 %v1084, 64
  %v1139 = vpop.permute.xlu0 %1138
  %1142 = vrot.lane.b32.xlu0 %v1094, 80
  %v1143 = vpop.permute.xlu0 %1142
  %1146 = vrot.lane.b32.xlu0 %v1088, 96
  %v1147 = vpop.permute.xlu0 %1146
  %1150 = vrot.lane.b32.xlu0 %v1096, 112
  %v1151 = vpop.permute.xlu0 %1150
  %v1153 = vsel %vm692, %v1016, %v1099
  %v1154 = vsel %vm694, %v1153, %v1103
  %v1155 = vsel %vm696, %v1154, %v1107
  %v1156 = vsel %vm698, %v1155, %v1111
  %v1157 = vsel %vm700, %v1156, %v1115
  %v1158 = vsel %vm702, %v1157, %v1119
  %v1159 = vsel %vm704, %v1158, %v1123
  %v1160 = vsel %vm692, %v1072, %v1127
  %v1161 = vsel %vm694, %v1160, %v1131
  %v1162 = vsel %vm696, %v1161, %v1135
  %v1163 = vsel %vm698, %v1162, %v1139
  %v1164 = vsel %vm700, %v1163, %v1143
  %v1165 = vsel %vm702, %v1164, %v1147
  %v1166 = vsel %vm704, %v1165, %v1151
  %1167 = vst [vmem:[#allocation3 + $0x20] sm:$0xf] %v1159
  %1168 = vst [vmem:[#allocation3 + $0x28] sm:$0xf] %v1166
  %v1169 = vld [vmem:[#allocation2 + $0x1] sm:$0xff]
  %v1170 = vld [vmem:[#allocation2 + $0x9] sm:$0xff]
  %v1171 = vld [vmem:[#allocation2 + $0x19] sm:$0xff]
  %v1172 = vld [vmem:[#allocation2 + $0x21] sm:$0xff]
  %v1173 = vld [vmem:[#allocation2 + $0x31] sm:$0xff]
  %v1174 = vld [vmem:[#allocation2 + $0x39] sm:$0xff]
  %v1175 = vld [vmem:[#allocation2 + $0x49] sm:$0xff]
  %v1176 = vld [vmem:[#allocation2 + $0x51] sm:$0xff]
  %v1177 = vrot.slane %v1173, 4
  %v1178 = vsel %vm92, %v1177, %v1169
  %v1179 = vrot.slane %v1169, 4
  %v1180 = vsel %vm92, %v1173, %v1179
  %v1182 = vunpack.c.l.s4 1983009808
  %v1183 = vunpack.c.0.s8 %v1182
  %v1184 = vperm.slane %v1178, %v1183
  %v1186 = vunpack.c.l.s4 1983009808
  %v1187 = vunpack.c.0.s8 %v1186
  %v1188 = vperm.slane %v1180, %v1187
  %v1189 = vrot.slane %v1175, 4
  %v1190 = vsel %vm92, %v1189, %v1171
  %v1191 = vrot.slane %v1171, 4
  %v1192 = vsel %vm92, %v1175, %v1191
  %v1194 = vunpack.c.l.s4 1983009808
  %v1195 = vunpack.c.0.s8 %v1194
  %v1196 = vperm.slane %v1190, %v1195
  %v1198 = vunpack.c.l.s4 1983009808
  %v1199 = vunpack.c.0.s8 %v1198
  %v1200 = vperm.slane %v1192, %v1199
  %v1201 = vrot.slane %v1196, 4
  %v1202 = vsel %vm92, %v1201, %v1184
  %v1203 = vrot.slane %v1184, 4
  %v1204 = vsel %vm92, %v1196, %v1203
  %v1206 = vunpack.c.l.s4 1934713408
  %v1207 = vunpack.c.0.s8 %v1206
  %v1208 = vperm.slane %v1202, %v1207
  %v1210 = vunpack.c.l.s4 1934713408
  %v1211 = vunpack.c.0.s8 %v1210
  %v1212 = vperm.slane %v1204, %v1211
  %v1213 = vrot.slane %v1200, 4
  %v1214 = vsel %vm92, %v1213, %v1188
  %v1215 = vrot.slane %v1188, 4
  %v1216 = vsel %vm92, %v1200, %v1215
  %v1218 = vunpack.c.l.s4 1934713408
  %v1219 = vunpack.c.0.s8 %v1218
  %v1220 = vperm.slane %v1214, %v1219
  %v1222 = vunpack.c.l.s4 1934713408
  %v1223 = vunpack.c.0.s8 %v1222
  %v1224 = vperm.slane %v1216, %v1223
  %v1225 = vrot.slane %v1208, 4
  %v1226 = vsel %vm92, 0.0, %v1225
  %v1227 = vrot.slane %v1212, 4
  %v1228 = vsel %vm92, 0.0, %v1227
  %v1229 = vrot.slane %v1220, 4
  %v1230 = vsel %vm92, 0.0, %v1229
  %v1231 = vrot.slane %v1224, 4
  %v1232 = vsel %vm92, 0.0, %v1231
  %v1233 = vrot.slane %v1174, 4
  %v1234 = vsel %vm92, %v1233, %v1170
  %v1235 = vrot.slane %v1170, 4
  %v1236 = vsel %vm92, %v1174, %v1235
  %v1238 = vunpack.c.l.s4 1983009808
  %v1239 = vunpack.c.0.s8 %v1238
  %v1240 = vperm.slane %v1234, %v1239
  %v1242 = vunpack.c.l.s4 1983009808
  %v1243 = vunpack.c.0.s8 %v1242
  %v1244 = vperm.slane %v1236, %v1243
  %v1245 = vrot.slane %v1176, 4
  %v1246 = vsel %vm92, %v1245, %v1172
  %v1247 = vrot.slane %v1172, 4
  %v1248 = vsel %vm92, %v1176, %v1247
  %v1250 = vunpack.c.l.s4 1983009808
  %v1251 = vunpack.c.0.s8 %v1250
  %v1252 = vperm.slane %v1246, %v1251
  %v1254 = vunpack.c.l.s4 1983009808
  %v1255 = vunpack.c.0.s8 %v1254
  %v1256 = vperm.slane %v1248, %v1255
  %v1257 = vrot.slane %v1252, 4
  %v1258 = vsel %vm92, %v1257, %v1240
  %v1259 = vrot.slane %v1240, 4
  %v1260 = vsel %vm92, %v1252, %v1259
  %v1262 = vunpack.c.l.s4 1934713408
  %v1263 = vunpack.c.0.s8 %v1262
  %v1264 = vperm.slane %v1258, %v1263
  %v1266 = vunpack.c.l.s4 1934713408
  %v1267 = vunpack.c.0.s8 %v1266
  %v1268 = vperm.slane %v1260, %v1267
  %v1269 = vrot.slane %v1256, 4
  %v1270 = vsel %vm92, %v1269, %v1244
  %v1271 = vrot.slane %v1244, 4
  %v1272 = vsel %vm92, %v1256, %v1271
  %v1274 = vunpack.c.l.s4 1934713408
  %v1275 = vunpack.c.0.s8 %v1274
  %v1276 = vperm.slane %v1270, %v1275
  %v1278 = vunpack.c.l.s4 1934713408
  %v1279 = vunpack.c.0.s8 %v1278
  %v1280 = vperm.slane %v1272, %v1279
  %v1281 = vrot.slane %v1264, 4
  %v1282 = vsel %vm92, 0.0, %v1281
  %v1283 = vrot.slane %v1268, 4
  %v1284 = vsel %vm92, 0.0, %v1283
  %v1285 = vrot.slane %v1276, 4
  %v1286 = vsel %vm92, 0.0, %v1285
  %v1287 = vrot.slane %v1280, 4
  %v1288 = vsel %vm92, 0.0, %v1287
  %1290 = vrot.lane.b32.xlu0 %v1226, 16
  %v1291 = vpop.permute.xlu0 %1290
  %1294 = vrot.lane.b32.xlu0 %v1212, 32
  %v1295 = vpop.permute.xlu0 %1294
  %1298 = vrot.lane.b32.xlu0 %v1228, 48
  %v1299 = vpop.permute.xlu0 %1298
  %1302 = vrot.lane.b32.xlu0 %v1220, 64
  %v1303 = vpop.permute.xlu0 %1302
  %1306 = vrot.lane.b32.xlu0 %v1230, 80
  %v1307 = vpop.permute.xlu0 %1306
  %1310 = vrot.lane.b32.xlu0 %v1224, 96
  %v1311 = vpop.permute.xlu0 %1310
  %1314 = vrot.lane.b32.xlu0 %v1232, 112
  %v1315 = vpop.permute.xlu0 %1314
  %1318 = vrot.lane.b32.xlu0 %v1282, 16
  %v1319 = vpop.permute.xlu0 %1318
  %1322 = vrot.lane.b32.xlu0 %v1268, 32
  %v1323 = vpop.permute.xlu0 %1322
  %1326 = vrot.lane.b32.xlu0 %v1284, 48
  %v1327 = vpop.permute.xlu0 %1326
  %1330 = vrot.lane.b32.xlu0 %v1276, 64
  %v1331 = vpop.permute.xlu0 %1330
  %1334 = vrot.lane.b32.xlu0 %v1286, 80
  %v1335 = vpop.permute.xlu0 %1334
  %1338 = vrot.lane.b32.xlu0 %v1280, 96
  %v1339 = vpop.permute.xlu0 %1338
  %1342 = vrot.lane.b32.xlu0 %v1288, 112
  %v1343 = vpop.permute.xlu0 %1342
  %v1345 = vsel %vm692, %v1208, %v1291
  %v1346 = vsel %vm694, %v1345, %v1295
  %v1347 = vsel %vm696, %v1346, %v1299
  %v1348 = vsel %vm698, %v1347, %v1303
  %v1349 = vsel %vm700, %v1348, %v1307
  %v1350 = vsel %vm702, %v1349, %v1311
  %v1351 = vsel %vm704, %v1350, %v1315
  %v1352 = vsel %vm692, %v1264, %v1319
  %v1353 = vsel %vm694, %v1352, %v1323
  %v1354 = vsel %vm696, %v1353, %v1327
  %v1355 = vsel %vm698, %v1354, %v1331
  %v1356 = vsel %vm700, %v1355, %v1335
  %v1357 = vsel %vm702, %v1356, %v1339
  %v1358 = vsel %vm704, %v1357, %v1343
  %v1361 = vrot.slane %v1351, 4
  %v1362 = vrot.slane %v1358, 4
  %1365 = vst [vmem:[#allocation3 + $0x20] sm:$0xf0] %v1361
  %1366 = vst [vmem:[#allocation3 + $0x28] sm:$0xf0] %v1362
  %v1367 = vld [vmem:[#allocation2 + $0x1] sm:$0xff]
  %v1368 = vld [vmem:[#allocation2 + $0x9] sm:$0xff]
  %v1369 = vld [vmem:[#allocation2 + $0x19] sm:$0xff]
  %v1370 = vld [vmem:[#allocation2 + $0x21] sm:$0xff]
  %v1371 = vld [vmem:[#allocation2 + $0x31] sm:$0xff]
  %v1372 = vld [vmem:[#allocation2 + $0x39] sm:$0xff]
  %v1373 = vld [vmem:[#allocation2 + $0x49] sm:$0xff]
  %v1374 = vld [vmem:[#allocation2 + $0x51] sm:$0xff]
  %1383 = vrot.lane.b32.xlu0 %v1367, 127
  %v1384 = vpop.permute.xlu0 %1383
  %1385 = vrot.lane.b32.xlu0 %v1368, 127
  %v1386 = vpop.permute.xlu0 %1385
  %1387 = vrot.lane.b32.xlu0 %v1369, 127
  %v1388 = vpop.permute.xlu0 %1387
  %1389 = vrot.lane.b32.xlu0 %v1370, 127
  %v1390 = vpop.permute.xlu0 %1389
  %1391 = vrot.lane.b32.xlu0 %v1371, 127
  %v1392 = vpop.permute.xlu0 %1391
  %1393 = vrot.lane.b32.xlu0 %v1372, 127
  %v1394 = vpop.permute.xlu0 %1393
  %1395 = vrot.lane.b32.xlu0 %v1373, 127
  %v1396 = vpop.permute.xlu0 %1395
  %1397 = vrot.lane.b32.xlu0 %v1374, 127
  %v1398 = vpop.permute.xlu0 %1397
  %v1407 = vrot.slane %v1392, 4
  %v1408 = vsel %vm92, %v1407, %v1384
  %v1409 = vrot.slane %v1384, 4
  %v1410 = vsel %vm92, %v1392, %v1409
  %v1412 = vunpack.c.l.s4 1983009808
  %v1413 = vunpack.c.0.s8 %v1412
  %v1414 = vperm.slane %v1408, %v1413
  %v1416 = vunpack.c.l.s4 1983009808
  %v1417 = vunpack.c.0.s8 %v1416
  %v1418 = vperm.slane %v1410, %v1417
  %v1419 = vrot.slane %v1396, 4
  %v1420 = vsel %vm92, %v1419, %v1388
  %v1421 = vrot.slane %v1388, 4
  %v1422 = vsel %vm92, %v1396, %v1421
  %v1424 = vunpack.c.l.s4 1983009808
  %v1425 = vunpack.c.0.s8 %v1424
  %v1426 = vperm.slane %v1420, %v1425
  %v1428 = vunpack.c.l.s4 1983009808
  %v1429 = vunpack.c.0.s8 %v1428
  %v1430 = vperm.slane %v1422, %v1429
  %v1431 = vrot.slane %v1426, 4
  %v1432 = vsel %vm92, %v1431, %v1414
  %v1433 = vrot.slane %v1414, 4
  %v1434 = vsel %vm92, %v1426, %v1433
  %v1436 = vunpack.c.l.s4 1934713408
  %v1437 = vunpack.c.0.s8 %v1436
  %v1438 = vperm.slane %v1432, %v1437
  %v1440 = vunpack.c.l.s4 1934713408
  %v1441 = vunpack.c.0.s8 %v1440
  %v1442 = vperm.slane %v1434, %v1441
  %v1443 = vrot.slane %v1430, 4
  %v1444 = vsel %vm92, %v1443, %v1418
  %v1445 = vrot.slane %v1418, 4
  %v1446 = vsel %vm92, %v1430, %v1445
  %v1448 = vunpack.c.l.s4 1934713408
  %v1449 = vunpack.c.0.s8 %v1448
  %v1450 = vperm.slane %v1444, %v1449
  %v1452 = vunpack.c.l.s4 1934713408
  %v1453 = vunpack.c.0.s8 %v1452
  %v1454 = vperm.slane %v1446, %v1453
  %v1455 = vrot.slane %v1438, 4
  %v1456 = vsel %vm92, 0.0, %v1455
  %v1457 = vrot.slane %v1442, 4
  %v1458 = vsel %vm92, 0.0, %v1457
  %v1459 = vrot.slane %v1450, 4
  %v1460 = vsel %vm92, 0.0, %v1459
  %v1461 = vrot.slane %v1454, 4
  %v1462 = vsel %vm92, 0.0, %v1461
  %v1463 = vrot.slane %v1394, 4
  %v1464 = vsel %vm92, %v1463, %v1386
  %v1465 = vrot.slane %v1386, 4
  %v1466 = vsel %vm92, %v1394, %v1465
  %v1468 = vunpack.c.l.s4 1983009808
  %v1469 = vunpack.c.0.s8 %v1468
  %v1470 = vperm.slane %v1464, %v1469
  %v1472 = vunpack.c.l.s4 1983009808
  %v1473 = vunpack.c.0.s8 %v1472
  %v1474 = vperm.slane %v1466, %v1473
  %v1475 = vrot.slane %v1398, 4
  %v1476 = vsel %vm92, %v1475, %v1390
  %v1477 = vrot.slane %v1390, 4
  %v1478 = vsel %vm92, %v1398, %v1477
  %v1480 = vunpack.c.l.s4 1983009808
  %v1481 = vunpack.c.0.s8 %v1480
  %v1482 = vperm.slane %v1476, %v1481
  %v1484 = vunpack.c.l.s4 1983009808
  %v1485 = vunpack.c.0.s8 %v1484
  %v1486 = vperm.slane %v1478, %v1485
  %v1487 = vrot.slane %v1482, 4
  %v1488 = vsel %vm92, %v1487, %v1470
  %v1489 = vrot.slane %v1470, 4
  %v1490 = vsel %vm92, %v1482, %v1489
  %v1492 = vunpack.c.l.s4 1934713408
  %v1493 = vunpack.c.0.s8 %v1492
  %v1494 = vperm.slane %v1488, %v1493
  %v1496 = vunpack.c.l.s4 1934713408
  %v1497 = vunpack.c.0.s8 %v1496
  %v1498 = vperm.slane %v1490, %v1497
  %v1499 = vrot.slane %v1486, 4
  %v1500 = vsel %vm92, %v1499, %v1474
  %v1501 = vrot.slane %v1474, 4
  %v1502 = vsel %vm92, %v1486, %v1501
  %v1504 = vunpack.c.l.s4 1934713408
  %v1505 = vunpack.c.0.s8 %v1504
  %v1506 = vperm.slane %v1500, %v1505
  %v1508 = vunpack.c.l.s4 1934713408
  %v1509 = vunpack.c.0.s8 %v1508
  %v1510 = vperm.slane %v1502, %v1509
  %v1511 = vrot.slane %v1494, 4
  %v1512 = vsel %vm92, 0.0, %v1511
  %v1513 = vrot.slane %v1498, 4
  %v1514 = vsel %vm92, 0.0, %v1513
  %v1515 = vrot.slane %v1506, 4
  %v1516 = vsel %vm92, 0.0, %v1515
  %v1517 = vrot.slane %v1510, 4
  %v1518 = vsel %vm92, 0.0, %v1517
  %1520 = vrot.lane.b32.xlu0 %v1456, 16
  %v1521 = vpop.permute.xlu0 %1520
  %1524 = vrot.lane.b32.xlu0 %v1442, 32
  %v1525 = vpop.permute.xlu0 %1524
  %1528 = vrot.lane.b32.xlu0 %v1458, 48
  %v1529 = vpop.permute.xlu0 %1528
  %1532 = vrot.lane.b32.xlu0 %v1450, 64
  %v1533 = vpop.permute.xlu0 %1532
  %1536 = vrot.lane.b32.xlu0 %v1460, 80
  %v1537 = vpop.permute.xlu0 %1536
  %1540 = vrot.lane.b32.xlu0 %v1454, 96
  %v1541 = vpop.permute.xlu0 %1540
  %1544 = vrot.lane.b32.xlu0 %v1462, 112
  %v1545 = vpop.permute.xlu0 %1544
  %1548 = vrot.lane.b32.xlu0 %v1512, 16
  %v1549 = vpop.permute.xlu0 %1548
  %1552 = vrot.lane.b32.xlu0 %v1498, 32
  %v1553 = vpop.permute.xlu0 %1552
  %1556 = vrot.lane.b32.xlu0 %v1514, 48
  %v1557 = vpop.permute.xlu0 %1556
  %1560 = vrot.lane.b32.xlu0 %v1506, 64
  %v1561 = vpop.permute.xlu0 %1560
  %1564 = vrot.lane.b32.xlu0 %v1516, 80
  %v1565 = vpop.permute.xlu0 %1564
  %1568 = vrot.lane.b32.xlu0 %v1510, 96
  %v1569 = vpop.permute.xlu0 %1568
  %1572 = vrot.lane.b32.xlu0 %v1518, 112
  %v1573 = vpop.permute.xlu0 %1572
  %v1575 = vsel %vm692, %v1438, %v1521
  %v1576 = vsel %vm694, %v1575, %v1525
  %v1577 = vsel %vm696, %v1576, %v1529
  %v1578 = vsel %vm698, %v1577, %v1533
  %v1579 = vsel %vm700, %v1578, %v1537
  %v1580 = vsel %vm702, %v1579, %v1541
  %v1581 = vsel %vm704, %v1580, %v1545
  %v1582 = vsel %vm692, %v1494, %v1549
  %v1583 = vsel %vm694, %v1582, %v1553
  %v1584 = vsel %vm696, %v1583, %v1557
  %v1585 = vsel %vm698, %v1584, %v1561
  %v1586 = vsel %vm700, %v1585, %v1565
  %v1587 = vsel %vm702, %v1586, %v1569
  %v1588 = vsel %vm704, %v1587, %v1573
  %1589 = vst [vmem:[#allocation3 + $0x40] sm:$0xf] %v1581
  %1590 = vst [vmem:[#allocation3 + $0x48] sm:$0xf] %v1588
  %v1591 = vld [vmem:[#allocation2 + $0x1] sm:$0xff]
  %v1592 = vld [vmem:[#allocation2 + $0x9] sm:$0xff]
  %v1593 = vld [vmem:[#allocation2 + $0x19] sm:$0xff]
  %v1594 = vld [vmem:[#allocation2 + $0x21] sm:$0xff]
  %v1595 = vld [vmem:[#allocation2 + $0x31] sm:$0xff]
  %v1596 = vld [vmem:[#allocation2 + $0x39] sm:$0xff]
  %v1597 = vld [vmem:[#allocation2 + $0x49] sm:$0xff]
  %v1598 = vld [vmem:[#allocation2 + $0x51] sm:$0xff]
  %1607 = vrot.lane.b32.xlu0 %v1591, 126
  %v1608 = vpop.permute.xlu0 %1607
  %1609 = vrot.lane.b32.xlu0 %v1592, 126
  %v1610 = vpop.permute.xlu0 %1609
  %1611 = vrot.lane.b32.xlu0 %v1593, 126
  %v1612 = vpop.permute.xlu0 %1611
  %1613 = vrot.lane.b32.xlu0 %v1594, 126
  %v1614 = vpop.permute.xlu0 %1613
  %1615 = vrot.lane.b32.xlu0 %v1595, 126
  %v1616 = vpop.permute.xlu0 %1615
  %1617 = vrot.lane.b32.xlu0 %v1596, 126
  %v1618 = vpop.permute.xlu0 %1617
  %1619 = vrot.lane.b32.xlu0 %v1597, 126
  %v1620 = vpop.permute.xlu0 %1619
  %1621 = vrot.lane.b32.xlu0 %v1598, 126
  %v1622 = vpop.permute.xlu0 %1621
  %v1631 = vrot.slane %v1616, 4
  %v1632 = vsel %vm92, %v1631, %v1608
  %v1633 = vrot.slane %v1608, 4
  %v1634 = vsel %vm92, %v1616, %v1633
  %v1636 = vunpack.c.l.s4 1983009808
  %v1637 = vunpack.c.0.s8 %v1636
  %v1638 = vperm.slane %v1632, %v1637
  %v1640 = vunpack.c.l.s4 1983009808
  %v1641 = vunpack.c.0.s8 %v1640
  %v1642 = vperm.slane %v1634, %v1641
  %v1643 = vrot.slane %v1620, 4
  %v1644 = vsel %vm92, %v1643, %v1612
  %v1645 = vrot.slane %v1612, 4
  %v1646 = vsel %vm92, %v1620, %v1645
  %v1648 = vunpack.c.l.s4 1983009808
  %v1649 = vunpack.c.0.s8 %v1648
  %v1650 = vperm.slane %v1644, %v1649
  %v1652 = vunpack.c.l.s4 1983009808
  %v1653 = vunpack.c.0.s8 %v1652
  %v1654 = vperm.slane %v1646, %v1653
  %v1655 = vrot.slane %v1650, 4
  %v1656 = vsel %vm92, %v1655, %v1638
  %v1657 = vrot.slane %v1638, 4
  %v1658 = vsel %vm92, %v1650, %v1657
  %v1660 = vunpack.c.l.s4 1934713408
  %v1661 = vunpack.c.0.s8 %v1660
  %v1662 = vperm.slane %v1656, %v1661
  %v1664 = vunpack.c.l.s4 1934713408
  %v1665 = vunpack.c.0.s8 %v1664
  %v1666 = vperm.slane %v1658, %v1665
  %v1667 = vrot.slane %v1654, 4
  %v1668 = vsel %vm92, %v1667, %v1642
  %v1669 = vrot.slane %v1642, 4
  %v1670 = vsel %vm92, %v1654, %v1669
  %v1672 = vunpack.c.l.s4 1934713408
  %v1673 = vunpack.c.0.s8 %v1672
  %v1674 = vperm.slane %v1668, %v1673
  %v1676 = vunpack.c.l.s4 1934713408
  %v1677 = vunpack.c.0.s8 %v1676
  %v1678 = vperm.slane %v1670, %v1677
  %v1679 = vrot.slane %v1662, 4
  %v1680 = vsel %vm92, 0.0, %v1679
  %v1681 = vrot.slane %v1666, 4
  %v1682 = vsel %vm92, 0.0, %v1681
  %v1683 = vrot.slane %v1674, 4
  %v1684 = vsel %vm92, 0.0, %v1683
  %v1685 = vrot.slane %v1678, 4
  %v1686 = vsel %vm92, 0.0, %v1685
  %v1687 = vrot.slane %v1618, 4
  %v1688 = vsel %vm92, %v1687, %v1610
  %v1689 = vrot.slane %v1610, 4
  %v1690 = vsel %vm92, %v1618, %v1689
  %v1692 = vunpack.c.l.s4 1983009808
  %v1693 = vunpack.c.0.s8 %v1692
  %v1694 = vperm.slane %v1688, %v1693
  %v1696 = vunpack.c.l.s4 1983009808
  %v1697 = vunpack.c.0.s8 %v1696
  %v1698 = vperm.slane %v1690, %v1697
  %v1699 = vrot.slane %v1622, 4
  %v1700 = vsel %vm92, %v1699, %v1614
  %v1701 = vrot.slane %v1614, 4
  %v1702 = vsel %vm92, %v1622, %v1701
  %v1704 = vunpack.c.l.s4 1983009808
  %v1705 = vunpack.c.0.s8 %v1704
  %v1706 = vperm.slane %v1700, %v1705
  %v1708 = vunpack.c.l.s4 1983009808
  %v1709 = vunpack.c.0.s8 %v1708
  %v1710 = vperm.slane %v1702, %v1709
  %v1711 = vrot.slane %v1706, 4
  %v1712 = vsel %vm92, %v1711, %v1694
  %v1713 = vrot.slane %v1694, 4
  %v1714 = vsel %vm92, %v1706, %v1713
  %v1716 = vunpack.c.l.s4 1934713408
  %v1717 = vunpack.c.0.s8 %v1716
  %v1718 = vperm.slane %v1712, %v1717
  %v1720 = vunpack.c.l.s4 1934713408
  %v1721 = vunpack.c.0.s8 %v1720
  %v1722 = vperm.slane %v1714, %v1721
  %v1723 = vrot.slane %v1710, 4
  %v1724 = vsel %vm92, %v1723, %v1698
  %v1725 = vrot.slane %v1698, 4
  %v1726 = vsel %vm92, %v1710, %v1725
  %v1728 = vunpack.c.l.s4 1934713408
  %v1729 = vunpack.c.0.s8 %v1728
  %v1730 = vperm.slane %v1724, %v1729
  %v1732 = vunpack.c.l.s4 1934713408
  %v1733 = vunpack.c.0.s8 %v1732
  %v1734 = vperm.slane %v1726, %v1733
  %v1735 = vrot.slane %v1718, 4
  %v1736 = vsel %vm92, 0.0, %v1735
  %v1737 = vrot.slane %v1722, 4
  %v1738 = vsel %vm92, 0.0, %v1737
  %v1739 = vrot.slane %v1730, 4
  %v1740 = vsel %vm92, 0.0, %v1739
  %v1741 = vrot.slane %v1734, 4
  %v1742 = vsel %vm92, 0.0, %v1741
  %1744 = vrot.lane.b32.xlu0 %v1680, 16
  %v1745 = vpop.permute.xlu0 %1744
  %1748 = vrot.lane.b32.xlu0 %v1666, 32
  %v1749 = vpop.permute.xlu0 %1748
  %1752 = vrot.lane.b32.xlu0 %v1682, 48
  %v1753 = vpop.permute.xlu0 %1752
  %1756 = vrot.lane.b32.xlu0 %v1674, 64
  %v1757 = vpop.permute.xlu0 %1756
  %1760 = vrot.lane.b32.xlu0 %v1684, 80
  %v1761 = vpop.permute.xlu0 %1760
  %1764 = vrot.lane.b32.xlu0 %v1678, 96
  %v1765 = vpop.permute.xlu0 %1764
  %1768 = vrot.lane.b32.xlu0 %v1686, 112
  %v1769 = vpop.permute.xlu0 %1768
  %1772 = vrot.lane.b32.xlu0 %v1736, 16
  %v1773 = vpop.permute.xlu0 %1772
  %1776 = vrot.lane.b32.xlu0 %v1722, 32
  %v1777 = vpop.permute.xlu0 %1776
  %1780 = vrot.lane.b32.xlu0 %v1738, 48
  %v1781 = vpop.permute.xlu0 %1780
  %1784 = vrot.lane.b32.xlu0 %v1730, 64
  %v1785 = vpop.permute.xlu0 %1784
  %1788 = vrot.lane.b32.xlu0 %v1740, 80
  %v1789 = vpop.permute.xlu0 %1788
  %1792 = vrot.lane.b32.xlu0 %v1734, 96
  %v1793 = vpop.permute.xlu0 %1792
  %1796 = vrot.lane.b32.xlu0 %v1742, 112
  %v1797 = vpop.permute.xlu0 %1796
  %v1799 = vsel %vm692, %v1662, %v1745
  %v1800 = vsel %vm694, %v1799, %v1749
  %v1801 = vsel %vm696, %v1800, %v1753
  %v1802 = vsel %vm698, %v1801, %v1757
  %v1803 = vsel %vm700, %v1802, %v1761
  %v1804 = vsel %vm702, %v1803, %v1765
  %v1805 = vsel %vm704, %v1804, %v1769
  %v1806 = vsel %vm692, %v1718, %v1773
  %v1807 = vsel %vm694, %v1806, %v1777
  %v1808 = vsel %vm696, %v1807, %v1781
  %v1809 = vsel %vm698, %v1808, %v1785
  %v1810 = vsel %vm700, %v1809, %v1789
  %v1811 = vsel %vm702, %v1810, %v1793
  %v1812 = vsel %vm704, %v1811, %v1797
  %v1815 = vrot.slane %v1805, 4
  %v1816 = vrot.slane %v1812, 4
  %1819 = vst [vmem:[#allocation3 + $0x40] sm:$0xf0] %v1815
  %1820 = vst [vmem:[#allocation3 + $0x48] sm:$0xf0] %v1816
  %v1821 = vld [vmem:[#allocation2 + $0x2] sm:$0xff]
  %v1822 = vld [vmem:[#allocation2 + $0xa] sm:$0xff]
  %v1823 = vld [vmem:[#allocation2 + $0x1a] sm:$0xff]
  %v1824 = vld [vmem:[#allocation2 + $0x22] sm:$0xff]
  %v1825 = vld [vmem:[#allocation2 + $0x32] sm:$0xff]
  %v1826 = vld [vmem:[#allocation2 + $0x3a] sm:$0xff]
  %v1827 = vld [vmem:[#allocation2 + $0x4a] sm:$0xff]
  %v1828 = vld [vmem:[#allocation2 + $0x52] sm:$0xff]
  %v1829 = vrot.slane %v1825, 4
  %v1830 = vsel %vm92, %v1829, %v1821
  %v1831 = vrot.slane %v1821, 4
  %v1832 = vsel %vm92, %v1825, %v1831
  %v1834 = vunpack.c.l.s4 1983009808
  %v1835 = vunpack.c.0.s8 %v1834
  %v1836 = vperm.slane %v1830, %v1835
  %v1838 = vunpack.c.l.s4 1983009808
  %v1839 = vunpack.c.0.s8 %v1838
  %v1840 = vperm.slane %v1832, %v1839
  %v1841 = vrot.slane %v1827, 4
  %v1842 = vsel %vm92, %v1841, %v1823
  %v1843 = vrot.slane %v1823, 4
  %v1844 = vsel %vm92, %v1827, %v1843
  %v1846 = vunpack.c.l.s4 1983009808
  %v1847 = vunpack.c.0.s8 %v1846
  %v1848 = vperm.slane %v1842, %v1847
  %v1850 = vunpack.c.l.s4 1983009808
  %v1851 = vunpack.c.0.s8 %v1850
  %v1852 = vperm.slane %v1844, %v1851
  %v1853 = vrot.slane %v1848, 4
  %v1854 = vsel %vm92, %v1853, %v1836
  %v1855 = vrot.slane %v1836, 4
  %v1856 = vsel %vm92, %v1848, %v1855
  %v1858 = vunpack.c.l.s4 1934713408
  %v1859 = vunpack.c.0.s8 %v1858
  %v1860 = vperm.slane %v1854, %v1859
  %v1862 = vunpack.c.l.s4 1934713408
  %v1863 = vunpack.c.0.s8 %v1862
  %v1864 = vperm.slane %v1856, %v1863
  %v1865 = vrot.slane %v1852, 4
  %v1866 = vsel %vm92, %v1865, %v1840
  %v1867 = vrot.slane %v1840, 4
  %v1868 = vsel %vm92, %v1852, %v1867
  %v1870 = vunpack.c.l.s4 1934713408
  %v1871 = vunpack.c.0.s8 %v1870
  %v1872 = vperm.slane %v1866, %v1871
  %v1874 = vunpack.c.l.s4 1934713408
  %v1875 = vunpack.c.0.s8 %v1874
  %v1876 = vperm.slane %v1868, %v1875
  %v1877 = vrot.slane %v1860, 4
  %v1878 = vsel %vm92, 0.0, %v1877
  %v1879 = vrot.slane %v1864, 4
  %v1880 = vsel %vm92, 0.0, %v1879
  %v1881 = vrot.slane %v1872, 4
  %v1882 = vsel %vm92, 0.0, %v1881
  %v1883 = vrot.slane %v1876, 4
  %v1884 = vsel %vm92, 0.0, %v1883
  %v1885 = vrot.slane %v1826, 4
  %v1886 = vsel %vm92, %v1885, %v1822
  %v1887 = vrot.slane %v1822, 4
  %v1888 = vsel %vm92, %v1826, %v1887
  %v1890 = vunpack.c.l.s4 1983009808
  %v1891 = vunpack.c.0.s8 %v1890
  %v1892 = vperm.slane %v1886, %v1891
  %v1894 = vunpack.c.l.s4 1983009808
  %v1895 = vunpack.c.0.s8 %v1894
  %v1896 = vperm.slane %v1888, %v1895
  %v1897 = vrot.slane %v1828, 4
  %v1898 = vsel %vm92, %v1897, %v1824
  %v1899 = vrot.slane %v1824, 4
  %v1900 = vsel %vm92, %v1828, %v1899
  %v1902 = vunpack.c.l.s4 1983009808
  %v1903 = vunpack.c.0.s8 %v1902
  %v1904 = vperm.slane %v1898, %v1903
  %v1906 = vunpack.c.l.s4 1983009808
  %v1907 = vunpack.c.0.s8 %v1906
  %v1908 = vperm.slane %v1900, %v1907
  %v1909 = vrot.slane %v1904, 4
  %v1910 = vsel %vm92, %v1909, %v1892
  %v1911 = vrot.slane %v1892, 4
  %v1912 = vsel %vm92, %v1904, %v1911
  %v1914 = vunpack.c.l.s4 1934713408
  %v1915 = vunpack.c.0.s8 %v1914
  %v1916 = vperm.slane %v1910, %v1915
  %v1918 = vunpack.c.l.s4 1934713408
  %v1919 = vunpack.c.0.s8 %v1918
  %v1920 = vperm.slane %v1912, %v1919
  %v1921 = vrot.slane %v1908, 4
  %v1922 = vsel %vm92, %v1921, %v1896
  %v1923 = vrot.slane %v1896, 4
  %v1924 = vsel %vm92, %v1908, %v1923
  %v1926 = vunpack.c.l.s4 1934713408
  %v1927 = vunpack.c.0.s8 %v1926
  %v1928 = vperm.slane %v1922, %v1927
  %v1930 = vunpack.c.l.s4 1934713408
  %v1931 = vunpack.c.0.s8 %v1930
  %v1932 = vperm.slane %v1924, %v1931
  %v1933 = vrot.slane %v1916, 4
  %v1934 = vsel %vm92, 0.0, %v1933
  %v1935 = vrot.slane %v1920, 4
  %v1936 = vsel %vm92, 0.0, %v1935
  %v1937 = vrot.slane %v1928, 4
  %v1938 = vsel %vm92, 0.0, %v1937
  %v1939 = vrot.slane %v1932, 4
  %v1940 = vsel %vm92, 0.0, %v1939
  %1942 = vrot.lane.b32.xlu0 %v1878, 16
  %v1943 = vpop.permute.xlu0 %1942
  %1946 = vrot.lane.b32.xlu0 %v1864, 32
  %v1947 = vpop.permute.xlu0 %1946
  %1950 = vrot.lane.b32.xlu0 %v1880, 48
  %v1951 = vpop.permute.xlu0 %1950
  %1954 = vrot.lane.b32.xlu0 %v1872, 64
  %v1955 = vpop.permute.xlu0 %1954
  %1958 = vrot.lane.b32.xlu0 %v1882, 80
  %v1959 = vpop.permute.xlu0 %1958
  %1962 = vrot.lane.b32.xlu0 %v1876, 96
  %v1963 = vpop.permute.xlu0 %1962
  %1966 = vrot.lane.b32.xlu0 %v1884, 112
  %v1967 = vpop.permute.xlu0 %1966
  %1970 = vrot.lane.b32.xlu0 %v1934, 16
  %v1971 = vpop.permute.xlu0 %1970
  %1974 = vrot.lane.b32.xlu0 %v1920, 32
  %v1975 = vpop.permute.xlu0 %1974
  %1978 = vrot.lane.b32.xlu0 %v1936, 48
  %v1979 = vpop.permute.xlu0 %1978
  %1982 = vrot.lane.b32.xlu0 %v1928, 64
  %v1983 = vpop.permute.xlu0 %1982
  %1986 = vrot.lane.b32.xlu0 %v1938, 80
  %v1987 = vpop.permute.xlu0 %1986
  %1990 = vrot.lane.b32.xlu0 %v1932, 96
  %v1991 = vpop.permute.xlu0 %1990
  %1994 = vrot.lane.b32.xlu0 %v1940, 112
  %v1995 = vpop.permute.xlu0 %1994
  %v1997 = vsel %vm692, %v1860, %v1943
  %v1998 = vsel %vm694, %v1997, %v1947
  %v1999 = vsel %vm696, %v1998, %v1951
  %v2000 = vsel %vm698, %v1999, %v1955
  %v2001 = vsel %vm700, %v2000, %v1959
  %v2002 = vsel %vm702, %v2001, %v1963
  %v2003 = vsel %vm704, %v2002, %v1967
  %v2004 = vsel %vm692, %v1916, %v1971
  %v2005 = vsel %vm694, %v2004, %v1975
  %v2006 = vsel %vm696, %v2005, %v1979
  %v2007 = vsel %vm698, %v2006, %v1983
  %v2008 = vsel %vm700, %v2007, %v1987
  %v2009 = vsel %vm702, %v2008, %v1991
  %v2010 = vsel %vm704, %v2009, %v1995
  %2011 = vst [vmem:[#allocation3 + $0x60] sm:$0xf] %v2003
  %2012 = vst [vmem:[#allocation3 + $0x68] sm:$0xf] %v2010
  %v2013 = vld [vmem:[#allocation2 + $0x2] sm:$0xff]
  %v2014 = vld [vmem:[#allocation2 + $0xa] sm:$0xff]
  %v2015 = vld [vmem:[#allocation2 + $0x1a] sm:$0xff]
  %v2016 = vld [vmem:[#allocation2 + $0x22] sm:$0xff]
  %v2017 = vld [vmem:[#allocation2 + $0x32] sm:$0xff]
  %v2018 = vld [vmem:[#allocation2 + $0x3a] sm:$0xff]
  %v2019 = vld [vmem:[#allocation2 + $0x4a] sm:$0xff]
  %v2020 = vld [vmem:[#allocation2 + $0x52] sm:$0xff]
  %2029 = vrot.lane.b32.xlu0 %v2013, 127
  %v2030 = vpop.permute.xlu0 %2029
  %2031 = vrot.lane.b32.xlu0 %v2014, 127
  %v2032 = vpop.permute.xlu0 %2031
  %2033 = vrot.lane.b32.xlu0 %v2015, 127
  %v2034 = vpop.permute.xlu0 %2033
  %2035 = vrot.lane.b32.xlu0 %v2016, 127
  %v2036 = vpop.permute.xlu0 %2035
  %2037 = vrot.lane.b32.xlu0 %v2017, 127
  %v2038 = vpop.permute.xlu0 %2037
  %2039 = vrot.lane.b32.xlu0 %v2018, 127
  %v2040 = vpop.permute.xlu0 %2039
  %2041 = vrot.lane.b32.xlu0 %v2019, 127
  %v2042 = vpop.permute.xlu0 %2041
  %2043 = vrot.lane.b32.xlu0 %v2020, 127
  %v2044 = vpop.permute.xlu0 %2043
  %v2053 = vrot.slane %v2038, 4
  %v2054 = vsel %vm92, %v2053, %v2030
  %v2055 = vrot.slane %v2030, 4
  %v2056 = vsel %vm92, %v2038, %v2055
  %v2058 = vunpack.c.l.s4 1983009808
  %v2059 = vunpack.c.0.s8 %v2058
  %v2060 = vperm.slane %v2054, %v2059
  %v2062 = vunpack.c.l.s4 1983009808
  %v2063 = vunpack.c.0.s8 %v2062
  %v2064 = vperm.slane %v2056, %v2063
  %v2065 = vrot.slane %v2042, 4
  %v2066 = vsel %vm92, %v2065, %v2034
  %v2067 = vrot.slane %v2034, 4
  %v2068 = vsel %vm92, %v2042, %v2067
  %v2070 = vunpack.c.l.s4 1983009808
  %v2071 = vunpack.c.0.s8 %v2070
  %v2072 = vperm.slane %v2066, %v2071
  %v2074 = vunpack.c.l.s4 1983009808
  %v2075 = vunpack.c.0.s8 %v2074
  %v2076 = vperm.slane %v2068, %v2075
  %v2077 = vrot.slane %v2072, 4
  %v2078 = vsel %vm92, %v2077, %v2060
  %v2079 = vrot.slane %v2060, 4
  %v2080 = vsel %vm92, %v2072, %v2079
  %v2082 = vunpack.c.l.s4 1934713408
  %v2083 = vunpack.c.0.s8 %v2082
  %v2084 = vperm.slane %v2078, %v2083
  %v2086 = vunpack.c.l.s4 1934713408
  %v2087 = vunpack.c.0.s8 %v2086
  %v2088 = vperm.slane %v2080, %v2087
  %v2089 = vrot.slane %v2076, 4
  %v2090 = vsel %vm92, %v2089, %v2064
  %v2091 = vrot.slane %v2064, 4
  %v2092 = vsel %vm92, %v2076, %v2091
  %v2094 = vunpack.c.l.s4 1934713408
  %v2095 = vunpack.c.0.s8 %v2094
  %v2096 = vperm.slane %v2090, %v2095
  %v2098 = vunpack.c.l.s4 1934713408
  %v2099 = vunpack.c.0.s8 %v2098
  %v2100 = vperm.slane %v2092, %v2099
  %v2101 = vrot.slane %v2084, 4
  %v2102 = vsel %vm92, 0.0, %v2101
  %v2103 = vrot.slane %v2088, 4
  %v2104 = vsel %vm92, 0.0, %v2103
  %v2105 = vrot.slane %v2096, 4
  %v2106 = vsel %vm92, 0.0, %v2105
  %v2107 = vrot.slane %v2100, 4
  %v2108 = vsel %vm92, 0.0, %v2107
  %v2109 = vrot.slane %v2040, 4
  %v2110 = vsel %vm92, %v2109, %v2032
  %v2111 = vrot.slane %v2032, 4
  %v2112 = vsel %vm92, %v2040, %v2111
  %v2114 = vunpack.c.l.s4 1983009808
  %v2115 = vunpack.c.0.s8 %v2114
  %v2116 = vperm.slane %v2110, %v2115
  %v2118 = vunpack.c.l.s4 1983009808
  %v2119 = vunpack.c.0.s8 %v2118
  %v2120 = vperm.slane %v2112, %v2119
  %v2121 = vrot.slane %v2044, 4
  %v2122 = vsel %vm92, %v2121, %v2036
  %v2123 = vrot.slane %v2036, 4
  %v2124 = vsel %vm92, %v2044, %v2123
  %v2126 = vunpack.c.l.s4 1983009808
  %v2127 = vunpack.c.0.s8 %v2126
  %v2128 = vperm.slane %v2122, %v2127
  %v2130 = vunpack.c.l.s4 1983009808
  %v2131 = vunpack.c.0.s8 %v2130
  %v2132 = vperm.slane %v2124, %v2131
  %v2133 = vrot.slane %v2128, 4
  %v2134 = vsel %vm92, %v2133, %v2116
  %v2135 = vrot.slane %v2116, 4
  %v2136 = vsel %vm92, %v2128, %v2135
  %v2138 = vunpack.c.l.s4 1934713408
  %v2139 = vunpack.c.0.s8 %v2138
  %v2140 = vperm.slane %v2134, %v2139
  %v2142 = vunpack.c.l.s4 1934713408
  %v2143 = vunpack.c.0.s8 %v2142
  %v2144 = vperm.slane %v2136, %v2143
  %v2145 = vrot.slane %v2132, 4
  %v2146 = vsel %vm92, %v2145, %v2120
  %v2147 = vrot.slane %v2120, 4
  %v2148 = vsel %vm92, %v2132, %v2147
  %v2150 = vunpack.c.l.s4 1934713408
  %v2151 = vunpack.c.0.s8 %v2150
  %v2152 = vperm.slane %v2146, %v2151
  %v2154 = vunpack.c.l.s4 1934713408
  %v2155 = vunpack.c.0.s8 %v2154
  %v2156 = vperm.slane %v2148, %v2155
  %v2157 = vrot.slane %v2140, 4
  %v2158 = vsel %vm92, 0.0, %v2157
  %v2159 = vrot.slane %v2144, 4
  %v2160 = vsel %vm92, 0.0, %v2159
  %v2161 = vrot.slane %v2152, 4
  %v2162 = vsel %vm92, 0.0, %v2161
  %v2163 = vrot.slane %v2156, 4
  %v2164 = vsel %vm92, 0.0, %v2163
  %2166 = vrot.lane.b32.xlu0 %v2102, 16
  %v2167 = vpop.permute.xlu0 %2166
  %2170 = vrot.lane.b32.xlu0 %v2088, 32
  %v2171 = vpop.permute.xlu0 %2170
  %2174 = vrot.lane.b32.xlu0 %v2104, 48
  %v2175 = vpop.permute.xlu0 %2174
  %2178 = vrot.lane.b32.xlu0 %v2096, 64
  %v2179 = vpop.permute.xlu0 %2178
  %2182 = vrot.lane.b32.xlu0 %v2106, 80
  %v2183 = vpop.permute.xlu0 %2182
  %2186 = vrot.lane.b32.xlu0 %v2100, 96
  %v2187 = vpop.permute.xlu0 %2186
  %2190 = vrot.lane.b32.xlu0 %v2108, 112
  %v2191 = vpop.permute.xlu0 %2190
  %2194 = vrot.lane.b32.xlu0 %v2158, 16
  %v2195 = vpop.permute.xlu0 %2194
  %2198 = vrot.lane.b32.xlu0 %v2144, 32
  %v2199 = vpop.permute.xlu0 %2198
  %2202 = vrot.lane.b32.xlu0 %v2160, 48
  %v2203 = vpop.permute.xlu0 %2202
  %2206 = vrot.lane.b32.xlu0 %v2152, 64
  %v2207 = vpop.permute.xlu0 %2206
  %2210 = vrot.lane.b32.xlu0 %v2162, 80
  %v2211 = vpop.permute.xlu0 %2210
  %2214 = vrot.lane.b32.xlu0 %v2156, 96
  %v2215 = vpop.permute.xlu0 %2214
  %2218 = vrot.lane.b32.xlu0 %v2164, 112
  %v2219 = vpop.permute.xlu0 %2218
  %v2221 = vsel %vm692, %v2084, %v2167
  %v2222 = vsel %vm694, %v2221, %v2171
  %v2223 = vsel %vm696, %v2222, %v2175
  %v2224 = vsel %vm698, %v2223, %v2179
  %v2225 = vsel %vm700, %v2224, %v2183
  %v2226 = vsel %vm702, %v2225, %v2187
  %v2227 = vsel %vm704, %v2226, %v2191
  %v2228 = vsel %vm692, %v2140, %v2195
  %v2229 = vsel %vm694, %v2228, %v2199
  %v2230 = vsel %vm696, %v2229, %v2203
  %v2231 = vsel %vm698, %v2230, %v2207
  %v2232 = vsel %vm700, %v2231, %v2211
  %v2233 = vsel %vm702, %v2232, %v2215
  %v2234 = vsel %vm704, %v2233, %v2219
  %v2237 = vrot.slane %v2227, 4
  %v2238 = vrot.slane %v2234, 4
  %2241 = vst [vmem:[#allocation3 + $0x60] sm:$0xf0] %v2237
  %2242 = vst [vmem:[#allocation3 + $0x68] sm:$0xf0] %v2238
  %v2243 = vld [vmem:[#allocation2 + $0x2] sm:$0xff]
  %v2244 = vld [vmem:[#allocation2 + $0xa] sm:$0xff]
  %v2245 = vld [vmem:[#allocation2 + $0x1a] sm:$0xff]
  %v2246 = vld [vmem:[#allocation2 + $0x22] sm:$0xff]
  %v2247 = vld [vmem:[#allocation2 + $0x32] sm:$0xff]
  %v2248 = vld [vmem:[#allocation2 + $0x3a] sm:$0xff]
  %v2249 = vld [vmem:[#allocation2 + $0x4a] sm:$0xff]
  %v2250 = vld [vmem:[#allocation2 + $0x52] sm:$0xff]
  %2259 = vrot.lane.b32.xlu0 %v2243, 126
  %v2260 = vpop.permute.xlu0 %2259
  %2261 = vrot.lane.b32.xlu0 %v2244, 126
  %v2262 = vpop.permute.xlu0 %2261
  %2263 = vrot.lane.b32.xlu0 %v2245, 126
  %v2264 = vpop.permute.xlu0 %2263
  %2265 = vrot.lane.b32.xlu0 %v2246, 126
  %v2266 = vpop.permute.xlu0 %2265
  %2267 = vrot.lane.b32.xlu0 %v2247, 126
  %v2268 = vpop.permute.xlu0 %2267
  %2269 = vrot.lane.b32.xlu0 %v2248, 126
  %v2270 = vpop.permute.xlu0 %2269
  %2271 = vrot.lane.b32.xlu0 %v2249, 126
  %v2272 = vpop.permute.xlu0 %2271
  %2273 = vrot.lane.b32.xlu0 %v2250, 126
  %v2274 = vpop.permute.xlu0 %2273
  %v2283 = vrot.slane %v2268, 4
  %v2284 = vsel %vm92, %v2283, %v2260
  %v2285 = vrot.slane %v2260, 4
  %v2286 = vsel %vm92, %v2268, %v2285
  %v2288 = vunpack.c.l.s4 1983009808
  %v2289 = vunpack.c.0.s8 %v2288
  %v2290 = vperm.slane %v2284, %v2289
  %v2292 = vunpack.c.l.s4 1983009808
  %v2293 = vunpack.c.0.s8 %v2292
  %v2294 = vperm.slane %v2286, %v2293
  %v2295 = vrot.slane %v2272, 4
  %v2296 = vsel %vm92, %v2295, %v2264
  %v2297 = vrot.slane %v2264, 4
  %v2298 = vsel %vm92, %v2272, %v2297
  %v2300 = vunpack.c.l.s4 1983009808
  %v2301 = vunpack.c.0.s8 %v2300
  %v2302 = vperm.slane %v2296, %v2301
  %v2304 = vunpack.c.l.s4 1983009808
  %v2305 = vunpack.c.0.s8 %v2304
  %v2306 = vperm.slane %v2298, %v2305
  %v2307 = vrot.slane %v2302, 4
  %v2308 = vsel %vm92, %v2307, %v2290
  %v2309 = vrot.slane %v2290, 4
  %v2310 = vsel %vm92, %v2302, %v2309
  %v2312 = vunpack.c.l.s4 1934713408
  %v2313 = vunpack.c.0.s8 %v2312
  %v2314 = vperm.slane %v2308, %v2313
  %v2316 = vunpack.c.l.s4 1934713408
  %v2317 = vunpack.c.0.s8 %v2316
  %v2318 = vperm.slane %v2310, %v2317
  %v2319 = vrot.slane %v2306, 4
  %v2320 = vsel %vm92, %v2319, %v2294
  %v2321 = vrot.slane %v2294, 4
  %v2322 = vsel %vm92, %v2306, %v2321
  %v2324 = vunpack.c.l.s4 1934713408
  %v2325 = vunpack.c.0.s8 %v2324
  %v2326 = vperm.slane %v2320, %v2325
  %v2328 = vunpack.c.l.s4 1934713408
  %v2329 = vunpack.c.0.s8 %v2328
  %v2330 = vperm.slane %v2322, %v2329
  %v2331 = vrot.slane %v2314, 4
  %v2332 = vsel %vm92, 0.0, %v2331
  %v2333 = vrot.slane %v2318, 4
  %v2334 = vsel %vm92, 0.0, %v2333
  %v2335 = vrot.slane %v2326, 4
  %v2336 = vsel %vm92, 0.0, %v2335
  %v2337 = vrot.slane %v2330, 4
  %v2338 = vsel %vm92, 0.0, %v2337
  %v2339 = vrot.slane %v2270, 4
  %v2340 = vsel %vm92, %v2339, %v2262
  %v2341 = vrot.slane %v2262, 4
  %v2342 = vsel %vm92, %v2270, %v2341
  %v2344 = vunpack.c.l.s4 1983009808
  %v2345 = vunpack.c.0.s8 %v2344
  %v2346 = vperm.slane %v2340, %v2345
  %v2348 = vunpack.c.l.s4 1983009808
  %v2349 = vunpack.c.0.s8 %v2348
  %v2350 = vperm.slane %v2342, %v2349
  %v2351 = vrot.slane %v2274, 4
  %v2352 = vsel %vm92, %v2351, %v2266
  %v2353 = vrot.slane %v2266, 4
  %v2354 = vsel %vm92, %v2274, %v2353
  %v2356 = vunpack.c.l.s4 1983009808
  %v2357 = vunpack.c.0.s8 %v2356
  %v2358 = vperm.slane %v2352, %v2357
  %v2360 = vunpack.c.l.s4 1983009808
  %v2361 = vunpack.c.0.s8 %v2360
  %v2362 = vperm.slane %v2354, %v2361
  %v2363 = vrot.slane %v2358, 4
  %v2364 = vsel %vm92, %v2363, %v2346
  %v2365 = vrot.slane %v2346, 4
  %v2366 = vsel %vm92, %v2358, %v2365
  %v2368 = vunpack.c.l.s4 1934713408
  %v2369 = vunpack.c.0.s8 %v2368
  %v2370 = vperm.slane %v2364, %v2369
  %v2372 = vunpack.c.l.s4 1934713408
  %v2373 = vunpack.c.0.s8 %v2372
  %v2374 = vperm.slane %v2366, %v2373
  %v2375 = vrot.slane %v2362, 4
  %v2376 = vsel %vm92, %v2375, %v2350
  %v2377 = vrot.slane %v2350, 4
  %v2378 = vsel %vm92, %v2362, %v2377
  %v2380 = vunpack.c.l.s4 1934713408
  %v2381 = vunpack.c.0.s8 %v2380
  %v2382 = vperm.slane %v2376, %v2381
  %v2384 = vunpack.c.l.s4 1934713408
  %v2385 = vunpack.c.0.s8 %v2384
  %v2386 = vperm.slane %v2378, %v2385
  %v2387 = vrot.slane %v2370, 4
  %v2388 = vsel %vm92, 0.0, %v2387
  %v2389 = vrot.slane %v2374, 4
  %v2390 = vsel %vm92, 0.0, %v2389
  %v2391 = vrot.slane %v2382, 4
  %v2392 = vsel %vm92, 0.0, %v2391
  %v2393 = vrot.slane %v2386, 4
  %v2394 = vsel %vm92, 0.0, %v2393
  %2396 = vrot.lane.b32.xlu0 %v2332, 16
  %v2397 = vpop.permute.xlu0 %2396
  %2400 = vrot.lane.b32.xlu0 %v2318, 32
  %v2401 = vpop.permute.xlu0 %2400
  %2404 = vrot.lane.b32.xlu0 %v2334, 48
  %v2405 = vpop.permute.xlu0 %2404
  %2408 = vrot.lane.b32.xlu0 %v2326, 64
  %v2409 = vpop.permute.xlu0 %2408
  %2412 = vrot.lane.b32.xlu0 %v2336, 80
  %v2413 = vpop.permute.xlu0 %2412
  %2416 = vrot.lane.b32.xlu0 %v2330, 96
  %v2417 = vpop.permute.xlu0 %2416
  %2420 = vrot.lane.b32.xlu0 %v2338, 112
  %v2421 = vpop.permute.xlu0 %2420
  %2424 = vrot.lane.b32.xlu0 %v2388, 16
  %v2425 = vpop.permute.xlu0 %2424
  %2428 = vrot.lane.b32.xlu0 %v2374, 32
  %v2429 = vpop.permute.xlu0 %2428
  %2432 = vrot.lane.b32.xlu0 %v2390, 48
  %v2433 = vpop.permute.xlu0 %2432
  %2436 = vrot.lane.b32.xlu0 %v2382, 64
  %v2437 = vpop.permute.xlu0 %2436
  %2440 = vrot.lane.b32.xlu0 %v2392, 80
  %v2441 = vpop.permute.xlu0 %2440
  %2444 = vrot.lane.b32.xlu0 %v2386, 96
  %v2445 = vpop.permute.xlu0 %2444
  %2448 = vrot.lane.b32.xlu0 %v2394, 112
  %v2449 = vpop.permute.xlu0 %2448
  %v2451 = vsel %vm692, %v2314, %v2397
  %v2452 = vsel %vm694, %v2451, %v2401
  %v2453 = vsel %vm696, %v2452, %v2405
  %v2454 = vsel %vm698, %v2453, %v2409
  %v2455 = vsel %vm700, %v2454, %v2413
  %v2456 = vsel %vm702, %v2455, %v2417
  %v2457 = vsel %vm704, %v2456, %v2421
  %v2458 = vsel %vm692, %v2370, %v2425
  %v2459 = vsel %vm694, %v2458, %v2429
  %v2460 = vsel %vm696, %v2459, %v2433
  %v2461 = vsel %vm698, %v2460, %v2437
  %v2462 = vsel %vm700, %v2461, %v2441
  %v2463 = vsel %vm702, %v2462, %v2445
  %v2464 = vsel %vm704, %v2463, %v2449
  %2465 = vst [vmem:[#allocation3 + $0x80] sm:$0xf] %v2457
  %2466 = vst [vmem:[#allocation3 + $0x88] sm:$0xf] %v2464
  %v2467 = vld [vmem:[%s507] sm:$0xff]
  %v2468 = vld [vmem:[%s507 + $0x8] sm:$0xff]
  %v2469 = vld [vmem:[%s507 + $0x18] sm:$0xff]
  %v2470 = vld [vmem:[%s507 + $0x20] sm:$0xff]
  %v2471 = vld [vmem:[%s507 + $0x30] sm:$0xff]
  %v2472 = vld [vmem:[%s507 + $0x38] sm:$0xff]
  %v2473 = vld [vmem:[%s507 + $0x48] sm:$0xff]
  %v2474 = vld [vmem:[%s507 + $0x50] sm:$0xff]
  %v2475 = vrot.slane %v2471, 4
  %v2476 = vsel %vm92, %v2475, %v2467
  %v2477 = vrot.slane %v2467, 4
  %v2478 = vsel %vm92, %v2471, %v2477
  %v2480 = vunpack.c.l.s4 1983009808
  %v2481 = vunpack.c.0.s8 %v2480
  %v2482 = vperm.slane %v2476, %v2481
  %v2484 = vunpack.c.l.s4 1983009808
  %v2485 = vunpack.c.0.s8 %v2484
  %v2486 = vperm.slane %v2478, %v2485
  %v2487 = vrot.slane %v2473, 4
  %v2488 = vsel %vm92, %v2487, %v2469
  %v2489 = vrot.slane %v2469, 4
  %v2490 = vsel %vm92, %v2473, %v2489
  %v2492 = vunpack.c.l.s4 1983009808
  %v2493 = vunpack.c.0.s8 %v2492
  %v2494 = vperm.slane %v2488, %v2493
  %v2496 = vunpack.c.l.s4 1983009808
  %v2497 = vunpack.c.0.s8 %v2496
  %v2498 = vperm.slane %v2490, %v2497
  %v2499 = vrot.slane %v2494, 4
  %v2500 = vsel %vm92, %v2499, %v2482
  %v2501 = vrot.slane %v2482, 4
  %v2502 = vsel %vm92, %v2494, %v2501
  %v2504 = vunpack.c.l.s4 1934713408
  %v2505 = vunpack.c.0.s8 %v2504
  %v2506 = vperm.slane %v2500, %v2505
  %v2508 = vunpack.c.l.s4 1934713408
  %v2509 = vunpack.c.0.s8 %v2508
  %v2510 = vperm.slane %v2502, %v2509
  %v2511 = vrot.slane %v2498, 4
  %v2512 = vsel %vm92, %v2511, %v2486
  %v2513 = vrot.slane %v2486, 4
  %v2514 = vsel %vm92, %v2498, %v2513
  %v2516 = vunpack.c.l.s4 1934713408
  %v2517 = vunpack.c.0.s8 %v2516
  %v2518 = vperm.slane %v2512, %v2517
  %v2520 = vunpack.c.l.s4 1934713408
  %v2521 = vunpack.c.0.s8 %v2520
  %v2522 = vperm.slane %v2514, %v2521
  %v2523 = vrot.slane %v2506, 4
  %v2524 = vsel %vm92, 0.0, %v2523
  %v2525 = vrot.slane %v2510, 4
  %v2526 = vsel %vm92, 0.0, %v2525
  %v2527 = vrot.slane %v2518, 4
  %v2528 = vsel %vm92, 0.0, %v2527
  %v2529 = vrot.slane %v2522, 4
  %v2530 = vsel %vm92, 0.0, %v2529
  %v2531 = vrot.slane %v2472, 4
  %v2532 = vsel %vm92, %v2531, %v2468
  %v2533 = vrot.slane %v2468, 4
  %v2534 = vsel %vm92, %v2472, %v2533
  %v2536 = vunpack.c.l.s4 1983009808
  %v2537 = vunpack.c.0.s8 %v2536
  %v2538 = vperm.slane %v2532, %v2537
  %v2540 = vunpack.c.l.s4 1983009808
  %v2541 = vunpack.c.0.s8 %v2540
  %v2542 = vperm.slane %v2534, %v2541
  %v2543 = vrot.slane %v2474, 4
  %v2544 = vsel %vm92, %v2543, %v2470
  %v2545 = vrot.slane %v2470, 4
  %v2546 = vsel %vm92, %v2474, %v2545
  %v2548 = vunpack.c.l.s4 1983009808
  %v2549 = vunpack.c.0.s8 %v2548
  %v2550 = vperm.slane %v2544, %v2549
  %v2552 = vunpack.c.l.s4 1983009808
  %v2553 = vunpack.c.0.s8 %v2552
  %v2554 = vperm.slane %v2546, %v2553
  %v2555 = vrot.slane %v2550, 4
  %v2556 = vsel %vm92, %v2555, %v2538
  %v2557 = vrot.slane %v2538, 4
  %v2558 = vsel %vm92, %v2550, %v2557
  %v2560 = vunpack.c.l.s4 1934713408
  %v2561 = vunpack.c.0.s8 %v2560
  %v2562 = vperm.slane %v2556, %v2561
  %v2564 = vunpack.c.l.s4 1934713408
  %v2565 = vunpack.c.0.s8 %v2564
  %v2566 = vperm.slane %v2558, %v2565
  %v2567 = vrot.slane %v2554, 4
  %v2568 = vsel %vm92, %v2567, %v2542
  %v2569 = vrot.slane %v2542, 4
  %v2570 = vsel %vm92, %v2554, %v2569
  %v2572 = vunpack.c.l.s4 1934713408
  %v2573 = vunpack.c.0.s8 %v2572
  %v2574 = vperm.slane %v2568, %v2573
  %v2576 = vunpack.c.l.s4 1934713408
  %v2577 = vunpack.c.0.s8 %v2576
  %v2578 = vperm.slane %v2570, %v2577
  %v2579 = vrot.slane %v2562, 4
  %v2580 = vsel %vm92, 0.0, %v2579
  %v2581 = vrot.slane %v2566, 4
  %v2582 = vsel %vm92, 0.0, %v2581
  %v2583 = vrot.slane %v2574, 4
  %v2584 = vsel %vm92, 0.0, %v2583
  %v2585 = vrot.slane %v2578, 4
  %v2586 = vsel %vm92, 0.0, %v2585
  %2588 = vrot.lane.b32.xlu0 %v2524, 16
  %v2589 = vpop.permute.xlu0 %2588
  %2592 = vrot.lane.b32.xlu0 %v2510, 32
  %v2593 = vpop.permute.xlu0 %2592
  %2596 = vrot.lane.b32.xlu0 %v2526, 48
  %v2597 = vpop.permute.xlu0 %2596
  %2600 = vrot.lane.b32.xlu0 %v2518, 64
  %v2601 = vpop.permute.xlu0 %2600
  %2604 = vrot.lane.b32.xlu0 %v2528, 80
  %v2605 = vpop.permute.xlu0 %2604
  %2608 = vrot.lane.b32.xlu0 %v2522, 96
  %v2609 = vpop.permute.xlu0 %2608
  %2612 = vrot.lane.b32.xlu0 %v2530, 112
  %v2613 = vpop.permute.xlu0 %2612
  %2616 = vrot.lane.b32.xlu0 %v2580, 16
  %v2617 = vpop.permute.xlu0 %2616
  %2620 = vrot.lane.b32.xlu0 %v2566, 32
  %v2621 = vpop.permute.xlu0 %2620
  %2624 = vrot.lane.b32.xlu0 %v2582, 48
  %v2625 = vpop.permute.xlu0 %2624
  %2628 = vrot.lane.b32.xlu0 %v2574, 64
  %v2629 = vpop.permute.xlu0 %2628
  %2632 = vrot.lane.b32.xlu0 %v2584, 80
  %v2633 = vpop.permute.xlu0 %2632
  %2636 = vrot.lane.b32.xlu0 %v2578, 96
  %v2637 = vpop.permute.xlu0 %2636
  %2640 = vrot.lane.b32.xlu0 %v2586, 112
  %v2641 = vpop.permute.xlu0 %2640
  %v2643 = vsel %vm692, %v2506, %v2589
  %v2644 = vsel %vm694, %v2643, %v2593
  %v2645 = vsel %vm696, %v2644, %v2597
  %v2646 = vsel %vm698, %v2645, %v2601
  %v2647 = vsel %vm700, %v2646, %v2605
  %v2648 = vsel %vm702, %v2647, %v2609
  %v2649 = vsel %vm704, %v2648, %v2613
  %v2650 = vsel %vm692, %v2562, %v2617
  %v2651 = vsel %vm694, %v2650, %v2621
  %v2652 = vsel %vm696, %v2651, %v2625
  %v2653 = vsel %vm698, %v2652, %v2629
  %v2654 = vsel %vm700, %v2653, %v2633
  %v2655 = vsel %vm702, %v2654, %v2637
  %v2656 = vsel %vm704, %v2655, %v2641
  %2657 = vst [vmem:[#allocation3 + $0x10] sm:$0xf] %v2649
  %2658 = vst [vmem:[#allocation3 + $0x18] sm:$0xf] %v2656
  %v2659 = vld [vmem:[%s507] sm:$0xff]
  %v2660 = vld [vmem:[%s507 + $0x8] sm:$0xff]
  %v2661 = vld [vmem:[%s507 + $0x18] sm:$0xff]
  %v2662 = vld [vmem:[%s507 + $0x20] sm:$0xff]
  %v2663 = vld [vmem:[%s507 + $0x30] sm:$0xff]
  %v2664 = vld [vmem:[%s507 + $0x38] sm:$0xff]
  %v2665 = vld [vmem:[%s507 + $0x48] sm:$0xff]
  %v2666 = vld [vmem:[%s507 + $0x50] sm:$0xff]
  %2675 = vrot.lane.b32.xlu0 %v2659, 127
  %v2676 = vpop.permute.xlu0 %2675
  %2677 = vrot.lane.b32.xlu0 %v2660, 127
  %v2678 = vpop.permute.xlu0 %2677
  %2679 = vrot.lane.b32.xlu0 %v2661, 127
  %v2680 = vpop.permute.xlu0 %2679
  %2681 = vrot.lane.b32.xlu0 %v2662, 127
  %v2682 = vpop.permute.xlu0 %2681
  %2683 = vrot.lane.b32.xlu0 %v2663, 127
  %v2684 = vpop.permute.xlu0 %2683
  %2685 = vrot.lane.b32.xlu0 %v2664, 127
  %v2686 = vpop.permute.xlu0 %2685
  %2687 = vrot.lane.b32.xlu0 %v2665, 127
  %v2688 = vpop.permute.xlu0 %2687
  %2689 = vrot.lane.b32.xlu0 %v2666, 127
  %v2690 = vpop.permute.xlu0 %2689
  %v2699 = vrot.slane %v2684, 4
  %v2700 = vsel %vm92, %v2699, %v2676
  %v2701 = vrot.slane %v2676, 4
  %v2702 = vsel %vm92, %v2684, %v2701
  %v2704 = vunpack.c.l.s4 1983009808
  %v2705 = vunpack.c.0.s8 %v2704
  %v2706 = vperm.slane %v2700, %v2705
  %v2708 = vunpack.c.l.s4 1983009808
  %v2709 = vunpack.c.0.s8 %v2708
  %v2710 = vperm.slane %v2702, %v2709
  %v2711 = vrot.slane %v2688, 4
  %v2712 = vsel %vm92, %v2711, %v2680
  %v2713 = vrot.slane %v2680, 4
  %v2714 = vsel %vm92, %v2688, %v2713
  %v2716 = vunpack.c.l.s4 1983009808
  %v2717 = vunpack.c.0.s8 %v2716
  %v2718 = vperm.slane %v2712, %v2717
  %v2720 = vunpack.c.l.s4 1983009808
  %v2721 = vunpack.c.0.s8 %v2720
  %v2722 = vperm.slane %v2714, %v2721
  %v2723 = vrot.slane %v2718, 4
  %v2724 = vsel %vm92, %v2723, %v2706
  %v2725 = vrot.slane %v2706, 4
  %v2726 = vsel %vm92, %v2718, %v2725
  %v2728 = vunpack.c.l.s4 1934713408
  %v2729 = vunpack.c.0.s8 %v2728
  %v2730 = vperm.slane %v2724, %v2729
  %v2732 = vunpack.c.l.s4 1934713408
  %v2733 = vunpack.c.0.s8 %v2732
  %v2734 = vperm.slane %v2726, %v2733
  %v2735 = vrot.slane %v2722, 4
  %v2736 = vsel %vm92, %v2735, %v2710
  %v2737 = vrot.slane %v2710, 4
  %v2738 = vsel %vm92, %v2722, %v2737
  %v2740 = vunpack.c.l.s4 1934713408
  %v2741 = vunpack.c.0.s8 %v2740
  %v2742 = vperm.slane %v2736, %v2741
  %v2744 = vunpack.c.l.s4 1934713408
  %v2745 = vunpack.c.0.s8 %v2744
  %v2746 = vperm.slane %v2738, %v2745
  %v2747 = vrot.slane %v2730, 4
  %v2748 = vsel %vm92, 0.0, %v2747
  %v2749 = vrot.slane %v2734, 4
  %v2750 = vsel %vm92, 0.0, %v2749
  %v2751 = vrot.slane %v2742, 4
  %v2752 = vsel %vm92, 0.0, %v2751
  %v2753 = vrot.slane %v2746, 4
  %v2754 = vsel %vm92, 0.0, %v2753
  %v2755 = vrot.slane %v2686, 4
  %v2756 = vsel %vm92, %v2755, %v2678
  %v2757 = vrot.slane %v2678, 4
  %v2758 = vsel %vm92, %v2686, %v2757
  %v2760 = vunpack.c.l.s4 1983009808
  %v2761 = vunpack.c.0.s8 %v2760
  %v2762 = vperm.slane %v2756, %v2761
  %v2764 = vunpack.c.l.s4 1983009808
  %v2765 = vunpack.c.0.s8 %v2764
  %v2766 = vperm.slane %v2758, %v2765
  %v2767 = vrot.slane %v2690, 4
  %v2768 = vsel %vm92, %v2767, %v2682
  %v2769 = vrot.slane %v2682, 4
  %v2770 = vsel %vm92, %v2690, %v2769
  %v2772 = vunpack.c.l.s4 1983009808
  %v2773 = vunpack.c.0.s8 %v2772
  %v2774 = vperm.slane %v2768, %v2773
  %v2776 = vunpack.c.l.s4 1983009808
  %v2777 = vunpack.c.0.s8 %v2776
  %v2778 = vperm.slane %v2770, %v2777
  %v2779 = vrot.slane %v2774, 4
  %v2780 = vsel %vm92, %v2779, %v2762
  %v2781 = vrot.slane %v2762, 4
  %v2782 = vsel %vm92, %v2774, %v2781
  %v2784 = vunpack.c.l.s4 1934713408
  %v2785 = vunpack.c.0.s8 %v2784
  %v2786 = vperm.slane %v2780, %v2785
  %v2788 = vunpack.c.l.s4 1934713408
  %v2789 = vunpack.c.0.s8 %v2788
  %v2790 = vperm.slane %v2782, %v2789
  %v2791 = vrot.slane %v2778, 4
  %v2792 = vsel %vm92, %v2791, %v2766
  %v2793 = vrot.slane %v2766, 4
  %v2794 = vsel %vm92, %v2778, %v2793
  %v2796 = vunpack.c.l.s4 1934713408
  %v2797 = vunpack.c.0.s8 %v2796
  %v2798 = vperm.slane %v2792, %v2797
  %v2800 = vunpack.c.l.s4 1934713408
  %v2801 = vunpack.c.0.s8 %v2800
  %v2802 = vperm.slane %v2794, %v2801
  %v2803 = vrot.slane %v2786, 4
  %v2804 = vsel %vm92, 0.0, %v2803
  %v2805 = vrot.slane %v2790, 4
  %v2806 = vsel %vm92, 0.0, %v2805
  %v2807 = vrot.slane %v2798, 4
  %v2808 = vsel %vm92, 0.0, %v2807
  %v2809 = vrot.slane %v2802, 4
  %v2810 = vsel %vm92, 0.0, %v2809
  %2812 = vrot.lane.b32.xlu0 %v2748, 16
  %v2813 = vpop.permute.xlu0 %2812
  %2816 = vrot.lane.b32.xlu0 %v2734, 32
  %v2817 = vpop.permute.xlu0 %2816
  %2820 = vrot.lane.b32.xlu0 %v2750, 48
  %v2821 = vpop.permute.xlu0 %2820
  %2824 = vrot.lane.b32.xlu0 %v2742, 64
  %v2825 = vpop.permute.xlu0 %2824
  %2828 = vrot.lane.b32.xlu0 %v2752, 80
  %v2829 = vpop.permute.xlu0 %2828
  %2832 = vrot.lane.b32.xlu0 %v2746, 96
  %v2833 = vpop.permute.xlu0 %2832
  %2836 = vrot.lane.b32.xlu0 %v2754, 112
  %v2837 = vpop.permute.xlu0 %2836
  %2840 = vrot.lane.b32.xlu0 %v2804, 16
  %v2841 = vpop.permute.xlu0 %2840
  %2844 = vrot.lane.b32.xlu0 %v2790, 32
  %v2845 = vpop.permute.xlu0 %2844
  %2848 = vrot.lane.b32.xlu0 %v2806, 48
  %v2849 = vpop.permute.xlu0 %2848
  %2852 = vrot.lane.b32.xlu0 %v2798, 64
  %v2853 = vpop.permute.xlu0 %2852
  %2856 = vrot.lane.b32.xlu0 %v2808, 80
  %v2857 = vpop.permute.xlu0 %2856
  %2860 = vrot.lane.b32.xlu0 %v2802, 96
  %v2861 = vpop.permute.xlu0 %2860
  %2864 = vrot.lane.b32.xlu0 %v2810, 112
  %v2865 = vpop.permute.xlu0 %2864
  %v2867 = vsel %vm692, %v2730, %v2813
  %v2868 = vsel %vm694, %v2867, %v2817
  %v2869 = vsel %vm696, %v2868, %v2821
  %v2870 = vsel %vm698, %v2869, %v2825
  %v2871 = vsel %vm700, %v2870, %v2829
  %v2872 = vsel %vm702, %v2871, %v2833
  %v2873 = vsel %vm704, %v2872, %v2837
  %v2874 = vsel %vm692, %v2786, %v2841
  %v2875 = vsel %vm694, %v2874, %v2845
  %v2876 = vsel %vm696, %v2875, %v2849
  %v2877 = vsel %vm698, %v2876, %v2853
  %v2878 = vsel %vm700, %v2877, %v2857
  %v2879 = vsel %vm702, %v2878, %v2861
  %v2880 = vsel %vm704, %v2879, %v2865
  %v2883 = vrot.slane %v2873, 4
  %v2884 = vrot.slane %v2880, 4
  %2887 = vst [vmem:[#allocation3 + $0x10] sm:$0xf0] %v2883
  %2888 = vst [vmem:[#allocation3 + $0x18] sm:$0xf0] %v2884
  %v2889 = vld [vmem:[%s507] sm:$0xff]
  %v2890 = vld [vmem:[%s507 + $0x8] sm:$0xff]
  %v2891 = vld [vmem:[%s507 + $0x18] sm:$0xff]
  %v2892 = vld [vmem:[%s507 + $0x20] sm:$0xff]
  %v2893 = vld [vmem:[%s507 + $0x30] sm:$0xff]
  %v2894 = vld [vmem:[%s507 + $0x38] sm:$0xff]
  %v2895 = vld [vmem:[%s507 + $0x48] sm:$0xff]
  %v2896 = vld [vmem:[%s507 + $0x50] sm:$0xff]
  %2905 = vrot.lane.b32.xlu0 %v2889, 126
  %v2906 = vpop.permute.xlu0 %2905
  %2907 = vrot.lane.b32.xlu0 %v2890, 126
  %v2908 = vpop.permute.xlu0 %2907
  %2909 = vrot.lane.b32.xlu0 %v2891, 126
  %v2910 = vpop.permute.xlu0 %2909
  %2911 = vrot.lane.b32.xlu0 %v2892, 126
  %v2912 = vpop.permute.xlu0 %2911
  %2913 = vrot.lane.b32.xlu0 %v2893, 126
  %v2914 = vpop.permute.xlu0 %2913
  %2915 = vrot.lane.b32.xlu0 %v2894, 126
  %v2916 = vpop.permute.xlu0 %2915
  %2917 = vrot.lane.b32.xlu0 %v2895, 126
  %v2918 = vpop.permute.xlu0 %2917
  %2919 = vrot.lane.b32.xlu0 %v2896, 126
  %v2920 = vpop.permute.xlu0 %2919
  %v2929 = vrot.slane %v2914, 4
  %v2930 = vsel %vm92, %v2929, %v2906
  %v2931 = vrot.slane %v2906, 4
  %v2932 = vsel %vm92, %v2914, %v2931
  %v2934 = vunpack.c.l.s4 1983009808
  %v2935 = vunpack.c.0.s8 %v2934
  %v2936 = vperm.slane %v2930, %v2935
  %v2938 = vunpack.c.l.s4 1983009808
  %v2939 = vunpack.c.0.s8 %v2938
  %v2940 = vperm.slane %v2932, %v2939
  %v2941 = vrot.slane %v2918, 4
  %v2942 = vsel %vm92, %v2941, %v2910
  %v2943 = vrot.slane %v2910, 4
  %v2944 = vsel %vm92, %v2918, %v2943
  %v2946 = vunpack.c.l.s4 1983009808
  %v2947 = vunpack.c.0.s8 %v2946
  %v2948 = vperm.slane %v2942, %v2947
  %v2950 = vunpack.c.l.s4 1983009808
  %v2951 = vunpack.c.0.s8 %v2950
  %v2952 = vperm.slane %v2944, %v2951
  %v2953 = vrot.slane %v2948, 4
  %v2954 = vsel %vm92, %v2953, %v2936
  %v2955 = vrot.slane %v2936, 4
  %v2956 = vsel %vm92, %v2948, %v2955
  %v2958 = vunpack.c.l.s4 1934713408
  %v2959 = vunpack.c.0.s8 %v2958
  %v2960 = vperm.slane %v2954, %v2959
  %v2962 = vunpack.c.l.s4 1934713408
  %v2963 = vunpack.c.0.s8 %v2962
  %v2964 = vperm.slane %v2956, %v2963
  %v2965 = vrot.slane %v2952, 4
  %v2966 = vsel %vm92, %v2965, %v2940
  %v2967 = vrot.slane %v2940, 4
  %v2968 = vsel %vm92, %v2952, %v2967
  %v2970 = vunpack.c.l.s4 1934713408
  %v2971 = vunpack.c.0.s8 %v2970
  %v2972 = vperm.slane %v2966, %v2971
  %v2974 = vunpack.c.l.s4 1934713408
  %v2975 = vunpack.c.0.s8 %v2974
  %v2976 = vperm.slane %v2968, %v2975
  %v2977 = vrot.slane %v2960, 4
  %v2978 = vsel %vm92, 0.0, %v2977
  %v2979 = vrot.slane %v2964, 4
  %v2980 = vsel %vm92, 0.0, %v2979
  %v2981 = vrot.slane %v2972, 4
  %v2982 = vsel %vm92, 0.0, %v2981
  %v2983 = vrot.slane %v2976, 4
  %v2984 = vsel %vm92, 0.0, %v2983
  %v2985 = vrot.slane %v2916, 4
  %v2986 = vsel %vm92, %v2985, %v2908
  %v2987 = vrot.slane %v2908, 4
  %v2988 = vsel %vm92, %v2916, %v2987
  %v2990 = vunpack.c.l.s4 1983009808
  %v2991 = vunpack.c.0.s8 %v2990
  %v2992 = vperm.slane %v2986, %v2991
  %v2994 = vunpack.c.l.s4 1983009808
  %v2995 = vunpack.c.0.s8 %v2994
  %v2996 = vperm.slane %v2988, %v2995
  %v2997 = vrot.slane %v2920, 4
  %v2998 = vsel %vm92, %v2997, %v2912
  %v2999 = vrot.slane %v2912, 4
  %v3000 = vsel %vm92, %v2920, %v2999
  %v3002 = vunpack.c.l.s4 1983009808
  %v3003 = vunpack.c.0.s8 %v3002
  %v3004 = vperm.slane %v2998, %v3003
  %v3006 = vunpack.c.l.s4 1983009808
  %v3007 = vunpack.c.0.s8 %v3006
  %v3008 = vperm.slane %v3000, %v3007
  %v3009 = vrot.slane %v3004, 4
  %v3010 = vsel %vm92, %v3009, %v2992
  %v3011 = vrot.slane %v2992, 4
  %v3012 = vsel %vm92, %v3004, %v3011
  %v3014 = vunpack.c.l.s4 1934713408
  %v3015 = vunpack.c.0.s8 %v3014
  %v3016 = vperm.slane %v3010, %v3015
  %v3018 = vunpack.c.l.s4 1934713408
  %v3019 = vunpack.c.0.s8 %v3018
  %v3020 = vperm.slane %v3012, %v3019
  %v3021 = vrot.slane %v3008, 4
  %v3022 = vsel %vm92, %v3021, %v2996
  %v3023 = vrot.slane %v2996, 4
  %v3024 = vsel %vm92, %v3008, %v3023
  %v3026 = vunpack.c.l.s4 1934713408
  %v3027 = vunpack.c.0.s8 %v3026
  %v3028 = vperm.slane %v3022, %v3027
  %v3030 = vunpack.c.l.s4 1934713408
  %v3031 = vunpack.c.0.s8 %v3030
  %v3032 = vperm.slane %v3024, %v3031
  %v3033 = vrot.slane %v3016, 4
  %v3034 = vsel %vm92, 0.0, %v3033
  %v3035 = vrot.slane %v3020, 4
  %v3036 = vsel %vm92, 0.0, %v3035
  %v3037 = vrot.slane %v3028, 4
  %v3038 = vsel %vm92, 0.0, %v3037
  %v3039 = vrot.slane %v3032, 4
  %v3040 = vsel %vm92, 0.0, %v3039
  %3042 = vrot.lane.b32.xlu0 %v2978, 16
  %v3043 = vpop.permute.xlu0 %3042
  %3046 = vrot.lane.b32.xlu0 %v2964, 32
  %v3047 = vpop.permute.xlu0 %3046
  %3050 = vrot.lane.b32.xlu0 %v2980, 48
  %v3051 = vpop.permute.xlu0 %3050
  %3054 = vrot.lane.b32.xlu0 %v2972, 64
  %v3055 = vpop.permute.xlu0 %3054
  %3058 = vrot.lane.b32.xlu0 %v2982, 80
  %v3059 = vpop.permute.xlu0 %3058
  %3062 = vrot.lane.b32.xlu0 %v2976, 96
  %v3063 = vpop.permute.xlu0 %3062
  %3066 = vrot.lane.b32.xlu0 %v2984, 112
  %v3067 = vpop.permute.xlu0 %3066
  %3070 = vrot.lane.b32.xlu0 %v3034, 16
  %v3071 = vpop.permute.xlu0 %3070
  %3074 = vrot.lane.b32.xlu0 %v3020, 32
  %v3075 = vpop.permute.xlu0 %3074
  %3078 = vrot.lane.b32.xlu0 %v3036, 48
  %v3079 = vpop.permute.xlu0 %3078
  %3082 = vrot.lane.b32.xlu0 %v3028, 64
  %v3083 = vpop.permute.xlu0 %3082
  %3086 = vrot.lane.b32.xlu0 %v3038, 80
  %v3087 = vpop.permute.xlu0 %3086
  %3090 = vrot.lane.b32.xlu0 %v3032, 96
  %v3091 = vpop.permute.xlu0 %3090
  %3094 = vrot.lane.b32.xlu0 %v3040, 112
  %v3095 = vpop.permute.xlu0 %3094
  %v3097 = vsel %vm692, %v2960, %v3043
  %v3098 = vsel %vm694, %v3097, %v3047
  %v3099 = vsel %vm696, %v3098, %v3051
  %v3100 = vsel %vm698, %v3099, %v3055
  %v3101 = vsel %vm700, %v3100, %v3059
  %v3102 = vsel %vm702, %v3101, %v3063
  %v3103 = vsel %vm704, %v3102, %v3067
  %v3104 = vsel %vm692, %v3016, %v3071
  %v3105 = vsel %vm694, %v3104, %v3075
  %v3106 = vsel %vm696, %v3105, %v3079
  %v3107 = vsel %vm698, %v3106, %v3083
  %v3108 = vsel %vm700, %v3107, %v3087
  %v3109 = vsel %vm702, %v3108, %v3091
  %v3110 = vsel %vm704, %v3109, %v3095
  %3111 = vst [vmem:[#allocation3 + $0x30] sm:$0xf] %v3103
  %3112 = vst [vmem:[#allocation3 + $0x38] sm:$0xf] %v3110
  %v3113 = vld [vmem:[%s507 + $0x1] sm:$0xff]
  %v3114 = vld [vmem:[%s507 + $0x9] sm:$0xff]
  %v3115 = vld [vmem:[%s507 + $0x19] sm:$0xff]
  %v3116 = vld [vmem:[%s507 + $0x21] sm:$0xff]
  %v3117 = vld [vmem:[%s507 + $0x31] sm:$0xff]
  %v3118 = vld [vmem:[%s507 + $0x39] sm:$0xff]
  %v3119 = vld [vmem:[%s507 + $0x49] sm:$0xff]
  %v3120 = vld [vmem:[%s507 + $0x51] sm:$0xff]
  %v3121 = vrot.slane %v3117, 4
  %v3122 = vsel %vm92, %v3121, %v3113
  %v3123 = vrot.slane %v3113, 4
  %v3124 = vsel %vm92, %v3117, %v3123
  %v3126 = vunpack.c.l.s4 1983009808
  %v3127 = vunpack.c.0.s8 %v3126
  %v3128 = vperm.slane %v3122, %v3127
  %v3130 = vunpack.c.l.s4 1983009808
  %v3131 = vunpack.c.0.s8 %v3130
  %v3132 = vperm.slane %v3124, %v3131
  %v3133 = vrot.slane %v3119, 4
  %v3134 = vsel %vm92, %v3133, %v3115
  %v3135 = vrot.slane %v3115, 4
  %v3136 = vsel %vm92, %v3119, %v3135
  %v3138 = vunpack.c.l.s4 1983009808
  %v3139 = vunpack.c.0.s8 %v3138
  %v3140 = vperm.slane %v3134, %v3139
  %v3142 = vunpack.c.l.s4 1983009808
  %v3143 = vunpack.c.0.s8 %v3142
  %v3144 = vperm.slane %v3136, %v3143
  %v3145 = vrot.slane %v3140, 4
  %v3146 = vsel %vm92, %v3145, %v3128
  %v3147 = vrot.slane %v3128, 4
  %v3148 = vsel %vm92, %v3140, %v3147
  %v3150 = vunpack.c.l.s4 1934713408
  %v3151 = vunpack.c.0.s8 %v3150
  %v3152 = vperm.slane %v3146, %v3151
  %v3154 = vunpack.c.l.s4 1934713408
  %v3155 = vunpack.c.0.s8 %v3154
  %v3156 = vperm.slane %v3148, %v3155
  %v3157 = vrot.slane %v3144, 4
  %v3158 = vsel %vm92, %v3157, %v3132
  %v3159 = vrot.slane %v3132, 4
  %v3160 = vsel %vm92, %v3144, %v3159
  %v3162 = vunpack.c.l.s4 1934713408
  %v3163 = vunpack.c.0.s8 %v3162
  %v3164 = vperm.slane %v3158, %v3163
  %v3166 = vunpack.c.l.s4 1934713408
  %v3167 = vunpack.c.0.s8 %v3166
  %v3168 = vperm.slane %v3160, %v3167
  %v3169 = vrot.slane %v3152, 4
  %v3170 = vsel %vm92, 0.0, %v3169
  %v3171 = vrot.slane %v3156, 4
  %v3172 = vsel %vm92, 0.0, %v3171
  %v3173 = vrot.slane %v3164, 4
  %v3174 = vsel %vm92, 0.0, %v3173
  %v3175 = vrot.slane %v3168, 4
  %v3176 = vsel %vm92, 0.0, %v3175
  %v3177 = vrot.slane %v3118, 4
  %v3178 = vsel %vm92, %v3177, %v3114
  %v3179 = vrot.slane %v3114, 4
  %v3180 = vsel %vm92, %v3118, %v3179
  %v3182 = vunpack.c.l.s4 1983009808
  %v3183 = vunpack.c.0.s8 %v3182
  %v3184 = vperm.slane %v3178, %v3183
  %v3186 = vunpack.c.l.s4 1983009808
  %v3187 = vunpack.c.0.s8 %v3186
  %v3188 = vperm.slane %v3180, %v3187
  %v3189 = vrot.slane %v3120, 4
  %v3190 = vsel %vm92, %v3189, %v3116
  %v3191 = vrot.slane %v3116, 4
  %v3192 = vsel %vm92, %v3120, %v3191
  %v3194 = vunpack.c.l.s4 1983009808
  %v3195 = vunpack.c.0.s8 %v3194
  %v3196 = vperm.slane %v3190, %v3195
  %v3198 = vunpack.c.l.s4 1983009808
  %v3199 = vunpack.c.0.s8 %v3198
  %v3200 = vperm.slane %v3192, %v3199
  %v3201 = vrot.slane %v3196, 4
  %v3202 = vsel %vm92, %v3201, %v3184
  %v3203 = vrot.slane %v3184, 4
  %v3204 = vsel %vm92, %v3196, %v3203
  %v3206 = vunpack.c.l.s4 1934713408
  %v3207 = vunpack.c.0.s8 %v3206
  %v3208 = vperm.slane %v3202, %v3207
  %v3210 = vunpack.c.l.s4 1934713408
  %v3211 = vunpack.c.0.s8 %v3210
  %v3212 = vperm.slane %v3204, %v3211
  %v3213 = vrot.slane %v3200, 4
  %v3214 = vsel %vm92, %v3213, %v3188
  %v3215 = vrot.slane %v3188, 4
  %v3216 = vsel %vm92, %v3200, %v3215
  %v3218 = vunpack.c.l.s4 1934713408
  %v3219 = vunpack.c.0.s8 %v3218
  %v3220 = vperm.slane %v3214, %v3219
  %v3222 = vunpack.c.l.s4 1934713408
  %v3223 = vunpack.c.0.s8 %v3222
  %v3224 = vperm.slane %v3216, %v3223
  %v3225 = vrot.slane %v3208, 4
  %v3226 = vsel %vm92, 0.0, %v3225
  %v3227 = vrot.slane %v3212, 4
  %v3228 = vsel %vm92, 0.0, %v3227
  %v3229 = vrot.slane %v3220, 4
  %v3230 = vsel %vm92, 0.0, %v3229
  %v3231 = vrot.slane %v3224, 4
  %v3232 = vsel %vm92, 0.0, %v3231
  %3234 = vrot.lane.b32.xlu0 %v3170, 16
  %v3235 = vpop.permute.xlu0 %3234
  %3238 = vrot.lane.b32.xlu0 %v3156, 32
  %v3239 = vpop.permute.xlu0 %3238
  %3242 = vrot.lane.b32.xlu0 %v3172, 48
  %v3243 = vpop.permute.xlu0 %3242
  %3246 = vrot.lane.b32.xlu0 %v3164, 64
  %v3247 = vpop.permute.xlu0 %3246
  %3250 = vrot.lane.b32.xlu0 %v3174, 80
  %v3251 = vpop.permute.xlu0 %3250
  %3254 = vrot.lane.b32.xlu0 %v3168, 96
  %v3255 = vpop.permute.xlu0 %3254
  %3258 = vrot.lane.b32.xlu0 %v3176, 112
  %v3259 = vpop.permute.xlu0 %3258
  %3262 = vrot.lane.b32.xlu0 %v3226, 16
  %v3263 = vpop.permute.xlu0 %3262
  %3266 = vrot.lane.b32.xlu0 %v3212, 32
  %v3267 = vpop.permute.xlu0 %3266
  %3270 = vrot.lane.b32.xlu0 %v3228, 48
  %v3271 = vpop.permute.xlu0 %3270
  %3274 = vrot.lane.b32.xlu0 %v3220, 64
  %v3275 = vpop.permute.xlu0 %3274
  %3278 = vrot.lane.b32.xlu0 %v3230, 80
  %v3279 = vpop.permute.xlu0 %3278
  %3282 = vrot.lane.b32.xlu0 %v3224, 96
  %v3283 = vpop.permute.xlu0 %3282
  %3286 = vrot.lane.b32.xlu0 %v3232, 112
  %v3287 = vpop.permute.xlu0 %3286
  %v3289 = vsel %vm692, %v3152, %v3235
  %v3290 = vsel %vm694, %v3289, %v3239
  %v3291 = vsel %vm696, %v3290, %v3243
  %v3292 = vsel %vm698, %v3291, %v3247
  %v3293 = vsel %vm700, %v3292, %v3251
  %v3294 = vsel %vm702, %v3293, %v3255
  %v3295 = vsel %vm704, %v3294, %v3259
  %v3296 = vsel %vm692, %v3208, %v3263
  %v3297 = vsel %vm694, %v3296, %v3267
  %v3298 = vsel %vm696, %v3297, %v3271
  %v3299 = vsel %vm698, %v3298, %v3275
  %v3300 = vsel %vm700, %v3299, %v3279
  %v3301 = vsel %vm702, %v3300, %v3283
  %v3302 = vsel %vm704, %v3301, %v3287
  %v3305 = vrot.slane %v3295, 4
  %v3306 = vrot.slane %v3302, 4
  %3309 = vst [vmem:[#allocation3 + $0x30] sm:$0xf0] %v3305
  %3310 = vst [vmem:[#allocation3 + $0x38] sm:$0xf0] %v3306
  %v3311 = vld [vmem:[%s507 + $0x1] sm:$0xff]
  %v3312 = vld [vmem:[%s507 + $0x9] sm:$0xff]
  %v3313 = vld [vmem:[%s507 + $0x19] sm:$0xff]
  %v3314 = vld [vmem:[%s507 + $0x21] sm:$0xff]
  %v3315 = vld [vmem:[%s507 + $0x31] sm:$0xff]
  %v3316 = vld [vmem:[%s507 + $0x39] sm:$0xff]
  %v3317 = vld [vmem:[%s507 + $0x49] sm:$0xff]
  %v3318 = vld [vmem:[%s507 + $0x51] sm:$0xff]
  %3327 = vrot.lane.b32.xlu0 %v3311, 127
  %v3328 = vpop.permute.xlu0 %3327
  %3329 = vrot.lane.b32.xlu0 %v3312, 127
  %v3330 = vpop.permute.xlu0 %3329
  %3331 = vrot.lane.b32.xlu0 %v3313, 127
  %v3332 = vpop.permute.xlu0 %3331
  %3333 = vrot.lane.b32.xlu0 %v3314, 127
  %v3334 = vpop.permute.xlu0 %3333
  %3335 = vrot.lane.b32.xlu0 %v3315, 127
  %v3336 = vpop.permute.xlu0 %3335
  %3337 = vrot.lane.b32.xlu0 %v3316, 127
  %v3338 = vpop.permute.xlu0 %3337
  %3339 = vrot.lane.b32.xlu0 %v3317, 127
  %v3340 = vpop.permute.xlu0 %3339
  %3341 = vrot.lane.b32.xlu0 %v3318, 127
  %v3342 = vpop.permute.xlu0 %3341
  %v3351 = vrot.slane %v3336, 4
  %v3352 = vsel %vm92, %v3351, %v3328
  %v3353 = vrot.slane %v3328, 4
  %v3354 = vsel %vm92, %v3336, %v3353
  %v3356 = vunpack.c.l.s4 1983009808
  %v3357 = vunpack.c.0.s8 %v3356
  %v3358 = vperm.slane %v3352, %v3357
  %v3360 = vunpack.c.l.s4 1983009808
  %v3361 = vunpack.c.0.s8 %v3360
  %v3362 = vperm.slane %v3354, %v3361
  %v3363 = vrot.slane %v3340, 4
  %v3364 = vsel %vm92, %v3363, %v3332
  %v3365 = vrot.slane %v3332, 4
  %v3366 = vsel %vm92, %v3340, %v3365
  %v3368 = vunpack.c.l.s4 1983009808
  %v3369 = vunpack.c.0.s8 %v3368
  %v3370 = vperm.slane %v3364, %v3369
  %v3372 = vunpack.c.l.s4 1983009808
  %v3373 = vunpack.c.0.s8 %v3372
  %v3374 = vperm.slane %v3366, %v3373
  %v3375 = vrot.slane %v3370, 4
  %v3376 = vsel %vm92, %v3375, %v3358
  %v3377 = vrot.slane %v3358, 4
  %v3378 = vsel %vm92, %v3370, %v3377
  %v3380 = vunpack.c.l.s4 1934713408
  %v3381 = vunpack.c.0.s8 %v3380
  %v3382 = vperm.slane %v3376, %v3381
  %v3384 = vunpack.c.l.s4 1934713408
  %v3385 = vunpack.c.0.s8 %v3384
  %v3386 = vperm.slane %v3378, %v3385
  %v3387 = vrot.slane %v3374, 4
  %v3388 = vsel %vm92, %v3387, %v3362
  %v3389 = vrot.slane %v3362, 4
  %v3390 = vsel %vm92, %v3374, %v3389
  %v3392 = vunpack.c.l.s4 1934713408
  %v3393 = vunpack.c.0.s8 %v3392
  %v3394 = vperm.slane %v3388, %v3393
  %v3396 = vunpack.c.l.s4 1934713408
  %v3397 = vunpack.c.0.s8 %v3396
  %v3398 = vperm.slane %v3390, %v3397
  %v3399 = vrot.slane %v3382, 4
  %v3400 = vsel %vm92, 0.0, %v3399
  %v3401 = vrot.slane %v3386, 4
  %v3402 = vsel %vm92, 0.0, %v3401
  %v3403 = vrot.slane %v3394, 4
  %v3404 = vsel %vm92, 0.0, %v3403
  %v3405 = vrot.slane %v3398, 4
  %v3406 = vsel %vm92, 0.0, %v3405
  %v3407 = vrot.slane %v3338, 4
  %v3408 = vsel %vm92, %v3407, %v3330
  %v3409 = vrot.slane %v3330, 4
  %v3410 = vsel %vm92, %v3338, %v3409
  %v3412 = vunpack.c.l.s4 1983009808
  %v3413 = vunpack.c.0.s8 %v3412
  %v3414 = vperm.slane %v3408, %v3413
  %v3416 = vunpack.c.l.s4 1983009808
  %v3417 = vunpack.c.0.s8 %v3416
  %v3418 = vperm.slane %v3410, %v3417
  %v3419 = vrot.slane %v3342, 4
  %v3420 = vsel %vm92, %v3419, %v3334
  %v3421 = vrot.slane %v3334, 4
  %v3422 = vsel %vm92, %v3342, %v3421
  %v3424 = vunpack.c.l.s4 1983009808
  %v3425 = vunpack.c.0.s8 %v3424
  %v3426 = vperm.slane %v3420, %v3425
  %v3428 = vunpack.c.l.s4 1983009808
  %v3429 = vunpack.c.0.s8 %v3428
  %v3430 = vperm.slane %v3422, %v3429
  %v3431 = vrot.slane %v3426, 4
  %v3432 = vsel %vm92, %v3431, %v3414
  %v3433 = vrot.slane %v3414, 4
  %v3434 = vsel %vm92, %v3426, %v3433
  %v3436 = vunpack.c.l.s4 1934713408
  %v3437 = vunpack.c.0.s8 %v3436
  %v3438 = vperm.slane %v3432, %v3437
  %v3440 = vunpack.c.l.s4 1934713408
  %v3441 = vunpack.c.0.s8 %v3440
  %v3442 = vperm.slane %v3434, %v3441
  %v3443 = vrot.slane %v3430, 4
  %v3444 = vsel %vm92, %v3443, %v3418
  %v3445 = vrot.slane %v3418, 4
  %v3446 = vsel %vm92, %v3430, %v3445
  %v3448 = vunpack.c.l.s4 1934713408
  %v3449 = vunpack.c.0.s8 %v3448
  %v3450 = vperm.slane %v3444, %v3449
  %v3452 = vunpack.c.l.s4 1934713408
  %v3453 = vunpack.c.0.s8 %v3452
  %v3454 = vperm.slane %v3446, %v3453
  %v3455 = vrot.slane %v3438, 4
  %v3456 = vsel %vm92, 0.0, %v3455
  %v3457 = vrot.slane %v3442, 4
  %v3458 = vsel %vm92, 0.0, %v3457
  %v3459 = vrot.slane %v3450, 4
  %v3460 = vsel %vm92, 0.0, %v3459
  %v3461 = vrot.slane %v3454, 4
  %v3462 = vsel %vm92, 0.0, %v3461
  %3464 = vrot.lane.b32.xlu0 %v3400, 16
  %v3465 = vpop.permute.xlu0 %3464
  %3468 = vrot.lane.b32.xlu0 %v3386, 32
  %v3469 = vpop.permute.xlu0 %3468
  %3472 = vrot.lane.b32.xlu0 %v3402, 48
  %v3473 = vpop.permute.xlu0 %3472
  %3476 = vrot.lane.b32.xlu0 %v3394, 64
  %v3477 = vpop.permute.xlu0 %3476
  %3480 = vrot.lane.b32.xlu0 %v3404, 80
  %v3481 = vpop.permute.xlu0 %3480
  %3484 = vrot.lane.b32.xlu0 %v3398, 96
  %v3485 = vpop.permute.xlu0 %3484
  %3488 = vrot.lane.b32.xlu0 %v3406, 112
  %v3489 = vpop.permute.xlu0 %3488
  %3492 = vrot.lane.b32.xlu0 %v3456, 16
  %v3493 = vpop.permute.xlu0 %3492
  %3496 = vrot.lane.b32.xlu0 %v3442, 32
  %v3497 = vpop.permute.xlu0 %3496
  %3500 = vrot.lane.b32.xlu0 %v3458, 48
  %v3501 = vpop.permute.xlu0 %3500
  %3504 = vrot.lane.b32.xlu0 %v3450, 64
  %v3505 = vpop.permute.xlu0 %3504
  %3508 = vrot.lane.b32.xlu0 %v3460, 80
  %v3509 = vpop.permute.xlu0 %3508
  %3512 = vrot.lane.b32.xlu0 %v3454, 96
  %v3513 = vpop.permute.xlu0 %3512
  %3516 = vrot.lane.b32.xlu0 %v3462, 112
  %v3517 = vpop.permute.xlu0 %3516
  %v3519 = vsel %vm692, %v3382, %v3465
  %v3520 = vsel %vm694, %v3519, %v3469
  %v3521 = vsel %vm696, %v3520, %v3473
  %v3522 = vsel %vm698, %v3521, %v3477
  %v3523 = vsel %vm700, %v3522, %v3481
  %v3524 = vsel %vm702, %v3523, %v3485
  %v3525 = vsel %vm704, %v3524, %v3489
  %v3526 = vsel %vm692, %v3438, %v3493
  %v3527 = vsel %vm694, %v3526, %v3497
  %v3528 = vsel %vm696, %v3527, %v3501
  %v3529 = vsel %vm698, %v3528, %v3505
  %v3530 = vsel %vm700, %v3529, %v3509
  %v3531 = vsel %vm702, %v3530, %v3513
  %v3532 = vsel %vm704, %v3531, %v3517
  %3533 = vst [vmem:[#allocation3 + $0x50] sm:$0xf] %v3525
  %3534 = vst [vmem:[#allocation3 + $0x58] sm:$0xf] %v3532
  %v3535 = vld [vmem:[%s507 + $0x1] sm:$0xff]
  %v3536 = vld [vmem:[%s507 + $0x9] sm:$0xff]
  %v3537 = vld [vmem:[%s507 + $0x19] sm:$0xff]
  %v3538 = vld [vmem:[%s507 + $0x21] sm:$0xff]
  %v3539 = vld [vmem:[%s507 + $0x31] sm:$0xff]
  %v3540 = vld [vmem:[%s507 + $0x39] sm:$0xff]
  %v3541 = vld [vmem:[%s507 + $0x49] sm:$0xff]
  %v3542 = vld [vmem:[%s507 + $0x51] sm:$0xff]
  %3551 = vrot.lane.b32.xlu0 %v3535, 126
  %v3552 = vpop.permute.xlu0 %3551
  %3553 = vrot.lane.b32.xlu0 %v3536, 126
  %v3554 = vpop.permute.xlu0 %3553
  %3555 = vrot.lane.b32.xlu0 %v3537, 126
  %v3556 = vpop.permute.xlu0 %3555
  %3557 = vrot.lane.b32.xlu0 %v3538, 126
  %v3558 = vpop.permute.xlu0 %3557
  %3559 = vrot.lane.b32.xlu0 %v3539, 126
  %v3560 = vpop.permute.xlu0 %3559
  %3561 = vrot.lane.b32.xlu0 %v3540, 126
  %v3562 = vpop.permute.xlu0 %3561
  %3563 = vrot.lane.b32.xlu0 %v3541, 126
  %v3564 = vpop.permute.xlu0 %3563
  %3565 = vrot.lane.b32.xlu0 %v3542, 126
  %v3566 = vpop.permute.xlu0 %3565
  %v3575 = vrot.slane %v3560, 4
  %v3576 = vsel %vm92, %v3575, %v3552
  %v3577 = vrot.slane %v3552, 4
  %v3578 = vsel %vm92, %v3560, %v3577
  %v3580 = vunpack.c.l.s4 1983009808
  %v3581 = vunpack.c.0.s8 %v3580
  %v3582 = vperm.slane %v3576, %v3581
  %v3584 = vunpack.c.l.s4 1983009808
  %v3585 = vunpack.c.0.s8 %v3584
  %v3586 = vperm.slane %v3578, %v3585
  %v3587 = vrot.slane %v3564, 4
  %v3588 = vsel %vm92, %v3587, %v3556
  %v3589 = vrot.slane %v3556, 4
  %v3590 = vsel %vm92, %v3564, %v3589
  %v3592 = vunpack.c.l.s4 1983009808
  %v3593 = vunpack.c.0.s8 %v3592
  %v3594 = vperm.slane %v3588, %v3593
  %v3596 = vunpack.c.l.s4 1983009808
  %v3597 = vunpack.c.0.s8 %v3596
  %v3598 = vperm.slane %v3590, %v3597
  %v3599 = vrot.slane %v3594, 4
  %v3600 = vsel %vm92, %v3599, %v3582
  %v3601 = vrot.slane %v3582, 4
  %v3602 = vsel %vm92, %v3594, %v3601
  %v3604 = vunpack.c.l.s4 1934713408
  %v3605 = vunpack.c.0.s8 %v3604
  %v3606 = vperm.slane %v3600, %v3605
  %v3608 = vunpack.c.l.s4 1934713408
  %v3609 = vunpack.c.0.s8 %v3608
  %v3610 = vperm.slane %v3602, %v3609
  %v3611 = vrot.slane %v3598, 4
  %v3612 = vsel %vm92, %v3611, %v3586
  %v3613 = vrot.slane %v3586, 4
  %v3614 = vsel %vm92, %v3598, %v3613
  %v3616 = vunpack.c.l.s4 1934713408
  %v3617 = vunpack.c.0.s8 %v3616
  %v3618 = vperm.slane %v3612, %v3617
  %v3620 = vunpack.c.l.s4 1934713408
  %v3621 = vunpack.c.0.s8 %v3620
  %v3622 = vperm.slane %v3614, %v3621
  %v3623 = vrot.slane %v3606, 4
  %v3624 = vsel %vm92, 0.0, %v3623
  %v3625 = vrot.slane %v3610, 4
  %v3626 = vsel %vm92, 0.0, %v3625
  %v3627 = vrot.slane %v3618, 4
  %v3628 = vsel %vm92, 0.0, %v3627
  %v3629 = vrot.slane %v3622, 4
  %v3630 = vsel %vm92, 0.0, %v3629
  %v3631 = vrot.slane %v3562, 4
  %v3632 = vsel %vm92, %v3631, %v3554
  %v3633 = vrot.slane %v3554, 4
  %v3634 = vsel %vm92, %v3562, %v3633
  %v3636 = vunpack.c.l.s4 1983009808
  %v3637 = vunpack.c.0.s8 %v3636
  %v3638 = vperm.slane %v3632, %v3637
  %v3640 = vunpack.c.l.s4 1983009808
  %v3641 = vunpack.c.0.s8 %v3640
  %v3642 = vperm.slane %v3634, %v3641
  %v3643 = vrot.slane %v3566, 4
  %v3644 = vsel %vm92, %v3643, %v3558
  %v3645 = vrot.slane %v3558, 4
  %v3646 = vsel %vm92, %v3566, %v3645
  %v3648 = vunpack.c.l.s4 1983009808
  %v3649 = vunpack.c.0.s8 %v3648
  %v3650 = vperm.slane %v3644, %v3649
  %v3652 = vunpack.c.l.s4 1983009808
  %v3653 = vunpack.c.0.s8 %v3652
  %v3654 = vperm.slane %v3646, %v3653
  %v3655 = vrot.slane %v3650, 4
  %v3656 = vsel %vm92, %v3655, %v3638
  %v3657 = vrot.slane %v3638, 4
  %v3658 = vsel %vm92, %v3650, %v3657
  %v3660 = vunpack.c.l.s4 1934713408
  %v3661 = vunpack.c.0.s8 %v3660
  %v3662 = vperm.slane %v3656, %v3661
  %v3664 = vunpack.c.l.s4 1934713408
  %v3665 = vunpack.c.0.s8 %v3664
  %v3666 = vperm.slane %v3658, %v3665
  %v3667 = vrot.slane %v3654, 4
  %v3668 = vsel %vm92, %v3667, %v3642
  %v3669 = vrot.slane %v3642, 4
  %v3670 = vsel %vm92, %v3654, %v3669
  %v3672 = vunpack.c.l.s4 1934713408
  %v3673 = vunpack.c.0.s8 %v3672
  %v3674 = vperm.slane %v3668, %v3673
  %v3676 = vunpack.c.l.s4 1934713408
  %v3677 = vunpack.c.0.s8 %v3676
  %v3678 = vperm.slane %v3670, %v3677
  %v3679 = vrot.slane %v3662, 4
  %v3680 = vsel %vm92, 0.0, %v3679
  %v3681 = vrot.slane %v3666, 4
  %v3682 = vsel %vm92, 0.0, %v3681
  %v3683 = vrot.slane %v3674, 4
  %v3684 = vsel %vm92, 0.0, %v3683
  %v3685 = vrot.slane %v3678, 4
  %v3686 = vsel %vm92, 0.0, %v3685
  %3688 = vrot.lane.b32.xlu0 %v3624, 16
  %v3689 = vpop.permute.xlu0 %3688
  %3692 = vrot.lane.b32.xlu0 %v3610, 32
  %v3693 = vpop.permute.xlu0 %3692
  %3696 = vrot.lane.b32.xlu0 %v3626, 48
  %v3697 = vpop.permute.xlu0 %3696
  %3700 = vrot.lane.b32.xlu0 %v3618, 64
  %v3701 = vpop.permute.xlu0 %3700
  %3704 = vrot.lane.b32.xlu0 %v3628, 80
  %v3705 = vpop.permute.xlu0 %3704
  %3708 = vrot.lane.b32.xlu0 %v3622, 96
  %v3709 = vpop.permute.xlu0 %3708
  %3712 = vrot.lane.b32.xlu0 %v3630, 112
  %v3713 = vpop.permute.xlu0 %3712
  %3716 = vrot.lane.b32.xlu0 %v3680, 16
  %v3717 = vpop.permute.xlu0 %3716
  %3720 = vrot.lane.b32.xlu0 %v3666, 32
  %v3721 = vpop.permute.xlu0 %3720
  %3724 = vrot.lane.b32.xlu0 %v3682, 48
  %v3725 = vpop.permute.xlu0 %3724
  %3728 = vrot.lane.b32.xlu0 %v3674, 64
  %v3729 = vpop.permute.xlu0 %3728
  %3732 = vrot.lane.b32.xlu0 %v3684, 80
  %v3733 = vpop.permute.xlu0 %3732
  %3736 = vrot.lane.b32.xlu0 %v3678, 96
  %v3737 = vpop.permute.xlu0 %3736
  %3740 = vrot.lane.b32.xlu0 %v3686, 112
  %v3741 = vpop.permute.xlu0 %3740
  %v3743 = vsel %vm692, %v3606, %v3689
  %v3744 = vsel %vm694, %v3743, %v3693
  %v3745 = vsel %vm696, %v3744, %v3697
  %v3746 = vsel %vm698, %v3745, %v3701
  %v3747 = vsel %vm700, %v3746, %v3705
  %v3748 = vsel %vm702, %v3747, %v3709
  %v3749 = vsel %vm704, %v3748, %v3713
  %v3750 = vsel %vm692, %v3662, %v3717
  %v3751 = vsel %vm694, %v3750, %v3721
  %v3752 = vsel %vm696, %v3751, %v3725
  %v3753 = vsel %vm698, %v3752, %v3729
  %v3754 = vsel %vm700, %v3753, %v3733
  %v3755 = vsel %vm702, %v3754, %v3737
  %v3756 = vsel %vm704, %v3755, %v3741
  %v3759 = vrot.slane %v3749, 4
  %v3760 = vrot.slane %v3756, 4
  %3763 = vst [vmem:[#allocation3 + $0x50] sm:$0xf0] %v3759
  %3764 = vst [vmem:[#allocation3 + $0x58] sm:$0xf0] %v3760
  %v3765 = vld [vmem:[%s507 + $0x2] sm:$0xff]
  %v3766 = vld [vmem:[%s507 + $0xa] sm:$0xff]
  %v3767 = vld [vmem:[%s507 + $0x1a] sm:$0xff]
  %v3768 = vld [vmem:[%s507 + $0x22] sm:$0xff]
  %v3769 = vld [vmem:[%s507 + $0x32] sm:$0xff]
  %v3770 = vld [vmem:[%s507 + $0x3a] sm:$0xff]
  %v3771 = vld [vmem:[%s507 + $0x4a] sm:$0xff]
  %v3772 = vld [vmem:[%s507 + $0x52] sm:$0xff]
  %v3773 = vrot.slane %v3769, 4
  %v3774 = vsel %vm92, %v3773, %v3765
  %v3775 = vrot.slane %v3765, 4
  %v3776 = vsel %vm92, %v3769, %v3775
  %v3778 = vunpack.c.l.s4 1983009808
  %v3779 = vunpack.c.0.s8 %v3778
  %v3780 = vperm.slane %v3774, %v3779
  %v3782 = vunpack.c.l.s4 1983009808
  %v3783 = vunpack.c.0.s8 %v3782
  %v3784 = vperm.slane %v3776, %v3783
  %v3785 = vrot.slane %v3771, 4
  %v3786 = vsel %vm92, %v3785, %v3767
  %v3787 = vrot.slane %v3767, 4
  %v3788 = vsel %vm92, %v3771, %v3787
  %v3790 = vunpack.c.l.s4 1983009808
  %v3791 = vunpack.c.0.s8 %v3790
  %v3792 = vperm.slane %v3786, %v3791
  %v3794 = vunpack.c.l.s4 1983009808
  %v3795 = vunpack.c.0.s8 %v3794
  %v3796 = vperm.slane %v3788, %v3795
  %v3797 = vrot.slane %v3792, 4
  %v3798 = vsel %vm92, %v3797, %v3780
  %v3799 = vrot.slane %v3780, 4
  %v3800 = vsel %vm92, %v3792, %v3799
  %v3802 = vunpack.c.l.s4 1934713408
  %v3803 = vunpack.c.0.s8 %v3802
  %v3804 = vperm.slane %v3798, %v3803
  %v3806 = vunpack.c.l.s4 1934713408
  %v3807 = vunpack.c.0.s8 %v3806
  %v3808 = vperm.slane %v3800, %v3807
  %v3809 = vrot.slane %v3796, 4
  %v3810 = vsel %vm92, %v3809, %v3784
  %v3811 = vrot.slane %v3784, 4
  %v3812 = vsel %vm92, %v3796, %v3811
  %v3814 = vunpack.c.l.s4 1934713408
  %v3815 = vunpack.c.0.s8 %v3814
  %v3816 = vperm.slane %v3810, %v3815
  %v3818 = vunpack.c.l.s4 1934713408
  %v3819 = vunpack.c.0.s8 %v3818
  %v3820 = vperm.slane %v3812, %v3819
  %v3821 = vrot.slane %v3804, 4
  %v3822 = vsel %vm92, 0.0, %v3821
  %v3823 = vrot.slane %v3808, 4
  %v3824 = vsel %vm92, 0.0, %v3823
  %v3825 = vrot.slane %v3816, 4
  %v3826 = vsel %vm92, 0.0, %v3825
  %v3827 = vrot.slane %v3820, 4
  %v3828 = vsel %vm92, 0.0, %v3827
  %v3829 = vrot.slane %v3770, 4
  %v3830 = vsel %vm92, %v3829, %v3766
  %v3831 = vrot.slane %v3766, 4
  %v3832 = vsel %vm92, %v3770, %v3831
  %v3834 = vunpack.c.l.s4 1983009808
  %v3835 = vunpack.c.0.s8 %v3834
  %v3836 = vperm.slane %v3830, %v3835
  %v3838 = vunpack.c.l.s4 1983009808
  %v3839 = vunpack.c.0.s8 %v3838
  %v3840 = vperm.slane %v3832, %v3839
  %v3841 = vrot.slane %v3772, 4
  %v3842 = vsel %vm92, %v3841, %v3768
  %v3843 = vrot.slane %v3768, 4
  %v3844 = vsel %vm92, %v3772, %v3843
  %v3846 = vunpack.c.l.s4 1983009808
  %v3847 = vunpack.c.0.s8 %v3846
  %v3848 = vperm.slane %v3842, %v3847
  %v3850 = vunpack.c.l.s4 1983009808
  %v3851 = vunpack.c.0.s8 %v3850
  %v3852 = vperm.slane %v3844, %v3851
  %v3853 = vrot.slane %v3848, 4
  %v3854 = vsel %vm92, %v3853, %v3836
  %v3855 = vrot.slane %v3836, 4
  %v3856 = vsel %vm92, %v3848, %v3855
  %v3858 = vunpack.c.l.s4 1934713408
  %v3859 = vunpack.c.0.s8 %v3858
  %v3860 = vperm.slane %v3854, %v3859
  %v3862 = vunpack.c.l.s4 1934713408
  %v3863 = vunpack.c.0.s8 %v3862
  %v3864 = vperm.slane %v3856, %v3863
  %v3865 = vrot.slane %v3852, 4
  %v3866 = vsel %vm92, %v3865, %v3840
  %v3867 = vrot.slane %v3840, 4
  %v3868 = vsel %vm92, %v3852, %v3867
  %v3870 = vunpack.c.l.s4 1934713408
  %v3871 = vunpack.c.0.s8 %v3870
  %v3872 = vperm.slane %v3866, %v3871
  %v3874 = vunpack.c.l.s4 1934713408
  %v3875 = vunpack.c.0.s8 %v3874
  %v3876 = vperm.slane %v3868, %v3875
  %v3877 = vrot.slane %v3860, 4
  %v3878 = vsel %vm92, 0.0, %v3877
  %v3879 = vrot.slane %v3864, 4
  %v3880 = vsel %vm92, 0.0, %v3879
  %v3881 = vrot.slane %v3872, 4
  %v3882 = vsel %vm92, 0.0, %v3881
  %v3883 = vrot.slane %v3876, 4
  %v3884 = vsel %vm92, 0.0, %v3883
  %3886 = vrot.lane.b32.xlu0 %v3822, 16
  %v3887 = vpop.permute.xlu0 %3886
  %3890 = vrot.lane.b32.xlu0 %v3808, 32
  %v3891 = vpop.permute.xlu0 %3890
  %3894 = vrot.lane.b32.xlu0 %v3824, 48
  %v3895 = vpop.permute.xlu0 %3894
  %3898 = vrot.lane.b32.xlu0 %v3816, 64
  %v3899 = vpop.permute.xlu0 %3898
  %3902 = vrot.lane.b32.xlu0 %v3826, 80
  %v3903 = vpop.permute.xlu0 %3902
  %3906 = vrot.lane.b32.xlu0 %v3820, 96
  %v3907 = vpop.permute.xlu0 %3906
  %3910 = vrot.lane.b32.xlu0 %v3828, 112
  %v3911 = vpop.permute.xlu0 %3910
  %3914 = vrot.lane.b32.xlu0 %v3878, 16
  %v3915 = vpop.permute.xlu0 %3914
  %3918 = vrot.lane.b32.xlu0 %v3864, 32
  %v3919 = vpop.permute.xlu0 %3918
  %3922 = vrot.lane.b32.xlu0 %v3880, 48
  %v3923 = vpop.permute.xlu0 %3922
  %3926 = vrot.lane.b32.xlu0 %v3872, 64
  %v3927 = vpop.permute.xlu0 %3926
  %3930 = vrot.lane.b32.xlu0 %v3882, 80
  %v3931 = vpop.permute.xlu0 %3930
  %3934 = vrot.lane.b32.xlu0 %v3876, 96
  %v3935 = vpop.permute.xlu0 %3934
  %3938 = vrot.lane.b32.xlu0 %v3884, 112
  %v3939 = vpop.permute.xlu0 %3938
  %v3941 = vsel %vm692, %v3804, %v3887
  %v3942 = vsel %vm694, %v3941, %v3891
  %v3943 = vsel %vm696, %v3942, %v3895
  %v3944 = vsel %vm698, %v3943, %v3899
  %v3945 = vsel %vm700, %v3944, %v3903
  %v3946 = vsel %vm702, %v3945, %v3907
  %v3947 = vsel %vm704, %v3946, %v3911
  %v3948 = vsel %vm692, %v3860, %v3915
  %v3949 = vsel %vm694, %v3948, %v3919
  %v3950 = vsel %vm696, %v3949, %v3923
  %v3951 = vsel %vm698, %v3950, %v3927
  %v3952 = vsel %vm700, %v3951, %v3931
  %v3953 = vsel %vm702, %v3952, %v3935
  %v3954 = vsel %vm704, %v3953, %v3939
  %3955 = vst [vmem:[#allocation3 + $0x70] sm:$0xf] %v3947
  %3956 = vst [vmem:[#allocation3 + $0x78] sm:$0xf] %v3954
  %v3957 = vld [vmem:[%s507 + $0x2] sm:$0xff]
  %v3958 = vld [vmem:[%s507 + $0xa] sm:$0xff]
  %v3959 = vld [vmem:[%s507 + $0x1a] sm:$0xff]
  %v3960 = vld [vmem:[%s507 + $0x22] sm:$0xff]
  %v3961 = vld [vmem:[%s507 + $0x32] sm:$0xff]
  %v3962 = vld [vmem:[%s507 + $0x3a] sm:$0xff]
  %v3963 = vld [vmem:[%s507 + $0x4a] sm:$0xff]
  %v3964 = vld [vmem:[%s507 + $0x52] sm:$0xff]
  %3973 = vrot.lane.b32.xlu0 %v3957, 127
  %v3974 = vpop.permute.xlu0 %3973
  %3975 = vrot.lane.b32.xlu0 %v3958, 127
  %v3976 = vpop.permute.xlu0 %3975
  %3977 = vrot.lane.b32.xlu0 %v3959, 127
  %v3978 = vpop.permute.xlu0 %3977
  %3979 = vrot.lane.b32.xlu0 %v3960, 127
  %v3980 = vpop.permute.xlu0 %3979
  %3981 = vrot.lane.b32.xlu0 %v3961, 127
  %v3982 = vpop.permute.xlu0 %3981
  %3983 = vrot.lane.b32.xlu0 %v3962, 127
  %v3984 = vpop.permute.xlu0 %3983
  %3985 = vrot.lane.b32.xlu0 %v3963, 127
  %v3986 = vpop.permute.xlu0 %3985
  %3987 = vrot.lane.b32.xlu0 %v3964, 127
  %v3988 = vpop.permute.xlu0 %3987
  %v3997 = vrot.slane %v3982, 4
  %v3998 = vsel %vm92, %v3997, %v3974
  %v3999 = vrot.slane %v3974, 4
  %v4000 = vsel %vm92, %v3982, %v3999
  %v4002 = vunpack.c.l.s4 1983009808
  %v4003 = vunpack.c.0.s8 %v4002
  %v4004 = vperm.slane %v3998, %v4003
  %v4006 = vunpack.c.l.s4 1983009808
  %v4007 = vunpack.c.0.s8 %v4006
  %v4008 = vperm.slane %v4000, %v4007
  %v4009 = vrot.slane %v3986, 4
  %v4010 = vsel %vm92, %v4009, %v3978
  %v4011 = vrot.slane %v3978, 4
  %v4012 = vsel %vm92, %v3986, %v4011
  %v4014 = vunpack.c.l.s4 1983009808
  %v4015 = vunpack.c.0.s8 %v4014
  %v4016 = vperm.slane %v4010, %v4015
  %v4018 = vunpack.c.l.s4 1983009808
  %v4019 = vunpack.c.0.s8 %v4018
  %v4020 = vperm.slane %v4012, %v4019
  %v4021 = vrot.slane %v4016, 4
  %v4022 = vsel %vm92, %v4021, %v4004
  %v4023 = vrot.slane %v4004, 4
  %v4024 = vsel %vm92, %v4016, %v4023
  %v4026 = vunpack.c.l.s4 1934713408
  %v4027 = vunpack.c.0.s8 %v4026
  %v4028 = vperm.slane %v4022, %v4027
  %v4030 = vunpack.c.l.s4 1934713408
  %v4031 = vunpack.c.0.s8 %v4030
  %v4032 = vperm.slane %v4024, %v4031
  %v4033 = vrot.slane %v4020, 4
  %v4034 = vsel %vm92, %v4033, %v4008
  %v4035 = vrot.slane %v4008, 4
  %v4036 = vsel %vm92, %v4020, %v4035
  %v4038 = vunpack.c.l.s4 1934713408
  %v4039 = vunpack.c.0.s8 %v4038
  %v4040 = vperm.slane %v4034, %v4039
  %v4042 = vunpack.c.l.s4 1934713408
  %v4043 = vunpack.c.0.s8 %v4042
  %v4044 = vperm.slane %v4036, %v4043
  %v4045 = vrot.slane %v4028, 4
  %v4046 = vsel %vm92, 0.0, %v4045
  %v4047 = vrot.slane %v4032, 4
  %v4048 = vsel %vm92, 0.0, %v4047
  %v4049 = vrot.slane %v4040, 4
  %v4050 = vsel %vm92, 0.0, %v4049
  %v4051 = vrot.slane %v4044, 4
  %v4052 = vsel %vm92, 0.0, %v4051
  %v4053 = vrot.slane %v3984, 4
  %v4054 = vsel %vm92, %v4053, %v3976
  %v4055 = vrot.slane %v3976, 4
  %v4056 = vsel %vm92, %v3984, %v4055
  %v4058 = vunpack.c.l.s4 1983009808
  %v4059 = vunpack.c.0.s8 %v4058
  %v4060 = vperm.slane %v4054, %v4059
  %v4062 = vunpack.c.l.s4 1983009808
  %v4063 = vunpack.c.0.s8 %v4062
  %v4064 = vperm.slane %v4056, %v4063
  %v4065 = vrot.slane %v3988, 4
  %v4066 = vsel %vm92, %v4065, %v3980
  %v4067 = vrot.slane %v3980, 4
  %v4068 = vsel %vm92, %v3988, %v4067
  %v4070 = vunpack.c.l.s4 1983009808
  %v4071 = vunpack.c.0.s8 %v4070
  %v4072 = vperm.slane %v4066, %v4071
  %v4074 = vunpack.c.l.s4 1983009808
  %v4075 = vunpack.c.0.s8 %v4074
  %v4076 = vperm.slane %v4068, %v4075
  %v4077 = vrot.slane %v4072, 4
  %v4078 = vsel %vm92, %v4077, %v4060
  %v4079 = vrot.slane %v4060, 4
  %v4080 = vsel %vm92, %v4072, %v4079
  %v4082 = vunpack.c.l.s4 1934713408
  %v4083 = vunpack.c.0.s8 %v4082
  %v4084 = vperm.slane %v4078, %v4083
  %v4086 = vunpack.c.l.s4 1934713408
  %v4087 = vunpack.c.0.s8 %v4086
  %v4088 = vperm.slane %v4080, %v4087
  %v4089 = vrot.slane %v4076, 4
  %v4090 = vsel %vm92, %v4089, %v4064
  %v4091 = vrot.slane %v4064, 4
  %v4092 = vsel %vm92, %v4076, %v4091
  %v4094 = vunpack.c.l.s4 1934713408
  %v4095 = vunpack.c.0.s8 %v4094
  %v4096 = vperm.slane %v4090, %v4095
  %v4098 = vunpack.c.l.s4 1934713408
  %v4099 = vunpack.c.0.s8 %v4098
  %v4100 = vperm.slane %v4092, %v4099
  %v4101 = vrot.slane %v4084, 4
  %v4102 = vsel %vm92, 0.0, %v4101
  %v4103 = vrot.slane %v4088, 4
  %v4104 = vsel %vm92, 0.0, %v4103
  %v4105 = vrot.slane %v4096, 4
  %v4106 = vsel %vm92, 0.0, %v4105
  %v4107 = vrot.slane %v4100, 4
  %v4108 = vsel %vm92, 0.0, %v4107
  %4110 = vrot.lane.b32.xlu0 %v4046, 16
  %v4111 = vpop.permute.xlu0 %4110
  %4114 = vrot.lane.b32.xlu0 %v4032, 32
  %v4115 = vpop.permute.xlu0 %4114
  %4118 = vrot.lane.b32.xlu0 %v4048, 48
  %v4119 = vpop.permute.xlu0 %4118
  %4122 = vrot.lane.b32.xlu0 %v4040, 64
  %v4123 = vpop.permute.xlu0 %4122
  %4126 = vrot.lane.b32.xlu0 %v4050, 80
  %v4127 = vpop.permute.xlu0 %4126
  %4130 = vrot.lane.b32.xlu0 %v4044, 96
  %v4131 = vpop.permute.xlu0 %4130
  %4134 = vrot.lane.b32.xlu0 %v4052, 112
  %v4135 = vpop.permute.xlu0 %4134
  %4138 = vrot.lane.b32.xlu0 %v4102, 16
  %v4139 = vpop.permute.xlu0 %4138
  %4142 = vrot.lane.b32.xlu0 %v4088, 32
  %v4143 = vpop.permute.xlu0 %4142
  %4146 = vrot.lane.b32.xlu0 %v4104, 48
  %v4147 = vpop.permute.xlu0 %4146
  %4150 = vrot.lane.b32.xlu0 %v4096, 64
  %v4151 = vpop.permute.xlu0 %4150
  %4154 = vrot.lane.b32.xlu0 %v4106, 80
  %v4155 = vpop.permute.xlu0 %4154
  %4158 = vrot.lane.b32.xlu0 %v4100, 96
  %v4159 = vpop.permute.xlu0 %4158
  %4162 = vrot.lane.b32.xlu0 %v4108, 112
  %v4163 = vpop.permute.xlu0 %4162
  %v4165 = vsel %vm692, %v4028, %v4111
  %v4166 = vsel %vm694, %v4165, %v4115
  %v4167 = vsel %vm696, %v4166, %v4119
  %v4168 = vsel %vm698, %v4167, %v4123
  %v4169 = vsel %vm700, %v4168, %v4127
  %v4170 = vsel %vm702, %v4169, %v4131
  %v4171 = vsel %vm704, %v4170, %v4135
  %v4172 = vsel %vm692, %v4084, %v4139
  %v4173 = vsel %vm694, %v4172, %v4143
  %v4174 = vsel %vm696, %v4173, %v4147
  %v4175 = vsel %vm698, %v4174, %v4151
  %v4176 = vsel %vm700, %v4175, %v4155
  %v4177 = vsel %vm702, %v4176, %v4159
  %v4178 = vsel %vm704, %v4177, %v4163
  %v4181 = vrot.slane %v4171, 4
  %v4182 = vrot.slane %v4178, 4
  %4185 = vst [vmem:[#allocation3 + $0x70] sm:$0xf0] %v4181
  %4186 = vst [vmem:[#allocation3 + $0x78] sm:$0xf0] %v4182
  %v4187 = vld [vmem:[%s507 + $0x2] sm:$0xff]
  %v4188 = vld [vmem:[%s507 + $0xa] sm:$0xff]
  %v4189 = vld [vmem:[%s507 + $0x1a] sm:$0xff]
  %v4190 = vld [vmem:[%s507 + $0x22] sm:$0xff]
  %v4191 = vld [vmem:[%s507 + $0x32] sm:$0xff]
  %v4192 = vld [vmem:[%s507 + $0x3a] sm:$0xff]
  %v4193 = vld [vmem:[%s507 + $0x4a] sm:$0xff]
  %v4194 = vld [vmem:[%s507 + $0x52] sm:$0xff]
  %4203 = vrot.lane.b32.xlu0 %v4187, 126
  %v4204 = vpop.permute.xlu0 %4203
  %4205 = vrot.lane.b32.xlu0 %v4188, 126
  %v4206 = vpop.permute.xlu0 %4205
  %4207 = vrot.lane.b32.xlu0 %v4189, 126
  %v4208 = vpop.permute.xlu0 %4207
  %4209 = vrot.lane.b32.xlu0 %v4190, 126
  %v4210 = vpop.permute.xlu0 %4209
  %4211 = vrot.lane.b32.xlu0 %v4191, 126
  %v4212 = vpop.permute.xlu0 %4211
  %4213 = vrot.lane.b32.xlu0 %v4192, 126
  %v4214 = vpop.permute.xlu0 %4213
  %4215 = vrot.lane.b32.xlu0 %v4193, 126
  %v4216 = vpop.permute.xlu0 %4215
  %4217 = vrot.lane.b32.xlu0 %v4194, 126
  %v4218 = vpop.permute.xlu0 %4217
  %v4227 = vrot.slane %v4212, 4
  %v4228 = vsel %vm92, %v4227, %v4204
  %v4229 = vrot.slane %v4204, 4
  %v4230 = vsel %vm92, %v4212, %v4229
  %v4232 = vunpack.c.l.s4 1983009808
  %v4233 = vunpack.c.0.s8 %v4232
  %v4234 = vperm.slane %v4228, %v4233
  %v4236 = vunpack.c.l.s4 1983009808
  %v4237 = vunpack.c.0.s8 %v4236
  %v4238 = vperm.slane %v4230, %v4237
  %v4239 = vrot.slane %v4216, 4
  %v4240 = vsel %vm92, %v4239, %v4208
  %v4241 = vrot.slane %v4208, 4
  %v4242 = vsel %vm92, %v4216, %v4241
  %v4244 = vunpack.c.l.s4 1983009808
  %v4245 = vunpack.c.0.s8 %v4244
  %v4246 = vperm.slane %v4240, %v4245
  %v4248 = vunpack.c.l.s4 1983009808
  %v4249 = vunpack.c.0.s8 %v4248
  %v4250 = vperm.slane %v4242, %v4249
  %v4251 = vrot.slane %v4246, 4
  %v4252 = vsel %vm92, %v4251, %v4234
  %v4253 = vrot.slane %v4234, 4
  %v4254 = vsel %vm92, %v4246, %v4253
  %v4256 = vunpack.c.l.s4 1934713408
  %v4257 = vunpack.c.0.s8 %v4256
  %v4258 = vperm.slane %v4252, %v4257
  %v4260 = vunpack.c.l.s4 1934713408
  %v4261 = vunpack.c.0.s8 %v4260
  %v4262 = vperm.slane %v4254, %v4261
  %v4263 = vrot.slane %v4250, 4
  %v4264 = vsel %vm92, %v4263, %v4238
  %v4265 = vrot.slane %v4238, 4
  %v4266 = vsel %vm92, %v4250, %v4265
  %v4268 = vunpack.c.l.s4 1934713408
  %v4269 = vunpack.c.0.s8 %v4268
  %v4270 = vperm.slane %v4264, %v4269
  %v4272 = vunpack.c.l.s4 1934713408
  %v4273 = vunpack.c.0.s8 %v4272
  %v4274 = vperm.slane %v4266, %v4273
  %v4275 = vrot.slane %v4258, 4
  %v4276 = vsel %vm92, 0.0, %v4275
  %v4277 = vrot.slane %v4262, 4
  %v4278 = vsel %vm92, 0.0, %v4277
  %v4279 = vrot.slane %v4270, 4
  %v4280 = vsel %vm92, 0.0, %v4279
  %v4281 = vrot.slane %v4274, 4
  %v4282 = vsel %vm92, 0.0, %v4281
  %v4283 = vrot.slane %v4214, 4
  %v4284 = vsel %vm92, %v4283, %v4206
  %v4285 = vrot.slane %v4206, 4
  %v4286 = vsel %vm92, %v4214, %v4285
  %v4288 = vunpack.c.l.s4 1983009808
  %v4289 = vunpack.c.0.s8 %v4288
  %v4290 = vperm.slane %v4284, %v4289
  %v4292 = vunpack.c.l.s4 1983009808
  %v4293 = vunpack.c.0.s8 %v4292
  %v4294 = vperm.slane %v4286, %v4293
  %v4295 = vrot.slane %v4218, 4
  %v4296 = vsel %vm92, %v4295, %v4210
  %v4297 = vrot.slane %v4210, 4
  %v4298 = vsel %vm92, %v4218, %v4297
  %v4300 = vunpack.c.l.s4 1983009808
  %v4301 = vunpack.c.0.s8 %v4300
  %v4302 = vperm.slane %v4296, %v4301
  %v4304 = vunpack.c.l.s4 1983009808
  %v4305 = vunpack.c.0.s8 %v4304
  %v4306 = vperm.slane %v4298, %v4305
  %v4307 = vrot.slane %v4302, 4
  %v4308 = vsel %vm92, %v4307, %v4290
  %v4309 = vrot.slane %v4290, 4
  %v4310 = vsel %vm92, %v4302, %v4309
  %v4312 = vunpack.c.l.s4 1934713408
  %v4313 = vunpack.c.0.s8 %v4312
  %v4314 = vperm.slane %v4308, %v4313
  %v4316 = vunpack.c.l.s4 1934713408
  %v4317 = vunpack.c.0.s8 %v4316
  %v4318 = vperm.slane %v4310, %v4317
  %v4319 = vrot.slane %v4306, 4
  %v4320 = vsel %vm92, %v4319, %v4294
  %v4321 = vrot.slane %v4294, 4
  %v4322 = vsel %vm92, %v4306, %v4321
  %v4324 = vunpack.c.l.s4 1934713408
  %v4325 = vunpack.c.0.s8 %v4324
  %v4326 = vperm.slane %v4320, %v4325
  %v4328 = vunpack.c.l.s4 1934713408
  %v4329 = vunpack.c.0.s8 %v4328
  %v4330 = vperm.slane %v4322, %v4329
  %v4331 = vrot.slane %v4314, 4
  %v4332 = vsel %vm92, 0.0, %v4331
  %v4333 = vrot.slane %v4318, 4
  %v4334 = vsel %vm92, 0.0, %v4333
  %v4335 = vrot.slane %v4326, 4
  %v4336 = vsel %vm92, 0.0, %v4335
  %v4337 = vrot.slane %v4330, 4
  %v4338 = vsel %vm92, 0.0, %v4337
  %4340 = vrot.lane.b32.xlu0 %v4276, 16
  %v4341 = vpop.permute.xlu0 %4340
  %4344 = vrot.lane.b32.xlu0 %v4262, 32
  %v4345 = vpop.permute.xlu0 %4344
  %4348 = vrot.lane.b32.xlu0 %v4278, 48
  %v4349 = vpop.permute.xlu0 %4348
  %4352 = vrot.lane.b32.xlu0 %v4270, 64
  %v4353 = vpop.permute.xlu0 %4352
  %4356 = vrot.lane.b32.xlu0 %v4280, 80
  %v4357 = vpop.permute.xlu0 %4356
  %4360 = vrot.lane.b32.xlu0 %v4274, 96
  %v4361 = vpop.permute.xlu0 %4360
  %4364 = vrot.lane.b32.xlu0 %v4282, 112
  %v4365 = vpop.permute.xlu0 %4364
  %4368 = vrot.lane.b32.xlu0 %v4332, 16
  %v4369 = vpop.permute.xlu0 %4368
  %4372 = vrot.lane.b32.xlu0 %v4318, 32
  %v4373 = vpop.permute.xlu0 %4372
  %4376 = vrot.lane.b32.xlu0 %v4334, 48
  %v4377 = vpop.permute.xlu0 %4376
  %4380 = vrot.lane.b32.xlu0 %v4326, 64
  %v4381 = vpop.permute.xlu0 %4380
  %4384 = vrot.lane.b32.xlu0 %v4336, 80
  %v4385 = vpop.permute.xlu0 %4384
  %4388 = vrot.lane.b32.xlu0 %v4330, 96
  %v4389 = vpop.permute.xlu0 %4388
  %4392 = vrot.lane.b32.xlu0 %v4338, 112
  %v4393 = vpop.permute.xlu0 %4392
  %v4395 = vsel %vm692, %v4258, %v4341
  %v4396 = vsel %vm694, %v4395, %v4345
  %v4397 = vsel %vm696, %v4396, %v4349
  %v4398 = vsel %vm698, %v4397, %v4353
  %v4399 = vsel %vm700, %v4398, %v4357
  %v4400 = vsel %vm702, %v4399, %v4361
  %v4401 = vsel %vm704, %v4400, %v4365
  %v4402 = vsel %vm692, %v4314, %v4369
  %v4403 = vsel %vm694, %v4402, %v4373
  %v4404 = vsel %vm696, %v4403, %v4377
  %v4405 = vsel %vm698, %v4404, %v4381
  %v4406 = vsel %vm700, %v4405, %v4385
  %v4407 = vsel %vm702, %v4406, %v4389
  %v4408 = vsel %vm704, %v4407, %v4393
  %4409 = vst [vmem:[#allocation3 + $0x90] sm:$0xf] %v4401
  %4410 = vst [vmem:[#allocation3 + $0x98] sm:$0xf] %v4408
  %v4411 = vld [vmem:[%s1] sm:$0xf]
  %v4412 = vld [vmem:[#allocation3] sm:$0xff]
  %v4413 = vld [vmem:[#allocation3 + $0x8] sm:$0xff]
  %v4414 = vld [vmem:[#allocation3 + $0x10] sm:$0xff]
  %v4415 = vld [vmem:[#allocation3 + $0x18] sm:$0xff]
  %v4416 = vld [vmem:[#allocation3 + $0x20] sm:$0xff]
  %v4417 = vld [vmem:[#allocation3 + $0x28] sm:$0xff]
  %v4418 = vld [vmem:[#allocation3 + $0x30] sm:$0xff]
  %v4419 = vld [vmem:[#allocation3 + $0x38] sm:$0xff]
  %v4420 = vld [vmem:[#allocation3 + $0x40] sm:$0xff]
  %v4421 = vld [vmem:[#allocation3 + $0x48] sm:$0xff]
  %v4422 = vld [vmem:[#allocation3 + $0x50] sm:$0xff]
  %v4423 = vld [vmem:[#allocation3 + $0x58] sm:$0xff]
  %v4424 = vld [vmem:[#allocation3 + $0x60] sm:$0xff]
  %v4425 = vld [vmem:[#allocation3 + $0x68] sm:$0xff]
  %v4426 = vld [vmem:[#allocation3 + $0x70] sm:$0xff]
  %v4427 = vld [vmem:[#allocation3 + $0x78] sm:$0xff]
  %v4428 = vld [vmem:[#allocation3 + $0x80] sm:$0xf]
  %v4429 = vld [vmem:[#allocation3 + $0x88] sm:$0xf]
  %v4430 = vld [vmem:[#allocation3 + $0x90] sm:$0xf]
  %v4431 = vld [vmem:[#allocation3 + $0x98] sm:$0xf]
  %vm4432 = vcmask 293888
  %v4434 = vsel %vm4432, %v4411, 0
  %vm4436 = vcmask 1043456
  %v4438 = vsel %vm4436, %v4428, 0
  %v4441 = vsel %vm4436, %v4429, 0
  %v4444 = vsel %vm4436, %v4430, 0
  %v4447 = vsel %vm4436, %v4431, 0
  %4449 = vmatpush.msra.mxu0 0.0
  %4450 = vmatpush.msra.mxu0 0.0
  %4451 = vmatpush.msra.mxu0 0.0
  %4452 = vmatpush.msra.mxu0 0.0
  %4453 = vmatpush.msra.mxu0 0.0
  %4454 = vmatpush.msra.mxu0 0.0
  %4455 = vmatpush.msra.mxu0 0.0
  %4456 = vmatpush.msra.mxu0 0.0
  %4457 = vmatpush.msra.mxu0 0.0
  %4458 = vmatpush.msra.mxu0 0.0
  %4459 = vmatpush.msra.mxu0 0.0
  %4460 = vmatpush.msra.mxu0 %v4438
  %4461 = vmatpush.msra.mxu0 %v4424
  %4462 = vmatpush.msra.mxu0 %v4420
  %4463 = vmatpush.msra.mxu0 %v4416
  %4464 = vmatpush.msra.mxu0 %v4412
  %4465 = vmatmul.f32.gmra.mxu0 %v4434
  %v4466 = vpop.f32.mrf.mxu0
  %v4467 = vadd.f32 0.0, %v4466
  %4468 = vdwg.mxu0
  %4469 = vmatpush.msra.mxu0 0.0
  %4470 = vmatpush.msra.mxu0 0.0
  %4471 = vmatpush.msra.mxu0 0.0
  %4472 = vmatpush.msra.mxu0 0.0
  %4473 = vmatpush.msra.mxu0 0.0
  %4474 = vmatpush.msra.mxu0 0.0
  %4475 = vmatpush.msra.mxu0 0.0
  %4476 = vmatpush.msra.mxu0 0.0
  %4477 = vmatpush.msra.mxu0 0.0
  %4478 = vmatpush.msra.mxu0 0.0
  %4479 = vmatpush.msra.mxu0 0.0
  %4480 = vmatpush.msra.mxu0 %v4441
  %4481 = vmatpush.msra.mxu0 %v4425
  %4482 = vmatpush.msra.mxu0 %v4421
  %4483 = vmatpush.msra.mxu0 %v4417
  %4484 = vmatpush.msra.mxu0 %v4413
  %4485 = vmatmul.f32.gmra.mxu0 %v4434
  %v4486 = vpop.f32.mrf.mxu0
  %v4487 = vadd.f32 0.0, %v4486
  %4488 = vdwg.mxu0
  %4489 = vmatpush.msra.mxu0 0.0
  %4490 = vmatpush.msra.mxu0 0.0
  %4491 = vmatpush.msra.mxu0 0.0
  %4492 = vmatpush.msra.mxu0 0.0
  %4493 = vmatpush.msra.mxu0 0.0
  %4494 = vmatpush.msra.mxu0 0.0
  %4495 = vmatpush.msra.mxu0 0.0
  %4496 = vmatpush.msra.mxu0 0.0
  %4497 = vmatpush.msra.mxu0 0.0
  %4498 = vmatpush.msra.mxu0 0.0
  %4499 = vmatpush.msra.mxu0 0.0
  %4500 = vmatpush.msra.mxu0 %v4444
  %4501 = vmatpush.msra.mxu0 %v4426
  %4502 = vmatpush.msra.mxu0 %v4422
  %4503 = vmatpush.msra.mxu0 %v4418
  %4504 = vmatpush.msra.mxu0 %v4414
  %4505 = vmatmul.f32.gmra.mxu0 %v4434
  %v4506 = vpop.f32.mrf.mxu0
  %v4507 = vadd.f32 0.0, %v4506
  %4508 = vdwg.mxu0
  %4509 = vmatpush.msra.mxu0 0.0
  %4510 = vmatpush.msra.mxu0 0.0
  %4511 = vmatpush.msra.mxu0 0.0
  %4512 = vmatpush.msra.mxu0 0.0
  %4513 = vmatpush.msra.mxu0 0.0
  %4514 = vmatpush.msra.mxu0 0.0
  %4515 = vmatpush.msra.mxu0 0.0
  %4516 = vmatpush.msra.mxu0 0.0
  %4517 = vmatpush.msra.mxu0 0.0
  %4518 = vmatpush.msra.mxu0 0.0
  %4519 = vmatpush.msra.mxu0 0.0
  %4520 = vmatpush.msra.mxu0 %v4447
  %4521 = vmatpush.msra.mxu0 %v4427
  %4522 = vmatpush.msra.mxu0 %v4423
  %4523 = vmatpush.msra.mxu0 %v4419
  %4524 = vmatpush.msra.mxu0 %v4415
  %4525 = vmatmul.f32.gmra.mxu0 %v4434
  %v4526 = vpop.f32.mrf.mxu0
  %v4527 = vadd.f32 0.0, %v4526
  %4528 = vdwg.mxu0
  %v4529 = vld [vmem:[%s2] sm:$0xf]
  %v4530 = vld [vmem:[%s3] sm:$0xf]
  %v4531 = vsel %vm4436, %v4467, 0.0
  %v4532 = vsel %vm4436, %v4487, 0.0
  %v4533 = vadd.f32 %v4531, %v4532
  %v4534 = vsel %vm4436, %v4507, 0.0
  %v4535 = vadd.f32 %v4533, %v4534
  %v4536 = vsel %vm4436, %v4527, 0.0
  %v4537 = vadd.f32 %v4535, %v4536
  %4538 = vadd.xlane.f32.xlu0 %v4537
  %v4539 = vpop.xlane.xlu0 %4538
  %v4540 = vmul.f32 %v4467, %v4467
  %v4541 = vmul.f32 %v4487, %v4487
  %v4542 = vmul.f32 %v4507, %v4507
  %v4543 = vmul.f32 %v4527, %v4527
  %v4544 = vsel %vm4436, %v4540, 0.0
  %v4545 = vsel %vm4436, %v4541, 0.0
  %v4546 = vadd.f32 %v4544, %v4545
  %v4547 = vsel %vm4436, %v4542, 0.0
  %v4548 = vadd.f32 %v4546, %v4547
  %v4549 = vsel %vm4436, %v4543, 0.0
  %v4550 = vadd.f32 %v4548, %v4549
  %4551 = vadd.xlane.f32.xlu0 %v4550
  %v4552 = vpop.xlane.xlu0 %4551
  %v4553 = vmul.f32 %v4539, 0.001953125
  %v4554 = vmul.f32 %v4552, 0.001953125
  %v4555 = vmul.f32 %v4553, %v4553
  %v4556 = vsub.f32 %v4554, %v4555
  %v4557 = vsub.f32 %v4467, %v4553
  %v4558 = vsub.f32 %v4487, %v4553
  %v4559 = vsub.f32 %v4507, %v4553
  %v4560 = vsub.f32 %v4527, %v4553
  %v4561 = vadd.f32 %v4556, 1e-05
  %v4562 = vrsqrt.pop %v4561
  %v4563 = vmul.f32 %v4562, %v4561
  %v4564 = vmul.f32 %v4563, %v4562
  %v4565 = vmul.f32 0.5, %v4564
  %v4566 = vsub.f32 1.5, %v4565
  %v4567 = vmul.f32 %v4562, %v4566
  %vm4568 = vweird.f32 %v4561
  %vm4569 = vweird.f32 %v4562
  %vm4570 = vmor %vm4568, %vm4569
  %v4571 = vsel %vm4570, %v4562, %v4567
  %v4572 = vmul.f32 %v4557, %v4571
  %v4573 = vmul.f32 %v4558, %v4571
  %v4574 = vmul.f32 %v4559, %v4571
  %v4575 = vmul.f32 %v4560, %v4571
  %4577 = vset.pattern.permute.xlu0 0
  %4578 = vperm.xlu0 %4577, %v4529
  %v4579 = vpop.permute.xlu0 %4578
  %v4581 = vmul.f32 %v4572, %v4579
  %v4582 = vmul.f32 %v4573, %v4579
  %v4583 = vmul.f32 %v4574, %v4579
  %v4584 = vmul.f32 %v4575, %v4579
  %4586 = vset.pattern.permute.xlu0 0
  %4587 = vperm.xlu0 %4586, %v4530
  %v4588 = vpop.permute.xlu0 %4587
  %v4590 = vadd.f32 %v4581, %v4588
  %v4591 = vadd.f32 %v4582, %v4588
  %v4592 = vadd.f32 %v4583, %v4588
  %v4593 = vadd.f32 %v4584, %v4588
  %v4594 = vmax.f32 %v4590, 0.0
  %v4595 = vmax.f32 %v4591, 0.0
  %v4596 = vmax.f32 %v4592, 0.0
  %v4597 = vmax.f32 %v4593, 0.0
  %4598 = vst.msk [vmem:[#allocation2] sm:$0xff] %vm26, 0.0
  %4599 = vst.msk [vmem:[#allocation2 + $0x8] sm:$0xff] %vm26, 0.0
  %4600 = vst.msk [vmem:[#allocation2 + $0x10] sm:$0x3] %vm29, 0.0
  %4601 = vst.msk [vmem:[#allocation2 + $0x18] sm:$0xff] %vm26, 0.0
  %4602 = vst.msk [vmem:[#allocation2 + $0x20] sm:$0xff] %vm26, 0.0
  %4603 = vst.msk [vmem:[#allocation2 + $0x28] sm:$0x3] %vm29, 0.0
  %4604 = vst.msk [vmem:[#allocation2 + $0x30] sm:$0xff] %vm26, 0.0
  %4605 = vst.msk [vmem:[#allocation2 + $0x38] sm:$0xff] %vm26, 0.0
  %4606 = vst.msk [vmem:[#allocation2 + $0x40] sm:$0x3] %vm29, 0.0
  %4607 = vst.msk [vmem:[#allocation2 + $0x48] sm:$0xff] %vm26, 0.0
  %4608 = vst.msk [vmem:[#allocation2 + $0x50] sm:$0xff] %vm26, 0.0
  %4609 = vst.msk [vmem:[#allocation2 + $0x58] sm:$0x3] %vm29, 0.0
  %4610 = vst.msk [vmem:[#allocation2 + $0x60] sm:$0xff] %vm26, 0.0
  %4611 = vst.msk [vmem:[#allocation2 + $0x68] sm:$0xff] %vm26, 0.0
  %4612 = vst.msk [vmem:[#allocation2 + $0x70] sm:$0x3] %vm29, 0.0
  %4613 = vst.msk [vmem:[#allocation2 + $0x78] sm:$0xff] %vm26, 0.0
  %4614 = vst.msk [vmem:[#allocation2 + $0x80] sm:$0xff] %vm26, 0.0
  %4615 = vst.msk [vmem:[#allocation2 + $0x88] sm:$0x3] %vm29, 0.0
  %4616 = vst.msk [vmem:[#allocation2 + $0x90] sm:$0xff] %vm26, 0.0
  %4617 = vst.msk [vmem:[#allocation2 + $0x98] sm:$0xff] %vm26, 0.0
  %4618 = vst.msk [vmem:[#allocation2 + $0xa0] sm:$0x3] %vm29, 0.0
  %4619 = vst.msk [vmem:[#allocation2 + $0xa8] sm:$0xff] %vm26, 0.0
  %4620 = vst.msk [vmem:[#allocation2 + $0xb0] sm:$0xff] %vm26, 0.0
  %4621 = vst.msk [vmem:[#allocation2 + $0xb8] sm:$0x3] %vm29, 0.0
  %4623 = vrot.lane.b32.xlu0 %v4594, 112
  %v4624 = vpop.permute.xlu0 %4623
  %4626 = vrot.lane.b32.xlu0 %v4594, 96
  %v4627 = vpop.permute.xlu0 %4626
  %4629 = vrot.lane.b32.xlu0 %v4594, 80
  %v4630 = vpop.permute.xlu0 %4629
  %4632 = vrot.lane.b32.xlu0 %v4594, 64
  %v4633 = vpop.permute.xlu0 %4632
  %4635 = vrot.lane.b32.xlu0 %v4594, 48
  %v4636 = vpop.permute.xlu0 %4635
  %4638 = vrot.lane.b32.xlu0 %v4594, 32
  %v4639 = vpop.permute.xlu0 %4638
  %4641 = vrot.lane.b32.xlu0 %v4594, 16
  %v4642 = vpop.permute.xlu0 %4641
  %4645 = vrot.lane.b32.xlu0 %v4595, 112
  %v4646 = vpop.permute.xlu0 %4645
  %4648 = vrot.lane.b32.xlu0 %v4595, 96
  %v4649 = vpop.permute.xlu0 %4648
  %4651 = vrot.lane.b32.xlu0 %v4595, 80
  %v4652 = vpop.permute.xlu0 %4651
  %4654 = vrot.lane.b32.xlu0 %v4595, 64
  %v4655 = vpop.permute.xlu0 %4654
  %4657 = vrot.lane.b32.xlu0 %v4595, 48
  %v4658 = vpop.permute.xlu0 %4657
  %4660 = vrot.lane.b32.xlu0 %v4595, 32
  %v4661 = vpop.permute.xlu0 %4660
  %4663 = vrot.lane.b32.xlu0 %v4595, 16
  %v4664 = vpop.permute.xlu0 %4663
  %v4666 = vrot.slane %v4627, 4
  %v4667 = vsel %vm92, %v4666, %v4594
  %v4669 = vunpack.c.l.s4 1983009808
  %v4670 = vunpack.c.0.s8 %v4669
  %v4671 = vperm.slane %v4667, %v4670
  %v4672 = vrot.slane %v4630, 4
  %v4673 = vsel %vm92, %v4672, %v4624
  %v4675 = vunpack.c.l.s4 1983009808
  %v4676 = vunpack.c.0.s8 %v4675
  %v4677 = vperm.slane %v4673, %v4676
  %v4678 = vrot.slane %v4639, 4
  %v4679 = vsel %vm92, %v4678, %v4633
  %v4681 = vunpack.c.l.s4 1983009808
  %v4682 = vunpack.c.0.s8 %v4681
  %v4683 = vperm.slane %v4679, %v4682
  %v4684 = vrot.slane %v4642, 4
  %v4685 = vsel %vm92, %v4684, %v4636
  %v4687 = vunpack.c.l.s4 1983009808
  %v4688 = vunpack.c.0.s8 %v4687
  %v4689 = vperm.slane %v4685, %v4688
  %v4690 = vrot.slane %v4677, 4
  %v4691 = vsel %vm92, %v4690, %v4671
  %v4692 = vrot.slane %v4671, 4
  %v4693 = vsel %vm92, %v4677, %v4692
  %v4695 = vunpack.c.l.s4 1934713408
  %v4696 = vunpack.c.0.s8 %v4695
  %v4697 = vperm.slane %v4691, %v4696
  %v4699 = vunpack.c.l.s4 1934713408
  %v4700 = vunpack.c.0.s8 %v4699
  %v4701 = vperm.slane %v4693, %v4700
  %v4702 = vrot.slane %v4689, 4
  %v4703 = vsel %vm92, %v4702, %v4683
  %v4704 = vrot.slane %v4683, 4
  %v4705 = vsel %vm92, %v4689, %v4704
  %v4707 = vunpack.c.l.s4 1934713408
  %v4708 = vunpack.c.0.s8 %v4707
  %v4709 = vperm.slane %v4703, %v4708
  %v4711 = vunpack.c.l.s4 1934713408
  %v4712 = vunpack.c.0.s8 %v4711
  %v4713 = vperm.slane %v4705, %v4712
  %v4714 = vrot.slane %v4709, 4
  %v4715 = vsel %vm92, %v4714, %v4697
  %v4716 = vrot.slane %v4697, 4
  %v4717 = vsel %vm92, %v4709, %v4716
  %v4718 = vrot.slane %v4713, 4
  %v4719 = vsel %vm92, %v4718, %v4701
  %v4720 = vrot.slane %v4701, 4
  %v4721 = vsel %vm92, %v4713, %v4720
  %v4722 = vrot.slane %v4649, 4
  %v4723 = vsel %vm92, %v4722, %v4595
  %v4725 = vunpack.c.l.s4 1983009808
  %v4726 = vunpack.c.0.s8 %v4725
  %v4727 = vperm.slane %v4723, %v4726
  %v4728 = vrot.slane %v4652, 4
  %v4729 = vsel %vm92, %v4728, %v4646
  %v4731 = vunpack.c.l.s4 1983009808
  %v4732 = vunpack.c.0.s8 %v4731
  %v4733 = vperm.slane %v4729, %v4732
  %v4734 = vrot.slane %v4661, 4
  %v4735 = vsel %vm92, %v4734, %v4655
  %v4737 = vunpack.c.l.s4 1983009808
  %v4738 = vunpack.c.0.s8 %v4737
  %v4739 = vperm.slane %v4735, %v4738
  %v4740 = vrot.slane %v4664, 4
  %v4741 = vsel %vm92, %v4740, %v4658
  %v4743 = vunpack.c.l.s4 1983009808
  %v4744 = vunpack.c.0.s8 %v4743
  %v4745 = vperm.slane %v4741, %v4744
  %v4746 = vrot.slane %v4733, 4
  %v4747 = vsel %vm92, %v4746, %v4727
  %v4748 = vrot.slane %v4727, 4
  %v4749 = vsel %vm92, %v4733, %v4748
  %v4751 = vunpack.c.l.s4 1934713408
  %v4752 = vunpack.c.0.s8 %v4751
  %v4753 = vperm.slane %v4747, %v4752
  %v4755 = vunpack.c.l.s4 1934713408
  %v4756 = vunpack.c.0.s8 %v4755
  %v4757 = vperm.slane %v4749, %v4756
  %v4758 = vrot.slane %v4745, 4
  %v4759 = vsel %vm92, %v4758, %v4739
  %v4760 = vrot.slane %v4739, 4
  %v4761 = vsel %vm92, %v4745, %v4760
  %v4763 = vunpack.c.l.s4 1934713408
  %v4764 = vunpack.c.0.s8 %v4763
  %v4765 = vperm.slane %v4759, %v4764
  %v4767 = vunpack.c.l.s4 1934713408
  %v4768 = vunpack.c.0.s8 %v4767
  %v4769 = vperm.slane %v4761, %v4768
  %v4770 = vrot.slane %v4765, 4
  %v4771 = vsel %vm92, %v4770, %v4753
  %v4772 = vrot.slane %v4753, 4
  %v4773 = vsel %vm92, %v4765, %v4772
  %v4774 = vrot.slane %v4769, 4
  %v4775 = vsel %vm92, %v4774, %v4757
  %v4776 = vrot.slane %v4757, 4
  %v4777 = vsel %vm92, %v4769, %v4776
  %4786 = vrot.lane.b32.xlu0 %v4715, 1
  %v4787 = vpop.permute.xlu0 %4786
  %4788 = vrot.lane.b32.xlu0 %v4771, 1
  %v4789 = vpop.permute.xlu0 %4788
  %4790 = vrot.lane.b32.xlu0 %v4717, 1
  %v4791 = vpop.permute.xlu0 %4790
  %4792 = vrot.lane.b32.xlu0 %v4773, 1
  %v4793 = vpop.permute.xlu0 %4792
  %4794 = vrot.lane.b32.xlu0 %v4719, 1
  %v4795 = vpop.permute.xlu0 %4794
  %4796 = vrot.lane.b32.xlu0 %v4775, 1
  %v4797 = vpop.permute.xlu0 %4796
  %4798 = vrot.lane.b32.xlu0 %v4721, 1
  %v4799 = vpop.permute.xlu0 %4798
  %4800 = vrot.lane.b32.xlu0 %v4777, 1
  %v4801 = vpop.permute.xlu0 %4800
  %4810 = vst.msk [vmem:[#allocation2 + $0x1] sm:$0xff] %vm275, %v4787
  %4811 = vst.msk [vmem:[#allocation2 + $0x9] sm:$0xff] %vm275, %v4789
  %4812 = vst.msk [vmem:[#allocation2 + $0x19] sm:$0xff] %vm275, %v4791
  %4813 = vst.msk [vmem:[#allocation2 + $0x21] sm:$0xff] %vm275, %v4793
  %4814 = vst.msk [vmem:[#allocation2 + $0x31] sm:$0xff] %vm275, %v4795
  %4815 = vst.msk [vmem:[#allocation2 + $0x39] sm:$0xff] %vm275, %v4797
  %4816 = vst.msk [vmem:[#allocation2 + $0x49] sm:$0xff] %vm275, %v4799
  %4817 = vst.msk [vmem:[#allocation2 + $0x51] sm:$0xff] %vm275, %v4801
  %4819 = vrot.lane.b32.xlu0 %v4596, 112
  %v4820 = vpop.permute.xlu0 %4819
  %4822 = vrot.lane.b32.xlu0 %v4596, 96
  %v4823 = vpop.permute.xlu0 %4822
  %4825 = vrot.lane.b32.xlu0 %v4596, 80
  %v4826 = vpop.permute.xlu0 %4825
  %4828 = vrot.lane.b32.xlu0 %v4596, 64
  %v4829 = vpop.permute.xlu0 %4828
  %4831 = vrot.lane.b32.xlu0 %v4596, 48
  %v4832 = vpop.permute.xlu0 %4831
  %4834 = vrot.lane.b32.xlu0 %v4596, 32
  %v4835 = vpop.permute.xlu0 %4834
  %4837 = vrot.lane.b32.xlu0 %v4596, 16
  %v4838 = vpop.permute.xlu0 %4837
  %4841 = vrot.lane.b32.xlu0 %v4597, 112
  %v4842 = vpop.permute.xlu0 %4841
  %4844 = vrot.lane.b32.xlu0 %v4597, 96
  %v4845 = vpop.permute.xlu0 %4844
  %4847 = vrot.lane.b32.xlu0 %v4597, 80
  %v4848 = vpop.permute.xlu0 %4847
  %4850 = vrot.lane.b32.xlu0 %v4597, 64
  %v4851 = vpop.permute.xlu0 %4850
  %4853 = vrot.lane.b32.xlu0 %v4597, 48
  %v4854 = vpop.permute.xlu0 %4853
  %4856 = vrot.lane.b32.xlu0 %v4597, 32
  %v4857 = vpop.permute.xlu0 %4856
  %4859 = vrot.lane.b32.xlu0 %v4597, 16
  %v4860 = vpop.permute.xlu0 %4859
  %v4862 = vrot.slane %v4823, 4
  %v4863 = vsel %vm92, %v4862, %v4596
  %v4865 = vunpack.c.l.s4 1983009808
  %v4866 = vunpack.c.0.s8 %v4865
  %v4867 = vperm.slane %v4863, %v4866
  %v4868 = vrot.slane %v4826, 4
  %v4869 = vsel %vm92, %v4868, %v4820
  %v4871 = vunpack.c.l.s4 1983009808
  %v4872 = vunpack.c.0.s8 %v4871
  %v4873 = vperm.slane %v4869, %v4872
  %v4874 = vrot.slane %v4835, 4
  %v4875 = vsel %vm92, %v4874, %v4829
  %v4877 = vunpack.c.l.s4 1983009808
  %v4878 = vunpack.c.0.s8 %v4877
  %v4879 = vperm.slane %v4875, %v4878
  %v4880 = vrot.slane %v4838, 4
  %v4881 = vsel %vm92, %v4880, %v4832
  %v4883 = vunpack.c.l.s4 1983009808
  %v4884 = vunpack.c.0.s8 %v4883
  %v4885 = vperm.slane %v4881, %v4884
  %v4886 = vrot.slane %v4873, 4
  %v4887 = vsel %vm92, %v4886, %v4867
  %v4888 = vrot.slane %v4867, 4
  %v4889 = vsel %vm92, %v4873, %v4888
  %v4891 = vunpack.c.l.s4 1934713408
  %v4892 = vunpack.c.0.s8 %v4891
  %v4893 = vperm.slane %v4887, %v4892
  %v4895 = vunpack.c.l.s4 1934713408
  %v4896 = vunpack.c.0.s8 %v4895
  %v4897 = vperm.slane %v4889, %v4896
  %v4898 = vrot.slane %v4885, 4
  %v4899 = vsel %vm92, %v4898, %v4879
  %v4900 = vrot.slane %v4879, 4
  %v4901 = vsel %vm92, %v4885, %v4900
  %v4903 = vunpack.c.l.s4 1934713408
  %v4904 = vunpack.c.0.s8 %v4903
  %v4905 = vperm.slane %v4899, %v4904
  %v4907 = vunpack.c.l.s4 1934713408
  %v4908 = vunpack.c.0.s8 %v4907
  %v4909 = vperm.slane %v4901, %v4908
  %v4910 = vrot.slane %v4905, 4
  %v4911 = vsel %vm92, %v4910, %v4893
  %v4912 = vrot.slane %v4893, 4
  %v4913 = vsel %vm92, %v4905, %v4912
  %v4914 = vrot.slane %v4909, 4
  %v4915 = vsel %vm92, %v4914, %v4897
  %v4916 = vrot.slane %v4897, 4
  %v4917 = vsel %vm92, %v4909, %v4916
  %v4918 = vrot.slane %v4845, 4
  %v4919 = vsel %vm92, %v4918, %v4597
  %v4921 = vunpack.c.l.s4 1983009808
  %v4922 = vunpack.c.0.s8 %v4921
  %v4923 = vperm.slane %v4919, %v4922
  %v4924 = vrot.slane %v4848, 4
  %v4925 = vsel %vm92, %v4924, %v4842
  %v4927 = vunpack.c.l.s4 1983009808
  %v4928 = vunpack.c.0.s8 %v4927
  %v4929 = vperm.slane %v4925, %v4928
  %v4930 = vrot.slane %v4857, 4
  %v4931 = vsel %vm92, %v4930, %v4851
  %v4933 = vunpack.c.l.s4 1983009808
  %v4934 = vunpack.c.0.s8 %v4933
  %v4935 = vperm.slane %v4931, %v4934
  %v4936 = vrot.slane %v4860, 4
  %v4937 = vsel %vm92, %v4936, %v4854
  %v4939 = vunpack.c.l.s4 1983009808
  %v4940 = vunpack.c.0.s8 %v4939
  %v4941 = vperm.slane %v4937, %v4940
  %v4942 = vrot.slane %v4929, 4
  %v4943 = vsel %vm92, %v4942, %v4923
  %v4944 = vrot.slane %v4923, 4
  %v4945 = vsel %vm92, %v4929, %v4944
  %v4947 = vunpack.c.l.s4 1934713408
  %v4948 = vunpack.c.0.s8 %v4947
  %v4949 = vperm.slane %v4943, %v4948
  %v4951 = vunpack.c.l.s4 1934713408
  %v4952 = vunpack.c.0.s8 %v4951
  %v4953 = vperm.slane %v4945, %v4952
  %v4954 = vrot.slane %v4941, 4
  %v4955 = vsel %vm92, %v4954, %v4935
  %v4956 = vrot.slane %v4935, 4
  %v4957 = vsel %vm92, %v4941, %v4956
  %v4959 = vunpack.c.l.s4 1934713408
  %v4960 = vunpack.c.0.s8 %v4959
  %v4961 = vperm.slane %v4955, %v4960
  %v4963 = vunpack.c.l.s4 1934713408
  %v4964 = vunpack.c.0.s8 %v4963
  %v4965 = vperm.slane %v4957, %v4964
  %v4966 = vrot.slane %v4961, 4
  %v4967 = vsel %vm92, %v4966, %v4949
  %v4968 = vrot.slane %v4949, 4
  %v4969 = vsel %vm92, %v4961, %v4968
  %v4970 = vrot.slane %v4965, 4
  %v4971 = vsel %vm92, %v4970, %v4953
  %v4972 = vrot.slane %v4953, 4
  %v4973 = vsel %vm92, %v4965, %v4972
  %4982 = vrot.lane.b32.xlu0 %v4911, 1
  %v4983 = vpop.permute.xlu0 %4982
  %4984 = vrot.lane.b32.xlu0 %v4967, 1
  %v4985 = vpop.permute.xlu0 %4984
  %4986 = vrot.lane.b32.xlu0 %v4913, 1
  %v4987 = vpop.permute.xlu0 %4986
  %4988 = vrot.lane.b32.xlu0 %v4969, 1
  %v4989 = vpop.permute.xlu0 %4988
  %4990 = vrot.lane.b32.xlu0 %v4915, 1
  %v4991 = vpop.permute.xlu0 %4990
  %4992 = vrot.lane.b32.xlu0 %v4971, 1
  %v4993 = vpop.permute.xlu0 %4992
  %4994 = vrot.lane.b32.xlu0 %v4917, 1
  %v4995 = vpop.permute.xlu0 %4994
  %4996 = vrot.lane.b32.xlu0 %v4973, 1
  %v4997 = vpop.permute.xlu0 %4996
  %5006 = vst.msk [vmem:[%s507 + $0x1] sm:$0xff] %vm275, %v4983
  %5007 = vst.msk [vmem:[%s507 + $0x9] sm:$0xff] %vm275, %v4985
  %5008 = vst.msk [vmem:[%s507 + $0x19] sm:$0xff] %vm275, %v4987
  %5009 = vst.msk [vmem:[%s507 + $0x21] sm:$0xff] %vm275, %v4989
  %5010 = vst.msk [vmem:[%s507 + $0x31] sm:$0xff] %vm275, %v4991
  %5011 = vst.msk [vmem:[%s507 + $0x39] sm:$0xff] %vm275, %v4993
  %5012 = vst.msk [vmem:[%s507 + $0x49] sm:$0xff] %vm275, %v4995
  %5013 = vst.msk [vmem:[%s507 + $0x51] sm:$0xff] %vm275, %v4997
  %v5014 = vld [vmem:[#allocation2] sm:$0xff]
  %v5015 = vld [vmem:[#allocation2 + $0x8] sm:$0xff]
  %v5016 = vld [vmem:[#allocation2 + $0x18] sm:$0xff]
  %v5017 = vld [vmem:[#allocation2 + $0x20] sm:$0xff]
  %v5018 = vld [vmem:[#allocation2 + $0x30] sm:$0xff]
  %v5019 = vld [vmem:[#allocation2 + $0x38] sm:$0xff]
  %v5020 = vld [vmem:[#allocation2 + $0x48] sm:$0xff]
  %v5021 = vld [vmem:[#allocation2 + $0x50] sm:$0xff]
  %v5022 = vrot.slane %v5018, 4
  %v5023 = vsel %vm92, %v5022, %v5014
  %v5024 = vrot.slane %v5014, 4
  %v5025 = vsel %vm92, %v5018, %v5024
  %v5027 = vunpack.c.l.s4 1983009808
  %v5028 = vunpack.c.0.s8 %v5027
  %v5029 = vperm.slane %v5023, %v5028
  %v5031 = vunpack.c.l.s4 1983009808
  %v5032 = vunpack.c.0.s8 %v5031
  %v5033 = vperm.slane %v5025, %v5032
  %v5034 = vrot.slane %v5020, 4
  %v5035 = vsel %vm92, %v5034, %v5016
  %v5036 = vrot.slane %v5016, 4
  %v5037 = vsel %vm92, %v5020, %v5036
  %v5039 = vunpack.c.l.s4 1983009808
  %v5040 = vunpack.c.0.s8 %v5039
  %v5041 = vperm.slane %v5035, %v5040
  %v5043 = vunpack.c.l.s4 1983009808
  %v5044 = vunpack.c.0.s8 %v5043
  %v5045 = vperm.slane %v5037, %v5044
  %v5046 = vrot.slane %v5041, 4
  %v5047 = vsel %vm92, %v5046, %v5029
  %v5048 = vrot.slane %v5029, 4
  %v5049 = vsel %vm92, %v5041, %v5048
  %v5051 = vunpack.c.l.s4 1934713408
  %v5052 = vunpack.c.0.s8 %v5051
  %v5053 = vperm.slane %v5047, %v5052
  %v5055 = vunpack.c.l.s4 1934713408
  %v5056 = vunpack.c.0.s8 %v5055
  %v5057 = vperm.slane %v5049, %v5056
  %v5058 = vrot.slane %v5045, 4
  %v5059 = vsel %vm92, %v5058, %v5033
  %v5060 = vrot.slane %v5033, 4
  %v5061 = vsel %vm92, %v5045, %v5060
  %v5063 = vunpack.c.l.s4 1934713408
  %v5064 = vunpack.c.0.s8 %v5063
  %v5065 = vperm.slane %v5059, %v5064
  %v5067 = vunpack.c.l.s4 1934713408
  %v5068 = vunpack.c.0.s8 %v5067
  %v5069 = vperm.slane %v5061, %v5068
  %v5070 = vrot.slane %v5053, 4
  %v5071 = vsel %vm92, 0.0, %v5070
  %v5072 = vrot.slane %v5057, 4
  %v5073 = vsel %vm92, 0.0, %v5072
  %v5074 = vrot.slane %v5065, 4
  %v5075 = vsel %vm92, 0.0, %v5074
  %v5076 = vrot.slane %v5069, 4
  %v5077 = vsel %vm92, 0.0, %v5076
  %v5078 = vrot.slane %v5019, 4
  %v5079 = vsel %vm92, %v5078, %v5015
  %v5080 = vrot.slane %v5015, 4
  %v5081 = vsel %vm92, %v5019, %v5080
  %v5083 = vunpack.c.l.s4 1983009808
  %v5084 = vunpack.c.0.s8 %v5083
  %v5085 = vperm.slane %v5079, %v5084
  %v5087 = vunpack.c.l.s4 1983009808
  %v5088 = vunpack.c.0.s8 %v5087
  %v5089 = vperm.slane %v5081, %v5088
  %v5090 = vrot.slane %v5021, 4
  %v5091 = vsel %vm92, %v5090, %v5017
  %v5092 = vrot.slane %v5017, 4
  %v5093 = vsel %vm92, %v5021, %v5092
  %v5095 = vunpack.c.l.s4 1983009808
  %v5096 = vunpack.c.0.s8 %v5095
  %v5097 = vperm.slane %v5091, %v5096
  %v5099 = vunpack.c.l.s4 1983009808
  %v5100 = vunpack.c.0.s8 %v5099
  %v5101 = vperm.slane %v5093, %v5100
  %v5102 = vrot.slane %v5097, 4
  %v5103 = vsel %vm92, %v5102, %v5085
  %v5104 = vrot.slane %v5085, 4
  %v5105 = vsel %vm92, %v5097, %v5104
  %v5107 = vunpack.c.l.s4 1934713408
  %v5108 = vunpack.c.0.s8 %v5107
  %v5109 = vperm.slane %v5103, %v5108
  %v5111 = vunpack.c.l.s4 1934713408
  %v5112 = vunpack.c.0.s8 %v5111
  %v5113 = vperm.slane %v5105, %v5112
  %v5114 = vrot.slane %v5101, 4
  %v5115 = vsel %vm92, %v5114, %v5089
  %v5116 = vrot.slane %v5089, 4
  %v5117 = vsel %vm92, %v5101, %v5116
  %v5119 = vunpack.c.l.s4 1934713408
  %v5120 = vunpack.c.0.s8 %v5119
  %v5121 = vperm.slane %v5115, %v5120
  %v5123 = vunpack.c.l.s4 1934713408
  %v5124 = vunpack.c.0.s8 %v5123
  %v5125 = vperm.slane %v5117, %v5124
  %v5126 = vrot.slane %v5109, 4
  %v5127 = vsel %vm92, 0.0, %v5126
  %v5128 = vrot.slane %v5113, 4
  %v5129 = vsel %vm92, 0.0, %v5128
  %v5130 = vrot.slane %v5121, 4
  %v5131 = vsel %vm92, 0.0, %v5130
  %v5132 = vrot.slane %v5125, 4
  %v5133 = vsel %vm92, 0.0, %v5132
  %5135 = vrot.lane.b32.xlu0 %v5071, 16
  %v5136 = vpop.permute.xlu0 %5135
  %5139 = vrot.lane.b32.xlu0 %v5057, 32
  %v5140 = vpop.permute.xlu0 %5139
  %5143 = vrot.lane.b32.xlu0 %v5073, 48
  %v5144 = vpop.permute.xlu0 %5143
  %5147 = vrot.lane.b32.xlu0 %v5065, 64
  %v5148 = vpop.permute.xlu0 %5147
  %5151 = vrot.lane.b32.xlu0 %v5075, 80
  %v5152 = vpop.permute.xlu0 %5151
  %5155 = vrot.lane.b32.xlu0 %v5069, 96
  %v5156 = vpop.permute.xlu0 %5155
  %5159 = vrot.lane.b32.xlu0 %v5077, 112
  %v5160 = vpop.permute.xlu0 %5159
  %5163 = vrot.lane.b32.xlu0 %v5127, 16
  %v5164 = vpop.permute.xlu0 %5163
  %5167 = vrot.lane.b32.xlu0 %v5113, 32
  %v5168 = vpop.permute.xlu0 %5167
  %5171 = vrot.lane.b32.xlu0 %v5129, 48
  %v5172 = vpop.permute.xlu0 %5171
  %5175 = vrot.lane.b32.xlu0 %v5121, 64
  %v5176 = vpop.permute.xlu0 %5175
  %5179 = vrot.lane.b32.xlu0 %v5131, 80
  %v5180 = vpop.permute.xlu0 %5179
  %5183 = vrot.lane.b32.xlu0 %v5125, 96
  %v5184 = vpop.permute.xlu0 %5183
  %5187 = vrot.lane.b32.xlu0 %v5133, 112
  %v5188 = vpop.permute.xlu0 %5187
  %v5190 = vsel %vm692, %v5053, %v5136
  %v5191 = vsel %vm694, %v5190, %v5140
  %v5192 = vsel %vm696, %v5191, %v5144
  %v5193 = vsel %vm698, %v5192, %v5148
  %v5194 = vsel %vm700, %v5193, %v5152
  %v5195 = vsel %vm702, %v5194, %v5156
  %v5196 = vsel %vm704, %v5195, %v5160
  %v5197 = vsel %vm692, %v5109, %v5164
  %v5198 = vsel %vm694, %v5197, %v5168
  %v5199 = vsel %vm696, %v5198, %v5172
  %v5200 = vsel %vm698, %v5199, %v5176
  %v5201 = vsel %vm700, %v5200, %v5180
  %v5202 = vsel %vm702, %v5201, %v5184
  %v5203 = vsel %vm704, %v5202, %v5188
  %5204 = vst [vmem:[#allocation3] sm:$0xf] %v5196
  %5205 = vst [vmem:[#allocation3 + $0x8] sm:$0xf] %v5203
  %v5206 = vld [vmem:[#allocation2] sm:$0xff]
  %v5207 = vld [vmem:[#allocation2 + $0x8] sm:$0xff]
  %v5208 = vld [vmem:[#allocation2 + $0x18] sm:$0xff]
  %v5209 = vld [vmem:[#allocation2 + $0x20] sm:$0xff]
  %v5210 = vld [vmem:[#allocation2 + $0x30] sm:$0xff]
  %v5211 = vld [vmem:[#allocation2 + $0x38] sm:$0xff]
  %v5212 = vld [vmem:[#allocation2 + $0x48] sm:$0xff]
  %v5213 = vld [vmem:[#allocation2 + $0x50] sm:$0xff]
  %5222 = vrot.lane.b32.xlu0 %v5206, 127
  %v5223 = vpop.permute.xlu0 %5222
  %5224 = vrot.lane.b32.xlu0 %v5207, 127
  %v5225 = vpop.permute.xlu0 %5224
  %5226 = vrot.lane.b32.xlu0 %v5208, 127
  %v5227 = vpop.permute.xlu0 %5226
  %5228 = vrot.lane.b32.xlu0 %v5209, 127
  %v5229 = vpop.permute.xlu0 %5228
  %5230 = vrot.lane.b32.xlu0 %v5210, 127
  %v5231 = vpop.permute.xlu0 %5230
  %5232 = vrot.lane.b32.xlu0 %v5211, 127
  %v5233 = vpop.permute.xlu0 %5232
  %5234 = vrot.lane.b32.xlu0 %v5212, 127
  %v5235 = vpop.permute.xlu0 %5234
  %5236 = vrot.lane.b32.xlu0 %v5213, 127
  %v5237 = vpop.permute.xlu0 %5236
  %v5246 = vrot.slane %v5231, 4
  %v5247 = vsel %vm92, %v5246, %v5223
  %v5248 = vrot.slane %v5223, 4
  %v5249 = vsel %vm92, %v5231, %v5248
  %v5251 = vunpack.c.l.s4 1983009808
  %v5252 = vunpack.c.0.s8 %v5251
  %v5253 = vperm.slane %v5247, %v5252
  %v5255 = vunpack.c.l.s4 1983009808
  %v5256 = vunpack.c.0.s8 %v5255
  %v5257 = vperm.slane %v5249, %v5256
  %v5258 = vrot.slane %v5235, 4
  %v5259 = vsel %vm92, %v5258, %v5227
  %v5260 = vrot.slane %v5227, 4
  %v5261 = vsel %vm92, %v5235, %v5260
  %v5263 = vunpack.c.l.s4 1983009808
  %v5264 = vunpack.c.0.s8 %v5263
  %v5265 = vperm.slane %v5259, %v5264
  %v5267 = vunpack.c.l.s4 1983009808
  %v5268 = vunpack.c.0.s8 %v5267
  %v5269 = vperm.slane %v5261, %v5268
  %v5270 = vrot.slane %v5265, 4
  %v5271 = vsel %vm92, %v5270, %v5253
  %v5272 = vrot.slane %v5253, 4
  %v5273 = vsel %vm92, %v5265, %v5272
  %v5275 = vunpack.c.l.s4 1934713408
  %v5276 = vunpack.c.0.s8 %v5275
  %v5277 = vperm.slane %v5271, %v5276
  %v5279 = vunpack.c.l.s4 1934713408
  %v5280 = vunpack.c.0.s8 %v5279
  %v5281 = vperm.slane %v5273, %v5280
  %v5282 = vrot.slane %v5269, 4
  %v5283 = vsel %vm92, %v5282, %v5257
  %v5284 = vrot.slane %v5257, 4
  %v5285 = vsel %vm92, %v5269, %v5284
  %v5287 = vunpack.c.l.s4 1934713408
  %v5288 = vunpack.c.0.s8 %v5287
  %v5289 = vperm.slane %v5283, %v5288
  %v5291 = vunpack.c.l.s4 1934713408
  %v5292 = vunpack.c.0.s8 %v5291
  %v5293 = vperm.slane %v5285, %v5292
  %v5294 = vrot.slane %v5277, 4
  %v5295 = vsel %vm92, 0.0, %v5294
  %v5296 = vrot.slane %v5281, 4
  %v5297 = vsel %vm92, 0.0, %v5296
  %v5298 = vrot.slane %v5289, 4
  %v5299 = vsel %vm92, 0.0, %v5298
  %v5300 = vrot.slane %v5293, 4
  %v5301 = vsel %vm92, 0.0, %v5300
  %v5302 = vrot.slane %v5233, 4
  %v5303 = vsel %vm92, %v5302, %v5225
  %v5304 = vrot.slane %v5225, 4
  %v5305 = vsel %vm92, %v5233, %v5304
  %v5307 = vunpack.c.l.s4 1983009808
  %v5308 = vunpack.c.0.s8 %v5307
  %v5309 = vperm.slane %v5303, %v5308
  %v5311 = vunpack.c.l.s4 1983009808
  %v5312 = vunpack.c.0.s8 %v5311
  %v5313 = vperm.slane %v5305, %v5312
  %v5314 = vrot.slane %v5237, 4
  %v5315 = vsel %vm92, %v5314, %v5229
  %v5316 = vrot.slane %v5229, 4
  %v5317 = vsel %vm92, %v5237, %v5316
  %v5319 = vunpack.c.l.s4 1983009808
  %v5320 = vunpack.c.0.s8 %v5319
  %v5321 = vperm.slane %v5315, %v5320
  %v5323 = vunpack.c.l.s4 1983009808
  %v5324 = vunpack.c.0.s8 %v5323
  %v5325 = vperm.slane %v5317, %v5324
  %v5326 = vrot.slane %v5321, 4
  %v5327 = vsel %vm92, %v5326, %v5309
  %v5328 = vrot.slane %v5309, 4
  %v5329 = vsel %vm92, %v5321, %v5328
  %v5331 = vunpack.c.l.s4 1934713408
  %v5332 = vunpack.c.0.s8 %v5331
  %v5333 = vperm.slane %v5327, %v5332
  %v5335 = vunpack.c.l.s4 1934713408
  %v5336 = vunpack.c.0.s8 %v5335
  %v5337 = vperm.slane %v5329, %v5336
  %v5338 = vrot.slane %v5325, 4
  %v5339 = vsel %vm92, %v5338, %v5313
  %v5340 = vrot.slane %v5313, 4
  %v5341 = vsel %vm92, %v5325, %v5340
  %v5343 = vunpack.c.l.s4 1934713408
  %v5344 = vunpack.c.0.s8 %v5343
  %v5345 = vperm.slane %v5339, %v5344
  %v5347 = vunpack.c.l.s4 1934713408
  %v5348 = vunpack.c.0.s8 %v5347
  %v5349 = vperm.slane %v5341, %v5348
  %v5350 = vrot.slane %v5333, 4
  %v5351 = vsel %vm92, 0.0, %v5350
  %v5352 = vrot.slane %v5337, 4
  %v5353 = vsel %vm92, 0.0, %v5352
  %v5354 = vrot.slane %v5345, 4
  %v5355 = vsel %vm92, 0.0, %v5354
  %v5356 = vrot.slane %v5349, 4
  %v5357 = vsel %vm92, 0.0, %v5356
  %5359 = vrot.lane.b32.xlu0 %v5295, 16
  %v5360 = vpop.permute.xlu0 %5359
  %5363 = vrot.lane.b32.xlu0 %v5281, 32
  %v5364 = vpop.permute.xlu0 %5363
  %5367 = vrot.lane.b32.xlu0 %v5297, 48
  %v5368 = vpop.permute.xlu0 %5367
  %5371 = vrot.lane.b32.xlu0 %v5289, 64
  %v5372 = vpop.permute.xlu0 %5371
  %5375 = vrot.lane.b32.xlu0 %v5299, 80
  %v5376 = vpop.permute.xlu0 %5375
  %5379 = vrot.lane.b32.xlu0 %v5293, 96
  %v5380 = vpop.permute.xlu0 %5379
  %5383 = vrot.lane.b32.xlu0 %v5301, 112
  %v5384 = vpop.permute.xlu0 %5383
  %5387 = vrot.lane.b32.xlu0 %v5351, 16
  %v5388 = vpop.permute.xlu0 %5387
  %5391 = vrot.lane.b32.xlu0 %v5337, 32
  %v5392 = vpop.permute.xlu0 %5391
  %5395 = vrot.lane.b32.xlu0 %v5353, 48
  %v5396 = vpop.permute.xlu0 %5395
  %5399 = vrot.lane.b32.xlu0 %v5345, 64
  %v5400 = vpop.permute.xlu0 %5399
  %5403 = vrot.lane.b32.xlu0 %v5355, 80
  %v5404 = vpop.permute.xlu0 %5403
  %5407 = vrot.lane.b32.xlu0 %v5349, 96
  %v5408 = vpop.permute.xlu0 %5407
  %5411 = vrot.lane.b32.xlu0 %v5357, 112
  %v5412 = vpop.permute.xlu0 %5411
  %v5414 = vsel %vm692, %v5277, %v5360
  %v5415 = vsel %vm694, %v5414, %v5364
  %v5416 = vsel %vm696, %v5415, %v5368
  %v5417 = vsel %vm698, %v5416, %v5372
  %v5418 = vsel %vm700, %v5417, %v5376
  %v5419 = vsel %vm702, %v5418, %v5380
  %v5420 = vsel %vm704, %v5419, %v5384
  %v5421 = vsel %vm692, %v5333, %v5388
  %v5422 = vsel %vm694, %v5421, %v5392
  %v5423 = vsel %vm696, %v5422, %v5396
  %v5424 = vsel %vm698, %v5423, %v5400
  %v5425 = vsel %vm700, %v5424, %v5404
  %v5426 = vsel %vm702, %v5425, %v5408
  %v5427 = vsel %vm704, %v5426, %v5412
  %v5430 = vrot.slane %v5420, 4
  %v5431 = vrot.slane %v5427, 4
  %5434 = vst [vmem:[#allocation3] sm:$0xf0] %v5430
  %5435 = vst [vmem:[#allocation3 + $0x8] sm:$0xf0] %v5431
  %v5436 = vld [vmem:[#allocation2] sm:$0xff]
  %v5437 = vld [vmem:[#allocation2 + $0x8] sm:$0xff]
  %v5438 = vld [vmem:[#allocation2 + $0x18] sm:$0xff]
  %v5439 = vld [vmem:[#allocation2 + $0x20] sm:$0xff]
  %v5440 = vld [vmem:[#allocation2 + $0x30] sm:$0xff]
  %v5441 = vld [vmem:[#allocation2 + $0x38] sm:$0xff]
  %v5442 = vld [vmem:[#allocation2 + $0x48] sm:$0xff]
  %v5443 = vld [vmem:[#allocation2 + $0x50] sm:$0xff]
  %5452 = vrot.lane.b32.xlu0 %v5436, 126
  %v5453 = vpop.permute.xlu0 %5452
  %5454 = vrot.lane.b32.xlu0 %v5437, 126
  %v5455 = vpop.permute.xlu0 %5454
  %5456 = vrot.lane.b32.xlu0 %v5438, 126
  %v5457 = vpop.permute.xlu0 %5456
  %5458 = vrot.lane.b32.xlu0 %v5439, 126
  %v5459 = vpop.permute.xlu0 %5458
  %5460 = vrot.lane.b32.xlu0 %v5440, 126
  %v5461 = vpop.permute.xlu0 %5460
  %5462 = vrot.lane.b32.xlu0 %v5441, 126
  %v5463 = vpop.permute.xlu0 %5462
  %5464 = vrot.lane.b32.xlu0 %v5442, 126
  %v5465 = vpop.permute.xlu0 %5464
  %5466 = vrot.lane.b32.xlu0 %v5443, 126
  %v5467 = vpop.permute.xlu0 %5466
  %v5476 = vrot.slane %v5461, 4
  %v5477 = vsel %vm92, %v5476, %v5453
  %v5478 = vrot.slane %v5453, 4
  %v5479 = vsel %vm92, %v5461, %v5478
  %v5481 = vunpack.c.l.s4 1983009808
  %v5482 = vunpack.c.0.s8 %v5481
  %v5483 = vperm.slane %v5477, %v5482
  %v5485 = vunpack.c.l.s4 1983009808
  %v5486 = vunpack.c.0.s8 %v5485
  %v5487 = vperm.slane %v5479, %v5486
  %v5488 = vrot.slane %v5465, 4
  %v5489 = vsel %vm92, %v5488, %v5457
  %v5490 = vrot.slane %v5457, 4
  %v5491 = vsel %vm92, %v5465, %v5490
  %v5493 = vunpack.c.l.s4 1983009808
  %v5494 = vunpack.c.0.s8 %v5493
  %v5495 = vperm.slane %v5489, %v5494
  %v5497 = vunpack.c.l.s4 1983009808
  %v5498 = vunpack.c.0.s8 %v5497
  %v5499 = vperm.slane %v5491, %v5498
  %v5500 = vrot.slane %v5495, 4
  %v5501 = vsel %vm92, %v5500, %v5483
  %v5502 = vrot.slane %v5483, 4
  %v5503 = vsel %vm92, %v5495, %v5502
  %v5505 = vunpack.c.l.s4 1934713408
  %v5506 = vunpack.c.0.s8 %v5505
  %v5507 = vperm.slane %v5501, %v5506
  %v5509 = vunpack.c.l.s4 1934713408
  %v5510 = vunpack.c.0.s8 %v5509
  %v5511 = vperm.slane %v5503, %v5510
  %v5512 = vrot.slane %v5499, 4
  %v5513 = vsel %vm92, %v5512, %v5487
  %v5514 = vrot.slane %v5487, 4
  %v5515 = vsel %vm92, %v5499, %v5514
  %v5517 = vunpack.c.l.s4 1934713408
  %v5518 = vunpack.c.0.s8 %v5517
  %v5519 = vperm.slane %v5513, %v5518
  %v5521 = vunpack.c.l.s4 1934713408
  %v5522 = vunpack.c.0.s8 %v5521
  %v5523 = vperm.slane %v5515, %v5522
  %v5524 = vrot.slane %v5507, 4
  %v5525 = vsel %vm92, 0.0, %v5524
  %v5526 = vrot.slane %v5511, 4
  %v5527 = vsel %vm92, 0.0, %v5526
  %v5528 = vrot.slane %v5519, 4
  %v5529 = vsel %vm92, 0.0, %v5528
  %v5530 = vrot.slane %v5523, 4
  %v5531 = vsel %vm92, 0.0, %v5530
  %v5532 = vrot.slane %v5463, 4
  %v5533 = vsel %vm92, %v5532, %v5455
  %v5534 = vrot.slane %v5455, 4
  %v5535 = vsel %vm92, %v5463, %v5534
  %v5537 = vunpack.c.l.s4 1983009808
  %v5538 = vunpack.c.0.s8 %v5537
  %v5539 = vperm.slane %v5533, %v5538
  %v5541 = vunpack.c.l.s4 1983009808
  %v5542 = vunpack.c.0.s8 %v5541
  %v5543 = vperm.slane %v5535, %v5542
  %v5544 = vrot.slane %v5467, 4
  %v5545 = vsel %vm92, %v5544, %v5459
  %v5546 = vrot.slane %v5459, 4
  %v5547 = vsel %vm92, %v5467, %v5546
  %v5549 = vunpack.c.l.s4 1983009808
  %v5550 = vunpack.c.0.s8 %v5549
  %v5551 = vperm.slane %v5545, %v5550
  %v5553 = vunpack.c.l.s4 1983009808
  %v5554 = vunpack.c.0.s8 %v5553
  %v5555 = vperm.slane %v5547, %v5554
  %v5556 = vrot.slane %v5551, 4
  %v5557 = vsel %vm92, %v5556, %v5539
  %v5558 = vrot.slane %v5539, 4
  %v5559 = vsel %vm92, %v5551, %v5558
  %v5561 = vunpack.c.l.s4 1934713408
  %v5562 = vunpack.c.0.s8 %v5561
  %v5563 = vperm.slane %v5557, %v5562
  %v5565 = vunpack.c.l.s4 1934713408
  %v5566 = vunpack.c.0.s8 %v5565
  %v5567 = vperm.slane %v5559, %v5566
  %v5568 = vrot.slane %v5555, 4
  %v5569 = vsel %vm92, %v5568, %v5543
  %v5570 = vrot.slane %v5543, 4
  %v5571 = vsel %vm92, %v5555, %v5570
  %v5573 = vunpack.c.l.s4 1934713408
  %v5574 = vunpack.c.0.s8 %v5573
  %v5575 = vperm.slane %v5569, %v5574
  %v5577 = vunpack.c.l.s4 1934713408
  %v5578 = vunpack.c.0.s8 %v5577
  %v5579 = vperm.slane %v5571, %v5578
  %v5580 = vrot.slane %v5563, 4
  %v5581 = vsel %vm92, 0.0, %v5580
  %v5582 = vrot.slane %v5567, 4
  %v5583 = vsel %vm92, 0.0, %v5582
  %v5584 = vrot.slane %v5575, 4
  %v5585 = vsel %vm92, 0.0, %v5584
  %v5586 = vrot.slane %v5579, 4
  %v5587 = vsel %vm92, 0.0, %v5586
  %5589 = vrot.lane.b32.xlu0 %v5525, 16
  %v5590 = vpop.permute.xlu0 %5589
  %5593 = vrot.lane.b32.xlu0 %v5511, 32
  %v5594 = vpop.permute.xlu0 %5593
  %5597 = vrot.lane.b32.xlu0 %v5527, 48
  %v5598 = vpop.permute.xlu0 %5597
  %5601 = vrot.lane.b32.xlu0 %v5519, 64
  %v5602 = vpop.permute.xlu0 %5601
  %5605 = vrot.lane.b32.xlu0 %v5529, 80
  %v5606 = vpop.permute.xlu0 %5605
  %5609 = vrot.lane.b32.xlu0 %v5523, 96
  %v5610 = vpop.permute.xlu0 %5609
  %5613 = vrot.lane.b32.xlu0 %v5531, 112
  %v5614 = vpop.permute.xlu0 %5613
  %5617 = vrot.lane.b32.xlu0 %v5581, 16
  %v5618 = vpop.permute.xlu0 %5617
  %5621 = vrot.lane.b32.xlu0 %v5567, 32
  %v5622 = vpop.permute.xlu0 %5621
  %5625 = vrot.lane.b32.xlu0 %v5583, 48
  %v5626 = vpop.permute.xlu0 %5625
  %5629 = vrot.lane.b32.xlu0 %v5575, 64
  %v5630 = vpop.permute.xlu0 %5629
  %5633 = vrot.lane.b32.xlu0 %v5585, 80
  %v5634 = vpop.permute.xlu0 %5633
  %5637 = vrot.lane.b32.xlu0 %v5579, 96
  %v5638 = vpop.permute.xlu0 %5637
  %5641 = vrot.lane.b32.xlu0 %v5587, 112
  %v5642 = vpop.permute.xlu0 %5641
  %v5644 = vsel %vm692, %v5507, %v5590
  %v5645 = vsel %vm694, %v5644, %v5594
  %v5646 = vsel %vm696, %v5645, %v5598
  %v5647 = vsel %vm698, %v5646, %v5602
  %v5648 = vsel %vm700, %v5647, %v5606
  %v5649 = vsel %vm702, %v5648, %v5610
  %v5650 = vsel %vm704, %v5649, %v5614
  %v5651 = vsel %vm692, %v5563, %v5618
  %v5652 = vsel %vm694, %v5651, %v5622
  %v5653 = vsel %vm696, %v5652, %v5626
  %v5654 = vsel %vm698, %v5653, %v5630
  %v5655 = vsel %vm700, %v5654, %v5634
  %v5656 = vsel %vm702, %v5655, %v5638
  %v5657 = vsel %vm704, %v5656, %v5642
  %5658 = vst [vmem:[#allocation3 + $0x20] sm:$0xf] %v5650
  %5659 = vst [vmem:[#allocation3 + $0x28] sm:$0xf] %v5657
  %v5660 = vld [vmem:[#allocation2 + $0x1] sm:$0xff]
  %v5661 = vld [vmem:[#allocation2 + $0x9] sm:$0xff]
  %v5662 = vld [vmem:[#allocation2 + $0x19] sm:$0xff]
  %v5663 = vld [vmem:[#allocation2 + $0x21] sm:$0xff]
  %v5664 = vld [vmem:[#allocation2 + $0x31] sm:$0xff]
  %v5665 = vld [vmem:[#allocation2 + $0x39] sm:$0xff]
  %v5666 = vld [vmem:[#allocation2 + $0x49] sm:$0xff]
  %v5667 = vld [vmem:[#allocation2 + $0x51] sm:$0xff]
  %v5668 = vrot.slane %v5664, 4
  %v5669 = vsel %vm92, %v5668, %v5660
  %v5670 = vrot.slane %v5660, 4
  %v5671 = vsel %vm92, %v5664, %v5670
  %v5673 = vunpack.c.l.s4 1983009808
  %v5674 = vunpack.c.0.s8 %v5673
  %v5675 = vperm.slane %v5669, %v5674
  %v5677 = vunpack.c.l.s4 1983009808
  %v5678 = vunpack.c.0.s8 %v5677
  %v5679 = vperm.slane %v5671, %v5678
  %v5680 = vrot.slane %v5666, 4
  %v5681 = vsel %vm92, %v5680, %v5662
  %v5682 = vrot.slane %v5662, 4
  %v5683 = vsel %vm92, %v5666, %v5682
  %v5685 = vunpack.c.l.s4 1983009808
  %v5686 = vunpack.c.0.s8 %v5685
  %v5687 = vperm.slane %v5681, %v5686
  %v5689 = vunpack.c.l.s4 1983009808
  %v5690 = vunpack.c.0.s8 %v5689
  %v5691 = vperm.slane %v5683, %v5690
  %v5692 = vrot.slane %v5687, 4
  %v5693 = vsel %vm92, %v5692, %v5675
  %v5694 = vrot.slane %v5675, 4
  %v5695 = vsel %vm92, %v5687, %v5694
  %v5697 = vunpack.c.l.s4 1934713408
  %v5698 = vunpack.c.0.s8 %v5697
  %v5699 = vperm.slane %v5693, %v5698
  %v5701 = vunpack.c.l.s4 1934713408
  %v5702 = vunpack.c.0.s8 %v5701
  %v5703 = vperm.slane %v5695, %v5702
  %v5704 = vrot.slane %v5691, 4
  %v5705 = vsel %vm92, %v5704, %v5679
  %v5706 = vrot.slane %v5679, 4
  %v5707 = vsel %vm92, %v5691, %v5706
  %v5709 = vunpack.c.l.s4 1934713408
  %v5710 = vunpack.c.0.s8 %v5709
  %v5711 = vperm.slane %v5705, %v5710
  %v5713 = vunpack.c.l.s4 1934713408
  %v5714 = vunpack.c.0.s8 %v5713
  %v5715 = vperm.slane %v5707, %v5714
  %v5716 = vrot.slane %v5699, 4
  %v5717 = vsel %vm92, 0.0, %v5716
  %v5718 = vrot.slane %v5703, 4
  %v5719 = vsel %vm92, 0.0, %v5718
  %v5720 = vrot.slane %v5711, 4
  %v5721 = vsel %vm92, 0.0, %v5720
  %v5722 = vrot.slane %v5715, 4
  %v5723 = vsel %vm92, 0.0, %v5722
  %v5724 = vrot.slane %v5665, 4
  %v5725 = vsel %vm92, %v5724, %v5661
  %v5726 = vrot.slane %v5661, 4
  %v5727 = vsel %vm92, %v5665, %v5726
  %v5729 = vunpack.c.l.s4 1983009808
  %v5730 = vunpack.c.0.s8 %v5729
  %v5731 = vperm.slane %v5725, %v5730
  %v5733 = vunpack.c.l.s4 1983009808
  %v5734 = vunpack.c.0.s8 %v5733
  %v5735 = vperm.slane %v5727, %v5734
  %v5736 = vrot.slane %v5667, 4
  %v5737 = vsel %vm92, %v5736, %v5663
  %v5738 = vrot.slane %v5663, 4
  %v5739 = vsel %vm92, %v5667, %v5738
  %v5741 = vunpack.c.l.s4 1983009808
  %v5742 = vunpack.c.0.s8 %v5741
  %v5743 = vperm.slane %v5737, %v5742
  %v5745 = vunpack.c.l.s4 1983009808
  %v5746 = vunpack.c.0.s8 %v5745
  %v5747 = vperm.slane %v5739, %v5746
  %v5748 = vrot.slane %v5743, 4
  %v5749 = vsel %vm92, %v5748, %v5731
  %v5750 = vrot.slane %v5731, 4
  %v5751 = vsel %vm92, %v5743, %v5750
  %v5753 = vunpack.c.l.s4 1934713408
  %v5754 = vunpack.c.0.s8 %v5753
  %v5755 = vperm.slane %v5749, %v5754
  %v5757 = vunpack.c.l.s4 1934713408
  %v5758 = vunpack.c.0.s8 %v5757
  %v5759 = vperm.slane %v5751, %v5758
  %v5760 = vrot.slane %v5747, 4
  %v5761 = vsel %vm92, %v5760, %v5735
  %v5762 = vrot.slane %v5735, 4
  %v5763 = vsel %vm92, %v5747, %v5762
  %v5765 = vunpack.c.l.s4 1934713408
  %v5766 = vunpack.c.0.s8 %v5765
  %v5767 = vperm.slane %v5761, %v5766
  %v5769 = vunpack.c.l.s4 1934713408
  %v5770 = vunpack.c.0.s8 %v5769
  %v5771 = vperm.slane %v5763, %v5770
  %v5772 = vrot.slane %v5755, 4
  %v5773 = vsel %vm92, 0.0, %v5772
  %v5774 = vrot.slane %v5759, 4
  %v5775 = vsel %vm92, 0.0, %v5774
  %v5776 = vrot.slane %v5767, 4
  %v5777 = vsel %vm92, 0.0, %v5776
  %v5778 = vrot.slane %v5771, 4
  %v5779 = vsel %vm92, 0.0, %v5778
  %5781 = vrot.lane.b32.xlu0 %v5717, 16
  %v5782 = vpop.permute.xlu0 %5781
  %5785 = vrot.lane.b32.xlu0 %v5703, 32
  %v5786 = vpop.permute.xlu0 %5785
  %5789 = vrot.lane.b32.xlu0 %v5719, 48
  %v5790 = vpop.permute.xlu0 %5789
  %5793 = vrot.lane.b32.xlu0 %v5711, 64
  %v5794 = vpop.permute.xlu0 %5793
  %5797 = vrot.lane.b32.xlu0 %v5721, 80
  %v5798 = vpop.permute.xlu0 %5797
  %5801 = vrot.lane.b32.xlu0 %v5715, 96
  %v5802 = vpop.permute.xlu0 %5801
  %5805 = vrot.lane.b32.xlu0 %v5723, 112
  %v5806 = vpop.permute.xlu0 %5805
  %5809 = vrot.lane.b32.xlu0 %v5773, 16
  %v5810 = vpop.permute.xlu0 %5809
  %5813 = vrot.lane.b32.xlu0 %v5759, 32
  %v5814 = vpop.permute.xlu0 %5813
  %5817 = vrot.lane.b32.xlu0 %v5775, 48
  %v5818 = vpop.permute.xlu0 %5817
  %5821 = vrot.lane.b32.xlu0 %v5767, 64
  %v5822 = vpop.permute.xlu0 %5821
  %5825 = vrot.lane.b32.xlu0 %v5777, 80
  %v5826 = vpop.permute.xlu0 %5825
  %5829 = vrot.lane.b32.xlu0 %v5771, 96
  %v5830 = vpop.permute.xlu0 %5829
  %5833 = vrot.lane.b32.xlu0 %v5779, 112
  %v5834 = vpop.permute.xlu0 %5833
  %v5836 = vsel %vm692, %v5699, %v5782
  %v5837 = vsel %vm694, %v5836, %v5786
  %v5838 = vsel %vm696, %v5837, %v5790
  %v5839 = vsel %vm698, %v5838, %v5794
  %v5840 = vsel %vm700, %v5839, %v5798
  %v5841 = vsel %vm702, %v5840, %v5802
  %v5842 = vsel %vm704, %v5841, %v5806
  %v5843 = vsel %vm692, %v5755, %v5810
  %v5844 = vsel %vm694, %v5843, %v5814
  %v5845 = vsel %vm696, %v5844, %v5818
  %v5846 = vsel %vm698, %v5845, %v5822
  %v5847 = vsel %vm700, %v5846, %v5826
  %v5848 = vsel %vm702, %v5847, %v5830
  %v5849 = vsel %vm704, %v5848, %v5834
  %v5852 = vrot.slane %v5842, 4
  %v5853 = vrot.slane %v5849, 4
  %5856 = vst [vmem:[#allocation3 + $0x20] sm:$0xf0] %v5852
  %5857 = vst [vmem:[#allocation3 + $0x28] sm:$0xf0] %v5853
  %v5858 = vld [vmem:[#allocation2 + $0x1] sm:$0xff]
  %v5859 = vld [vmem:[#allocation2 + $0x9] sm:$0xff]
  %v5860 = vld [vmem:[#allocation2 + $0x19] sm:$0xff]
  %v5861 = vld [vmem:[#allocation2 + $0x21] sm:$0xff]
  %v5862 = vld [vmem:[#allocation2 + $0x31] sm:$0xff]
  %v5863 = vld [vmem:[#allocation2 + $0x39] sm:$0xff]
  %v5864 = vld [vmem:[#allocation2 + $0x49] sm:$0xff]
  %v5865 = vld [vmem:[#allocation2 + $0x51] sm:$0xff]
  %5874 = vrot.lane.b32.xlu0 %v5858, 127
  %v5875 = vpop.permute.xlu0 %5874
  %5876 = vrot.lane.b32.xlu0 %v5859, 127
  %v5877 = vpop.permute.xlu0 %5876
  %5878 = vrot.lane.b32.xlu0 %v5860, 127
  %v5879 = vpop.permute.xlu0 %5878
  %5880 = vrot.lane.b32.xlu0 %v5861, 127
  %v5881 = vpop.permute.xlu0 %5880
  %5882 = vrot.lane.b32.xlu0 %v5862, 127
  %v5883 = vpop.permute.xlu0 %5882
  %5884 = vrot.lane.b32.xlu0 %v5863, 127
  %v5885 = vpop.permute.xlu0 %5884
  %5886 = vrot.lane.b32.xlu0 %v5864, 127
  %v5887 = vpop.permute.xlu0 %5886
  %5888 = vrot.lane.b32.xlu0 %v5865, 127
  %v5889 = vpop.permute.xlu0 %5888
  %v5898 = vrot.slane %v5883, 4
  %v5899 = vsel %vm92, %v5898, %v5875
  %v5900 = vrot.slane %v5875, 4
  %v5901 = vsel %vm92, %v5883, %v5900
  %v5903 = vunpack.c.l.s4 1983009808
  %v5904 = vunpack.c.0.s8 %v5903
  %v5905 = vperm.slane %v5899, %v5904
  %v5907 = vunpack.c.l.s4 1983009808
  %v5908 = vunpack.c.0.s8 %v5907
  %v5909 = vperm.slane %v5901, %v5908
  %v5910 = vrot.slane %v5887, 4
  %v5911 = vsel %vm92, %v5910, %v5879
  %v5912 = vrot.slane %v5879, 4
  %v5913 = vsel %vm92, %v5887, %v5912
  %v5915 = vunpack.c.l.s4 1983009808
  %v5916 = vunpack.c.0.s8 %v5915
  %v5917 = vperm.slane %v5911, %v5916
  %v5919 = vunpack.c.l.s4 1983009808
  %v5920 = vunpack.c.0.s8 %v5919
  %v5921 = vperm.slane %v5913, %v5920
  %v5922 = vrot.slane %v5917, 4
  %v5923 = vsel %vm92, %v5922, %v5905
  %v5924 = vrot.slane %v5905, 4
  %v5925 = vsel %vm92, %v5917, %v5924
  %v5927 = vunpack.c.l.s4 1934713408
  %v5928 = vunpack.c.0.s8 %v5927
  %v5929 = vperm.slane %v5923, %v5928
  %v5931 = vunpack.c.l.s4 1934713408
  %v5932 = vunpack.c.0.s8 %v5931
  %v5933 = vperm.slane %v5925, %v5932
  %v5934 = vrot.slane %v5921, 4
  %v5935 = vsel %vm92, %v5934, %v5909
  %v5936 = vrot.slane %v5909, 4
  %v5937 = vsel %vm92, %v5921, %v5936
  %v5939 = vunpack.c.l.s4 1934713408
  %v5940 = vunpack.c.0.s8 %v5939
  %v5941 = vperm.slane %v5935, %v5940
  %v5943 = vunpack.c.l.s4 1934713408
  %v5944 = vunpack.c.0.s8 %v5943
  %v5945 = vperm.slane %v5937, %v5944
  %v5946 = vrot.slane %v5929, 4
  %v5947 = vsel %vm92, 0.0, %v5946
  %v5948 = vrot.slane %v5933, 4
  %v5949 = vsel %vm92, 0.0, %v5948
  %v5950 = vrot.slane %v5941, 4
  %v5951 = vsel %vm92, 0.0, %v5950
  %v5952 = vrot.slane %v5945, 4
  %v5953 = vsel %vm92, 0.0, %v5952
  %v5954 = vrot.slane %v5885, 4
  %v5955 = vsel %vm92, %v5954, %v5877
  %v5956 = vrot.slane %v5877, 4
  %v5957 = vsel %vm92, %v5885, %v5956
  %v5959 = vunpack.c.l.s4 1983009808
  %v5960 = vunpack.c.0.s8 %v5959
  %v5961 = vperm.slane %v5955, %v5960
  %v5963 = vunpack.c.l.s4 1983009808
  %v5964 = vunpack.c.0.s8 %v5963
  %v5965 = vperm.slane %v5957, %v5964
  %v5966 = vrot.slane %v5889, 4
  %v5967 = vsel %vm92, %v5966, %v5881
  %v5968 = vrot.slane %v5881, 4
  %v5969 = vsel %vm92, %v5889, %v5968
  %v5971 = vunpack.c.l.s4 1983009808
  %v5972 = vunpack.c.0.s8 %v5971
  %v5973 = vperm.slane %v5967, %v5972
  %v5975 = vunpack.c.l.s4 1983009808
  %v5976 = vunpack.c.0.s8 %v5975
  %v5977 = vperm.slane %v5969, %v5976
  %v5978 = vrot.slane %v5973, 4
  %v5979 = vsel %vm92, %v5978, %v5961
  %v5980 = vrot.slane %v5961, 4
  %v5981 = vsel %vm92, %v5973, %v5980
  %v5983 = vunpack.c.l.s4 1934713408
  %v5984 = vunpack.c.0.s8 %v5983
  %v5985 = vperm.slane %v5979, %v5984
  %v5987 = vunpack.c.l.s4 1934713408
  %v5988 = vunpack.c.0.s8 %v5987
  %v5989 = vperm.slane %v5981, %v5988
  %v5990 = vrot.slane %v5977, 4
  %v5991 = vsel %vm92, %v5990, %v5965
  %v5992 = vrot.slane %v5965, 4
  %v5993 = vsel %vm92, %v5977, %v5992
  %v5995 = vunpack.c.l.s4 1934713408
  %v5996 = vunpack.c.0.s8 %v5995
  %v5997 = vperm.slane %v5991, %v5996
  %v5999 = vunpack.c.l.s4 1934713408
  %v6000 = vunpack.c.0.s8 %v5999
  %v6001 = vperm.slane %v5993, %v6000
  %v6002 = vrot.slane %v5985, 4
  %v6003 = vsel %vm92, 0.0, %v6002
  %v6004 = vrot.slane %v5989, 4
  %v6005 = vsel %vm92, 0.0, %v6004
  %v6006 = vrot.slane %v5997, 4
  %v6007 = vsel %vm92, 0.0, %v6006
  %v6008 = vrot.slane %v6001, 4
  %v6009 = vsel %vm92, 0.0, %v6008
  %6011 = vrot.lane.b32.xlu0 %v5947, 16
  %v6012 = vpop.permute.xlu0 %6011
  %6015 = vrot.lane.b32.xlu0 %v5933, 32
  %v6016 = vpop.permute.xlu0 %6015
  %6019 = vrot.lane.b32.xlu0 %v5949, 48
  %v6020 = vpop.permute.xlu0 %6019
  %6023 = vrot.lane.b32.xlu0 %v5941, 64
  %v6024 = vpop.permute.xlu0 %6023
  %6027 = vrot.lane.b32.xlu0 %v5951, 80
  %v6028 = vpop.permute.xlu0 %6027
  %6031 = vrot.lane.b32.xlu0 %v5945, 96
  %v6032 = vpop.permute.xlu0 %6031
  %6035 = vrot.lane.b32.xlu0 %v5953, 112
  %v6036 = vpop.permute.xlu0 %6035
  %6039 = vrot.lane.b32.xlu0 %v6003, 16
  %v6040 = vpop.permute.xlu0 %6039
  %6043 = vrot.lane.b32.xlu0 %v5989, 32
  %v6044 = vpop.permute.xlu0 %6043
  %6047 = vrot.lane.b32.xlu0 %v6005, 48
  %v6048 = vpop.permute.xlu0 %6047
  %6051 = vrot.lane.b32.xlu0 %v5997, 64
  %v6052 = vpop.permute.xlu0 %6051
  %6055 = vrot.lane.b32.xlu0 %v6007, 80
  %v6056 = vpop.permute.xlu0 %6055
  %6059 = vrot.lane.b32.xlu0 %v6001, 96
  %v6060 = vpop.permute.xlu0 %6059
  %6063 = vrot.lane.b32.xlu0 %v6009, 112
  %v6064 = vpop.permute.xlu0 %6063
  %v6066 = vsel %vm692, %v5929, %v6012
  %v6067 = vsel %vm694, %v6066, %v6016
  %v6068 = vsel %vm696, %v6067, %v6020
  %v6069 = vsel %vm698, %v6068, %v6024
  %v6070 = vsel %vm700, %v6069, %v6028
  %v6071 = vsel %vm702, %v6070, %v6032
  %v6072 = vsel %vm704, %v6071, %v6036
  %v6073 = vsel %vm692, %v5985, %v6040
  %v6074 = vsel %vm694, %v6073, %v6044
  %v6075 = vsel %vm696, %v6074, %v6048
  %v6076 = vsel %vm698, %v6075, %v6052
  %v6077 = vsel %vm700, %v6076, %v6056
  %v6078 = vsel %vm702, %v6077, %v6060
  %v6079 = vsel %vm704, %v6078, %v6064
  %6080 = vst [vmem:[#allocation3 + $0x40] sm:$0xf] %v6072
  %6081 = vst [vmem:[#allocation3 + $0x48] sm:$0xf] %v6079
  %v6082 = vld [vmem:[#allocation2 + $0x1] sm:$0xff]
  %v6083 = vld [vmem:[#allocation2 + $0x9] sm:$0xff]
  %v6084 = vld [vmem:[#allocation2 + $0x19] sm:$0xff]
  %v6085 = vld [vmem:[#allocation2 + $0x21] sm:$0xff]
  %v6086 = vld [vmem:[#allocation2 + $0x31] sm:$0xff]
  %v6087 = vld [vmem:[#allocation2 + $0x39] sm:$0xff]
  %v6088 = vld [vmem:[#allocation2 + $0x49] sm:$0xff]
  %v6089 = vld [vmem:[#allocation2 + $0x51] sm:$0xff]
  %6098 = vrot.lane.b32.xlu0 %v6082, 126
  %v6099 = vpop.permute.xlu0 %6098
  %6100 = vrot.lane.b32.xlu0 %v6083, 126
  %v6101 = vpop.permute.xlu0 %6100
  %6102 = vrot.lane.b32.xlu0 %v6084, 126
  %v6103 = vpop.permute.xlu0 %6102
  %6104 = vrot.lane.b32.xlu0 %v6085, 126
  %v6105 = vpop.permute.xlu0 %6104
  %6106 = vrot.lane.b32.xlu0 %v6086, 126
  %v6107 = vpop.permute.xlu0 %6106
  %6108 = vrot.lane.b32.xlu0 %v6087, 126
  %v6109 = vpop.permute.xlu0 %6108
  %6110 = vrot.lane.b32.xlu0 %v6088, 126
  %v6111 = vpop.permute.xlu0 %6110
  %6112 = vrot.lane.b32.xlu0 %v6089, 126
  %v6113 = vpop.permute.xlu0 %6112
  %v6122 = vrot.slane %v6107, 4
  %v6123 = vsel %vm92, %v6122, %v6099
  %v6124 = vrot.slane %v6099, 4
  %v6125 = vsel %vm92, %v6107, %v6124
  %v6127 = vunpack.c.l.s4 1983009808
  %v6128 = vunpack.c.0.s8 %v6127
  %v6129 = vperm.slane %v6123, %v6128
  %v6131 = vunpack.c.l.s4 1983009808
  %v6132 = vunpack.c.0.s8 %v6131
  %v6133 = vperm.slane %v6125, %v6132
  %v6134 = vrot.slane %v6111, 4
  %v6135 = vsel %vm92, %v6134, %v6103
  %v6136 = vrot.slane %v6103, 4
  %v6137 = vsel %vm92, %v6111, %v6136
  %v6139 = vunpack.c.l.s4 1983009808
  %v6140 = vunpack.c.0.s8 %v6139
  %v6141 = vperm.slane %v6135, %v6140
  %v6143 = vunpack.c.l.s4 1983009808
  %v6144 = vunpack.c.0.s8 %v6143
  %v6145 = vperm.slane %v6137, %v6144
  %v6146 = vrot.slane %v6141, 4
  %v6147 = vsel %vm92, %v6146, %v6129
  %v6148 = vrot.slane %v6129, 4
  %v6149 = vsel %vm92, %v6141, %v6148
  %v6151 = vunpack.c.l.s4 1934713408
  %v6152 = vunpack.c.0.s8 %v6151
  %v6153 = vperm.slane %v6147, %v6152
  %v6155 = vunpack.c.l.s4 1934713408
  %v6156 = vunpack.c.0.s8 %v6155
  %v6157 = vperm.slane %v6149, %v6156
  %v6158 = vrot.slane %v6145, 4
  %v6159 = vsel %vm92, %v6158, %v6133
  %v6160 = vrot.slane %v6133, 4
  %v6161 = vsel %vm92, %v6145, %v6160
  %v6163 = vunpack.c.l.s4 1934713408
  %v6164 = vunpack.c.0.s8 %v6163
  %v6165 = vperm.slane %v6159, %v6164
  %v6167 = vunpack.c.l.s4 1934713408
  %v6168 = vunpack.c.0.s8 %v6167
  %v6169 = vperm.slane %v6161, %v6168
  %v6170 = vrot.slane %v6153, 4
  %v6171 = vsel %vm92, 0.0, %v6170
  %v6172 = vrot.slane %v6157, 4
  %v6173 = vsel %vm92, 0.0, %v6172
  %v6174 = vrot.slane %v6165, 4
  %v6175 = vsel %vm92, 0.0, %v6174
  %v6176 = vrot.slane %v6169, 4
  %v6177 = vsel %vm92, 0.0, %v6176
  %v6178 = vrot.slane %v6109, 4
  %v6179 = vsel %vm92, %v6178, %v6101
  %v6180 = vrot.slane %v6101, 4
  %v6181 = vsel %vm92, %v6109, %v6180
  %v6183 = vunpack.c.l.s4 1983009808
  %v6184 = vunpack.c.0.s8 %v6183
  %v6185 = vperm.slane %v6179, %v6184
  %v6187 = vunpack.c.l.s4 1983009808
  %v6188 = vunpack.c.0.s8 %v6187
  %v6189 = vperm.slane %v6181, %v6188
  %v6190 = vrot.slane %v6113, 4
  %v6191 = vsel %vm92, %v6190, %v6105
  %v6192 = vrot.slane %v6105, 4
  %v6193 = vsel %vm92, %v6113, %v6192
  %v6195 = vunpack.c.l.s4 1983009808
  %v6196 = vunpack.c.0.s8 %v6195
  %v6197 = vperm.slane %v6191, %v6196
  %v6199 = vunpack.c.l.s4 1983009808
  %v6200 = vunpack.c.0.s8 %v6199
  %v6201 = vperm.slane %v6193, %v6200
  %v6202 = vrot.slane %v6197, 4
  %v6203 = vsel %vm92, %v6202, %v6185
  %v6204 = vrot.slane %v6185, 4
  %v6205 = vsel %vm92, %v6197, %v6204
  %v6207 = vunpack.c.l.s4 1934713408
  %v6208 = vunpack.c.0.s8 %v6207
  %v6209 = vperm.slane %v6203, %v6208
  %v6211 = vunpack.c.l.s4 1934713408
  %v6212 = vunpack.c.0.s8 %v6211
  %v6213 = vperm.slane %v6205, %v6212
  %v6214 = vrot.slane %v6201, 4
  %v6215 = vsel %vm92, %v6214, %v6189
  %v6216 = vrot.slane %v6189, 4
  %v6217 = vsel %vm92, %v6201, %v6216
  %v6219 = vunpack.c.l.s4 1934713408
  %v6220 = vunpack.c.0.s8 %v6219
  %v6221 = vperm.slane %v6215, %v6220
  %v6223 = vunpack.c.l.s4 1934713408
  %v6224 = vunpack.c.0.s8 %v6223
  %v6225 = vperm.slane %v6217, %v6224
  %v6226 = vrot.slane %v6209, 4
  %v6227 = vsel %vm92, 0.0, %v6226
  %v6228 = vrot.slane %v6213, 4
  %v6229 = vsel %vm92, 0.0, %v6228
  %v6230 = vrot.slane %v6221, 4
  %v6231 = vsel %vm92, 0.0, %v6230
  %v6232 = vrot.slane %v6225, 4
  %v6233 = vsel %vm92, 0.0, %v6232
  %6235 = vrot.lane.b32.xlu0 %v6171, 16
  %v6236 = vpop.permute.xlu0 %6235
  %6239 = vrot.lane.b32.xlu0 %v6157, 32
  %v6240 = vpop.permute.xlu0 %6239
  %6243 = vrot.lane.b32.xlu0 %v6173, 48
  %v6244 = vpop.permute.xlu0 %6243
  %6247 = vrot.lane.b32.xlu0 %v6165, 64
  %v6248 = vpop.permute.xlu0 %6247
  %6251 = vrot.lane.b32.xlu0 %v6175, 80
  %v6252 = vpop.permute.xlu0 %6251
  %6255 = vrot.lane.b32.xlu0 %v6169, 96
  %v6256 = vpop.permute.xlu0 %6255
  %6259 = vrot.lane.b32.xlu0 %v6177, 112
  %v6260 = vpop.permute.xlu0 %6259
  %6263 = vrot.lane.b32.xlu0 %v6227, 16
  %v6264 = vpop.permute.xlu0 %6263
  %6267 = vrot.lane.b32.xlu0 %v6213, 32
  %v6268 = vpop.permute.xlu0 %6267
  %6271 = vrot.lane.b32.xlu0 %v6229, 48
  %v6272 = vpop.permute.xlu0 %6271
  %6275 = vrot.lane.b32.xlu0 %v6221, 64
  %v6276 = vpop.permute.xlu0 %6275
  %6279 = vrot.lane.b32.xlu0 %v6231, 80
  %v6280 = vpop.permute.xlu0 %6279
  %6283 = vrot.lane.b32.xlu0 %v6225, 96
  %v6284 = vpop.permute.xlu0 %6283
  %6287 = vrot.lane.b32.xlu0 %v6233, 112
  %v6288 = vpop.permute.xlu0 %6287
  %v6290 = vsel %vm692, %v6153, %v6236
  %v6291 = vsel %vm694, %v6290, %v6240
  %v6292 = vsel %vm696, %v6291, %v6244
  %v6293 = vsel %vm698, %v6292, %v6248
  %v6294 = vsel %vm700, %v6293, %v6252
  %v6295 = vsel %vm702, %v6294, %v6256
  %v6296 = vsel %vm704, %v6295, %v6260
  %v6297 = vsel %vm692, %v6209, %v6264
  %v6298 = vsel %vm694, %v6297, %v6268
  %v6299 = vsel %vm696, %v6298, %v6272
  %v6300 = vsel %vm698, %v6299, %v6276
  %v6301 = vsel %vm700, %v6300, %v6280
  %v6302 = vsel %vm702, %v6301, %v6284
  %v6303 = vsel %vm704, %v6302, %v6288
  %v6306 = vrot.slane %v6296, 4
  %v6307 = vrot.slane %v6303, 4
  %6310 = vst [vmem:[#allocation3 + $0x40] sm:$0xf0] %v6306
  %6311 = vst [vmem:[#allocation3 + $0x48] sm:$0xf0] %v6307
  %v6312 = vld [vmem:[#allocation2 + $0x2] sm:$0xff]
  %v6313 = vld [vmem:[#allocation2 + $0xa] sm:$0xff]
  %v6314 = vld [vmem:[#allocation2 + $0x1a] sm:$0xff]
  %v6315 = vld [vmem:[#allocation2 + $0x22] sm:$0xff]
  %v6316 = vld [vmem:[#allocation2 + $0x32] sm:$0xff]
  %v6317 = vld [vmem:[#allocation2 + $0x3a] sm:$0xff]
  %v6318 = vld [vmem:[#allocation2 + $0x4a] sm:$0xff]
  %v6319 = vld [vmem:[#allocation2 + $0x52] sm:$0xff]
  %v6320 = vrot.slane %v6316, 4
  %v6321 = vsel %vm92, %v6320, %v6312
  %v6322 = vrot.slane %v6312, 4
  %v6323 = vsel %vm92, %v6316, %v6322
  %v6325 = vunpack.c.l.s4 1983009808
  %v6326 = vunpack.c.0.s8 %v6325
  %v6327 = vperm.slane %v6321, %v6326
  %v6329 = vunpack.c.l.s4 1983009808
  %v6330 = vunpack.c.0.s8 %v6329
  %v6331 = vperm.slane %v6323, %v6330
  %v6332 = vrot.slane %v6318, 4
  %v6333 = vsel %vm92, %v6332, %v6314
  %v6334 = vrot.slane %v6314, 4
  %v6335 = vsel %vm92, %v6318, %v6334
  %v6337 = vunpack.c.l.s4 1983009808
  %v6338 = vunpack.c.0.s8 %v6337
  %v6339 = vperm.slane %v6333, %v6338
  %v6341 = vunpack.c.l.s4 1983009808
  %v6342 = vunpack.c.0.s8 %v6341
  %v6343 = vperm.slane %v6335, %v6342
  %v6344 = vrot.slane %v6339, 4
  %v6345 = vsel %vm92, %v6344, %v6327
  %v6346 = vrot.slane %v6327, 4
  %v6347 = vsel %vm92, %v6339, %v6346
  %v6349 = vunpack.c.l.s4 1934713408
  %v6350 = vunpack.c.0.s8 %v6349
  %v6351 = vperm.slane %v6345, %v6350
  %v6353 = vunpack.c.l.s4 1934713408
  %v6354 = vunpack.c.0.s8 %v6353
  %v6355 = vperm.slane %v6347, %v6354
  %v6356 = vrot.slane %v6343, 4
  %v6357 = vsel %vm92, %v6356, %v6331
  %v6358 = vrot.slane %v6331, 4
  %v6359 = vsel %vm92, %v6343, %v6358
  %v6361 = vunpack.c.l.s4 1934713408
  %v6362 = vunpack.c.0.s8 %v6361
  %v6363 = vperm.slane %v6357, %v6362
  %v6365 = vunpack.c.l.s4 1934713408
  %v6366 = vunpack.c.0.s8 %v6365
  %v6367 = vperm.slane %v6359, %v6366
  %v6368 = vrot.slane %v6351, 4
  %v6369 = vsel %vm92, 0.0, %v6368
  %v6370 = vrot.slane %v6355, 4
  %v6371 = vsel %vm92, 0.0, %v6370
  %v6372 = vrot.slane %v6363, 4
  %v6373 = vsel %vm92, 0.0, %v6372
  %v6374 = vrot.slane %v6367, 4
  %v6375 = vsel %vm92, 0.0, %v6374
  %v6376 = vrot.slane %v6317, 4
  %v6377 = vsel %vm92, %v6376, %v6313
  %v6378 = vrot.slane %v6313, 4
  %v6379 = vsel %vm92, %v6317, %v6378
  %v6381 = vunpack.c.l.s4 1983009808
  %v6382 = vunpack.c.0.s8 %v6381
  %v6383 = vperm.slane %v6377, %v6382
  %v6385 = vunpack.c.l.s4 1983009808
  %v6386 = vunpack.c.0.s8 %v6385
  %v6387 = vperm.slane %v6379, %v6386
  %v6388 = vrot.slane %v6319, 4
  %v6389 = vsel %vm92, %v6388, %v6315
  %v6390 = vrot.slane %v6315, 4
  %v6391 = vsel %vm92, %v6319, %v6390
  %v6393 = vunpack.c.l.s4 1983009808
  %v6394 = vunpack.c.0.s8 %v6393
  %v6395 = vperm.slane %v6389, %v6394
  %v6397 = vunpack.c.l.s4 1983009808
  %v6398 = vunpack.c.0.s8 %v6397
  %v6399 = vperm.slane %v6391, %v6398
  %v6400 = vrot.slane %v6395, 4
  %v6401 = vsel %vm92, %v6400, %v6383
  %v6402 = vrot.slane %v6383, 4
  %v6403 = vsel %vm92, %v6395, %v6402
  %v6405 = vunpack.c.l.s4 1934713408
  %v6406 = vunpack.c.0.s8 %v6405
  %v6407 = vperm.slane %v6401, %v6406
  %v6409 = vunpack.c.l.s4 1934713408
  %v6410 = vunpack.c.0.s8 %v6409
  %v6411 = vperm.slane %v6403, %v6410
  %v6412 = vrot.slane %v6399, 4
  %v6413 = vsel %vm92, %v6412, %v6387
  %v6414 = vrot.slane %v6387, 4
  %v6415 = vsel %vm92, %v6399, %v6414
  %v6417 = vunpack.c.l.s4 1934713408
  %v6418 = vunpack.c.0.s8 %v6417
  %v6419 = vperm.slane %v6413, %v6418
  %v6421 = vunpack.c.l.s4 1934713408
  %v6422 = vunpack.c.0.s8 %v6421
  %v6423 = vperm.slane %v6415, %v6422
  %v6424 = vrot.slane %v6407, 4
  %v6425 = vsel %vm92, 0.0, %v6424
  %v6426 = vrot.slane %v6411, 4
  %v6427 = vsel %vm92, 0.0, %v6426
  %v6428 = vrot.slane %v6419, 4
  %v6429 = vsel %vm92, 0.0, %v6428
  %v6430 = vrot.slane %v6423, 4
  %v6431 = vsel %vm92, 0.0, %v6430
  %6433 = vrot.lane.b32.xlu0 %v6369, 16
  %v6434 = vpop.permute.xlu0 %6433
  %6437 = vrot.lane.b32.xlu0 %v6355, 32
  %v6438 = vpop.permute.xlu0 %6437
  %6441 = vrot.lane.b32.xlu0 %v6371, 48
  %v6442 = vpop.permute.xlu0 %6441
  %6445 = vrot.lane.b32.xlu0 %v6363, 64
  %v6446 = vpop.permute.xlu0 %6445
  %6449 = vrot.lane.b32.xlu0 %v6373, 80
  %v6450 = vpop.permute.xlu0 %6449
  %6453 = vrot.lane.b32.xlu0 %v6367, 96
  %v6454 = vpop.permute.xlu0 %6453
  %6457 = vrot.lane.b32.xlu0 %v6375, 112
  %v6458 = vpop.permute.xlu0 %6457
  %6461 = vrot.lane.b32.xlu0 %v6425, 16
  %v6462 = vpop.permute.xlu0 %6461
  %6465 = vrot.lane.b32.xlu0 %v6411, 32
  %v6466 = vpop.permute.xlu0 %6465
  %6469 = vrot.lane.b32.xlu0 %v6427, 48
  %v6470 = vpop.permute.xlu0 %6469
  %6473 = vrot.lane.b32.xlu0 %v6419, 64
  %v6474 = vpop.permute.xlu0 %6473
  %6477 = vrot.lane.b32.xlu0 %v6429, 80
  %v6478 = vpop.permute.xlu0 %6477
  %6481 = vrot.lane.b32.xlu0 %v6423, 96
  %v6482 = vpop.permute.xlu0 %6481
  %6485 = vrot.lane.b32.xlu0 %v6431, 112
  %v6486 = vpop.permute.xlu0 %6485
  %v6488 = vsel %vm692, %v6351, %v6434
  %v6489 = vsel %vm694, %v6488, %v6438
  %v6490 = vsel %vm696, %v6489, %v6442
  %v6491 = vsel %vm698, %v6490, %v6446
  %v6492 = vsel %vm700, %v6491, %v6450
  %v6493 = vsel %vm702, %v6492, %v6454
  %v6494 = vsel %vm704, %v6493, %v6458
  %v6495 = vsel %vm692, %v6407, %v6462
  %v6496 = vsel %vm694, %v6495, %v6466
  %v6497 = vsel %vm696, %v6496, %v6470
  %v6498 = vsel %vm698, %v6497, %v6474
  %v6499 = vsel %vm700, %v6498, %v6478
  %v6500 = vsel %vm702, %v6499, %v6482
  %v6501 = vsel %vm704, %v6500, %v6486
  %6502 = vst [vmem:[#allocation3 + $0x60] sm:$0xf] %v6494
  %6503 = vst [vmem:[#allocation3 + $0x68] sm:$0xf] %v6501
  %v6504 = vld [vmem:[#allocation2 + $0x2] sm:$0xff]
  %v6505 = vld [vmem:[#allocation2 + $0xa] sm:$0xff]
  %v6506 = vld [vmem:[#allocation2 + $0x1a] sm:$0xff]
  %v6507 = vld [vmem:[#allocation2 + $0x22] sm:$0xff]
  %v6508 = vld [vmem:[#allocation2 + $0x32] sm:$0xff]
  %v6509 = vld [vmem:[#allocation2 + $0x3a] sm:$0xff]
  %v6510 = vld [vmem:[#allocation2 + $0x4a] sm:$0xff]
  %v6511 = vld [vmem:[#allocation2 + $0x52] sm:$0xff]
  %6520 = vrot.lane.b32.xlu0 %v6504, 127
  %v6521 = vpop.permute.xlu0 %6520
  %6522 = vrot.lane.b32.xlu0 %v6505, 127
  %v6523 = vpop.permute.xlu0 %6522
  %6524 = vrot.lane.b32.xlu0 %v6506, 127
  %v6525 = vpop.permute.xlu0 %6524
  %6526 = vrot.lane.b32.xlu0 %v6507, 127
  %v6527 = vpop.permute.xlu0 %6526
  %6528 = vrot.lane.b32.xlu0 %v6508, 127
  %v6529 = vpop.permute.xlu0 %6528
  %6530 = vrot.lane.b32.xlu0 %v6509, 127
  %v6531 = vpop.permute.xlu0 %6530
  %6532 = vrot.lane.b32.xlu0 %v6510, 127
  %v6533 = vpop.permute.xlu0 %6532
  %6534 = vrot.lane.b32.xlu0 %v6511, 127
  %v6535 = vpop.permute.xlu0 %6534
  %v6544 = vrot.slane %v6529, 4
  %v6545 = vsel %vm92, %v6544, %v6521
  %v6546 = vrot.slane %v6521, 4
  %v6547 = vsel %vm92, %v6529, %v6546
  %v6549 = vunpack.c.l.s4 1983009808
  %v6550 = vunpack.c.0.s8 %v6549
  %v6551 = vperm.slane %v6545, %v6550
  %v6553 = vunpack.c.l.s4 1983009808
  %v6554 = vunpack.c.0.s8 %v6553
  %v6555 = vperm.slane %v6547, %v6554
  %v6556 = vrot.slane %v6533, 4
  %v6557 = vsel %vm92, %v6556, %v6525
  %v6558 = vrot.slane %v6525, 4
  %v6559 = vsel %vm92, %v6533, %v6558
  %v6561 = vunpack.c.l.s4 1983009808
  %v6562 = vunpack.c.0.s8 %v6561
  %v6563 = vperm.slane %v6557, %v6562
  %v6565 = vunpack.c.l.s4 1983009808
  %v6566 = vunpack.c.0.s8 %v6565
  %v6567 = vperm.slane %v6559, %v6566
  %v6568 = vrot.slane %v6563, 4
  %v6569 = vsel %vm92, %v6568, %v6551
  %v6570 = vrot.slane %v6551, 4
  %v6571 = vsel %vm92, %v6563, %v6570
  %v6573 = vunpack.c.l.s4 1934713408
  %v6574 = vunpack.c.0.s8 %v6573
  %v6575 = vperm.slane %v6569, %v6574
  %v6577 = vunpack.c.l.s4 1934713408
  %v6578 = vunpack.c.0.s8 %v6577
  %v6579 = vperm.slane %v6571, %v6578
  %v6580 = vrot.slane %v6567, 4
  %v6581 = vsel %vm92, %v6580, %v6555
  %v6582 = vrot.slane %v6555, 4
  %v6583 = vsel %vm92, %v6567, %v6582
  %v6585 = vunpack.c.l.s4 1934713408
  %v6586 = vunpack.c.0.s8 %v6585
  %v6587 = vperm.slane %v6581, %v6586
  %v6589 = vunpack.c.l.s4 1934713408
  %v6590 = vunpack.c.0.s8 %v6589
  %v6591 = vperm.slane %v6583, %v6590
  %v6592 = vrot.slane %v6575, 4
  %v6593 = vsel %vm92, 0.0, %v6592
  %v6594 = vrot.slane %v6579, 4
  %v6595 = vsel %vm92, 0.0, %v6594
  %v6596 = vrot.slane %v6587, 4
  %v6597 = vsel %vm92, 0.0, %v6596
  %v6598 = vrot.slane %v6591, 4
  %v6599 = vsel %vm92, 0.0, %v6598
  %v6600 = vrot.slane %v6531, 4
  %v6601 = vsel %vm92, %v6600, %v6523
  %v6602 = vrot.slane %v6523, 4
  %v6603 = vsel %vm92, %v6531, %v6602
  %v6605 = vunpack.c.l.s4 1983009808
  %v6606 = vunpack.c.0.s8 %v6605
  %v6607 = vperm.slane %v6601, %v6606
  %v6609 = vunpack.c.l.s4 1983009808
  %v6610 = vunpack.c.0.s8 %v6609
  %v6611 = vperm.slane %v6603, %v6610
  %v6612 = vrot.slane %v6535, 4
  %v6613 = vsel %vm92, %v6612, %v6527
  %v6614 = vrot.slane %v6527, 4
  %v6615 = vsel %vm92, %v6535, %v6614
  %v6617 = vunpack.c.l.s4 1983009808
  %v6618 = vunpack.c.0.s8 %v6617
  %v6619 = vperm.slane %v6613, %v6618
  %v6621 = vunpack.c.l.s4 1983009808
  %v6622 = vunpack.c.0.s8 %v6621
  %v6623 = vperm.slane %v6615, %v6622
  %v6624 = vrot.slane %v6619, 4
  %v6625 = vsel %vm92, %v6624, %v6607
  %v6626 = vrot.slane %v6607, 4
  %v6627 = vsel %vm92, %v6619, %v6626
  %v6629 = vunpack.c.l.s4 1934713408
  %v6630 = vunpack.c.0.s8 %v6629
  %v6631 = vperm.slane %v6625, %v6630
  %v6633 = vunpack.c.l.s4 1934713408
  %v6634 = vunpack.c.0.s8 %v6633
  %v6635 = vperm.slane %v6627, %v6634
  %v6636 = vrot.slane %v6623, 4
  %v6637 = vsel %vm92, %v6636, %v6611
  %v6638 = vrot.slane %v6611, 4
  %v6639 = vsel %vm92, %v6623, %v6638
  %v6641 = vunpack.c.l.s4 1934713408
  %v6642 = vunpack.c.0.s8 %v6641
  %v6643 = vperm.slane %v6637, %v6642
  %v6645 = vunpack.c.l.s4 1934713408
  %v6646 = vunpack.c.0.s8 %v6645
  %v6647 = vperm.slane %v6639, %v6646
  %v6648 = vrot.slane %v6631, 4
  %v6649 = vsel %vm92, 0.0, %v6648
  %v6650 = vrot.slane %v6635, 4
  %v6651 = vsel %vm92, 0.0, %v6650
  %v6652 = vrot.slane %v6643, 4
  %v6653 = vsel %vm92, 0.0, %v6652
  %v6654 = vrot.slane %v6647, 4
  %v6655 = vsel %vm92, 0.0, %v6654
  %6657 = vrot.lane.b32.xlu0 %v6593, 16
  %v6658 = vpop.permute.xlu0 %6657
  %6661 = vrot.lane.b32.xlu0 %v6579, 32
  %v6662 = vpop.permute.xlu0 %6661
  %6665 = vrot.lane.b32.xlu0 %v6595, 48
  %v6666 = vpop.permute.xlu0 %6665
  %6669 = vrot.lane.b32.xlu0 %v6587, 64
  %v6670 = vpop.permute.xlu0 %6669
  %6673 = vrot.lane.b32.xlu0 %v6597, 80
  %v6674 = vpop.permute.xlu0 %6673
  %6677 = vrot.lane.b32.xlu0 %v6591, 96
  %v6678 = vpop.permute.xlu0 %6677
  %6681 = vrot.lane.b32.xlu0 %v6599, 112
  %v6682 = vpop.permute.xlu0 %6681
  %6685 = vrot.lane.b32.xlu0 %v6649, 16
  %v6686 = vpop.permute.xlu0 %6685
  %6689 = vrot.lane.b32.xlu0 %v6635, 32
  %v6690 = vpop.permute.xlu0 %6689
  %6693 = vrot.lane.b32.xlu0 %v6651, 48
  %v6694 = vpop.permute.xlu0 %6693
  %6697 = vrot.lane.b32.xlu0 %v6643, 64
  %v6698 = vpop.permute.xlu0 %6697
  %6701 = vrot.lane.b32.xlu0 %v6653, 80
  %v6702 = vpop.permute.xlu0 %6701
  %6705 = vrot.lane.b32.xlu0 %v6647, 96
  %v6706 = vpop.permute.xlu0 %6705
  %6709 = vrot.lane.b32.xlu0 %v6655, 112
  %v6710 = vpop.permute.xlu0 %6709
  %v6712 = vsel %vm692, %v6575, %v6658
  %v6713 = vsel %vm694, %v6712, %v6662
  %v6714 = vsel %vm696, %v6713, %v6666
  %v6715 = vsel %vm698, %v6714, %v6670
  %v6716 = vsel %vm700, %v6715, %v6674
  %v6717 = vsel %vm702, %v6716, %v6678
  %v6718 = vsel %vm704, %v6717, %v6682
  %v6719 = vsel %vm692, %v6631, %v6686
  %v6720 = vsel %vm694, %v6719, %v6690
  %v6721 = vsel %vm696, %v6720, %v6694
  %v6722 = vsel %vm698, %v6721, %v6698
  %v6723 = vsel %vm700, %v6722, %v6702
  %v6724 = vsel %vm702, %v6723, %v6706
  %v6725 = vsel %vm704, %v6724, %v6710
  %v6728 = vrot.slane %v6718, 4
  %v6729 = vrot.slane %v6725, 4
  %6732 = vst [vmem:[#allocation3 + $0x60] sm:$0xf0] %v6728
  %6733 = vst [vmem:[#allocation3 + $0x68] sm:$0xf0] %v6729
  %v6734 = vld [vmem:[#allocation2 + $0x2] sm:$0xff]
  %v6735 = vld [vmem:[#allocation2 + $0xa] sm:$0xff]
  %v6736 = vld [vmem:[#allocation2 + $0x1a] sm:$0xff]
  %v6737 = vld [vmem:[#allocation2 + $0x22] sm:$0xff]
  %v6738 = vld [vmem:[#allocation2 + $0x32] sm:$0xff]
  %v6739 = vld [vmem:[#allocation2 + $0x3a] sm:$0xff]
  %v6740 = vld [vmem:[#allocation2 + $0x4a] sm:$0xff]
  %v6741 = vld [vmem:[#allocation2 + $0x52] sm:$0xff]
  %6750 = vrot.lane.b32.xlu0 %v6734, 126
  %v6751 = vpop.permute.xlu0 %6750
  %6752 = vrot.lane.b32.xlu0 %v6735, 126
  %v6753 = vpop.permute.xlu0 %6752
  %6754 = vrot.lane.b32.xlu0 %v6736, 126
  %v6755 = vpop.permute.xlu0 %6754
  %6756 = vrot.lane.b32.xlu0 %v6737, 126
  %v6757 = vpop.permute.xlu0 %6756
  %6758 = vrot.lane.b32.xlu0 %v6738, 126
  %v6759 = vpop.permute.xlu0 %6758
  %6760 = vrot.lane.b32.xlu0 %v6739, 126
  %v6761 = vpop.permute.xlu0 %6760
  %6762 = vrot.lane.b32.xlu0 %v6740, 126
  %v6763 = vpop.permute.xlu0 %6762
  %6764 = vrot.lane.b32.xlu0 %v6741, 126
  %v6765 = vpop.permute.xlu0 %6764
  %v6774 = vrot.slane %v6759, 4
  %v6775 = vsel %vm92, %v6774, %v6751
  %v6776 = vrot.slane %v6751, 4
  %v6777 = vsel %vm92, %v6759, %v6776
  %v6779 = vunpack.c.l.s4 1983009808
  %v6780 = vunpack.c.0.s8 %v6779
  %v6781 = vperm.slane %v6775, %v6780
  %v6783 = vunpack.c.l.s4 1983009808
  %v6784 = vunpack.c.0.s8 %v6783
  %v6785 = vperm.slane %v6777, %v6784
  %v6786 = vrot.slane %v6763, 4
  %v6787 = vsel %vm92, %v6786, %v6755
  %v6788 = vrot.slane %v6755, 4
  %v6789 = vsel %vm92, %v6763, %v6788
  %v6791 = vunpack.c.l.s4 1983009808
  %v6792 = vunpack.c.0.s8 %v6791
  %v6793 = vperm.slane %v6787, %v6792
  %v6795 = vunpack.c.l.s4 1983009808
  %v6796 = vunpack.c.0.s8 %v6795
  %v6797 = vperm.slane %v6789, %v6796
  %v6798 = vrot.slane %v6793, 4
  %v6799 = vsel %vm92, %v6798, %v6781
  %v6800 = vrot.slane %v6781, 4
  %v6801 = vsel %vm92, %v6793, %v6800
  %v6803 = vunpack.c.l.s4 1934713408
  %v6804 = vunpack.c.0.s8 %v6803
  %v6805 = vperm.slane %v6799, %v6804
  %v6807 = vunpack.c.l.s4 1934713408
  %v6808 = vunpack.c.0.s8 %v6807
  %v6809 = vperm.slane %v6801, %v6808
  %v6810 = vrot.slane %v6797, 4
  %v6811 = vsel %vm92, %v6810, %v6785
  %v6812 = vrot.slane %v6785, 4
  %v6813 = vsel %vm92, %v6797, %v6812
  %v6815 = vunpack.c.l.s4 1934713408
  %v6816 = vunpack.c.0.s8 %v6815
  %v6817 = vperm.slane %v6811, %v6816
  %v6819 = vunpack.c.l.s4 1934713408
  %v6820 = vunpack.c.0.s8 %v6819
  %v6821 = vperm.slane %v6813, %v6820
  %v6822 = vrot.slane %v6805, 4
  %v6823 = vsel %vm92, 0.0, %v6822
  %v6824 = vrot.slane %v6809, 4
  %v6825 = vsel %vm92, 0.0, %v6824
  %v6826 = vrot.slane %v6817, 4
  %v6827 = vsel %vm92, 0.0, %v6826
  %v6828 = vrot.slane %v6821, 4
  %v6829 = vsel %vm92, 0.0, %v6828
  %v6830 = vrot.slane %v6761, 4
  %v6831 = vsel %vm92, %v6830, %v6753
  %v6832 = vrot.slane %v6753, 4
  %v6833 = vsel %vm92, %v6761, %v6832
  %v6835 = vunpack.c.l.s4 1983009808
  %v6836 = vunpack.c.0.s8 %v6835
  %v6837 = vperm.slane %v6831, %v6836
  %v6839 = vunpack.c.l.s4 1983009808
  %v6840 = vunpack.c.0.s8 %v6839
  %v6841 = vperm.slane %v6833, %v6840
  %v6842 = vrot.slane %v6765, 4
  %v6843 = vsel %vm92, %v6842, %v6757
  %v6844 = vrot.slane %v6757, 4
  %v6845 = vsel %vm92, %v6765, %v6844
  %v6847 = vunpack.c.l.s4 1983009808
  %v6848 = vunpack.c.0.s8 %v6847
  %v6849 = vperm.slane %v6843, %v6848
  %v6851 = vunpack.c.l.s4 1983009808
  %v6852 = vunpack.c.0.s8 %v6851
  %v6853 = vperm.slane %v6845, %v6852
  %v6854 = vrot.slane %v6849, 4
  %v6855 = vsel %vm92, %v6854, %v6837
  %v6856 = vrot.slane %v6837, 4
  %v6857 = vsel %vm92, %v6849, %v6856
  %v6859 = vunpack.c.l.s4 1934713408
  %v6860 = vunpack.c.0.s8 %v6859
  %v6861 = vperm.slane %v6855, %v6860
  %v6863 = vunpack.c.l.s4 1934713408
  %v6864 = vunpack.c.0.s8 %v6863
  %v6865 = vperm.slane %v6857, %v6864
  %v6866 = vrot.slane %v6853, 4
  %v6867 = vsel %vm92, %v6866, %v6841
  %v6868 = vrot.slane %v6841, 4
  %v6869 = vsel %vm92, %v6853, %v6868
  %v6871 = vunpack.c.l.s4 1934713408
  %v6872 = vunpack.c.0.s8 %v6871
  %v6873 = vperm.slane %v6867, %v6872
  %v6875 = vunpack.c.l.s4 1934713408
  %v6876 = vunpack.c.0.s8 %v6875
  %v6877 = vperm.slane %v6869, %v6876
  %v6878 = vrot.slane %v6861, 4
  %v6879 = vsel %vm92, 0.0, %v6878
  %v6880 = vrot.slane %v6865, 4
  %v6881 = vsel %vm92, 0.0, %v6880
  %v6882 = vrot.slane %v6873, 4
  %v6883 = vsel %vm92, 0.0, %v6882
  %v6884 = vrot.slane %v6877, 4
  %v6885 = vsel %vm92, 0.0, %v6884
  %6887 = vrot.lane.b32.xlu0 %v6823, 16
  %v6888 = vpop.permute.xlu0 %6887
  %6891 = vrot.lane.b32.xlu0 %v6809, 32
  %v6892 = vpop.permute.xlu0 %6891
  %6895 = vrot.lane.b32.xlu0 %v6825, 48
  %v6896 = vpop.permute.xlu0 %6895
  %6899 = vrot.lane.b32.xlu0 %v6817, 64
  %v6900 = vpop.permute.xlu0 %6899
  %6903 = vrot.lane.b32.xlu0 %v6827, 80
  %v6904 = vpop.permute.xlu0 %6903
  %6907 = vrot.lane.b32.xlu0 %v6821, 96
  %v6908 = vpop.permute.xlu0 %6907
  %6911 = vrot.lane.b32.xlu0 %v6829, 112
  %v6912 = vpop.permute.xlu0 %6911
  %6915 = vrot.lane.b32.xlu0 %v6879, 16
  %v6916 = vpop.permute.xlu0 %6915
  %6919 = vrot.lane.b32.xlu0 %v6865, 32
  %v6920 = vpop.permute.xlu0 %6919
  %6923 = vrot.lane.b32.xlu0 %v6881, 48
  %v6924 = vpop.permute.xlu0 %6923
  %6927 = vrot.lane.b32.xlu0 %v6873, 64
  %v6928 = vpop.permute.xlu0 %6927
  %6931 = vrot.lane.b32.xlu0 %v6883, 80
  %v6932 = vpop.permute.xlu0 %6931
  %6935 = vrot.lane.b32.xlu0 %v6877, 96
  %v6936 = vpop.permute.xlu0 %6935
  %6939 = vrot.lane.b32.xlu0 %v6885, 112
  %v6940 = vpop.permute.xlu0 %6939
  %v6942 = vsel %vm692, %v6805, %v6888
  %v6943 = vsel %vm694, %v6942, %v6892
  %v6944 = vsel %vm696, %v6943, %v6896
  %v6945 = vsel %vm698, %v6944, %v6900
  %v6946 = vsel %vm700, %v6945, %v6904
  %v6947 = vsel %vm702, %v6946, %v6908
  %v6948 = vsel %vm704, %v6947, %v6912
  %v6949 = vsel %vm692, %v6861, %v6916
  %v6950 = vsel %vm694, %v6949, %v6920
  %v6951 = vsel %vm696, %v6950, %v6924
  %v6952 = vsel %vm698, %v6951, %v6928
  %v6953 = vsel %vm700, %v6952, %v6932
  %v6954 = vsel %vm702, %v6953, %v6936
  %v6955 = vsel %vm704, %v6954, %v6940
  %6956 = vst [vmem:[#allocation3 + $0x80] sm:$0xf] %v6948
  %6957 = vst [vmem:[#allocation3 + $0x88] sm:$0xf] %v6955
  %v6958 = vld [vmem:[%s507] sm:$0xff]
  %v6959 = vld [vmem:[%s507 + $0x8] sm:$0xff]
  %v6960 = vld [vmem:[%s507 + $0x18] sm:$0xff]
  %v6961 = vld [vmem:[%s507 + $0x20] sm:$0xff]
  %v6962 = vld [vmem:[%s507 + $0x30] sm:$0xff]
  %v6963 = vld [vmem:[%s507 + $0x38] sm:$0xff]
  %v6964 = vld [vmem:[%s507 + $0x48] sm:$0xff]
  %v6965 = vld [vmem:[%s507 + $0x50] sm:$0xff]
  %v6966 = vrot.slane %v6962, 4
  %v6967 = vsel %vm92, %v6966, %v6958
  %v6968 = vrot.slane %v6958, 4
  %v6969 = vsel %vm92, %v6962, %v6968
  %v6971 = vunpack.c.l.s4 1983009808
  %v6972 = vunpack.c.0.s8 %v6971
  %v6973 = vperm.slane %v6967, %v6972
  %v6975 = vunpack.c.l.s4 1983009808
  %v6976 = vunpack.c.0.s8 %v6975
  %v6977 = vperm.slane %v6969, %v6976
  %v6978 = vrot.slane %v6964, 4
  %v6979 = vsel %vm92, %v6978, %v6960
  %v6980 = vrot.slane %v6960, 4
  %v6981 = vsel %vm92, %v6964, %v6980
  %v6983 = vunpack.c.l.s4 1983009808
  %v6984 = vunpack.c.0.s8 %v6983
  %v6985 = vperm.slane %v6979, %v6984
  %v6987 = vunpack.c.l.s4 1983009808
  %v6988 = vunpack.c.0.s8 %v6987
  %v6989 = vperm.slane %v6981, %v6988
  %v6990 = vrot.slane %v6985, 4
  %v6991 = vsel %vm92, %v6990, %v6973
  %v6992 = vrot.slane %v6973, 4
  %v6993 = vsel %vm92, %v6985, %v6992
  %v6995 = vunpack.c.l.s4 1934713408
  %v6996 = vunpack.c.0.s8 %v6995
  %v6997 = vperm.slane %v6991, %v6996
  %v6999 = vunpack.c.l.s4 1934713408
  %v7000 = vunpack.c.0.s8 %v6999
  %v7001 = vperm.slane %v6993, %v7000
  %v7002 = vrot.slane %v6989, 4
  %v7003 = vsel %vm92, %v7002, %v6977
  %v7004 = vrot.slane %v6977, 4
  %v7005 = vsel %vm92, %v6989, %v7004
  %v7007 = vunpack.c.l.s4 1934713408
  %v7008 = vunpack.c.0.s8 %v7007
  %v7009 = vperm.slane %v7003, %v7008
  %v7011 = vunpack.c.l.s4 1934713408
  %v7012 = vunpack.c.0.s8 %v7011
  %v7013 = vperm.slane %v7005, %v7012
  %v7014 = vrot.slane %v6997, 4
  %v7015 = vsel %vm92, 0.0, %v7014
  %v7016 = vrot.slane %v7001, 4
  %v7017 = vsel %vm92, 0.0, %v7016
  %v7018 = vrot.slane %v7009, 4
  %v7019 = vsel %vm92, 0.0, %v7018
  %v7020 = vrot.slane %v7013, 4
  %v7021 = vsel %vm92, 0.0, %v7020
  %v7022 = vrot.slane %v6963, 4
  %v7023 = vsel %vm92, %v7022, %v6959
  %v7024 = vrot.slane %v6959, 4
  %v7025 = vsel %vm92, %v6963, %v7024
  %v7027 = vunpack.c.l.s4 1983009808
  %v7028 = vunpack.c.0.s8 %v7027
  %v7029 = vperm.slane %v7023, %v7028
  %v7031 = vunpack.c.l.s4 1983009808
  %v7032 = vunpack.c.0.s8 %v7031
  %v7033 = vperm.slane %v7025, %v7032
  %v7034 = vrot.slane %v6965, 4
  %v7035 = vsel %vm92, %v7034, %v6961
  %v7036 = vrot.slane %v6961, 4
  %v7037 = vsel %vm92, %v6965, %v7036
  %v7039 = vunpack.c.l.s4 1983009808
  %v7040 = vunpack.c.0.s8 %v7039
  %v7041 = vperm.slane %v7035, %v7040
  %v7043 = vunpack.c.l.s4 1983009808
  %v7044 = vunpack.c.0.s8 %v7043
  %v7045 = vperm.slane %v7037, %v7044
  %v7046 = vrot.slane %v7041, 4
  %v7047 = vsel %vm92, %v7046, %v7029
  %v7048 = vrot.slane %v7029, 4
  %v7049 = vsel %vm92, %v7041, %v7048
  %v7051 = vunpack.c.l.s4 1934713408
  %v7052 = vunpack.c.0.s8 %v7051
  %v7053 = vperm.slane %v7047, %v7052
  %v7055 = vunpack.c.l.s4 1934713408
  %v7056 = vunpack.c.0.s8 %v7055
  %v7057 = vperm.slane %v7049, %v7056
  %v7058 = vrot.slane %v7045, 4
  %v7059 = vsel %vm92, %v7058, %v7033
  %v7060 = vrot.slane %v7033, 4
  %v7061 = vsel %vm92, %v7045, %v7060
  %v7063 = vunpack.c.l.s4 1934713408
  %v7064 = vunpack.c.0.s8 %v7063
  %v7065 = vperm.slane %v7059, %v7064
  %v7067 = vunpack.c.l.s4 1934713408
  %v7068 = vunpack.c.0.s8 %v7067
  %v7069 = vperm.slane %v7061, %v7068
  %v7070 = vrot.slane %v7053, 4
  %v7071 = vsel %vm92, 0.0, %v7070
  %v7072 = vrot.slane %v7057, 4
  %v7073 = vsel %vm92, 0.0, %v7072
  %v7074 = vrot.slane %v7065, 4
  %v7075 = vsel %vm92, 0.0, %v7074
  %v7076 = vrot.slane %v7069, 4
  %v7077 = vsel %vm92, 0.0, %v7076
  %7079 = vrot.lane.b32.xlu0 %v7015, 16
  %v7080 = vpop.permute.xlu0 %7079
  %7083 = vrot.lane.b32.xlu0 %v7001, 32
  %v7084 = vpop.permute.xlu0 %7083
  %7087 = vrot.lane.b32.xlu0 %v7017, 48
  %v7088 = vpop.permute.xlu0 %7087
  %7091 = vrot.lane.b32.xlu0 %v7009, 64
  %v7092 = vpop.permute.xlu0 %7091
  %7095 = vrot.lane.b32.xlu0 %v7019, 80
  %v7096 = vpop.permute.xlu0 %7095
  %7099 = vrot.lane.b32.xlu0 %v7013, 96
  %v7100 = vpop.permute.xlu0 %7099
  %7103 = vrot.lane.b32.xlu0 %v7021, 112
  %v7104 = vpop.permute.xlu0 %7103
  %7107 = vrot.lane.b32.xlu0 %v7071, 16
  %v7108 = vpop.permute.xlu0 %7107
  %7111 = vrot.lane.b32.xlu0 %v7057, 32
  %v7112 = vpop.permute.xlu0 %7111
  %7115 = vrot.lane.b32.xlu0 %v7073, 48
  %v7116 = vpop.permute.xlu0 %7115
  %7119 = vrot.lane.b32.xlu0 %v7065, 64
  %v7120 = vpop.permute.xlu0 %7119
  %7123 = vrot.lane.b32.xlu0 %v7075, 80
  %v7124 = vpop.permute.xlu0 %7123
  %7127 = vrot.lane.b32.xlu0 %v7069, 96
  %v7128 = vpop.permute.xlu0 %7127
  %7131 = vrot.lane.b32.xlu0 %v7077, 112
  %v7132 = vpop.permute.xlu0 %7131
  %v7134 = vsel %vm692, %v6997, %v7080
  %v7135 = vsel %vm694, %v7134, %v7084
  %v7136 = vsel %vm696, %v7135, %v7088
  %v7137 = vsel %vm698, %v7136, %v7092
  %v7138 = vsel %vm700, %v7137, %v7096
  %v7139 = vsel %vm702, %v7138, %v7100
  %v7140 = vsel %vm704, %v7139, %v7104
  %v7141 = vsel %vm692, %v7053, %v7108
  %v7142 = vsel %vm694, %v7141, %v7112
  %v7143 = vsel %vm696, %v7142, %v7116
  %v7144 = vsel %vm698, %v7143, %v7120
  %v7145 = vsel %vm700, %v7144, %v7124
  %v7146 = vsel %vm702, %v7145, %v7128
  %v7147 = vsel %vm704, %v7146, %v7132
  %7148 = vst [vmem:[#allocation3 + $0x10] sm:$0xf] %v7140
  %7149 = vst [vmem:[#allocation3 + $0x18] sm:$0xf] %v7147
  %v7150 = vld [vmem:[%s507] sm:$0xff]
  %v7151 = vld [vmem:[%s507 + $0x8] sm:$0xff]
  %v7152 = vld [vmem:[%s507 + $0x18] sm:$0xff]
  %v7153 = vld [vmem:[%s507 + $0x20] sm:$0xff]
  %v7154 = vld [vmem:[%s507 + $0x30] sm:$0xff]
  %v7155 = vld [vmem:[%s507 + $0x38] sm:$0xff]
  %v7156 = vld [vmem:[%s507 + $0x48] sm:$0xff]
  %v7157 = vld [vmem:[%s507 + $0x50] sm:$0xff]
  %7166 = vrot.lane.b32.xlu0 %v7150, 127
  %v7167 = vpop.permute.xlu0 %7166
  %7168 = vrot.lane.b32.xlu0 %v7151, 127
  %v7169 = vpop.permute.xlu0 %7168
  %7170 = vrot.lane.b32.xlu0 %v7152, 127
  %v7171 = vpop.permute.xlu0 %7170
  %7172 = vrot.lane.b32.xlu0 %v7153, 127
  %v7173 = vpop.permute.xlu0 %7172
  %7174 = vrot.lane.b32.xlu0 %v7154, 127
  %v7175 = vpop.permute.xlu0 %7174
  %7176 = vrot.lane.b32.xlu0 %v7155, 127
  %v7177 = vpop.permute.xlu0 %7176
  %7178 = vrot.lane.b32.xlu0 %v7156, 127
  %v7179 = vpop.permute.xlu0 %7178
  %7180 = vrot.lane.b32.xlu0 %v7157, 127
  %v7181 = vpop.permute.xlu0 %7180
  %v7190 = vrot.slane %v7175, 4
  %v7191 = vsel %vm92, %v7190, %v7167
  %v7192 = vrot.slane %v7167, 4
  %v7193 = vsel %vm92, %v7175, %v7192
  %v7195 = vunpack.c.l.s4 1983009808
  %v7196 = vunpack.c.0.s8 %v7195
  %v7197 = vperm.slane %v7191, %v7196
  %v7199 = vunpack.c.l.s4 1983009808
  %v7200 = vunpack.c.0.s8 %v7199
  %v7201 = vperm.slane %v7193, %v7200
  %v7202 = vrot.slane %v7179, 4
  %v7203 = vsel %vm92, %v7202, %v7171
  %v7204 = vrot.slane %v7171, 4
  %v7205 = vsel %vm92, %v7179, %v7204
  %v7207 = vunpack.c.l.s4 1983009808
  %v7208 = vunpack.c.0.s8 %v7207
  %v7209 = vperm.slane %v7203, %v7208
  %v7211 = vunpack.c.l.s4 1983009808
  %v7212 = vunpack.c.0.s8 %v7211
  %v7213 = vperm.slane %v7205, %v7212
  %v7214 = vrot.slane %v7209, 4
  %v7215 = vsel %vm92, %v7214, %v7197
  %v7216 = vrot.slane %v7197, 4
  %v7217 = vsel %vm92, %v7209, %v7216
  %v7219 = vunpack.c.l.s4 1934713408
  %v7220 = vunpack.c.0.s8 %v7219
  %v7221 = vperm.slane %v7215, %v7220
  %v7223 = vunpack.c.l.s4 1934713408
  %v7224 = vunpack.c.0.s8 %v7223
  %v7225 = vperm.slane %v7217, %v7224
  %v7226 = vrot.slane %v7213, 4
  %v7227 = vsel %vm92, %v7226, %v7201
  %v7228 = vrot.slane %v7201, 4
  %v7229 = vsel %vm92, %v7213, %v7228
  %v7231 = vunpack.c.l.s4 1934713408
  %v7232 = vunpack.c.0.s8 %v7231
  %v7233 = vperm.slane %v7227, %v7232
  %v7235 = vunpack.c.l.s4 1934713408
  %v7236 = vunpack.c.0.s8 %v7235
  %v7237 = vperm.slane %v7229, %v7236
  %v7238 = vrot.slane %v7221, 4
  %v7239 = vsel %vm92, 0.0, %v7238
  %v7240 = vrot.slane %v7225, 4
  %v7241 = vsel %vm92, 0.0, %v7240
  %v7242 = vrot.slane %v7233, 4
  %v7243 = vsel %vm92, 0.0, %v7242
  %v7244 = vrot.slane %v7237, 4
  %v7245 = vsel %vm92, 0.0, %v7244
  %v7246 = vrot.slane %v7177, 4
  %v7247 = vsel %vm92, %v7246, %v7169
  %v7248 = vrot.slane %v7169, 4
  %v7249 = vsel %vm92, %v7177, %v7248
  %v7251 = vunpack.c.l.s4 1983009808
  %v7252 = vunpack.c.0.s8 %v7251
  %v7253 = vperm.slane %v7247, %v7252
  %v7255 = vunpack.c.l.s4 1983009808
  %v7256 = vunpack.c.0.s8 %v7255
  %v7257 = vperm.slane %v7249, %v7256
  %v7258 = vrot.slane %v7181, 4
  %v7259 = vsel %vm92, %v7258, %v7173
  %v7260 = vrot.slane %v7173, 4
  %v7261 = vsel %vm92, %v7181, %v7260
  %v7263 = vunpack.c.l.s4 1983009808
  %v7264 = vunpack.c.0.s8 %v7263
  %v7265 = vperm.slane %v7259, %v7264
  %v7267 = vunpack.c.l.s4 1983009808
  %v7268 = vunpack.c.0.s8 %v7267
  %v7269 = vperm.slane %v7261, %v7268
  %v7270 = vrot.slane %v7265, 4
  %v7271 = vsel %vm92, %v7270, %v7253
  %v7272 = vrot.slane %v7253, 4
  %v7273 = vsel %vm92, %v7265, %v7272
  %v7275 = vunpack.c.l.s4 1934713408
  %v7276 = vunpack.c.0.s8 %v7275
  %v7277 = vperm.slane %v7271, %v7276
  %v7279 = vunpack.c.l.s4 1934713408
  %v7280 = vunpack.c.0.s8 %v7279
  %v7281 = vperm.slane %v7273, %v7280
  %v7282 = vrot.slane %v7269, 4
  %v7283 = vsel %vm92, %v7282, %v7257
  %v7284 = vrot.slane %v7257, 4
  %v7285 = vsel %vm92, %v7269, %v7284
  %v7287 = vunpack.c.l.s4 1934713408
  %v7288 = vunpack.c.0.s8 %v7287
  %v7289 = vperm.slane %v7283, %v7288
  %v7291 = vunpack.c.l.s4 1934713408
  %v7292 = vunpack.c.0.s8 %v7291
  %v7293 = vperm.slane %v7285, %v7292
  %v7294 = vrot.slane %v7277, 4
  %v7295 = vsel %vm92, 0.0, %v7294
  %v7296 = vrot.slane %v7281, 4
  %v7297 = vsel %vm92, 0.0, %v7296
  %v7298 = vrot.slane %v7289, 4
  %v7299 = vsel %vm92, 0.0, %v7298
  %v7300 = vrot.slane %v7293, 4
  %v7301 = vsel %vm92, 0.0, %v7300
  %7303 = vrot.lane.b32.xlu0 %v7239, 16
  %v7304 = vpop.permute.xlu0 %7303
  %7307 = vrot.lane.b32.xlu0 %v7225, 32
  %v7308 = vpop.permute.xlu0 %7307
  %7311 = vrot.lane.b32.xlu0 %v7241, 48
  %v7312 = vpop.permute.xlu0 %7311
  %7315 = vrot.lane.b32.xlu0 %v7233, 64
  %v7316 = vpop.permute.xlu0 %7315
  %7319 = vrot.lane.b32.xlu0 %v7243, 80
  %v7320 = vpop.permute.xlu0 %7319
  %7323 = vrot.lane.b32.xlu0 %v7237, 96
  %v7324 = vpop.permute.xlu0 %7323
  %7327 = vrot.lane.b32.xlu0 %v7245, 112
  %v7328 = vpop.permute.xlu0 %7327
  %7331 = vrot.lane.b32.xlu0 %v7295, 16
  %v7332 = vpop.permute.xlu0 %7331
  %7335 = vrot.lane.b32.xlu0 %v7281, 32
  %v7336 = vpop.permute.xlu0 %7335
  %7339 = vrot.lane.b32.xlu0 %v7297, 48
  %v7340 = vpop.permute.xlu0 %7339
  %7343 = vrot.lane.b32.xlu0 %v7289, 64
  %v7344 = vpop.permute.xlu0 %7343
  %7347 = vrot.lane.b32.xlu0 %v7299, 80
  %v7348 = vpop.permute.xlu0 %7347
  %7351 = vrot.lane.b32.xlu0 %v7293, 96
  %v7352 = vpop.permute.xlu0 %7351
  %7355 = vrot.lane.b32.xlu0 %v7301, 112
  %v7356 = vpop.permute.xlu0 %7355
  %v7358 = vsel %vm692, %v7221, %v7304
  %v7359 = vsel %vm694, %v7358, %v7308
  %v7360 = vsel %vm696, %v7359, %v7312
  %v7361 = vsel %vm698, %v7360, %v7316
  %v7362 = vsel %vm700, %v7361, %v7320
  %v7363 = vsel %vm702, %v7362, %v7324
  %v7364 = vsel %vm704, %v7363, %v7328
  %v7365 = vsel %vm692, %v7277, %v7332
  %v7366 = vsel %vm694, %v7365, %v7336
  %v7367 = vsel %vm696, %v7366, %v7340
  %v7368 = vsel %vm698, %v7367, %v7344
  %v7369 = vsel %vm700, %v7368, %v7348
  %v7370 = vsel %vm702, %v7369, %v7352
  %v7371 = vsel %vm704, %v7370, %v7356
  %v7374 = vrot.slane %v7364, 4
  %v7375 = vrot.slane %v7371, 4
  %7378 = vst [vmem:[#allocation3 + $0x10] sm:$0xf0] %v7374
  %7379 = vst [vmem:[#allocation3 + $0x18] sm:$0xf0] %v7375
  %v7380 = vld [vmem:[%s507] sm:$0xff]
  %v7381 = vld [vmem:[%s507 + $0x8] sm:$0xff]
  %v7382 = vld [vmem:[%s507 + $0x18] sm:$0xff]
  %v7383 = vld [vmem:[%s507 + $0x20] sm:$0xff]
  %v7384 = vld [vmem:[%s507 + $0x30] sm:$0xff]
  %v7385 = vld [vmem:[%s507 + $0x38] sm:$0xff]
  %v7386 = vld [vmem:[%s507 + $0x48] sm:$0xff]
  %v7387 = vld [vmem:[%s507 + $0x50] sm:$0xff]
  %7396 = vrot.lane.b32.xlu0 %v7380, 126
  %v7397 = vpop.permute.xlu0 %7396
  %7398 = vrot.lane.b32.xlu0 %v7381, 126
  %v7399 = vpop.permute.xlu0 %7398
  %7400 = vrot.lane.b32.xlu0 %v7382, 126
  %v7401 = vpop.permute.xlu0 %7400
  %7402 = vrot.lane.b32.xlu0 %v7383, 126
  %v7403 = vpop.permute.xlu0 %7402
  %7404 = vrot.lane.b32.xlu0 %v7384, 126
  %v7405 = vpop.permute.xlu0 %7404
  %7406 = vrot.lane.b32.xlu0 %v7385, 126
  %v7407 = vpop.permute.xlu0 %7406
  %7408 = vrot.lane.b32.xlu0 %v7386, 126
  %v7409 = vpop.permute.xlu0 %7408
  %7410 = vrot.lane.b32.xlu0 %v7387, 126
  %v7411 = vpop.permute.xlu0 %7410
  %v7420 = vrot.slane %v7405, 4
  %v7421 = vsel %vm92, %v7420, %v7397
  %v7422 = vrot.slane %v7397, 4
  %v7423 = vsel %vm92, %v7405, %v7422
  %v7425 = vunpack.c.l.s4 1983009808
  %v7426 = vunpack.c.0.s8 %v7425
  %v7427 = vperm.slane %v7421, %v7426
  %v7429 = vunpack.c.l.s4 1983009808
  %v7430 = vunpack.c.0.s8 %v7429
  %v7431 = vperm.slane %v7423, %v7430
  %v7432 = vrot.slane %v7409, 4
  %v7433 = vsel %vm92, %v7432, %v7401
  %v7434 = vrot.slane %v7401, 4
  %v7435 = vsel %vm92, %v7409, %v7434
  %v7437 = vunpack.c.l.s4 1983009808
  %v7438 = vunpack.c.0.s8 %v7437
  %v7439 = vperm.slane %v7433, %v7438
  %v7441 = vunpack.c.l.s4 1983009808
  %v7442 = vunpack.c.0.s8 %v7441
  %v7443 = vperm.slane %v7435, %v7442
  %v7444 = vrot.slane %v7439, 4
  %v7445 = vsel %vm92, %v7444, %v7427
  %v7446 = vrot.slane %v7427, 4
  %v7447 = vsel %vm92, %v7439, %v7446
  %v7449 = vunpack.c.l.s4 1934713408
  %v7450 = vunpack.c.0.s8 %v7449
  %v7451 = vperm.slane %v7445, %v7450
  %v7453 = vunpack.c.l.s4 1934713408
  %v7454 = vunpack.c.0.s8 %v7453
  %v7455 = vperm.slane %v7447, %v7454
  %v7456 = vrot.slane %v7443, 4
  %v7457 = vsel %vm92, %v7456, %v7431
  %v7458 = vrot.slane %v7431, 4
  %v7459 = vsel %vm92, %v7443, %v7458
  %v7461 = vunpack.c.l.s4 1934713408
  %v7462 = vunpack.c.0.s8 %v7461
  %v7463 = vperm.slane %v7457, %v7462
  %v7465 = vunpack.c.l.s4 1934713408
  %v7466 = vunpack.c.0.s8 %v7465
  %v7467 = vperm.slane %v7459, %v7466
  %v7468 = vrot.slane %v7451, 4
  %v7469 = vsel %vm92, 0.0, %v7468
  %v7470 = vrot.slane %v7455, 4
  %v7471 = vsel %vm92, 0.0, %v7470
  %v7472 = vrot.slane %v7463, 4
  %v7473 = vsel %vm92, 0.0, %v7472
  %v7474 = vrot.slane %v7467, 4
  %v7475 = vsel %vm92, 0.0, %v7474
  %v7476 = vrot.slane %v7407, 4
  %v7477 = vsel %vm92, %v7476, %v7399
  %v7478 = vrot.slane %v7399, 4
  %v7479 = vsel %vm92, %v7407, %v7478
  %v7481 = vunpack.c.l.s4 1983009808
  %v7482 = vunpack.c.0.s8 %v7481
  %v7483 = vperm.slane %v7477, %v7482
  %v7485 = vunpack.c.l.s4 1983009808
  %v7486 = vunpack.c.0.s8 %v7485
  %v7487 = vperm.slane %v7479, %v7486
  %v7488 = vrot.slane %v7411, 4
  %v7489 = vsel %vm92, %v7488, %v7403
  %v7490 = vrot.slane %v7403, 4
  %v7491 = vsel %vm92, %v7411, %v7490
  %v7493 = vunpack.c.l.s4 1983009808
  %v7494 = vunpack.c.0.s8 %v7493
  %v7495 = vperm.slane %v7489, %v7494
  %v7497 = vunpack.c.l.s4 1983009808
  %v7498 = vunpack.c.0.s8 %v7497
  %v7499 = vperm.slane %v7491, %v7498
  %v7500 = vrot.slane %v7495, 4
  %v7501 = vsel %vm92, %v7500, %v7483
  %v7502 = vrot.slane %v7483, 4
  %v7503 = vsel %vm92, %v7495, %v7502
  %v7505 = vunpack.c.l.s4 1934713408
  %v7506 = vunpack.c.0.s8 %v7505
  %v7507 = vperm.slane %v7501, %v7506
  %v7509 = vunpack.c.l.s4 1934713408
  %v7510 = vunpack.c.0.s8 %v7509
  %v7511 = vperm.slane %v7503, %v7510
  %v7512 = vrot.slane %v7499, 4
  %v7513 = vsel %vm92, %v7512, %v7487
  %v7514 = vrot.slane %v7487, 4
  %v7515 = vsel %vm92, %v7499, %v7514
  %v7517 = vunpack.c.l.s4 1934713408
  %v7518 = vunpack.c.0.s8 %v7517
  %v7519 = vperm.slane %v7513, %v7518
  %v7521 = vunpack.c.l.s4 1934713408
  %v7522 = vunpack.c.0.s8 %v7521
  %v7523 = vperm.slane %v7515, %v7522
  %v7524 = vrot.slane %v7507, 4
  %v7525 = vsel %vm92, 0.0, %v7524
  %v7526 = vrot.slane %v7511, 4
  %v7527 = vsel %vm92, 0.0, %v7526
  %v7528 = vrot.slane %v7519, 4
  %v7529 = vsel %vm92, 0.0, %v7528
  %v7530 = vrot.slane %v7523, 4
  %v7531 = vsel %vm92, 0.0, %v7530
  %7533 = vrot.lane.b32.xlu0 %v7469, 16
  %v7534 = vpop.permute.xlu0 %7533
  %7537 = vrot.lane.b32.xlu0 %v7455, 32
  %v7538 = vpop.permute.xlu0 %7537
  %7541 = vrot.lane.b32.xlu0 %v7471, 48
  %v7542 = vpop.permute.xlu0 %7541
  %7545 = vrot.lane.b32.xlu0 %v7463, 64
  %v7546 = vpop.permute.xlu0 %7545
  %7549 = vrot.lane.b32.xlu0 %v7473, 80
  %v7550 = vpop.permute.xlu0 %7549
  %7553 = vrot.lane.b32.xlu0 %v7467, 96
  %v7554 = vpop.permute.xlu0 %7553
  %7557 = vrot.lane.b32.xlu0 %v7475, 112
  %v7558 = vpop.permute.xlu0 %7557
  %7561 = vrot.lane.b32.xlu0 %v7525, 16
  %v7562 = vpop.permute.xlu0 %7561
  %7565 = vrot.lane.b32.xlu0 %v7511, 32
  %v7566 = vpop.permute.xlu0 %7565
  %7569 = vrot.lane.b32.xlu0 %v7527, 48
  %v7570 = vpop.permute.xlu0 %7569
  %7573 = vrot.lane.b32.xlu0 %v7519, 64
  %v7574 = vpop.permute.xlu0 %7573
  %7577 = vrot.lane.b32.xlu0 %v7529, 80
  %v7578 = vpop.permute.xlu0 %7577
  %7581 = vrot.lane.b32.xlu0 %v7523, 96
  %v7582 = vpop.permute.xlu0 %7581
  %7585 = vrot.lane.b32.xlu0 %v7531, 112
  %v7586 = vpop.permute.xlu0 %7585
  %v7588 = vsel %vm692, %v7451, %v7534
  %v7589 = vsel %vm694, %v7588, %v7538
  %v7590 = vsel %vm696, %v7589, %v7542
  %v7591 = vsel %vm698, %v7590, %v7546
  %v7592 = vsel %vm700, %v7591, %v7550
  %v7593 = vsel %vm702, %v7592, %v7554
  %v7594 = vsel %vm704, %v7593, %v7558
  %v7595 = vsel %vm692, %v7507, %v7562
  %v7596 = vsel %vm694, %v7595, %v7566
  %v7597 = vsel %vm696, %v7596, %v7570
  %v7598 = vsel %vm698, %v7597, %v7574
  %v7599 = vsel %vm700, %v7598, %v7578
  %v7600 = vsel %vm702, %v7599, %v7582
  %v7601 = vsel %vm704, %v7600, %v7586
  %7602 = vst [vmem:[#allocation3 + $0x30] sm:$0xf] %v7594
  %7603 = vst [vmem:[#allocation3 + $0x38] sm:$0xf] %v7601
  %v7604 = vld [vmem:[%s507 + $0x1] sm:$0xff]
  %v7605 = vld [vmem:[%s507 + $0x9] sm:$0xff]
  %v7606 = vld [vmem:[%s507 + $0x19] sm:$0xff]
  %v7607 = vld [vmem:[%s507 + $0x21] sm:$0xff]
  %v7608 = vld [vmem:[%s507 + $0x31] sm:$0xff]
  %v7609 = vld [vmem:[%s507 + $0x39] sm:$0xff]
  %v7610 = vld [vmem:[%s507 + $0x49] sm:$0xff]
  %v7611 = vld [vmem:[%s507 + $0x51] sm:$0xff]
  %v7612 = vrot.slane %v7608, 4
  %v7613 = vsel %vm92, %v7612, %v7604
  %v7614 = vrot.slane %v7604, 4
  %v7615 = vsel %vm92, %v7608, %v7614
  %v7617 = vunpack.c.l.s4 1983009808
  %v7618 = vunpack.c.0.s8 %v7617
  %v7619 = vperm.slane %v7613, %v7618
  %v7621 = vunpack.c.l.s4 1983009808
  %v7622 = vunpack.c.0.s8 %v7621
  %v7623 = vperm.slane %v7615, %v7622
  %v7624 = vrot.slane %v7610, 4
  %v7625 = vsel %vm92, %v7624, %v7606
  %v7626 = vrot.slane %v7606, 4
  %v7627 = vsel %vm92, %v7610, %v7626
  %v7629 = vunpack.c.l.s4 1983009808
  %v7630 = vunpack.c.0.s8 %v7629
  %v7631 = vperm.slane %v7625, %v7630
  %v7633 = vunpack.c.l.s4 1983009808
  %v7634 = vunpack.c.0.s8 %v7633
  %v7635 = vperm.slane %v7627, %v7634
  %v7636 = vrot.slane %v7631, 4
  %v7637 = vsel %vm92, %v7636, %v7619
  %v7638 = vrot.slane %v7619, 4
  %v7639 = vsel %vm92, %v7631, %v7638
  %v7641 = vunpack.c.l.s4 1934713408
  %v7642 = vunpack.c.0.s8 %v7641
  %v7643 = vperm.slane %v7637, %v7642
  %v7645 = vunpack.c.l.s4 1934713408
  %v7646 = vunpack.c.0.s8 %v7645
  %v7647 = vperm.slane %v7639, %v7646
  %v7648 = vrot.slane %v7635, 4
  %v7649 = vsel %vm92, %v7648, %v7623
  %v7650 = vrot.slane %v7623, 4
  %v7651 = vsel %vm92, %v7635, %v7650
  %v7653 = vunpack.c.l.s4 1934713408
  %v7654 = vunpack.c.0.s8 %v7653
  %v7655 = vperm.slane %v7649, %v7654
  %v7657 = vunpack.c.l.s4 1934713408
  %v7658 = vunpack.c.0.s8 %v7657
  %v7659 = vperm.slane %v7651, %v7658
  %v7660 = vrot.slane %v7643, 4
  %v7661 = vsel %vm92, 0.0, %v7660
  %v7662 = vrot.slane %v7647, 4
  %v7663 = vsel %vm92, 0.0, %v7662
  %v7664 = vrot.slane %v7655, 4
  %v7665 = vsel %vm92, 0.0, %v7664
  %v7666 = vrot.slane %v7659, 4
  %v7667 = vsel %vm92, 0.0, %v7666
  %v7668 = vrot.slane %v7609, 4
  %v7669 = vsel %vm92, %v7668, %v7605
  %v7670 = vrot.slane %v7605, 4
  %v7671 = vsel %vm92, %v7609, %v7670
  %v7673 = vunpack.c.l.s4 1983009808
  %v7674 = vunpack.c.0.s8 %v7673
  %v7675 = vperm.slane %v7669, %v7674
  %v7677 = vunpack.c.l.s4 1983009808
  %v7678 = vunpack.c.0.s8 %v7677
  %v7679 = vperm.slane %v7671, %v7678
  %v7680 = vrot.slane %v7611, 4
  %v7681 = vsel %vm92, %v7680, %v7607
  %v7682 = vrot.slane %v7607, 4
  %v7683 = vsel %vm92, %v7611, %v7682
  %v7685 = vunpack.c.l.s4 1983009808
  %v7686 = vunpack.c.0.s8 %v7685
  %v7687 = vperm.slane %v7681, %v7686
  %v7689 = vunpack.c.l.s4 1983009808
  %v7690 = vunpack.c.0.s8 %v7689
  %v7691 = vperm.slane %v7683, %v7690
  %v7692 = vrot.slane %v7687, 4
  %v7693 = vsel %vm92, %v7692, %v7675
  %v7694 = vrot.slane %v7675, 4
  %v7695 = vsel %vm92, %v7687, %v7694
  %v7697 = vunpack.c.l.s4 1934713408
  %v7698 = vunpack.c.0.s8 %v7697
  %v7699 = vperm.slane %v7693, %v7698
  %v7701 = vunpack.c.l.s4 1934713408
  %v7702 = vunpack.c.0.s8 %v7701
  %v7703 = vperm.slane %v7695, %v7702
  %v7704 = vrot.slane %v7691, 4
  %v7705 = vsel %vm92, %v7704, %v7679
  %v7706 = vrot.slane %v7679, 4
  %v7707 = vsel %vm92, %v7691, %v7706
  %v7709 = vunpack.c.l.s4 1934713408
  %v7710 = vunpack.c.0.s8 %v7709
  %v7711 = vperm.slane %v7705, %v7710
  %v7713 = vunpack.c.l.s4 1934713408
  %v7714 = vunpack.c.0.s8 %v7713
  %v7715 = vperm.slane %v7707, %v7714
  %v7716 = vrot.slane %v7699, 4
  %v7717 = vsel %vm92, 0.0, %v7716
  %v7718 = vrot.slane %v7703, 4
  %v7719 = vsel %vm92, 0.0, %v7718
  %v7720 = vrot.slane %v7711, 4
  %v7721 = vsel %vm92, 0.0, %v7720
  %v7722 = vrot.slane %v7715, 4
  %v7723 = vsel %vm92, 0.0, %v7722
  %7725 = vrot.lane.b32.xlu0 %v7661, 16
  %v7726 = vpop.permute.xlu0 %7725
  %7729 = vrot.lane.b32.xlu0 %v7647, 32
  %v7730 = vpop.permute.xlu0 %7729
  %7733 = vrot.lane.b32.xlu0 %v7663, 48
  %v7734 = vpop.permute.xlu0 %7733
  %7737 = vrot.lane.b32.xlu0 %v7655, 64
  %v7738 = vpop.permute.xlu0 %7737
  %7741 = vrot.lane.b32.xlu0 %v7665, 80
  %v7742 = vpop.permute.xlu0 %7741
  %7745 = vrot.lane.b32.xlu0 %v7659, 96
  %v7746 = vpop.permute.xlu0 %7745
  %7749 = vrot.lane.b32.xlu0 %v7667, 112
  %v7750 = vpop.permute.xlu0 %7749
  %7753 = vrot.lane.b32.xlu0 %v7717, 16
  %v7754 = vpop.permute.xlu0 %7753
  %7757 = vrot.lane.b32.xlu0 %v7703, 32
  %v7758 = vpop.permute.xlu0 %7757
  %7761 = vrot.lane.b32.xlu0 %v7719, 48
  %v7762 = vpop.permute.xlu0 %7761
  %7765 = vrot.lane.b32.xlu0 %v7711, 64
  %v7766 = vpop.permute.xlu0 %7765
  %7769 = vrot.lane.b32.xlu0 %v7721, 80
  %v7770 = vpop.permute.xlu0 %7769
  %7773 = vrot.lane.b32.xlu0 %v7715, 96
  %v7774 = vpop.permute.xlu0 %7773
  %7777 = vrot.lane.b32.xlu0 %v7723, 112
  %v7778 = vpop.permute.xlu0 %7777
  %v7780 = vsel %vm692, %v7643, %v7726
  %v7781 = vsel %vm694, %v7780, %v7730
  %v7782 = vsel %vm696, %v7781, %v7734
  %v7783 = vsel %vm698, %v7782, %v7738
  %v7784 = vsel %vm700, %v7783, %v7742
  %v7785 = vsel %vm702, %v7784, %v7746
  %v7786 = vsel %vm704, %v7785, %v7750
  %v7787 = vsel %vm692, %v7699, %v7754
  %v7788 = vsel %vm694, %v7787, %v7758
  %v7789 = vsel %vm696, %v7788, %v7762
  %v7790 = vsel %vm698, %v7789, %v7766
  %v7791 = vsel %vm700, %v7790, %v7770
  %v7792 = vsel %vm702, %v7791, %v7774
  %v7793 = vsel %vm704, %v7792, %v7778
  %v7796 = vrot.slane %v7786, 4
  %v7797 = vrot.slane %v7793, 4
  %7800 = vst [vmem:[#allocation3 + $0x30] sm:$0xf0] %v7796
  %7801 = vst [vmem:[#allocation3 + $0x38] sm:$0xf0] %v7797
  %v7802 = vld [vmem:[%s507 + $0x1] sm:$0xff]
  %v7803 = vld [vmem:[%s507 + $0x9] sm:$0xff]
  %v7804 = vld [vmem:[%s507 + $0x19] sm:$0xff]
  %v7805 = vld [vmem:[%s507 + $0x21] sm:$0xff]
  %v7806 = vld [vmem:[%s507 + $0x31] sm:$0xff]
  %v7807 = vld [vmem:[%s507 + $0x39] sm:$0xff]
  %v7808 = vld [vmem:[%s507 + $0x49] sm:$0xff]
  %v7809 = vld [vmem:[%s507 + $0x51] sm:$0xff]
  %7818 = vrot.lane.b32.xlu0 %v7802, 127
  %v7819 = vpop.permute.xlu0 %7818
  %7820 = vrot.lane.b32.xlu0 %v7803, 127
  %v7821 = vpop.permute.xlu0 %7820
  %7822 = vrot.lane.b32.xlu0 %v7804, 127
  %v7823 = vpop.permute.xlu0 %7822
  %7824 = vrot.lane.b32.xlu0 %v7805, 127
  %v7825 = vpop.permute.xlu0 %7824
  %7826 = vrot.lane.b32.xlu0 %v7806, 127
  %v7827 = vpop.permute.xlu0 %7826
  %7828 = vrot.lane.b32.xlu0 %v7807, 127
  %v7829 = vpop.permute.xlu0 %7828
  %7830 = vrot.lane.b32.xlu0 %v7808, 127
  %v7831 = vpop.permute.xlu0 %7830
  %7832 = vrot.lane.b32.xlu0 %v7809, 127
  %v7833 = vpop.permute.xlu0 %7832
  %v7842 = vrot.slane %v7827, 4
  %v7843 = vsel %vm92, %v7842, %v7819
  %v7844 = vrot.slane %v7819, 4
  %v7845 = vsel %vm92, %v7827, %v7844
  %v7847 = vunpack.c.l.s4 1983009808
  %v7848 = vunpack.c.0.s8 %v7847
  %v7849 = vperm.slane %v7843, %v7848
  %v7851 = vunpack.c.l.s4 1983009808
  %v7852 = vunpack.c.0.s8 %v7851
  %v7853 = vperm.slane %v7845, %v7852
  %v7854 = vrot.slane %v7831, 4
  %v7855 = vsel %vm92, %v7854, %v7823
  %v7856 = vrot.slane %v7823, 4
  %v7857 = vsel %vm92, %v7831, %v7856
  %v7859 = vunpack.c.l.s4 1983009808
  %v7860 = vunpack.c.0.s8 %v7859
  %v7861 = vperm.slane %v7855, %v7860
  %v7863 = vunpack.c.l.s4 1983009808
  %v7864 = vunpack.c.0.s8 %v7863
  %v7865 = vperm.slane %v7857, %v7864
  %v7866 = vrot.slane %v7861, 4
  %v7867 = vsel %vm92, %v7866, %v7849
  %v7868 = vrot.slane %v7849, 4
  %v7869 = vsel %vm92, %v7861, %v7868
  %v7871 = vunpack.c.l.s4 1934713408
  %v7872 = vunpack.c.0.s8 %v7871
  %v7873 = vperm.slane %v7867, %v7872
  %v7875 = vunpack.c.l.s4 1934713408
  %v7876 = vunpack.c.0.s8 %v7875
  %v7877 = vperm.slane %v7869, %v7876
  %v7878 = vrot.slane %v7865, 4
  %v7879 = vsel %vm92, %v7878, %v7853
  %v7880 = vrot.slane %v7853, 4
  %v7881 = vsel %vm92, %v7865, %v7880
  %v7883 = vunpack.c.l.s4 1934713408
  %v7884 = vunpack.c.0.s8 %v7883
  %v7885 = vperm.slane %v7879, %v7884
  %v7887 = vunpack.c.l.s4 1934713408
  %v7888 = vunpack.c.0.s8 %v7887
  %v7889 = vperm.slane %v7881, %v7888
  %v7890 = vrot.slane %v7873, 4
  %v7891 = vsel %vm92, 0.0, %v7890
  %v7892 = vrot.slane %v7877, 4
  %v7893 = vsel %vm92, 0.0, %v7892
  %v7894 = vrot.slane %v7885, 4
  %v7895 = vsel %vm92, 0.0, %v7894
  %v7896 = vrot.slane %v7889, 4
  %v7897 = vsel %vm92, 0.0, %v7896
  %v7898 = vrot.slane %v7829, 4
  %v7899 = vsel %vm92, %v7898, %v7821
  %v7900 = vrot.slane %v7821, 4
  %v7901 = vsel %vm92, %v7829, %v7900
  %v7903 = vunpack.c.l.s4 1983009808
  %v7904 = vunpack.c.0.s8 %v7903
  %v7905 = vperm.slane %v7899, %v7904
  %v7907 = vunpack.c.l.s4 1983009808
  %v7908 = vunpack.c.0.s8 %v7907
  %v7909 = vperm.slane %v7901, %v7908
  %v7910 = vrot.slane %v7833, 4
  %v7911 = vsel %vm92, %v7910, %v7825
  %v7912 = vrot.slane %v7825, 4
  %v7913 = vsel %vm92, %v7833, %v7912
  %v7915 = vunpack.c.l.s4 1983009808
  %v7916 = vunpack.c.0.s8 %v7915
  %v7917 = vperm.slane %v7911, %v7916
  %v7919 = vunpack.c.l.s4 1983009808
  %v7920 = vunpack.c.0.s8 %v7919
  %v7921 = vperm.slane %v7913, %v7920
  %v7922 = vrot.slane %v7917, 4
  %v7923 = vsel %vm92, %v7922, %v7905
  %v7924 = vrot.slane %v7905, 4
  %v7925 = vsel %vm92, %v7917, %v7924
  %v7927 = vunpack.c.l.s4 1934713408
  %v7928 = vunpack.c.0.s8 %v7927
  %v7929 = vperm.slane %v7923, %v7928
  %v7931 = vunpack.c.l.s4 1934713408
  %v7932 = vunpack.c.0.s8 %v7931
  %v7933 = vperm.slane %v7925, %v7932
  %v7934 = vrot.slane %v7921, 4
  %v7935 = vsel %vm92, %v7934, %v7909
  %v7936 = vrot.slane %v7909, 4
  %v7937 = vsel %vm92, %v7921, %v7936
  %v7939 = vunpack.c.l.s4 1934713408
  %v7940 = vunpack.c.0.s8 %v7939
  %v7941 = vperm.slane %v7935, %v7940
  %v7943 = vunpack.c.l.s4 1934713408
  %v7944 = vunpack.c.0.s8 %v7943
  %v7945 = vperm.slane %v7937, %v7944
  %v7946 = vrot.slane %v7929, 4
  %v7947 = vsel %vm92, 0.0, %v7946
  %v7948 = vrot.slane %v7933, 4
  %v7949 = vsel %vm92, 0.0, %v7948
  %v7950 = vrot.slane %v7941, 4
  %v7951 = vsel %vm92, 0.0, %v7950
  %v7952 = vrot.slane %v7945, 4
  %v7953 = vsel %vm92, 0.0, %v7952
  %7955 = vrot.lane.b32.xlu0 %v7891, 16
  %v7956 = vpop.permute.xlu0 %7955
  %7959 = vrot.lane.b32.xlu0 %v7877, 32
  %v7960 = vpop.permute.xlu0 %7959
  %7963 = vrot.lane.b32.xlu0 %v7893, 48
  %v7964 = vpop.permute.xlu0 %7963
  %7967 = vrot.lane.b32.xlu0 %v7885, 64
  %v7968 = vpop.permute.xlu0 %7967
  %7971 = vrot.lane.b32.xlu0 %v7895, 80
  %v7972 = vpop.permute.xlu0 %7971
  %7975 = vrot.lane.b32.xlu0 %v7889, 96
  %v7976 = vpop.permute.xlu0 %7975
  %7979 = vrot.lane.b32.xlu0 %v7897, 112
  %v7980 = vpop.permute.xlu0 %7979
  %7983 = vrot.lane.b32.xlu0 %v7947, 16
  %v7984 = vpop.permute.xlu0 %7983
  %7987 = vrot.lane.b32.xlu0 %v7933, 32
  %v7988 = vpop.permute.xlu0 %7987
  %7991 = vrot.lane.b32.xlu0 %v7949, 48
  %v7992 = vpop.permute.xlu0 %7991
  %7995 = vrot.lane.b32.xlu0 %v7941, 64
  %v7996 = vpop.permute.xlu0 %7995
  %7999 = vrot.lane.b32.xlu0 %v7951, 80
  %v8000 = vpop.permute.xlu0 %7999
  %8003 = vrot.lane.b32.xlu0 %v7945, 96
  %v8004 = vpop.permute.xlu0 %8003
  %8007 = vrot.lane.b32.xlu0 %v7953, 112
  %v8008 = vpop.permute.xlu0 %8007
  %v8010 = vsel %vm692, %v7873, %v7956
  %v8011 = vsel %vm694, %v8010, %v7960
  %v8012 = vsel %vm696, %v8011, %v7964
  %v8013 = vsel %vm698, %v8012, %v7968
  %v8014 = vsel %vm700, %v8013, %v7972
  %v8015 = vsel %vm702, %v8014, %v7976
  %v8016 = vsel %vm704, %v8015, %v7980
  %v8017 = vsel %vm692, %v7929, %v7984
  %v8018 = vsel %vm694, %v8017, %v7988
  %v8019 = vsel %vm696, %v8018, %v7992
  %v8020 = vsel %vm698, %v8019, %v7996
  %v8021 = vsel %vm700, %v8020, %v8000
  %v8022 = vsel %vm702, %v8021, %v8004
  %v8023 = vsel %vm704, %v8022, %v8008
  %8024 = vst [vmem:[#allocation3 + $0x50] sm:$0xf] %v8016
  %8025 = vst [vmem:[#allocation3 + $0x58] sm:$0xf] %v8023
  %v8026 = vld [vmem:[%s507 + $0x1] sm:$0xff]
  %v8027 = vld [vmem:[%s507 + $0x9] sm:$0xff]
  %v8028 = vld [vmem:[%s507 + $0x19] sm:$0xff]
  %v8029 = vld [vmem:[%s507 + $0x21] sm:$0xff]
  %v8030 = vld [vmem:[%s507 + $0x31] sm:$0xff]
  %v8031 = vld [vmem:[%s507 + $0x39] sm:$0xff]
  %v8032 = vld [vmem:[%s507 + $0x49] sm:$0xff]
  %v8033 = vld [vmem:[%s507 + $0x51] sm:$0xff]
  %8042 = vrot.lane.b32.xlu0 %v8026, 126
  %v8043 = vpop.permute.xlu0 %8042
  %8044 = vrot.lane.b32.xlu0 %v8027, 126
  %v8045 = vpop.permute.xlu0 %8044
  %8046 = vrot.lane.b32.xlu0 %v8028, 126
  %v8047 = vpop.permute.xlu0 %8046
  %8048 = vrot.lane.b32.xlu0 %v8029, 126
  %v8049 = vpop.permute.xlu0 %8048
  %8050 = vrot.lane.b32.xlu0 %v8030, 126
  %v8051 = vpop.permute.xlu0 %8050
  %8052 = vrot.lane.b32.xlu0 %v8031, 126
  %v8053 = vpop.permute.xlu0 %8052
  %8054 = vrot.lane.b32.xlu0 %v8032, 126
  %v8055 = vpop.permute.xlu0 %8054
  %8056 = vrot.lane.b32.xlu0 %v8033, 126
  %v8057 = vpop.permute.xlu0 %8056
  %v8066 = vrot.slane %v8051, 4
  %v8067 = vsel %vm92, %v8066, %v8043
  %v8068 = vrot.slane %v8043, 4
  %v8069 = vsel %vm92, %v8051, %v8068
  %v8071 = vunpack.c.l.s4 1983009808
  %v8072 = vunpack.c.0.s8 %v8071
  %v8073 = vperm.slane %v8067, %v8072
  %v8075 = vunpack.c.l.s4 1983009808
  %v8076 = vunpack.c.0.s8 %v8075
  %v8077 = vperm.slane %v8069, %v8076
  %v8078 = vrot.slane %v8055, 4
  %v8079 = vsel %vm92, %v8078, %v8047
  %v8080 = vrot.slane %v8047, 4
  %v8081 = vsel %vm92, %v8055, %v8080
  %v8083 = vunpack.c.l.s4 1983009808
  %v8084 = vunpack.c.0.s8 %v8083
  %v8085 = vperm.slane %v8079, %v8084
  %v8087 = vunpack.c.l.s4 1983009808
  %v8088 = vunpack.c.0.s8 %v8087
  %v8089 = vperm.slane %v8081, %v8088
  %v8090 = vrot.slane %v8085, 4
  %v8091 = vsel %vm92, %v8090, %v8073
  %v8092 = vrot.slane %v8073, 4
  %v8093 = vsel %vm92, %v8085, %v8092
  %v8095 = vunpack.c.l.s4 1934713408
  %v8096 = vunpack.c.0.s8 %v8095
  %v8097 = vperm.slane %v8091, %v8096
  %v8099 = vunpack.c.l.s4 1934713408
  %v8100 = vunpack.c.0.s8 %v8099
  %v8101 = vperm.slane %v8093, %v8100
  %v8102 = vrot.slane %v8089, 4
  %v8103 = vsel %vm92, %v8102, %v8077
  %v8104 = vrot.slane %v8077, 4
  %v8105 = vsel %vm92, %v8089, %v8104
  %v8107 = vunpack.c.l.s4 1934713408
  %v8108 = vunpack.c.0.s8 %v8107
  %v8109 = vperm.slane %v8103, %v8108
  %v8111 = vunpack.c.l.s4 1934713408
  %v8112 = vunpack.c.0.s8 %v8111
  %v8113 = vperm.slane %v8105, %v8112
  %v8114 = vrot.slane %v8097, 4
  %v8115 = vsel %vm92, 0.0, %v8114
  %v8116 = vrot.slane %v8101, 4
  %v8117 = vsel %vm92, 0.0, %v8116
  %v8118 = vrot.slane %v8109, 4
  %v8119 = vsel %vm92, 0.0, %v8118
  %v8120 = vrot.slane %v8113, 4
  %v8121 = vsel %vm92, 0.0, %v8120
  %v8122 = vrot.slane %v8053, 4
  %v8123 = vsel %vm92, %v8122, %v8045
  %v8124 = vrot.slane %v8045, 4
  %v8125 = vsel %vm92, %v8053, %v8124
  %v8127 = vunpack.c.l.s4 1983009808
  %v8128 = vunpack.c.0.s8 %v8127
  %v8129 = vperm.slane %v8123, %v8128
  %v8131 = vunpack.c.l.s4 1983009808
  %v8132 = vunpack.c.0.s8 %v8131
  %v8133 = vperm.slane %v8125, %v8132
  %v8134 = vrot.slane %v8057, 4
  %v8135 = vsel %vm92, %v8134, %v8049
  %v8136 = vrot.slane %v8049, 4
  %v8137 = vsel %vm92, %v8057, %v8136
  %v8139 = vunpack.c.l.s4 1983009808
  %v8140 = vunpack.c.0.s8 %v8139
  %v8141 = vperm.slane %v8135, %v8140
  %v8143 = vunpack.c.l.s4 1983009808
  %v8144 = vunpack.c.0.s8 %v8143
  %v8145 = vperm.slane %v8137, %v8144
  %v8146 = vrot.slane %v8141, 4
  %v8147 = vsel %vm92, %v8146, %v8129
  %v8148 = vrot.slane %v8129, 4
  %v8149 = vsel %vm92, %v8141, %v8148
  %v8151 = vunpack.c.l.s4 1934713408
  %v8152 = vunpack.c.0.s8 %v8151
  %v8153 = vperm.slane %v8147, %v8152
  %v8155 = vunpack.c.l.s4 1934713408
  %v8156 = vunpack.c.0.s8 %v8155
  %v8157 = vperm.slane %v8149, %v8156
  %v8158 = vrot.slane %v8145, 4
  %v8159 = vsel %vm92, %v8158, %v8133
  %v8160 = vrot.slane %v8133, 4
  %v8161 = vsel %vm92, %v8145, %v8160
  %v8163 = vunpack.c.l.s4 1934713408
  %v8164 = vunpack.c.0.s8 %v8163
  %v8165 = vperm.slane %v8159, %v8164
  %v8167 = vunpack.c.l.s4 1934713408
  %v8168 = vunpack.c.0.s8 %v8167
  %v8169 = vperm.slane %v8161, %v8168
  %v8170 = vrot.slane %v8153, 4
  %v8171 = vsel %vm92, 0.0, %v8170
  %v8172 = vrot.slane %v8157, 4
  %v8173 = vsel %vm92, 0.0, %v8172
  %v8174 = vrot.slane %v8165, 4
  %v8175 = vsel %vm92, 0.0, %v8174
  %v8176 = vrot.slane %v8169, 4
  %v8177 = vsel %vm92, 0.0, %v8176
  %8179 = vrot.lane.b32.xlu0 %v8115, 16
  %v8180 = vpop.permute.xlu0 %8179
  %8183 = vrot.lane.b32.xlu0 %v8101, 32
  %v8184 = vpop.permute.xlu0 %8183
  %8187 = vrot.lane.b32.xlu0 %v8117, 48
  %v8188 = vpop.permute.xlu0 %8187
  %8191 = vrot.lane.b32.xlu0 %v8109, 64
  %v8192 = vpop.permute.xlu0 %8191
  %8195 = vrot.lane.b32.xlu0 %v8119, 80
  %v8196 = vpop.permute.xlu0 %8195
  %8199 = vrot.lane.b32.xlu0 %v8113, 96
  %v8200 = vpop.permute.xlu0 %8199
  %8203 = vrot.lane.b32.xlu0 %v8121, 112
  %v8204 = vpop.permute.xlu0 %8203
  %8207 = vrot.lane.b32.xlu0 %v8171, 16
  %v8208 = vpop.permute.xlu0 %8207
  %8211 = vrot.lane.b32.xlu0 %v8157, 32
  %v8212 = vpop.permute.xlu0 %8211
  %8215 = vrot.lane.b32.xlu0 %v8173, 48
  %v8216 = vpop.permute.xlu0 %8215
  %8219 = vrot.lane.b32.xlu0 %v8165, 64
  %v8220 = vpop.permute.xlu0 %8219
  %8223 = vrot.lane.b32.xlu0 %v8175, 80
  %v8224 = vpop.permute.xlu0 %8223
  %8227 = vrot.lane.b32.xlu0 %v8169, 96
  %v8228 = vpop.permute.xlu0 %8227
  %8231 = vrot.lane.b32.xlu0 %v8177, 112
  %v8232 = vpop.permute.xlu0 %8231
  %v8234 = vsel %vm692, %v8097, %v8180
  %v8235 = vsel %vm694, %v8234, %v8184
  %v8236 = vsel %vm696, %v8235, %v8188
  %v8237 = vsel %vm698, %v8236, %v8192
  %v8238 = vsel %vm700, %v8237, %v8196
  %v8239 = vsel %vm702, %v8238, %v8200
  %v8240 = vsel %vm704, %v8239, %v8204
  %v8241 = vsel %vm692, %v8153, %v8208
  %v8242 = vsel %vm694, %v8241, %v8212
  %v8243 = vsel %vm696, %v8242, %v8216
  %v8244 = vsel %vm698, %v8243, %v8220
  %v8245 = vsel %vm700, %v8244, %v8224
  %v8246 = vsel %vm702, %v8245, %v8228
  %v8247 = vsel %vm704, %v8246, %v8232
  %v8250 = vrot.slane %v8240, 4
  %v8251 = vrot.slane %v8247, 4
  %8254 = vst [vmem:[#allocation3 + $0x50] sm:$0xf0] %v8250
  %8255 = vst [vmem:[#allocation3 + $0x58] sm:$0xf0] %v8251
  %v8256 = vld [vmem:[%s507 + $0x2] sm:$0xff]
  %v8257 = vld [vmem:[%s507 + $0xa] sm:$0xff]
  %v8258 = vld [vmem:[%s507 + $0x1a] sm:$0xff]
  %v8259 = vld [vmem:[%s507 + $0x22] sm:$0xff]
  %v8260 = vld [vmem:[%s507 + $0x32] sm:$0xff]
  %v8261 = vld [vmem:[%s507 + $0x3a] sm:$0xff]
  %v8262 = vld [vmem:[%s507 + $0x4a] sm:$0xff]
  %v8263 = vld [vmem:[%s507 + $0x52] sm:$0xff]
  %v8264 = vrot.slane %v8260, 4
  %v8265 = vsel %vm92, %v8264, %v8256
  %v8266 = vrot.slane %v8256, 4
  %v8267 = vsel %vm92, %v8260, %v8266
  %v8269 = vunpack.c.l.s4 1983009808
  %v8270 = vunpack.c.0.s8 %v8269
  %v8271 = vperm.slane %v8265, %v8270
  %v8273 = vunpack.c.l.s4 1983009808
  %v8274 = vunpack.c.0.s8 %v8273
  %v8275 = vperm.slane %v8267, %v8274
  %v8276 = vrot.slane %v8262, 4
  %v8277 = vsel %vm92, %v8276, %v8258
  %v8278 = vrot.slane %v8258, 4
  %v8279 = vsel %vm92, %v8262, %v8278
  %v8281 = vunpack.c.l.s4 1983009808
  %v8282 = vunpack.c.0.s8 %v8281
  %v8283 = vperm.slane %v8277, %v8282
  %v8285 = vunpack.c.l.s4 1983009808
  %v8286 = vunpack.c.0.s8 %v8285
  %v8287 = vperm.slane %v8279, %v8286
  %v8288 = vrot.slane %v8283, 4
  %v8289 = vsel %vm92, %v8288, %v8271
  %v8290 = vrot.slane %v8271, 4
  %v8291 = vsel %vm92, %v8283, %v8290
  %v8293 = vunpack.c.l.s4 1934713408
  %v8294 = vunpack.c.0.s8 %v8293
  %v8295 = vperm.slane %v8289, %v8294
  %v8297 = vunpack.c.l.s4 1934713408
  %v8298 = vunpack.c.0.s8 %v8297
  %v8299 = vperm.slane %v8291, %v8298
  %v8300 = vrot.slane %v8287, 4
  %v8301 = vsel %vm92, %v8300, %v8275
  %v8302 = vrot.slane %v8275, 4
  %v8303 = vsel %vm92, %v8287, %v8302
  %v8305 = vunpack.c.l.s4 1934713408
  %v8306 = vunpack.c.0.s8 %v8305
  %v8307 = vperm.slane %v8301, %v8306
  %v8309 = vunpack.c.l.s4 1934713408
  %v8310 = vunpack.c.0.s8 %v8309
  %v8311 = vperm.slane %v8303, %v8310
  %v8312 = vrot.slane %v8295, 4
  %v8313 = vsel %vm92, 0.0, %v8312
  %v8314 = vrot.slane %v8299, 4
  %v8315 = vsel %vm92, 0.0, %v8314
  %v8316 = vrot.slane %v8307, 4
  %v8317 = vsel %vm92, 0.0, %v8316
  %v8318 = vrot.slane %v8311, 4
  %v8319 = vsel %vm92, 0.0, %v8318
  %v8320 = vrot.slane %v8261, 4
  %v8321 = vsel %vm92, %v8320, %v8257
  %v8322 = vrot.slane %v8257, 4
  %v8323 = vsel %vm92, %v8261, %v8322
  %v8325 = vunpack.c.l.s4 1983009808
  %v8326 = vunpack.c.0.s8 %v8325
  %v8327 = vperm.slane %v8321, %v8326
  %v8329 = vunpack.c.l.s4 1983009808
  %v8330 = vunpack.c.0.s8 %v8329
  %v8331 = vperm.slane %v8323, %v8330
  %v8332 = vrot.slane %v8263, 4
  %v8333 = vsel %vm92, %v8332, %v8259
  %v8334 = vrot.slane %v8259, 4
  %v8335 = vsel %vm92, %v8263, %v8334
  %v8337 = vunpack.c.l.s4 1983009808
  %v8338 = vunpack.c.0.s8 %v8337
  %v8339 = vperm.slane %v8333, %v8338
  %v8341 = vunpack.c.l.s4 1983009808
  %v8342 = vunpack.c.0.s8 %v8341
  %v8343 = vperm.slane %v8335, %v8342
  %v8344 = vrot.slane %v8339, 4
  %v8345 = vsel %vm92, %v8344, %v8327
  %v8346 = vrot.slane %v8327, 4
  %v8347 = vsel %vm92, %v8339, %v8346
  %v8349 = vunpack.c.l.s4 1934713408
  %v8350 = vunpack.c.0.s8 %v8349
  %v8351 = vperm.slane %v8345, %v8350
  %v8353 = vunpack.c.l.s4 1934713408
  %v8354 = vunpack.c.0.s8 %v8353
  %v8355 = vperm.slane %v8347, %v8354
  %v8356 = vrot.slane %v8343, 4
  %v8357 = vsel %vm92, %v8356, %v8331
  %v8358 = vrot.slane %v8331, 4
  %v8359 = vsel %vm92, %v8343, %v8358
  %v8361 = vunpack.c.l.s4 1934713408
  %v8362 = vunpack.c.0.s8 %v8361
  %v8363 = vperm.slane %v8357, %v8362
  %v8365 = vunpack.c.l.s4 1934713408
  %v8366 = vunpack.c.0.s8 %v8365
  %v8367 = vperm.slane %v8359, %v8366
  %v8368 = vrot.slane %v8351, 4
  %v8369 = vsel %vm92, 0.0, %v8368
  %v8370 = vrot.slane %v8355, 4
  %v8371 = vsel %vm92, 0.0, %v8370
  %v8372 = vrot.slane %v8363, 4
  %v8373 = vsel %vm92, 0.0, %v8372
  %v8374 = vrot.slane %v8367, 4
  %v8375 = vsel %vm92, 0.0, %v8374
  %8377 = vrot.lane.b32.xlu0 %v8313, 16
  %v8378 = vpop.permute.xlu0 %8377
  %8381 = vrot.lane.b32.xlu0 %v8299, 32
  %v8382 = vpop.permute.xlu0 %8381
  %8385 = vrot.lane.b32.xlu0 %v8315, 48
  %v8386 = vpop.permute.xlu0 %8385
  %8389 = vrot.lane.b32.xlu0 %v8307, 64
  %v8390 = vpop.permute.xlu0 %8389
  %8393 = vrot.lane.b32.xlu0 %v8317, 80
  %v8394 = vpop.permute.xlu0 %8393
  %8397 = vrot.lane.b32.xlu0 %v8311, 96
  %v8398 = vpop.permute.xlu0 %8397
  %8401 = vrot.lane.b32.xlu0 %v8319, 112
  %v8402 = vpop.permute.xlu0 %8401
  %8405 = vrot.lane.b32.xlu0 %v8369, 16
  %v8406 = vpop.permute.xlu0 %8405
  %8409 = vrot.lane.b32.xlu0 %v8355, 32
  %v8410 = vpop.permute.xlu0 %8409
  %8413 = vrot.lane.b32.xlu0 %v8371, 48
  %v8414 = vpop.permute.xlu0 %8413
  %8417 = vrot.lane.b32.xlu0 %v8363, 64
  %v8418 = vpop.permute.xlu0 %8417
  %8421 = vrot.lane.b32.xlu0 %v8373, 80
  %v8422 = vpop.permute.xlu0 %8421
  %8425 = vrot.lane.b32.xlu0 %v8367, 96
  %v8426 = vpop.permute.xlu0 %8425
  %8429 = vrot.lane.b32.xlu0 %v8375, 112
  %v8430 = vpop.permute.xlu0 %8429
  %v8432 = vsel %vm692, %v8295, %v8378
  %v8433 = vsel %vm694, %v8432, %v8382
  %v8434 = vsel %vm696, %v8433, %v8386
  %v8435 = vsel %vm698, %v8434, %v8390
  %v8436 = vsel %vm700, %v8435, %v8394
  %v8437 = vsel %vm702, %v8436, %v8398
  %v8438 = vsel %vm704, %v8437, %v8402
  %v8439 = vsel %vm692, %v8351, %v8406
  %v8440 = vsel %vm694, %v8439, %v8410
  %v8441 = vsel %vm696, %v8440, %v8414
  %v8442 = vsel %vm698, %v8441, %v8418
  %v8443 = vsel %vm700, %v8442, %v8422
  %v8444 = vsel %vm702, %v8443, %v8426
  %v8445 = vsel %vm704, %v8444, %v8430
  %8446 = vst [vmem:[#allocation3 + $0x70] sm:$0xf] %v8438
  %8447 = vst [vmem:[#allocation3 + $0x78] sm:$0xf] %v8445
  %v8448 = vld [vmem:[%s507 + $0x2] sm:$0xff]
  %v8449 = vld [vmem:[%s507 + $0xa] sm:$0xff]
  %v8450 = vld [vmem:[%s507 + $0x1a] sm:$0xff]
  %v8451 = vld [vmem:[%s507 + $0x22] sm:$0xff]
  %v8452 = vld [vmem:[%s507 + $0x32] sm:$0xff]
  %v8453 = vld [vmem:[%s507 + $0x3a] sm:$0xff]
  %v8454 = vld [vmem:[%s507 + $0x4a] sm:$0xff]
  %v8455 = vld [vmem:[%s507 + $0x52] sm:$0xff]
  %8464 = vrot.lane.b32.xlu0 %v8448, 127
  %v8465 = vpop.permute.xlu0 %8464
  %8466 = vrot.lane.b32.xlu0 %v8449, 127
  %v8467 = vpop.permute.xlu0 %8466
  %8468 = vrot.lane.b32.xlu0 %v8450, 127
  %v8469 = vpop.permute.xlu0 %8468
  %8470 = vrot.lane.b32.xlu0 %v8451, 127
  %v8471 = vpop.permute.xlu0 %8470
  %8472 = vrot.lane.b32.xlu0 %v8452, 127
  %v8473 = vpop.permute.xlu0 %8472
  %8474 = vrot.lane.b32.xlu0 %v8453, 127
  %v8475 = vpop.permute.xlu0 %8474
  %8476 = vrot.lane.b32.xlu0 %v8454, 127
  %v8477 = vpop.permute.xlu0 %8476
  %8478 = vrot.lane.b32.xlu0 %v8455, 127
  %v8479 = vpop.permute.xlu0 %8478
  %v8488 = vrot.slane %v8473, 4
  %v8489 = vsel %vm92, %v8488, %v8465
  %v8490 = vrot.slane %v8465, 4
  %v8491 = vsel %vm92, %v8473, %v8490
  %v8493 = vunpack.c.l.s4 1983009808
  %v8494 = vunpack.c.0.s8 %v8493
  %v8495 = vperm.slane %v8489, %v8494
  %v8497 = vunpack.c.l.s4 1983009808
  %v8498 = vunpack.c.0.s8 %v8497
  %v8499 = vperm.slane %v8491, %v8498
  %v8500 = vrot.slane %v8477, 4
  %v8501 = vsel %vm92, %v8500, %v8469
  %v8502 = vrot.slane %v8469, 4
  %v8503 = vsel %vm92, %v8477, %v8502
  %v8505 = vunpack.c.l.s4 1983009808
  %v8506 = vunpack.c.0.s8 %v8505
  %v8507 = vperm.slane %v8501, %v8506
  %v8509 = vunpack.c.l.s4 1983009808
  %v8510 = vunpack.c.0.s8 %v8509
  %v8511 = vperm.slane %v8503, %v8510
  %v8512 = vrot.slane %v8507, 4
  %v8513 = vsel %vm92, %v8512, %v8495
  %v8514 = vrot.slane %v8495, 4
  %v8515 = vsel %vm92, %v8507, %v8514
  %v8517 = vunpack.c.l.s4 1934713408
  %v8518 = vunpack.c.0.s8 %v8517
  %v8519 = vperm.slane %v8513, %v8518
  %v8521 = vunpack.c.l.s4 1934713408
  %v8522 = vunpack.c.0.s8 %v8521
  %v8523 = vperm.slane %v8515, %v8522
  %v8524 = vrot.slane %v8511, 4
  %v8525 = vsel %vm92, %v8524, %v8499
  %v8526 = vrot.slane %v8499, 4
  %v8527 = vsel %vm92, %v8511, %v8526
  %v8529 = vunpack.c.l.s4 1934713408
  %v8530 = vunpack.c.0.s8 %v8529
  %v8531 = vperm.slane %v8525, %v8530
  %v8533 = vunpack.c.l.s4 1934713408
  %v8534 = vunpack.c.0.s8 %v8533
  %v8535 = vperm.slane %v8527, %v8534
  %v8536 = vrot.slane %v8519, 4
  %v8537 = vsel %vm92, 0.0, %v8536
  %v8538 = vrot.slane %v8523, 4
  %v8539 = vsel %vm92, 0.0, %v8538
  %v8540 = vrot.slane %v8531, 4
  %v8541 = vsel %vm92, 0.0, %v8540
  %v8542 = vrot.slane %v8535, 4
  %v8543 = vsel %vm92, 0.0, %v8542
  %v8544 = vrot.slane %v8475, 4
  %v8545 = vsel %vm92, %v8544, %v8467
  %v8546 = vrot.slane %v8467, 4
  %v8547 = vsel %vm92, %v8475, %v8546
  %v8549 = vunpack.c.l.s4 1983009808
  %v8550 = vunpack.c.0.s8 %v8549
  %v8551 = vperm.slane %v8545, %v8550
  %v8553 = vunpack.c.l.s4 1983009808
  %v8554 = vunpack.c.0.s8 %v8553
  %v8555 = vperm.slane %v8547, %v8554
  %v8556 = vrot.slane %v8479, 4
  %v8557 = vsel %vm92, %v8556, %v8471
  %v8558 = vrot.slane %v8471, 4
  %v8559 = vsel %vm92, %v8479, %v8558
  %v8561 = vunpack.c.l.s4 1983009808
  %v8562 = vunpack.c.0.s8 %v8561
  %v8563 = vperm.slane %v8557, %v8562
  %v8565 = vunpack.c.l.s4 1983009808
  %v8566 = vunpack.c.0.s8 %v8565
  %v8567 = vperm.slane %v8559, %v8566
  %v8568 = vrot.slane %v8563, 4
  %v8569 = vsel %vm92, %v8568, %v8551
  %v8570 = vrot.slane %v8551, 4
  %v8571 = vsel %vm92, %v8563, %v8570
  %v8573 = vunpack.c.l.s4 1934713408
  %v8574 = vunpack.c.0.s8 %v8573
  %v8575 = vperm.slane %v8569, %v8574
  %v8577 = vunpack.c.l.s4 1934713408
  %v8578 = vunpack.c.0.s8 %v8577
  %v8579 = vperm.slane %v8571, %v8578
  %v8580 = vrot.slane %v8567, 4
  %v8581 = vsel %vm92, %v8580, %v8555
  %v8582 = vrot.slane %v8555, 4
  %v8583 = vsel %vm92, %v8567, %v8582
  %v8585 = vunpack.c.l.s4 1934713408
  %v8586 = vunpack.c.0.s8 %v8585
  %v8587 = vperm.slane %v8581, %v8586
  %v8589 = vunpack.c.l.s4 1934713408
  %v8590 = vunpack.c.0.s8 %v8589
  %v8591 = vperm.slane %v8583, %v8590
  %v8592 = vrot.slane %v8575, 4
  %v8593 = vsel %vm92, 0.0, %v8592
  %v8594 = vrot.slane %v8579, 4
  %v8595 = vsel %vm92, 0.0, %v8594
  %v8596 = vrot.slane %v8587, 4
  %v8597 = vsel %vm92, 0.0, %v8596
  %v8598 = vrot.slane %v8591, 4
  %v8599 = vsel %vm92, 0.0, %v8598
  %8601 = vrot.lane.b32.xlu0 %v8537, 16
  %v8602 = vpop.permute.xlu0 %8601
  %8605 = vrot.lane.b32.xlu0 %v8523, 32
  %v8606 = vpop.permute.xlu0 %8605
  %8609 = vrot.lane.b32.xlu0 %v8539, 48
  %v8610 = vpop.permute.xlu0 %8609
  %8613 = vrot.lane.b32.xlu0 %v8531, 64
  %v8614 = vpop.permute.xlu0 %8613
  %8617 = vrot.lane.b32.xlu0 %v8541, 80
  %v8618 = vpop.permute.xlu0 %8617
  %8621 = vrot.lane.b32.xlu0 %v8535, 96
  %v8622 = vpop.permute.xlu0 %8621
  %8625 = vrot.lane.b32.xlu0 %v8543, 112
  %v8626 = vpop.permute.xlu0 %8625
  %8629 = vrot.lane.b32.xlu0 %v8593, 16
  %v8630 = vpop.permute.xlu0 %8629
  %8633 = vrot.lane.b32.xlu0 %v8579, 32
  %v8634 = vpop.permute.xlu0 %8633
  %8637 = vrot.lane.b32.xlu0 %v8595, 48
  %v8638 = vpop.permute.xlu0 %8637
  %8641 = vrot.lane.b32.xlu0 %v8587, 64
  %v8642 = vpop.permute.xlu0 %8641
  %8645 = vrot.lane.b32.xlu0 %v8597, 80
  %v8646 = vpop.permute.xlu0 %8645
  %8649 = vrot.lane.b32.xlu0 %v8591, 96
  %v8650 = vpop.permute.xlu0 %8649
  %8653 = vrot.lane.b32.xlu0 %v8599, 112
  %v8654 = vpop.permute.xlu0 %8653
  %v8656 = vsel %vm692, %v8519, %v8602
  %v8657 = vsel %vm694, %v8656, %v8606
  %v8658 = vsel %vm696, %v8657, %v8610
  %v8659 = vsel %vm698, %v8658, %v8614
  %v8660 = vsel %vm700, %v8659, %v8618
  %v8661 = vsel %vm702, %v8660, %v8622
  %v8662 = vsel %vm704, %v8661, %v8626
  %v8663 = vsel %vm692, %v8575, %v8630
  %v8664 = vsel %vm694, %v8663, %v8634
  %v8665 = vsel %vm696, %v8664, %v8638
  %v8666 = vsel %vm698, %v8665, %v8642
  %v8667 = vsel %vm700, %v8666, %v8646
  %v8668 = vsel %vm702, %v8667, %v8650
  %v8669 = vsel %vm704, %v8668, %v8654
  %v8672 = vrot.slane %v8662, 4
  %v8673 = vrot.slane %v8669, 4
  %8676 = vst [vmem:[#allocation3 + $0x70] sm:$0xf0] %v8672
  %8677 = vst [vmem:[#allocation3 + $0x78] sm:$0xf0] %v8673
  %v8678 = vld [vmem:[%s507 + $0x2] sm:$0xff]
  %v8679 = vld [vmem:[%s507 + $0xa] sm:$0xff]
  %v8680 = vld [vmem:[%s507 + $0x1a] sm:$0xff]
  %v8681 = vld [vmem:[%s507 + $0x22] sm:$0xff]
  %v8682 = vld [vmem:[%s507 + $0x32] sm:$0xff]
  %v8683 = vld [vmem:[%s507 + $0x3a] sm:$0xff]
  %v8684 = vld [vmem:[%s507 + $0x4a] sm:$0xff]
  %v8685 = vld [vmem:[%s507 + $0x52] sm:$0xff]
  %8694 = vrot.lane.b32.xlu0 %v8678, 126
  %v8695 = vpop.permute.xlu0 %8694
  %8696 = vrot.lane.b32.xlu0 %v8679, 126
  %v8697 = vpop.permute.xlu0 %8696
  %8698 = vrot.lane.b32.xlu0 %v8680, 126
  %v8699 = vpop.permute.xlu0 %8698
  %8700 = vrot.lane.b32.xlu0 %v8681, 126
  %v8701 = vpop.permute.xlu0 %8700
  %8702 = vrot.lane.b32.xlu0 %v8682, 126
  %v8703 = vpop.permute.xlu0 %8702
  %8704 = vrot.lane.b32.xlu0 %v8683, 126
  %v8705 = vpop.permute.xlu0 %8704
  %8706 = vrot.lane.b32.xlu0 %v8684, 126
  %v8707 = vpop.permute.xlu0 %8706
  %8708 = vrot.lane.b32.xlu0 %v8685, 126
  %v8709 = vpop.permute.xlu0 %8708
  %v8718 = vrot.slane %v8703, 4
  %v8719 = vsel %vm92, %v8718, %v8695
  %v8720 = vrot.slane %v8695, 4
  %v8721 = vsel %vm92, %v8703, %v8720
  %v8723 = vunpack.c.l.s4 1983009808
  %v8724 = vunpack.c.0.s8 %v8723
  %v8725 = vperm.slane %v8719, %v8724
  %v8727 = vunpack.c.l.s4 1983009808
  %v8728 = vunpack.c.0.s8 %v8727
  %v8729 = vperm.slane %v8721, %v8728
  %v8730 = vrot.slane %v8707, 4
  %v8731 = vsel %vm92, %v8730, %v8699
  %v8732 = vrot.slane %v8699, 4
  %v8733 = vsel %vm92, %v8707, %v8732
  %v8735 = vunpack.c.l.s4 1983009808
  %v8736 = vunpack.c.0.s8 %v8735
  %v8737 = vperm.slane %v8731, %v8736
  %v8739 = vunpack.c.l.s4 1983009808
  %v8740 = vunpack.c.0.s8 %v8739
  %v8741 = vperm.slane %v8733, %v8740
  %v8742 = vrot.slane %v8737, 4
  %v8743 = vsel %vm92, %v8742, %v8725
  %v8744 = vrot.slane %v8725, 4
  %v8745 = vsel %vm92, %v8737, %v8744
  %v8747 = vunpack.c.l.s4 1934713408
  %v8748 = vunpack.c.0.s8 %v8747
  %v8749 = vperm.slane %v8743, %v8748
  %v8751 = vunpack.c.l.s4 1934713408
  %v8752 = vunpack.c.0.s8 %v8751
  %v8753 = vperm.slane %v8745, %v8752
  %v8754 = vrot.slane %v8741, 4
  %v8755 = vsel %vm92, %v8754, %v8729
  %v8756 = vrot.slane %v8729, 4
  %v8757 = vsel %vm92, %v8741, %v8756
  %v8759 = vunpack.c.l.s4 1934713408
  %v8760 = vunpack.c.0.s8 %v8759
  %v8761 = vperm.slane %v8755, %v8760
  %v8763 = vunpack.c.l.s4 1934713408
  %v8764 = vunpack.c.0.s8 %v8763
  %v8765 = vperm.slane %v8757, %v8764
  %v8766 = vrot.slane %v8749, 4
  %v8767 = vsel %vm92, 0.0, %v8766
  %v8768 = vrot.slane %v8753, 4
  %v8769 = vsel %vm92, 0.0, %v8768
  %v8770 = vrot.slane %v8761, 4
  %v8771 = vsel %vm92, 0.0, %v8770
  %v8772 = vrot.slane %v8765, 4
  %v8773 = vsel %vm92, 0.0, %v8772
  %v8774 = vrot.slane %v8705, 4
  %v8775 = vsel %vm92, %v8774, %v8697
  %v8776 = vrot.slane %v8697, 4
  %v8777 = vsel %vm92, %v8705, %v8776
  %v8779 = vunpack.c.l.s4 1983009808
  %v8780 = vunpack.c.0.s8 %v8779
  %v8781 = vperm.slane %v8775, %v8780
  %v8783 = vunpack.c.l.s4 1983009808
  %v8784 = vunpack.c.0.s8 %v8783
  %v8785 = vperm.slane %v8777, %v8784
  %v8786 = vrot.slane %v8709, 4
  %v8787 = vsel %vm92, %v8786, %v8701
  %v8788 = vrot.slane %v8701, 4
  %v8789 = vsel %vm92, %v8709, %v8788
  %v8791 = vunpack.c.l.s4 1983009808
  %v8792 = vunpack.c.0.s8 %v8791
  %v8793 = vperm.slane %v8787, %v8792
  %v8795 = vunpack.c.l.s4 1983009808
  %v8796 = vunpack.c.0.s8 %v8795
  %v8797 = vperm.slane %v8789, %v8796
  %v8798 = vrot.slane %v8793, 4
  %v8799 = vsel %vm92, %v8798, %v8781
  %v8800 = vrot.slane %v8781, 4
  %v8801 = vsel %vm92, %v8793, %v8800
  %v8803 = vunpack.c.l.s4 1934713408
  %v8804 = vunpack.c.0.s8 %v8803
  %v8805 = vperm.slane %v8799, %v8804
  %v8807 = vunpack.c.l.s4 1934713408
  %v8808 = vunpack.c.0.s8 %v8807
  %v8809 = vperm.slane %v8801, %v8808
  %v8810 = vrot.slane %v8797, 4
  %v8811 = vsel %vm92, %v8810, %v8785
  %v8812 = vrot.slane %v8785, 4
  %v8813 = vsel %vm92, %v8797, %v8812
  %v8815 = vunpack.c.l.s4 1934713408
  %v8816 = vunpack.c.0.s8 %v8815
  %v8817 = vperm.slane %v8811, %v8816
  %v8819 = vunpack.c.l.s4 1934713408
  %v8820 = vunpack.c.0.s8 %v8819
  %v8821 = vperm.slane %v8813, %v8820
  %v8822 = vrot.slane %v8805, 4
  %v8823 = vsel %vm92, 0.0, %v8822
  %v8824 = vrot.slane %v8809, 4
  %v8825 = vsel %vm92, 0.0, %v8824
  %v8826 = vrot.slane %v8817, 4
  %v8827 = vsel %vm92, 0.0, %v8826
  %v8828 = vrot.slane %v8821, 4
  %v8829 = vsel %vm92, 0.0, %v8828
  %8831 = vrot.lane.b32.xlu0 %v8767, 16
  %v8832 = vpop.permute.xlu0 %8831
  %8835 = vrot.lane.b32.xlu0 %v8753, 32
  %v8836 = vpop.permute.xlu0 %8835
  %8839 = vrot.lane.b32.xlu0 %v8769, 48
  %v8840 = vpop.permute.xlu0 %8839
  %8843 = vrot.lane.b32.xlu0 %v8761, 64
  %v8844 = vpop.permute.xlu0 %8843
  %8847 = vrot.lane.b32.xlu0 %v8771, 80
  %v8848 = vpop.permute.xlu0 %8847
  %8851 = vrot.lane.b32.xlu0 %v8765, 96
  %v8852 = vpop.permute.xlu0 %8851
  %8855 = vrot.lane.b32.xlu0 %v8773, 112
  %v8856 = vpop.permute.xlu0 %8855
  %8859 = vrot.lane.b32.xlu0 %v8823, 16
  %v8860 = vpop.permute.xlu0 %8859
  %8863 = vrot.lane.b32.xlu0 %v8809, 32
  %v8864 = vpop.permute.xlu0 %8863
  %8867 = vrot.lane.b32.xlu0 %v8825, 48
  %v8868 = vpop.permute.xlu0 %8867
  %8871 = vrot.lane.b32.xlu0 %v8817, 64
  %v8872 = vpop.permute.xlu0 %8871
  %8875 = vrot.lane.b32.xlu0 %v8827, 80
  %v8876 = vpop.permute.xlu0 %8875
  %8879 = vrot.lane.b32.xlu0 %v8821, 96
  %v8880 = vpop.permute.xlu0 %8879
  %8883 = vrot.lane.b32.xlu0 %v8829, 112
  %v8884 = vpop.permute.xlu0 %8883
  %v8886 = vsel %vm692, %v8749, %v8832
  %v8887 = vsel %vm694, %v8886, %v8836
  %v8888 = vsel %vm696, %v8887, %v8840
  %v8889 = vsel %vm698, %v8888, %v8844
  %v8890 = vsel %vm700, %v8889, %v8848
  %v8891 = vsel %vm702, %v8890, %v8852
  %v8892 = vsel %vm704, %v8891, %v8856
  %v8893 = vsel %vm692, %v8805, %v8860
  %v8894 = vsel %vm694, %v8893, %v8864
  %v8895 = vsel %vm696, %v8894, %v8868
  %v8896 = vsel %vm698, %v8895, %v8872
  %v8897 = vsel %vm700, %v8896, %v8876
  %v8898 = vsel %vm702, %v8897, %v8880
  %v8899 = vsel %vm704, %v8898, %v8884
  %8900 = vst [vmem:[#allocation3 + $0x90] sm:$0xf] %v8892
  %8901 = vst [vmem:[#allocation3 + $0x98] sm:$0xf] %v8899
  %v8902 = vld [vmem:[%s4] sm:$0xf]
  %v8903 = vld [vmem:[#allocation3] sm:$0xff]
  %v8904 = vld [vmem:[#allocation3 + $0x8] sm:$0xff]
  %v8905 = vld [vmem:[#allocation3 + $0x10] sm:$0xff]
  %v8906 = vld [vmem:[#allocation3 + $0x18] sm:$0xff]
  %v8907 = vld [vmem:[#allocation3 + $0x20] sm:$0xff]
  %v8908 = vld [vmem:[#allocation3 + $0x28] sm:$0xff]
  %v8909 = vld [vmem:[#allocation3 + $0x30] sm:$0xff]
  %v8910 = vld [vmem:[#allocation3 + $0x38] sm:$0xff]
  %v8911 = vld [vmem:[#allocation3 + $0x40] sm:$0xff]
  %v8912 = vld [vmem:[#allocation3 + $0x48] sm:$0xff]
  %v8913 = vld [vmem:[#allocation3 + $0x50] sm:$0xff]
  %v8914 = vld [vmem:[#allocation3 + $0x58] sm:$0xff]
  %v8915 = vld [vmem:[#allocation3 + $0x60] sm:$0xff]
  %v8916 = vld [vmem:[#allocation3 + $0x68] sm:$0xff]
  %v8917 = vld [vmem:[#allocation3 + $0x70] sm:$0xff]
  %v8918 = vld [vmem:[#allocation3 + $0x78] sm:$0xff]
  %v8919 = vld [vmem:[#allocation3 + $0x80] sm:$0xf]
  %v8920 = vld [vmem:[#allocation3 + $0x88] sm:$0xf]
  %v8921 = vld [vmem:[#allocation3 + $0x90] sm:$0xf]
  %v8922 = vld [vmem:[#allocation3 + $0x98] sm:$0xf]
  %v8924 = vsel %vm4432, %v8902, 0
  %v8927 = vsel %vm4436, %v8919, 0
  %v8930 = vsel %vm4436, %v8920, 0
  %v8933 = vsel %vm4436, %v8921, 0
  %v8936 = vsel %vm4436, %v8922, 0
  %8938 = vmatpush.msra.mxu0 0.0
  %8939 = vmatpush.msra.mxu0 0.0
  %8940 = vmatpush.msra.mxu0 0.0
  %8941 = vmatpush.msra.mxu0 0.0
  %8942 = vmatpush.msra.mxu0 0.0
  %8943 = vmatpush.msra.mxu0 0.0
  %8944 = vmatpush.msra.mxu0 0.0
  %8945 = vmatpush.msra.mxu0 0.0
  %8946 = vmatpush.msra.mxu0 0.0
  %8947 = vmatpush.msra.mxu0 0.0
  %8948 = vmatpush.msra.mxu0 0.0
  %8949 = vmatpush.msra.mxu0 %v8927
  %8950 = vmatpush.msra.mxu0 %v8915
  %8951 = vmatpush.msra.mxu0 %v8911
  %8952 = vmatpush.msra.mxu0 %v8907
  %8953 = vmatpush.msra.mxu0 %v8903
  %8954 = vmatmul.f32.gmra.mxu0 %v8924
  %v8955 = vpop.f32.mrf.mxu0
  %v8956 = vadd.f32 0.0, %v8955
  %8957 = vdwg.mxu0
  %8958 = vmatpush.msra.mxu0 0.0
  %8959 = vmatpush.msra.mxu0 0.0
  %8960 = vmatpush.msra.mxu0 0.0
  %8961 = vmatpush.msra.mxu0 0.0
  %8962 = vmatpush.msra.mxu0 0.0
  %8963 = vmatpush.msra.mxu0 0.0
  %8964 = vmatpush.msra.mxu0 0.0
  %8965 = vmatpush.msra.mxu0 0.0
  %8966 = vmatpush.msra.mxu0 0.0
  %8967 = vmatpush.msra.mxu0 0.0
  %8968 = vmatpush.msra.mxu0 0.0
  %8969 = vmatpush.msra.mxu0 %v8930
  %8970 = vmatpush.msra.mxu0 %v8916
  %8971 = vmatpush.msra.mxu0 %v8912
  %8972 = vmatpush.msra.mxu0 %v8908
  %8973 = vmatpush.msra.mxu0 %v8904
  %8974 = vmatmul.f32.gmra.mxu0 %v8924
  %v8975 = vpop.f32.mrf.mxu0
  %v8976 = vadd.f32 0.0, %v8975
  %8977 = vdwg.mxu0
  %8978 = vmatpush.msra.mxu0 0.0
  %8979 = vmatpush.msra.mxu0 0.0
  %8980 = vmatpush.msra.mxu0 0.0
  %8981 = vmatpush.msra.mxu0 0.0
  %8982 = vmatpush.msra.mxu0 0.0
  %8983 = vmatpush.msra.mxu0 0.0
  %8984 = vmatpush.msra.mxu0 0.0
  %8985 = vmatpush.msra.mxu0 0.0
  %8986 = vmatpush.msra.mxu0 0.0
  %8987 = vmatpush.msra.mxu0 0.0
  %8988 = vmatpush.msra.mxu0 0.0
  %8989 = vmatpush.msra.mxu0 %v8933
  %8990 = vmatpush.msra.mxu0 %v8917
  %8991 = vmatpush.msra.mxu0 %v8913
  %8992 = vmatpush.msra.mxu0 %v8909
  %8993 = vmatpush.msra.mxu0 %v8905
  %8994 = vmatmul.f32.gmra.mxu0 %v8924
  %v8995 = vpop.f32.mrf.mxu0
  %v8996 = vadd.f32 0.0, %v8995
  %8997 = vdwg.mxu0
  %8998 = vmatpush.msra.mxu0 0.0
  %8999 = vmatpush.msra.mxu0 0.0
  %9000 = vmatpush.msra.mxu0 0.0
  %9001 = vmatpush.msra.mxu0 0.0
  %9002 = vmatpush.msra.mxu0 0.0
  %9003 = vmatpush.msra.mxu0 0.0
  %9004 = vmatpush.msra.mxu0 0.0
  %9005 = vmatpush.msra.mxu0 0.0
  %9006 = vmatpush.msra.mxu0 0.0
  %9007 = vmatpush.msra.mxu0 0.0
  %9008 = vmatpush.msra.mxu0 0.0
  %9009 = vmatpush.msra.mxu0 %v8936
  %9010 = vmatpush.msra.mxu0 %v8918
  %9011 = vmatpush.msra.mxu0 %v8914
  %9012 = vmatpush.msra.mxu0 %v8910
  %9013 = vmatpush.msra.mxu0 %v8906
  %9014 = vmatmul.f32.gmra.mxu0 %v8924
  %v9015 = vpop.f32.mrf.mxu0
  %v9016 = vadd.f32 0.0, %v9015
  %9017 = vdwg.mxu0
  %v9018 = vld [vmem:[%s5] sm:$0xf]
  %v9019 = vld [vmem:[%s6] sm:$0xf]
  %v9020 = vsel %vm4436, %v8956, 0.0
  %v9021 = vsel %vm4436, %v8976, 0.0
  %v9022 = vadd.f32 %v9020, %v9021
  %v9023 = vsel %vm4436, %v8996, 0.0
  %v9024 = vadd.f32 %v9022, %v9023
  %v9025 = vsel %vm4436, %v9016, 0.0
  %v9026 = vadd.f32 %v9024, %v9025
  %9027 = vadd.xlane.f32.xlu0 %v9026
  %v9028 = vpop.xlane.xlu0 %9027
  %v9029 = vmul.f32 %v8956, %v8956
  %v9030 = vmul.f32 %v8976, %v8976
  %v9031 = vmul.f32 %v8996, %v8996
  %v9032 = vmul.f32 %v9016, %v9016
  %v9033 = vsel %vm4436, %v9029, 0.0
  %v9034 = vsel %vm4436, %v9030, 0.0
  %v9035 = vadd.f32 %v9033, %v9034
  %v9036 = vsel %vm4436, %v9031, 0.0
  %v9037 = vadd.f32 %v9035, %v9036
  %v9038 = vsel %vm4436, %v9032, 0.0
  %v9039 = vadd.f32 %v9037, %v9038
  %9040 = vadd.xlane.f32.xlu0 %v9039
  %v9041 = vpop.xlane.xlu0 %9040
  %v9042 = vmul.f32 %v9028, 0.001953125
  %v9043 = vmul.f32 %v9041, 0.001953125
  %v9044 = vmul.f32 %v9042, %v9042
  %v9045 = vsub.f32 %v9043, %v9044
  %v9046 = vsub.f32 %v8956, %v9042
  %v9047 = vsub.f32 %v8976, %v9042
  %v9048 = vsub.f32 %v8996, %v9042
  %v9049 = vsub.f32 %v9016, %v9042
  %v9050 = vadd.f32 %v9045, 1e-05
  %v9051 = vrsqrt.pop %v9050
  %v9052 = vmul.f32 %v9051, %v9050
  %v9053 = vmul.f32 %v9052, %v9051
  %v9054 = vmul.f32 0.5, %v9053
  %v9055 = vsub.f32 1.5, %v9054
  %v9056 = vmul.f32 %v9051, %v9055
  %vm9057 = vweird.f32 %v9050
  %vm9058 = vweird.f32 %v9051
  %vm9059 = vmor %vm9057, %vm9058
  %v9060 = vsel %vm9059, %v9051, %v9056
  %v9061 = vmul.f32 %v9046, %v9060
  %v9062 = vmul.f32 %v9047, %v9060
  %v9063 = vmul.f32 %v9048, %v9060
  %v9064 = vmul.f32 %v9049, %v9060
  %9066 = vset.pattern.permute.xlu0 0
  %9067 = vperm.xlu0 %9066, %v9018
  %v9068 = vpop.permute.xlu0 %9067
  %v9070 = vmul.f32 %v9061, %v9068
  %v9071 = vmul.f32 %v9062, %v9068
  %v9072 = vmul.f32 %v9063, %v9068
  %v9073 = vmul.f32 %v9064, %v9068
  %9075 = vset.pattern.permute.xlu0 0
  %9076 = vperm.xlu0 %9075, %v9019
  %v9077 = vpop.permute.xlu0 %9076
  %v9079 = vadd.f32 %v9070, %v9077
  %v9080 = vadd.f32 %v9071, %v9077
  %v9081 = vadd.f32 %v9072, %v9077
  %v9082 = vadd.f32 %v9073, %v9077
  %v9083 = vld [vmem:[%s0] sm:$0xff]
  %9085 = vst [vmem:[#allocation1] ss:$2 sm:$0xff] %v9083
  %v9086 = vld.sshfl [vmem:[#allocation1] sm:$0xff pattern:$0x75316420]
  %v9087 = vld.sshfl [vmem:[#allocation1 + $0x8] sm:$0xff pattern:$0x75316420]
  %v9090 = vadd.f32 %v9079, %v9086
  %v9091 = vadd.f32 %v9080, %v9087
  %v9092 = vmax.f32 %v9090, 0.0
  %v9093 = vmax.f32 %v9091, 0.0
  %v9096 = vrot.slane %v9093, 4
  %v9097 = vsel %vm4436, %v9092, %v9096
  %9099 = vst [vmem:[%s7] sm:$0xff] %v9097
  %v9100 = vld [vmem:[%s284] sm:$0xff]
  %9102 = vst [vmem:[#allocation1] ss:$2 sm:$0xff] %v9100
  %v9103 = vld.sshfl [vmem:[#allocation1] sm:$0xff pattern:$0x75316420]
  %v9104 = vld.sshfl [vmem:[#allocation1 + $0x8] sm:$0xff pattern:$0x75316420]
  %v9107 = vadd.f32 %v9081, %v9103
  %v9108 = vadd.f32 %v9082, %v9104
  %v9109 = vmax.f32 %v9107, 0.0
  %v9110 = vmax.f32 %v9108, 0.0
  %v9113 = vrot.slane %v9110, 4
  %v9114 = vsel %vm4436, %v9109, %v9113
  %s9116 = scalar_lea.vmem %s7, 8
  %9117 = vst [vmem:[%s9116] sm:$0xff] %v9114
  // Predicated region
  $region30: #{basic_block_forward.1} parent=0 // pred_check
    _
  $region31: #{basic_block_forward.1} parent=0 // pred_check_branch
    %9119 = sbr.rel (0) target = $region33
  $region32: #{basic_block_forward.1} parent=0 // pred_region
    _
  $region33: #{basic_block_forward.1} parent=0 // pred_fallthru
    _
  // Predicated region
  $region34: #{basic_block_forward.1} parent=0 // pred_check
    _
  $region35: #{basic_block_forward.1} parent=0 // pred_check_branch
    %9121 = sbr.rel (0) target = $region37
  $region36: #{basic_block_forward.1} parent=0 // pred_region
    _
  $region37: #{basic_block_forward.1} parent=0 // pred_fallthru
    _

</llo_original>
